<compile_context>
chip_gen: v5e
topology: v5e:2x2
jax: 0.10.0
libtpu: 0.0.40
codegen_flags: <defaults>
</compile_context>

<pallas_src>
import numpy as np

import jax
import jax.numpy as jnp
from jax import lax
from jax.experimental import pallas as pl
from jax.experimental.pallas import tpu as pltpu

NEG_INF = -1e30


# ============================================================================
# Static spatial helpers (host-side numpy, become small VMEM constants)
# ============================================================================
def _pooled_dims(h, w):
    return (h - 1) // 2 + 1, (w - 1) // 2 + 1


def _conv_offsets(w):
    # Flattened-lane offset of the source pixel for each 3x3 tap (ky, kx), pad=1.
    return [(ky - 1) * w + (kx - 1) for ky in range(3) for kx in range(3)]


def _tap_mask(h, w, n):
    """(9, 1, n*h*w) 0/1 mask: tap t is valid at output (y, x) iff the source
    pixel (y+ky-1, x+kx-1) lies inside the image.  Shared by the 3x3 conv
    (multiplicative zero-pad) and the 3x3 max-pool (-inf pad).  Because every
    out-of-image source is masked, lane-roll wraparound (including across the
    batch images packed on the lane axis) never leaks wrong data."""
    m = np.zeros((9, h * w), np.float32)
    for ky in range(3):
        for kx in range(3):
            t = ky * 3 + kx
            for y in range(h):
                if not (0 <= y + ky - 1 < h):
                    continue
                for x in range(w):
                    if 0 <= x + kx - 1 < w:
                        m[t, y * w + x] = 1.0
    return np.tile(m, (1, n)).reshape(9, 1, n * h * w)


def _pool_select(h, w, n):
    """(n*h*w, n*ho*wo) 0/1 matrix selecting the stride-2 positions: a stride-2
    downsample of the dilated 3x3 max equals MaxPool2d(3, stride=2, pad=1)."""
    ho, wo = _pooled_dims(h, w)
    s = np.zeros((h * w, ho * wo), np.float32)
    for i in range(ho):
        for j in range(wo):
            s[(2 * i) * w + 2 * j, i * wo + j] = 1.0
    return np.kron(np.eye(n, dtype=np.float32), s)


def _interp_matrix(n_in, n_out):
    """align_corners=True bilinear weights (n_out, n_in) (nn.UpsamplingBilinear2d)."""
    W = np.zeros((n_out, n_in), np.float32)
    if n_out == 1 or n_in == 1:
        W[:, 0] = 1.0
        return W
    scale = (n_in - 1) / (n_out - 1)
    for i in range(n_out):
        src = i * scale
        p0 = min(int(np.floor(src)), n_in - 2)
        f = src - p0
        W[i, p0] = 1.0 - f
        W[i, p0 + 1] = f
    return W


def _upsample_mat(h_in, w_in, h_out, w_out, n):
    """(n*h_in*w_in, n*h_out*w_out) block-diag bilinear matrix: y = x @ U."""
    u = np.kron(_interp_matrix(h_in, h_out), _interp_matrix(w_in, w_out)).T
    return np.kron(np.eye(n, dtype=np.float32), u.astype(np.float32))


def build_operators(h1, w1, n):
    h2, w2 = _pooled_dims(h1, w1)
    h3, w3 = _pooled_dims(h2, w2)
    ops = dict(
        mask1=_tap_mask(h1, w1, n),
        mask2=_tap_mask(h2, w2, n),
        mask3=_tap_mask(h3, w3, n),
        sel1=_pool_select(h1, w1, n),
        sel2=_pool_select(h2, w2, n),
        up32=_upsample_mat(h3, w3, h2, w2, n),   # level 3 (4x4) -> level 2 (8x8)
        up21=_upsample_mat(h2, w2, h1, w1, n),   # level 2 (8x8) -> level 1 (16x16)
    )
    return {k: jnp.asarray(v, jnp.float32) for k, v in ops.items()}


# ============================================================================
# The single fused Pallas kernel: whole AttentionModule_stage2, whole batch
# ============================================================================
def make_kernel(h1, w1, mxu_dtype=jnp.float32):
    """Activations live as (C, N*H*W): channels on sublanes, batch*spatial on
    lanes (lane-dense stores, wide MXU free dim, no serial batch grid)."""
    h2, w2 = _pooled_dims(h1, w1)
    h3, w3 = _pooled_dims(h2, w2)
    off1, off2, off3 = _conv_offsets(w1), _conv_offsets(w2), _conv_offsets(w3)

    def kernel(x_ref,
               bn1s_ref, bn1b_ref, w1_ref,
               bn2s_ref, bn2b_ref, w2c_ref,
               bn3s_ref, bn3b_ref, w3_ref,
               s4s_ref, s4b_ref, s4w_ref,
               m1_ref, m2_ref, m3_ref,
               sel1_ref, sel2_ref, u32_ref, u21_ref,
               o_ref):

        def mm(a, b):
            # Single switch point for bf16 MXU operands on v6e/v7x.
            return jnp.dot(a.astype(mxu_dtype), b.astype(mxu_dtype),
                           preferred_element_type=jnp.float32)

        def shift(a, off):
            # Lane shift so position p reads source p+off (wrap gets masked).
            return a if off == 0 else jnp.roll(a, -off, axis=-1)

        def res_block(h, i, offs, m_ref):
            # pre-act residual block: BN-ReLU-1x1 -> BN-ReLU-3x3 -> BN-ReLU-1x1 + h
            a1 = jnp.maximum(h * bn1s_ref[i] + bn1b_ref[i], 0.0)            # (C, M)
            a2 = jnp.maximum(mm(w1_ref[i], a1) * bn2s_ref[i] + bn2b_ref[i], 0.0)
            # 3x3 conv (pad=1): 9 masked lane shifts stacked on sublanes, then
            # ONE (C4P, 9*C4P) matmul folds the tap + channel reduction.
            taps = jnp.concatenate(
                [m_ref[t] * shift(a2, offs[t]) for t in range(9)], axis=0)  # (9*C4P, M)
            conv = mm(w2c_ref[i], taps)                                     # (C4P, M)
            a3 = jnp.maximum(conv * bn3s_ref[i] + bn3b_ref[i], 0.0)
            return mm(w3_ref[i], a3) + h                                    # (C, M)

        def maxpool(h, offs, m_ref, sel_ref):
            # MaxPool2d(3, stride=2, pad=1): dilated 3x3 max via masked shifts
            # (VPU/XLU), pairwise tree-max, then one stride-2 selection matmul.
            vals = [jnp.where(m_ref[t] != 0.0, shift(h, offs[t]), NEG_INF)
                    for t in range(9)]
            while len(vals) > 1:
                nxt = [jnp.maximum(a, b) for a, b in zip(vals[0::2], vals[1::2])]
                if len(vals) % 2:
                    nxt.append(vals[-1])
                vals = nxt
            return mm(vals[0], sel_ref[...])

        x = x_ref[...]                                            # (C, NM1)
        x1 = res_block(x, 0, off1, m1_ref)                        # first_residual_blocks
        tr = res_block(res_block(x1, 1, off1, m1_ref), 2, off1, m1_ref)   # trunk
        p1 = maxpool(x1, off1, m1_ref, sel1_ref)                  # mpool1 -> (C, NM2)
        sm1 = res_block(p1, 3, off2, m2_ref)                      # softmax1_blocks
        sk1 = res_block(sm1, 4, off2, m2_ref)                     # skip1_connection
        p2 = maxpool(sm1, off2, m2_ref, sel2_ref)                 # mpool2 -> (C, NM3)
        sm2 = res_block(res_block(p2, 5, off3, m3_ref), 6, off3, m3_ref)  # softmax2
        out2 = mm(sm2, u32_ref[...]) + sm1 + sk1                  # interp2 + skips
        sm3 = res_block(out2, 7, off2, m2_ref)                    # softmax3_blocks
        out1 = mm(sm3, u21_ref[...]) + tr                         # interp1 + trunk
        # softmax4_blocks: BN-ReLU-1x1, BN-ReLU-1x1, sigmoid (exact)
        z = mm(s4w_ref[0], jnp.maximum(out1 * s4s_ref[0] + s4b_ref[0], 0.0))
        z = mm(s4w_ref[1], jnp.maximum(z * s4s_ref[1] + s4b_ref[1], 0.0))
        sig = 1.0 / (1.0 + jnp.exp(-z))
        o_ref[...] = res_block((1.0 + sig) * tr, 8, off1, m1_ref)  # last_blocks

    return kernel


def attention_module_stage2(x, kparams, ops):
    """x: (N, C, H, W) float32 (NCHW, same as the torch module)."""
    N, C, H, W = x.shape
    NM = N * H * W
    # channels -> sublanes, batch*spatial -> lanes; whole batch in ONE kernel
    xf = jnp.transpose(x, (1, 0, 2, 3)).reshape(C, NM)
    args = (xf,
            kparams["bn1_s"], kparams["bn1_b"], kparams["w1"],
            kparams["bn2_s"], kparams["bn2_b"], kparams["w2c"],
            kparams["bn3_s"], kparams["bn3_b"], kparams["w3"],
            kparams["s4_s"], kparams["s4_b"], kparams["s4_w"],
            ops["mask1"], ops["mask2"], ops["mask3"],
            ops["sel1"], ops["sel2"], ops["up32"], ops["up21"])
    out = pl.pallas_call(
        make_kernel(H, W),
        out_shape=jax.ShapeDtypeStruct((C, NM), jnp.float32),
        in_specs=[pl.BlockSpec(memory_space=pltpu.MemorySpace.VMEM)
                  for _ in args],
        out_specs=pl.BlockSpec(memory_space=pltpu.MemorySpace.VMEM),
        compiler_params=pltpu.CompilerParams(
            vmem_limit_bytes=16 * 1024 * 1024),
    )(*args)
    return jnp.transpose(out.reshape(C, N, H, W), (1, 0, 2, 3))


# ============================================================================
# Parameters (deterministic synthetic init, eval-mode folded BatchNorm)
# ============================================================================
def init_bn(key, c):
    k1, k2, k3, k4 = jax.random.split(key, 4)
    gamma = 1.0 + 0.1 * jax.random.normal(k1, (c,))
    beta = 0.1 * jax.random.normal(k2, (c,))
    mean = 0.1 * jax.random.normal(k3, (c,))
    var = 1.0 + 0.1 * jax.random.uniform(k4, (c,))
    scale = gamma / jnp.sqrt(var + 1e-5)
    bias = beta - mean * scale
    return scale.astype(jnp.float32), bias.astype(jnp.float32)


def init_params(key, c):
    """Raw (reference-layout) parameters."""
    c4 = c // 4
    kb = jax.random.split(key, 10)
    acc = {k: [] for k in ("bn1_s", "bn1_b", "w1", "bn2_s", "bn2_b",
                           "w2", "bn3_s", "bn3_b", "w3")}
    for i in range(9):  # first, trunk0, trunk1, softmax1, skip1, sm2_0, sm2_1, sm3, last
        k = jax.random.split(kb[i], 6)
        s, b = init_bn(k[0], c); acc["bn1_s"].append(s); acc["bn1_b"].append(b)
        acc["w1"].append(0.1 * jax.random.normal(k[1], (c4, c)))            # (Cout, Cin)
        s, b = init_bn(k[2], c4); acc["bn2_s"].append(s); acc["bn2_b"].append(b)
        acc["w2"].append(0.1 * jax.random.normal(k[3], (c4, c4, 3, 3)))     # torch OIHW
        s, b = init_bn(k[4], c4); acc["bn3_s"].append(s); acc["bn3_b"].append(b)
        acc["w3"].append(0.1 * jax.random.normal(k[5], (c, c4)))
        # ResidualBlock.conv4 shortcut unused: in_channels == out_channels, stride == 1
    p = {k: jnp.stack(v).astype(jnp.float32) for k, v in acc.items()}
    k4 = jax.random.split(kb[9], 4)
    s1, b1 = init_bn(k4[0], c)
    s2, b2 = init_bn(k4[2], c)
    p["s4_s"] = jnp.stack([s1, s2])
    p["s4_b"] = jnp.stack([b1, b2])
    p["s4_w"] = jnp.stack([0.1 * jax.random.normal(k4[1], (c, c)),
                           0.1 * jax.random.normal(k4[3], (c, c))]).astype(jnp.float32)
    return p


def pack_params(p, c):
    """Kernel-layout parameters: mid (C/4) channels zero-padded up to a sublane
    multiple so the tap concat is tile-aligned; 3x3 weights flattened to one
    (C4P, 9*C4P) matrix per block; BN scale/bias as (*, C, 1) columns."""
    c4 = c // 4
    c4p = ((c4 + 7) // 8) * 8
    pad = c4p - c4

    def pad_axis(a, axis):
        if pad == 0:
            return a
        cfg = [(0, 0)] * a.ndim
        cfg[axis] = (0, pad)
        return jnp.pad(a, cfg)

    # (9, o, j, ky, kx) -> (9, o, ky, kx, j) -> pad j -> (9, C4, 9*C4P) -> pad o
    w2 = pad_axis(jnp.transpose(p["w2"], (0, 1, 3, 4, 2)), 4)
    w2c = pad_axis(w2.reshape(9, c4, 9 * c4p), 1)

    kp = dict(
        bn1_s=p["bn1_s"][:, :, None], bn1_b=p["bn1_b"][:, :, None],
        w1=pad_axis(p["w1"], 1),                                   # (9, C4P, C)
        bn2_s=pad_axis(p["bn2_s"], 1)[:, :, None],
        bn2_b=pad_axis(p["bn2_b"], 1)[:, :, None],
        w2c=w2c,                                                   # (9, C4P, 9*C4P)
        bn3_s=pad_axis(p["bn3_s"], 1)[:, :, None],
        bn3_b=pad_axis(p["bn3_b"], 1)[:, :, None],
        w3=pad_axis(p["w3"], 2),                                   # (9, C, C4P)
        s4_s=p["s4_s"][:, :, None], s4_b=p["s4_b"][:, :, None],
        s4_w=p["s4_w"],
    )
    return {k: v.astype(jnp.float32) for k, v in kp.items()}


# ============================================================================
# Pure-JAX (XLA) reference of the same module, for the correctness check
# ============================================================================
def reference_forward(x, p):
    N, C, H, W = x.shape
    PREC = lax.Precision.HIGHEST

    def bn(h, s, b):
        return h * s.reshape(1, -1, 1, 1) + b.reshape(1, -1, 1, 1)

    def conv1x1(h, w):
        return jnp.einsum("oi,nihw->nohw", w, h, precision=PREC)

    def conv3x3(h, w):
        return lax.conv_general_dilated(
            h, w, window_strides=(1, 1), padding=((1, 1), (1, 1)),
            dimension_numbers=("NCHW", "OIHW", "NCHW"), precision=PREC)

    def res_block(h, i):
        a1 = jnp.maximum(bn(h, p["bn1_s"][i], p["bn1_b"][i]), 0.0)
        t = conv1x1(a1, p["w1"][i])
        a2 = jnp.maximum(bn(t, p["bn2_s"][i], p["bn2_b"][i]), 0.0)
        t = conv3x3(a2, p["w2"][i])
        a3 = jnp.maximum(bn(t, p["bn3_s"][i], p["bn3_b"][i]), 0.0)
        return conv1x1(a3, p["w3"][i]) + h

    def maxpool(h):
        return lax.reduce_window(h, -jnp.inf, lax.max, (1, 1, 3, 3), (1, 1, 2, 2),
                                 ((0, 0), (0, 0), (1, 1), (1, 1)))

    def upsample(h, ho, wo):
        R = jnp.asarray(_interp_matrix(h.shape[2], ho))
        Cm = jnp.asarray(_interp_matrix(h.shape[3], wo))
        return jnp.einsum("ih,nchw,jw->ncij", R, h, Cm, precision=PREC)

    x1 = res_block(x, 0)
    tr = res_block(res_block(x1, 1), 2)
    p1 = maxpool(x1)
    sm1 = res_block(p1, 3)
    sk1 = res_block(sm1, 4)
    p2 = maxpool(sm1)
    sm2 = res_block(res_block(p2, 5), 6)
    out2 = upsample(sm2, sm1.shape[2], sm1.shape[3]) + sm1 + sk1
    sm3 = res_block(out2, 7)
    out1 = upsample(sm3, H, W) + tr
    a = jnp.maximum(bn(out1, p["s4_s"][0], p["s4_b"][0]), 0.0)
    z = conv1x1(a, p["s4_w"][0])
    a = jnp.maximum(bn(z, p["s4_s"][1], p["s4_b"][1]), 0.0)
    z = conv1x1(a, p["s4_w"][1])
    gated = (1.0 + jax.nn.sigmoid(z)) * tr
    return res_block(gated, 8)


# ============================================================================
if __name__ == "__main__":
    key = jax.random.PRNGKey(0)
    N, C, H, W = 2, 8, 16, 16          # NCHW; size1=(16,16), size2=(8,8) implied
    kx, kprm = jax.random.split(key)
    x = jax.random.normal(kx, (N, C, H, W), dtype=jnp.float32)

    raw_params = init_params(kprm, C)
    kparams = pack_params(raw_params, C)
    ops = build_operators(H, W, N)

    fwd = jax.jit(attention_module_stage2)
    out = jax.block_until_ready(fwd(x, kparams, ops))

    assert out.shape == (N, C, H, W), out.shape
    assert bool(jnp.all(jnp.isfinite(out)))

    # Correctness check against a pure-XLA reference (exact sigmoid + f32 MXU
    # operands in the kernel -> tight tolerance).
    ref = jax.block_until_ready(jax.jit(reference_forward)(x, raw_params))
    max_err = float(jnp.max(jnp.abs(out - ref)))
    assert max_err < 1e-3, f"kernel vs reference mismatch: max abs err = {max_err}"

    print("KERNEL_OK")
</pallas_src>

<mosaic_0001>
module attributes {stable_mosaic.version = 11 : i64} {
  func.func @kernel(%arg0: memref<8x512xf32, #tpu.memory_space<vmem>>, %arg1: memref<9x8x1xf32, #tpu.memory_space<vmem>>, %arg2: memref<9x8x1xf32, #tpu.memory_space<vmem>>, %arg3: memref<9x8x8xf32, #tpu.memory_space<vmem>>, %arg4: memref<9x8x1xf32, #tpu.memory_space<vmem>>, %arg5: memref<9x8x1xf32, #tpu.memory_space<vmem>>, %arg6: memref<9x8x72xf32, #tpu.memory_space<vmem>>, %arg7: memref<9x8x1xf32, #tpu.memory_space<vmem>>, %arg8: memref<9x8x1xf32, #tpu.memory_space<vmem>>, %arg9: memref<9x8x8xf32, #tpu.memory_space<vmem>>, %arg10: memref<2x8x1xf32, #tpu.memory_space<vmem>>, %arg11: memref<2x8x1xf32, #tpu.memory_space<vmem>>, %arg12: memref<2x8x8xf32, #tpu.memory_space<vmem>>, %arg13: memref<9x1x512xf32, #tpu.memory_space<vmem>>, %arg14: memref<9x1x128xf32, #tpu.memory_space<vmem>>, %arg15: memref<9x1x32xf32, #tpu.memory_space<vmem>>, %arg16: memref<512x128xf32, #tpu.memory_space<vmem>>, %arg17: memref<128x32xf32, #tpu.memory_space<vmem>>, %arg18: memref<32x128xf32, #tpu.memory_space<vmem>>, %arg19: memref<128x512xf32, #tpu.memory_space<vmem>>, %arg20: memref<8x512xf32, #tpu.memory_space<vmem>>) attributes {dimension_semantics = [], scalar_prefetch = 0 : i64, scratch_operands = 0 : i64, tpu.core_type = #tpu.core_type<tc>} {
    %c0 = arith.constant 0 : index
    %c0_0 = arith.constant 0 : index
    %0 = vector.load %arg0[%c0, %c0_0] : memref<8x512xf32, #tpu.memory_space<vmem>>, vector<8x512xf32>
    %c0_1 = arith.constant 0 : index
    %c0_2 = arith.constant 0 : index
    %c0_3 = arith.constant 0 : index
    %1 = vector.load %arg1[%c0_1, %c0_2, %c0_3] : memref<9x8x1xf32, #tpu.memory_space<vmem>>, vector<1x8x1xf32>
    %2 = vector.shape_cast %1 : vector<1x8x1xf32> to vector<8x1xf32>
    %3 = vector.broadcast %2 : vector<8x1xf32> to vector<8x512xf32>
    %4 = arith.mulf %0, %3 : vector<8x512xf32>
    %c0_4 = arith.constant 0 : index
    %c0_5 = arith.constant 0 : index
    %c0_6 = arith.constant 0 : index
    %5 = vector.load %arg2[%c0_4, %c0_5, %c0_6] : memref<9x8x1xf32, #tpu.memory_space<vmem>>, vector<1x8x1xf32>
    %6 = vector.shape_cast %5 : vector<1x8x1xf32> to vector<8x1xf32>
    %7 = vector.broadcast %6 : vector<8x1xf32> to vector<8x512xf32>
    %8 = arith.addf %4, %7 : vector<8x512xf32>
    %cst = arith.constant 0.000000e+00 : f32
    %9 = vector.broadcast %cst : f32 to vector<8x512xf32>
    %10 = arith.maximumf %8, %9 : vector<8x512xf32>
    %c0_7 = arith.constant 0 : index
    %c0_8 = arith.constant 0 : index
    %c0_9 = arith.constant 0 : index
    %11 = vector.load %arg3[%c0_7, %c0_8, %c0_9] : memref<9x8x8xf32, #tpu.memory_space<vmem>>, vector<1x8x8xf32>
    %12 = vector.shape_cast %11 : vector<1x8x8xf32> to vector<8x8xf32>
    %cst_10 = arith.constant dense<0.000000e+00> : vector<8x512xf32>
    %13 = tpu.matmul %12, %10, %cst_10 {dimension_numbers = #tpu.dot_dimension_numbers<[1], [0], [0], [1], [0, 0, 1, 1], [], []>} : vector<8x8xf32>, vector<8x512xf32>, vector<8x512xf32> -> vector<8x512xf32>
    %c0_11 = arith.constant 0 : index
    %c0_12 = arith.constant 0 : index
    %c0_13 = arith.constant 0 : index
    %14 = vector.load %arg4[%c0_11, %c0_12, %c0_13] : memref<9x8x1xf32, #tpu.memory_space<vmem>>, vector<1x8x1xf32>
    %15 = vector.shape_cast %14 : vector<1x8x1xf32> to vector<8x1xf32>
    %16 = vector.broadcast %15 : vector<8x1xf32> to vector<8x512xf32>
    %17 = arith.mulf %13, %16 : vector<8x512xf32>
    %c0_14 = arith.constant 0 : index
    %c0_15 = arith.constant 0 : index
    %c0_16 = arith.constant 0 : index
    %18 = vector.load %arg5[%c0_14, %c0_15, %c0_16] : memref<9x8x1xf32, #tpu.memory_space<vmem>>, vector<1x8x1xf32>
    %19 = vector.shape_cast %18 : vector<1x8x1xf32> to vector<8x1xf32>
    %20 = vector.broadcast %19 : vector<8x1xf32> to vector<8x512xf32>
    %21 = arith.addf %17, %20 : vector<8x512xf32>
    %cst_17 = arith.constant 0.000000e+00 : f32
    %22 = vector.broadcast %cst_17 : f32 to vector<8x512xf32>
    %23 = arith.maximumf %21, %22 : vector<8x512xf32>
    %c0_18 = arith.constant 0 : index
    %c0_19 = arith.constant 0 : index
    %c0_20 = arith.constant 0 : index
    %24 = vector.load %arg13[%c0_18, %c0_19, %c0_20] : memref<9x1x512xf32, #tpu.memory_space<vmem>>, vector<1x1x512xf32>
    %25 = vector.shape_cast %24 : vector<1x1x512xf32> to vector<1x512xf32>
    %26 = vector.extract_strided_slice %23 {offsets = [0, 495], sizes = [8, 17], strides = [1, 1]} : vector<8x512xf32> to vector<8x17xf32>
    %27 = vector.extract_strided_slice %23 {offsets = [0, 0], sizes = [8, 495], strides = [1, 1]} : vector<8x512xf32> to vector<8x495xf32>
    %28 = tpu.concatenate %26, %27 in 1 : vector<8x17xf32>, vector<8x495xf32> -> vector<8x512xf32>
    %29 = vector.broadcast %25 : vector<1x512xf32> to vector<8x512xf32>
    %30 = arith.mulf %29, %28 : vector<8x512xf32>
    %c1 = arith.constant 1 : index
    %c0_21 = arith.constant 0 : index
    %c0_22 = arith.constant 0 : index
    %31 = vector.load %arg13[%c1, %c0_21, %c0_22] : memref<9x1x512xf32, #tpu.memory_space<vmem>>, vector<1x1x512xf32>
    %32 = vector.shape_cast %31 : vector<1x1x512xf32> to vector<1x512xf32>
    %33 = vector.extract_strided_slice %23 {offsets = [0, 496], sizes = [8, 16], strides = [1, 1]} : vector<8x512xf32> to vector<8x16xf32>
    %34 = vector.extract_strided_slice %23 {offsets = [0, 0], sizes = [8, 496], strides = [1, 1]} : vector<8x512xf32> to vector<8x496xf32>
    %35 = tpu.concatenate %33, %34 in 1 : vector<8x16xf32>, vector<8x496xf32> -> vector<8x512xf32>
    %36 = vector.broadcast %32 : vector<1x512xf32> to vector<8x512xf32>
    %37 = arith.mulf %36, %35 : vector<8x512xf32>
    %c2 = arith.constant 2 : index
    %c0_23 = arith.constant 0 : index
    %c0_24 = arith.constant 0 : index
    %38 = vector.load %arg13[%c2, %c0_23, %c0_24] : memref<9x1x512xf32, #tpu.memory_space<vmem>>, vector<1x1x512xf32>
    %39 = vector.shape_cast %38 : vector<1x1x512xf32> to vector<1x512xf32>
    %40 = vector.extract_strided_slice %23 {offsets = [0, 497], sizes = [8, 15], strides = [1, 1]} : vector<8x512xf32> to vector<8x15xf32>
    %41 = vector.extract_strided_slice %23 {offsets = [0, 0], sizes = [8, 497], strides = [1, 1]} : vector<8x512xf32> to vector<8x497xf32>
    %42 = tpu.concatenate %40, %41 in 1 : vector<8x15xf32>, vector<8x497xf32> -> vector<8x512xf32>
    %43 = vector.broadcast %39 : vector<1x512xf32> to vector<8x512xf32>
    %44 = arith.mulf %43, %42 : vector<8x512xf32>
    %c3 = arith.constant 3 : index
    %c0_25 = arith.constant 0 : index
    %c0_26 = arith.constant 0 : index
    %45 = vector.load %arg13[%c3, %c0_25, %c0_26] : memref<9x1x512xf32, #tpu.memory_space<vmem>>, vector<1x1x512xf32>
    %46 = vector.shape_cast %45 : vector<1x1x512xf32> to vector<1x512xf32>
    %47 = vector.extract_strided_slice %23 {offsets = [0, 511], sizes = [8, 1], strides = [1, 1]} : vector<8x512xf32> to vector<8x1xf32>
    %48 = vector.extract_strided_slice %23 {offsets = [0, 0], sizes = [8, 511], strides = [1, 1]} : vector<8x512xf32> to vector<8x511xf32>
    %49 = tpu.concatenate %47, %48 in 1 : vector<8x1xf32>, vector<8x511xf32> -> vector<8x512xf32>
    %50 = vector.broadcast %46 : vector<1x512xf32> to vector<8x512xf32>
    %51 = arith.mulf %50, %49 : vector<8x512xf32>
    %c4 = arith.constant 4 : index
    %c0_27 = arith.constant 0 : index
    %c0_28 = arith.constant 0 : index
    %52 = vector.load %arg13[%c4, %c0_27, %c0_28] : memref<9x1x512xf32, #tpu.memory_space<vmem>>, vector<1x1x512xf32>
    %53 = vector.shape_cast %52 : vector<1x1x512xf32> to vector<1x512xf32>
    %54 = vector.broadcast %53 : vector<1x512xf32> to vector<8x512xf32>
    %55 = arith.mulf %54, %23 : vector<8x512xf32>
    %c5 = arith.constant 5 : index
    %c0_29 = arith.constant 0 : index
    %c0_30 = arith.constant 0 : index
    %56 = vector.load %arg13[%c5, %c0_29, %c0_30] : memref<9x1x512xf32, #tpu.memory_space<vmem>>, vector<1x1x512xf32>
    %57 = vector.shape_cast %56 : vector<1x1x512xf32> to vector<1x512xf32>
    %58 = vector.extract_strided_slice %23 {offsets = [0, 1], sizes = [8, 511], strides = [1, 1]} : vector<8x512xf32> to vector<8x511xf32>
    %59 = vector.extract_strided_slice %23 {offsets = [0, 0], sizes = [8, 1], strides = [1, 1]} : vector<8x512xf32> to vector<8x1xf32>
    %60 = tpu.concatenate %58, %59 in 1 : vector<8x511xf32>, vector<8x1xf32> -> vector<8x512xf32>
    %61 = vector.broadcast %57 : vector<1x512xf32> to vector<8x512xf32>
    %62 = arith.mulf %61, %60 : vector<8x512xf32>
    %c6 = arith.constant 6 : index
    %c0_31 = arith.constant 0 : index
    %c0_32 = arith.constant 0 : index
    %63 = vector.load %arg13[%c6, %c0_31, %c0_32] : memref<9x1x512xf32, #tpu.memory_space<vmem>>, vector<1x1x512xf32>
    %64 = vector.shape_cast %63 : vector<1x1x512xf32> to vector<1x512xf32>
    %65 = vector.extract_strided_slice %23 {offsets = [0, 15], sizes = [8, 497], strides = [1, 1]} : vector<8x512xf32> to vector<8x497xf32>
    %66 = vector.extract_strided_slice %23 {offsets = [0, 0], sizes = [8, 15], strides = [1, 1]} : vector<8x512xf32> to vector<8x15xf32>
    %67 = tpu.concatenate %65, %66 in 1 : vector<8x497xf32>, vector<8x15xf32> -> vector<8x512xf32>
    %68 = vector.broadcast %64 : vector<1x512xf32> to vector<8x512xf32>
    %69 = arith.mulf %68, %67 : vector<8x512xf32>
    %c7 = arith.constant 7 : index
    %c0_33 = arith.constant 0 : index
    %c0_34 = arith.constant 0 : index
    %70 = vector.load %arg13[%c7, %c0_33, %c0_34] : memref<9x1x512xf32, #tpu.memory_space<vmem>>, vector<1x1x512xf32>
    %71 = vector.shape_cast %70 : vector<1x1x512xf32> to vector<1x512xf32>
    %72 = vector.extract_strided_slice %23 {offsets = [0, 16], sizes = [8, 496], strides = [1, 1]} : vector<8x512xf32> to vector<8x496xf32>
    %73 = vector.extract_strided_slice %23 {offsets = [0, 0], sizes = [8, 16], strides = [1, 1]} : vector<8x512xf32> to vector<8x16xf32>
    %74 = tpu.concatenate %72, %73 in 1 : vector<8x496xf32>, vector<8x16xf32> -> vector<8x512xf32>
    %75 = vector.broadcast %71 : vector<1x512xf32> to vector<8x512xf32>
    %76 = arith.mulf %75, %74 : vector<8x512xf32>
    %c8 = arith.constant 8 : index
    %c0_35 = arith.constant 0 : index
    %c0_36 = arith.constant 0 : index
    %77 = vector.load %arg13[%c8, %c0_35, %c0_36] : memref<9x1x512xf32, #tpu.memory_space<vmem>>, vector<1x1x512xf32>
    %78 = vector.shape_cast %77 : vector<1x1x512xf32> to vector<1x512xf32>
    %79 = vector.extract_strided_slice %23 {offsets = [0, 17], sizes = [8, 495], strides = [1, 1]} : vector<8x512xf32> to vector<8x495xf32>
    %80 = vector.extract_strided_slice %23 {offsets = [0, 0], sizes = [8, 17], strides = [1, 1]} : vector<8x512xf32> to vector<8x17xf32>
    %81 = tpu.concatenate %79, %80 in 1 : vector<8x495xf32>, vector<8x17xf32> -> vector<8x512xf32>
    %82 = vector.broadcast %78 : vector<1x512xf32> to vector<8x512xf32>
    %83 = arith.mulf %82, %81 : vector<8x512xf32>
    %84 = tpu.concatenate %30, %37, %44, %51, %55, %62, %69, %76, %83 in 0 : vector<8x512xf32>, vector<8x512xf32>, vector<8x512xf32>, vector<8x512xf32>, vector<8x512xf32>, vector<8x512xf32>, vector<8x512xf32>, vector<8x512xf32>, vector<8x512xf32> -> vector<72x512xf32>
    %c0_37 = arith.constant 0 : index
    %c0_38 = arith.constant 0 : index
    %c0_39 = arith.constant 0 : index
    %85 = vector.load %arg6[%c0_37, %c0_38, %c0_39] : memref<9x8x72xf32, #tpu.memory_space<vmem>>, vector<1x8x72xf32>
    %86 = vector.shape_cast %85 : vector<1x8x72xf32> to vector<8x72xf32>
    %cst_40 = arith.constant dense<0.000000e+00> : vector<8x512xf32>
    %87 = tpu.matmul %86, %84, %cst_40 {dimension_numbers = #tpu.dot_dimension_numbers<[1], [0], [0], [1], [0, 0, 1, 1], [], []>} : vector<8x72xf32>, vector<72x512xf32>, vector<8x512xf32> -> vector<8x512xf32>
    %c0_41 = arith.constant 0 : index
    %c0_42 = arith.constant 0 : index
    %c0_43 = arith.constant 0 : index
    %88 = vector.load %arg7[%c0_41, %c0_42, %c0_43] : memref<9x8x1xf32, #tpu.memory_space<vmem>>, vector<1x8x1xf32>
    %89 = vector.shape_cast %88 : vector<1x8x1xf32> to vector<8x1xf32>
    %90 = vector.broadcast %89 : vector<8x1xf32> to vector<8x512xf32>
    %91 = arith.mulf %87, %90 : vector<8x512xf32>
    %c0_44 = arith.constant 0 : index
    %c0_45 = arith.constant 0 : index
    %c0_46 = arith.constant 0 : index
    %92 = vector.load %arg8[%c0_44, %c0_45, %c0_46] : memref<9x8x1xf32, #tpu.memory_space<vmem>>, vector<1x8x1xf32>
    %93 = vector.shape_cast %92 : vector<1x8x1xf32> to vector<8x1xf32>
    %94 = vector.broadcast %93 : vector<8x1xf32> to vector<8x512xf32>
    %95 = arith.addf %91, %94 : vector<8x512xf32>
    %cst_47 = arith.constant 0.000000e+00 : f32
    %96 = vector.broadcast %cst_47 : f32 to vector<8x512xf32>
    %97 = arith.maximumf %95, %96 : vector<8x512xf32>
    %c0_48 = arith.constant 0 : index
    %c0_49 = arith.constant 0 : index
    %c0_50 = arith.constant 0 : index
    %98 = vector.load %arg9[%c0_48, %c0_49, %c0_50] : memref<9x8x8xf32, #tpu.memory_space<vmem>>, vector<1x8x8xf32>
    %99 = vector.shape_cast %98 : vector<1x8x8xf32> to vector<8x8xf32>
    %cst_51 = arith.constant dense<0.000000e+00> : vector<8x512xf32>
    %100 = tpu.matmul %99, %97, %cst_51 {dimension_numbers = #tpu.dot_dimension_numbers<[1], [0], [0], [1], [0, 0, 1, 1], [], []>} : vector<8x8xf32>, vector<8x512xf32>, vector<8x512xf32> -> vector<8x512xf32>
    %101 = arith.addf %100, %0 : vector<8x512xf32>
    %c1_52 = arith.constant 1 : index
    %c0_53 = arith.constant 0 : index
    %c0_54 = arith.constant 0 : index
    %102 = vector.load %arg1[%c1_52, %c0_53, %c0_54] : memref<9x8x1xf32, #tpu.memory_space<vmem>>, vector<1x8x1xf32>
    %103 = vector.shape_cast %102 : vector<1x8x1xf32> to vector<8x1xf32>
    %104 = vector.broadcast %103 : vector<8x1xf32> to vector<8x512xf32>
    %105 = arith.mulf %101, %104 : vector<8x512xf32>
    %c1_55 = arith.constant 1 : index
    %c0_56 = arith.constant 0 : index
    %c0_57 = arith.constant 0 : index
    %106 = vector.load %arg2[%c1_55, %c0_56, %c0_57] : memref<9x8x1xf32, #tpu.memory_space<vmem>>, vector<1x8x1xf32>
    %107 = vector.shape_cast %106 : vector<1x8x1xf32> to vector<8x1xf32>
    %108 = vector.broadcast %107 : vector<8x1xf32> to vector<8x512xf32>
    %109 = arith.addf %105, %108 : vector<8x512xf32>
    %cst_58 = arith.constant 0.000000e+00 : f32
    %110 = vector.broadcast %cst_58 : f32 to vector<8x512xf32>
    %111 = arith.maximumf %109, %110 : vector<8x512xf32>
    %c1_59 = arith.constant 1 : index
    %c0_60 = arith.constant 0 : index
    %c0_61 = arith.constant 0 : index
    %112 = vector.load %arg3[%c1_59, %c0_60, %c0_61] : memref<9x8x8xf32, #tpu.memory_space<vmem>>, vector<1x8x8xf32>
    %113 = vector.shape_cast %112 : vector<1x8x8xf32> to vector<8x8xf32>
    %cst_62 = arith.constant dense<0.000000e+00> : vector<8x512xf32>
    %114 = tpu.matmul %113, %111, %cst_62 {dimension_numbers = #tpu.dot_dimension_numbers<[1], [0], [0], [1], [0, 0, 1, 1], [], []>} : vector<8x8xf32>, vector<8x512xf32>, vector<8x512xf32> -> vector<8x512xf32>
    %c1_63 = arith.constant 1 : index
    %c0_64 = arith.constant 0 : index
    %c0_65 = arith.constant 0 : index
    %115 = vector.load %arg4[%c1_63, %c0_64, %c0_65] : memref<9x8x1xf32, #tpu.memory_space<vmem>>, vector<1x8x1xf32>
    %116 = vector.shape_cast %115 : vector<1x8x1xf32> to vector<8x1xf32>
    %117 = vector.broadcast %116 : vector<8x1xf32> to vector<8x512xf32>
    %118 = arith.mulf %114, %117 : vector<8x512xf32>
    %c1_66 = arith.constant 1 : index
    %c0_67 = arith.constant 0 : index
    %c0_68 = arith.constant 0 : index
    %119 = vector.load %arg5[%c1_66, %c0_67, %c0_68] : memref<9x8x1xf32, #tpu.memory_space<vmem>>, vector<1x8x1xf32>
    %120 = vector.shape_cast %119 : vector<1x8x1xf32> to vector<8x1xf32>
    %121 = vector.broadcast %120 : vector<8x1xf32> to vector<8x512xf32>
    %122 = arith.addf %118, %121 : vector<8x512xf32>
    %cst_69 = arith.constant 0.000000e+00 : f32
    %123 = vector.broadcast %cst_69 : f32 to vector<8x512xf32>
    %124 = arith.maximumf %122, %123 : vector<8x512xf32>
    %c0_70 = arith.constant 0 : index
    %c0_71 = arith.constant 0 : index
    %c0_72 = arith.constant 0 : index
    %125 = vector.load %arg13[%c0_70, %c0_71, %c0_72] : memref<9x1x512xf32, #tpu.memory_space<vmem>>, vector<1x1x512xf32>
    %126 = vector.shape_cast %125 : vector<1x1x512xf32> to vector<1x512xf32>
    %127 = vector.extract_strided_slice %124 {offsets = [0, 495], sizes = [8, 17], strides = [1, 1]} : vector<8x512xf32> to vector<8x17xf32>
    %128 = vector.extract_strided_slice %124 {offsets = [0, 0], sizes = [8, 495], strides = [1, 1]} : vector<8x512xf32> to vector<8x495xf32>
    %129 = tpu.concatenate %127, %128 in 1 : vector<8x17xf32>, vector<8x495xf32> -> vector<8x512xf32>
    %130 = vector.broadcast %126 : vector<1x512xf32> to vector<8x512xf32>
    %131 = arith.mulf %130, %129 : vector<8x512xf32>
    %c1_73 = arith.constant 1 : index
    %c0_74 = arith.constant 0 : index
    %c0_75 = arith.constant 0 : index
    %132 = vector.load %arg13[%c1_73, %c0_74, %c0_75] : memref<9x1x512xf32, #tpu.memory_space<vmem>>, vector<1x1x512xf32>
    %133 = vector.shape_cast %132 : vector<1x1x512xf32> to vector<1x512xf32>
    %134 = vector.extract_strided_slice %124 {offsets = [0, 496], sizes = [8, 16], strides = [1, 1]} : vector<8x512xf32> to vector<8x16xf32>
    %135 = vector.extract_strided_slice %124 {offsets = [0, 0], sizes = [8, 496], strides = [1, 1]} : vector<8x512xf32> to vector<8x496xf32>
    %136 = tpu.concatenate %134, %135 in 1 : vector<8x16xf32>, vector<8x496xf32> -> vector<8x512xf32>
    %137 = vector.broadcast %133 : vector<1x512xf32> to vector<8x512xf32>
    %138 = arith.mulf %137, %136 : vector<8x512xf32>
    %c2_76 = arith.constant 2 : index
    %c0_77 = arith.constant 0 : index
    %c0_78 = arith.constant 0 : index
    %139 = vector.load %arg13[%c2_76, %c0_77, %c0_78] : memref<9x1x512xf32, #tpu.memory_space<vmem>>, vector<1x1x512xf32>
    %140 = vector.shape_cast %139 : vector<1x1x512xf32> to vector<1x512xf32>
    %141 = vector.extract_strided_slice %124 {offsets = [0, 497], sizes = [8, 15], strides = [1, 1]} : vector<8x512xf32> to vector<8x15xf32>
    %142 = vector.extract_strided_slice %124 {offsets = [0, 0], sizes = [8, 497], strides = [1, 1]} : vector<8x512xf32> to vector<8x497xf32>
    %143 = tpu.concatenate %141, %142 in 1 : vector<8x15xf32>, vector<8x497xf32> -> vector<8x512xf32>
    %144 = vector.broadcast %140 : vector<1x512xf32> to vector<8x512xf32>
    %145 = arith.mulf %144, %143 : vector<8x512xf32>
    %c3_79 = arith.constant 3 : index
    %c0_80 = arith.constant 0 : index
    %c0_81 = arith.constant 0 : index
    %146 = vector.load %arg13[%c3_79, %c0_80, %c0_81] : memref<9x1x512xf32, #tpu.memory_space<vmem>>, vector<1x1x512xf32>
    %147 = vector.shape_cast %146 : vector<1x1x512xf32> to vector<1x512xf32>
    %148 = vector.extract_strided_slice %124 {offsets = [0, 511], sizes = [8, 1], strides = [1, 1]} : vector<8x512xf32> to vector<8x1xf32>
    %149 = vector.extract_strided_slice %124 {offsets = [0, 0], sizes = [8, 511], strides = [1, 1]} : vector<8x512xf32> to vector<8x511xf32>
    %150 = tpu.concatenate %148, %149 in 1 : vector<8x1xf32>, vector<8x511xf32> -> vector<8x512xf32>
    %151 = vector.broadcast %147 : vector<1x512xf32> to vector<8x512xf32>
    %152 = arith.mulf %151, %150 : vector<8x512xf32>
    %c4_82 = arith.constant 4 : index
    %c0_83 = arith.constant 0 : index
    %c0_84 = arith.constant 0 : index
    %153 = vector.load %arg13[%c4_82, %c0_83, %c0_84] : memref<9x1x512xf32, #tpu.memory_space<vmem>>, vector<1x1x512xf32>
    %154 = vector.shape_cast %153 : vector<1x1x512xf32> to vector<1x512xf32>
    %155 = vector.broadcast %154 : vector<1x512xf32> to vector<8x512xf32>
    %156 = arith.mulf %155, %124 : vector<8x512xf32>
    %c5_85 = arith.constant 5 : index
    %c0_86 = arith.constant 0 : index
    %c0_87 = arith.constant 0 : index
    %157 = vector.load %arg13[%c5_85, %c0_86, %c0_87] : memref<9x1x512xf32, #tpu.memory_space<vmem>>, vector<1x1x512xf32>
    %158 = vector.shape_cast %157 : vector<1x1x512xf32> to vector<1x512xf32>
    %159 = vector.extract_strided_slice %124 {offsets = [0, 1], sizes = [8, 511], strides = [1, 1]} : vector<8x512xf32> to vector<8x511xf32>
    %160 = vector.extract_strided_slice %124 {offsets = [0, 0], sizes = [8, 1], strides = [1, 1]} : vector<8x512xf32> to vector<8x1xf32>
    %161 = tpu.concatenate %159, %160 in 1 : vector<8x511xf32>, vector<8x1xf32> -> vector<8x512xf32>
    %162 = vector.broadcast %158 : vector<1x512xf32> to vector<8x512xf32>
    %163 = arith.mulf %162, %161 : vector<8x512xf32>
    %c6_88 = arith.constant 6 : index
    %c0_89 = arith.constant 0 : index
    %c0_90 = arith.constant 0 : index
    %164 = vector.load %arg13[%c6_88, %c0_89, %c0_90] : memref<9x1x512xf32, #tpu.memory_space<vmem>>, vector<1x1x512xf32>
    %165 = vector.shape_cast %164 : vector<1x1x512xf32> to vector<1x512xf32>
    %166 = vector.extract_strided_slice %124 {offsets = [0, 15], sizes = [8, 497], strides = [1, 1]} : vector<8x512xf32> to vector<8x497xf32>
    %167 = vector.extract_strided_slice %124 {offsets = [0, 0], sizes = [8, 15], strides = [1, 1]} : vector<8x512xf32> to vector<8x15xf32>
    %168 = tpu.concatenate %166, %167 in 1 : vector<8x497xf32>, vector<8x15xf32> -> vector<8x512xf32>
    %169 = vector.broadcast %165 : vector<1x512xf32> to vector<8x512xf32>
    %170 = arith.mulf %169, %168 : vector<8x512xf32>
    %c7_91 = arith.constant 7 : index
    %c0_92 = arith.constant 0 : index
    %c0_93 = arith.constant 0 : index
    %171 = vector.load %arg13[%c7_91, %c0_92, %c0_93] : memref<9x1x512xf32, #tpu.memory_space<vmem>>, vector<1x1x512xf32>
    %172 = vector.shape_cast %171 : vector<1x1x512xf32> to vector<1x512xf32>
    %173 = vector.extract_strided_slice %124 {offsets = [0, 16], sizes = [8, 496], strides = [1, 1]} : vector<8x512xf32> to vector<8x496xf32>
    %174 = vector.extract_strided_slice %124 {offsets = [0, 0], sizes = [8, 16], strides = [1, 1]} : vector<8x512xf32> to vector<8x16xf32>
    %175 = tpu.concatenate %173, %174 in 1 : vector<8x496xf32>, vector<8x16xf32> -> vector<8x512xf32>
    %176 = vector.broadcast %172 : vector<1x512xf32> to vector<8x512xf32>
    %177 = arith.mulf %176, %175 : vector<8x512xf32>
    %c8_94 = arith.constant 8 : index
    %c0_95 = arith.constant 0 : index
    %c0_96 = arith.constant 0 : index
    %178 = vector.load %arg13[%c8_94, %c0_95, %c0_96] : memref<9x1x512xf32, #tpu.memory_space<vmem>>, vector<1x1x512xf32>
    %179 = vector.shape_cast %178 : vector<1x1x512xf32> to vector<1x512xf32>
    %180 = vector.extract_strided_slice %124 {offsets = [0, 17], sizes = [8, 495], strides = [1, 1]} : vector<8x512xf32> to vector<8x495xf32>
    %181 = vector.extract_strided_slice %124 {offsets = [0, 0], sizes = [8, 17], strides = [1, 1]} : vector<8x512xf32> to vector<8x17xf32>
    %182 = tpu.concatenate %180, %181 in 1 : vector<8x495xf32>, vector<8x17xf32> -> vector<8x512xf32>
    %183 = vector.broadcast %179 : vector<1x512xf32> to vector<8x512xf32>
    %184 = arith.mulf %183, %182 : vector<8x512xf32>
    %185 = tpu.concatenate %131, %138, %145, %152, %156, %163, %170, %177, %184 in 0 : vector<8x512xf32>, vector<8x512xf32>, vector<8x512xf32>, vector<8x512xf32>, vector<8x512xf32>, vector<8x512xf32>, vector<8x512xf32>, vector<8x512xf32>, vector<8x512xf32> -> vector<72x512xf32>
    %c1_97 = arith.constant 1 : index
    %c0_98 = arith.constant 0 : index
    %c0_99 = arith.constant 0 : index
    %186 = vector.load %arg6[%c1_97, %c0_98, %c0_99] : memref<9x8x72xf32, #tpu.memory_space<vmem>>, vector<1x8x72xf32>
    %187 = vector.shape_cast %186 : vector<1x8x72xf32> to vector<8x72xf32>
    %cst_100 = arith.constant dense<0.000000e+00> : vector<8x512xf32>
    %188 = tpu.matmul %187, %185, %cst_100 {dimension_numbers = #tpu.dot_dimension_numbers<[1], [0], [0], [1], [0, 0, 1, 1], [], []>} : vector<8x72xf32>, vector<72x512xf32>, vector<8x512xf32> -> vector<8x512xf32>
    %c1_101 = arith.constant 1 : index
    %c0_102 = arith.constant 0 : index
    %c0_103 = arith.constant 0 : index
    %189 = vector.load %arg7[%c1_101, %c0_102, %c0_103] : memref<9x8x1xf32, #tpu.memory_space<vmem>>, vector<1x8x1xf32>
    %190 = vector.shape_cast %189 : vector<1x8x1xf32> to vector<8x1xf32>
    %191 = vector.broadcast %190 : vector<8x1xf32> to vector<8x512xf32>
    %192 = arith.mulf %188, %191 : vector<8x512xf32>
    %c1_104 = arith.constant 1 : index
    %c0_105 = arith.constant 0 : index
    %c0_106 = arith.constant 0 : index
    %193 = vector.load %arg8[%c1_104, %c0_105, %c0_106] : memref<9x8x1xf32, #tpu.memory_space<vmem>>, vector<1x8x1xf32>
    %194 = vector.shape_cast %193 : vector<1x8x1xf32> to vector<8x1xf32>
    %195 = vector.broadcast %194 : vector<8x1xf32> to vector<8x512xf32>
    %196 = arith.addf %192, %195 : vector<8x512xf32>
    %cst_107 = arith.constant 0.000000e+00 : f32
    %197 = vector.broadcast %cst_107 : f32 to vector<8x512xf32>
    %198 = arith.maximumf %196, %197 : vector<8x512xf32>
    %c1_108 = arith.constant 1 : index
    %c0_109 = arith.constant 0 : index
    %c0_110 = arith.constant 0 : index
    %199 = vector.load %arg9[%c1_108, %c0_109, %c0_110] : memref<9x8x8xf32, #tpu.memory_space<vmem>>, vector<1x8x8xf32>
    %200 = vector.shape_cast %199 : vector<1x8x8xf32> to vector<8x8xf32>
    %cst_111 = arith.constant dense<0.000000e+00> : vector<8x512xf32>
    %201 = tpu.matmul %200, %198, %cst_111 {dimension_numbers = #tpu.dot_dimension_numbers<[1], [0], [0], [1], [0, 0, 1, 1], [], []>} : vector<8x8xf32>, vector<8x512xf32>, vector<8x512xf32> -> vector<8x512xf32>
    %202 = arith.addf %201, %101 : vector<8x512xf32>
    %c2_112 = arith.constant 2 : index
    %c0_113 = arith.constant 0 : index
    %c0_114 = arith.constant 0 : index
    %203 = vector.load %arg1[%c2_112, %c0_113, %c0_114] : memref<9x8x1xf32, #tpu.memory_space<vmem>>, vector<1x8x1xf32>
    %204 = vector.shape_cast %203 : vector<1x8x1xf32> to vector<8x1xf32>
    %205 = vector.broadcast %204 : vector<8x1xf32> to vector<8x512xf32>
    %206 = arith.mulf %202, %205 : vector<8x512xf32>
    %c2_115 = arith.constant 2 : index
    %c0_116 = arith.constant 0 : index
    %c0_117 = arith.constant 0 : index
    %207 = vector.load %arg2[%c2_115, %c0_116, %c0_117] : memref<9x8x1xf32, #tpu.memory_space<vmem>>, vector<1x8x1xf32>
    %208 = vector.shape_cast %207 : vector<1x8x1xf32> to vector<8x1xf32>
    %209 = vector.broadcast %208 : vector<8x1xf32> to vector<8x512xf32>
    %210 = arith.addf %206, %209 : vector<8x512xf32>
    %cst_118 = arith.constant 0.000000e+00 : f32
    %211 = vector.broadcast %cst_118 : f32 to vector<8x512xf32>
    %212 = arith.maximumf %210, %211 : vector<8x512xf32>
    %c2_119 = arith.constant 2 : index
    %c0_120 = arith.constant 0 : index
    %c0_121 = arith.constant 0 : index
    %213 = vector.load %arg3[%c2_119, %c0_120, %c0_121] : memref<9x8x8xf32, #tpu.memory_space<vmem>>, vector<1x8x8xf32>
    %214 = vector.shape_cast %213 : vector<1x8x8xf32> to vector<8x8xf32>
    %cst_122 = arith.constant dense<0.000000e+00> : vector<8x512xf32>
    %215 = tpu.matmul %214, %212, %cst_122 {dimension_numbers = #tpu.dot_dimension_numbers<[1], [0], [0], [1], [0, 0, 1, 1], [], []>} : vector<8x8xf32>, vector<8x512xf32>, vector<8x512xf32> -> vector<8x512xf32>
    %c2_123 = arith.constant 2 : index
    %c0_124 = arith.constant 0 : index
    %c0_125 = arith.constant 0 : index
    %216 = vector.load %arg4[%c2_123, %c0_124, %c0_125] : memref<9x8x1xf32, #tpu.memory_space<vmem>>, vector<1x8x1xf32>
    %217 = vector.shape_cast %216 : vector<1x8x1xf32> to vector<8x1xf32>
    %218 = vector.broadcast %217 : vector<8x1xf32> to vector<8x512xf32>
    %219 = arith.mulf %215, %218 : vector<8x512xf32>
    %c2_126 = arith.constant 2 : index
    %c0_127 = arith.constant 0 : index
    %c0_128 = arith.constant 0 : index
    %220 = vector.load %arg5[%c2_126, %c0_127, %c0_128] : memref<9x8x1xf32, #tpu.memory_space<vmem>>, vector<1x8x1xf32>
    %221 = vector.shape_cast %220 : vector<1x8x1xf32> to vector<8x1xf32>
    %222 = vector.broadcast %221 : vector<8x1xf32> to vector<8x512xf32>
    %223 = arith.addf %219, %222 : vector<8x512xf32>
    %cst_129 = arith.constant 0.000000e+00 : f32
    %224 = vector.broadcast %cst_129 : f32 to vector<8x512xf32>
    %225 = arith.maximumf %223, %224 : vector<8x512xf32>
    %c0_130 = arith.constant 0 : index
    %c0_131 = arith.constant 0 : index
    %c0_132 = arith.constant 0 : index
    %226 = vector.load %arg13[%c0_130, %c0_131, %c0_132] : memref<9x1x512xf32, #tpu.memory_space<vmem>>, vector<1x1x512xf32>
    %227 = vector.shape_cast %226 : vector<1x1x512xf32> to vector<1x512xf32>
    %228 = vector.extract_strided_slice %225 {offsets = [0, 495], sizes = [8, 17], strides = [1, 1]} : vector<8x512xf32> to vector<8x17xf32>
    %229 = vector.extract_strided_slice %225 {offsets = [0, 0], sizes = [8, 495], strides = [1, 1]} : vector<8x512xf32> to vector<8x495xf32>
    %230 = tpu.concatenate %228, %229 in 1 : vector<8x17xf32>, vector<8x495xf32> -> vector<8x512xf32>
    %231 = vector.broadcast %227 : vector<1x512xf32> to vector<8x512xf32>
    %232 = arith.mulf %231, %230 : vector<8x512xf32>
    %c1_133 = arith.constant 1 : index
    %c0_134 = arith.constant 0 : index
    %c0_135 = arith.constant 0 : index
    %233 = vector.load %arg13[%c1_133, %c0_134, %c0_135] : memref<9x1x512xf32, #tpu.memory_space<vmem>>, vector<1x1x512xf32>
    %234 = vector.shape_cast %233 : vector<1x1x512xf32> to vector<1x512xf32>
    %235 = vector.extract_strided_slice %225 {offsets = [0, 496], sizes = [8, 16], strides = [1, 1]} : vector<8x512xf32> to vector<8x16xf32>
    %236 = vector.extract_strided_slice %225 {offsets = [0, 0], sizes = [8, 496], strides = [1, 1]} : vector<8x512xf32> to vector<8x496xf32>
    %237 = tpu.concatenate %235, %236 in 1 : vector<8x16xf32>, vector<8x496xf32> -> vector<8x512xf32>
    %238 = vector.broadcast %234 : vector<1x512xf32> to vector<8x512xf32>
    %239 = arith.mulf %238, %237 : vector<8x512xf32>
    %c2_136 = arith.constant 2 : index
    %c0_137 = arith.constant 0 : index
    %c0_138 = arith.constant 0 : index
    %240 = vector.load %arg13[%c2_136, %c0_137, %c0_138] : memref<9x1x512xf32, #tpu.memory_space<vmem>>, vector<1x1x512xf32>
    %241 = vector.shape_cast %240 : vector<1x1x512xf32> to vector<1x512xf32>
    %242 = vector.extract_strided_slice %225 {offsets = [0, 497], sizes = [8, 15], strides = [1, 1]} : vector<8x512xf32> to vector<8x15xf32>
    %243 = vector.extract_strided_slice %225 {offsets = [0, 0], sizes = [8, 497], strides = [1, 1]} : vector<8x512xf32> to vector<8x497xf32>
    %244 = tpu.concatenate %242, %243 in 1 : vector<8x15xf32>, vector<8x497xf32> -> vector<8x512xf32>
    %245 = vector.broadcast %241 : vector<1x512xf32> to vector<8x512xf32>
    %246 = arith.mulf %245, %244 : vector<8x512xf32>
    %c3_139 = arith.constant 3 : index
    %c0_140 = arith.constant 0 : index
    %c0_141 = arith.constant 0 : index
    %247 = vector.load %arg13[%c3_139, %c0_140, %c0_141] : memref<9x1x512xf32, #tpu.memory_space<vmem>>, vector<1x1x512xf32>
    %248 = vector.shape_cast %247 : vector<1x1x512xf32> to vector<1x512xf32>
    %249 = vector.extract_strided_slice %225 {offsets = [0, 511], sizes = [8, 1], strides = [1, 1]} : vector<8x512xf32> to vector<8x1xf32>
    %250 = vector.extract_strided_slice %225 {offsets = [0, 0], sizes = [8, 511], strides = [1, 1]} : vector<8x512xf32> to vector<8x511xf32>
    %251 = tpu.concatenate %249, %250 in 1 : vector<8x1xf32>, vector<8x511xf32> -> vector<8x512xf32>
    %252 = vector.broadcast %248 : vector<1x512xf32> to vector<8x512xf32>
    %253 = arith.mulf %252, %251 : vector<8x512xf32>
    %c4_142 = arith.constant 4 : index
    %c0_143 = arith.constant 0 : index
    %c0_144 = arith.constant 0 : index
    %254 = vector.load %arg13[%c4_142, %c0_143, %c0_144] : memref<9x1x512xf32, #tpu.memory_space<vmem>>, vector<1x1x512xf32>
    %255 = vector.shape_cast %254 : vector<1x1x512xf32> to vector<1x512xf32>
    %256 = vector.broadcast %255 : vector<1x512xf32> to vector<8x512xf32>
    %257 = arith.mulf %256, %225 : vector<8x512xf32>
    %c5_145 = arith.constant 5 : index
    %c0_146 = arith.constant 0 : index
    %c0_147 = arith.constant 0 : index
    %258 = vector.load %arg13[%c5_145, %c0_146, %c0_147] : memref<9x1x512xf32, #tpu.memory_space<vmem>>, vector<1x1x512xf32>
    %259 = vector.shape_cast %258 : vector<1x1x512xf32> to vector<1x512xf32>
    %260 = vector.extract_strided_slice %225 {offsets = [0, 1], sizes = [8, 511], strides = [1, 1]} : vector<8x512xf32> to vector<8x511xf32>
    %261 = vector.extract_strided_slice %225 {offsets = [0, 0], sizes = [8, 1], strides = [1, 1]} : vector<8x512xf32> to vector<8x1xf32>
    %262 = tpu.concatenate %260, %261 in 1 : vector<8x511xf32>, vector<8x1xf32> -> vector<8x512xf32>
    %263 = vector.broadcast %259 : vector<1x512xf32> to vector<8x512xf32>
    %264 = arith.mulf %263, %262 : vector<8x512xf32>
    %c6_148 = arith.constant 6 : index
    %c0_149 = arith.constant 0 : index
    %c0_150 = arith.constant 0 : index
    %265 = vector.load %arg13[%c6_148, %c0_149, %c0_150] : memref<9x1x512xf32, #tpu.memory_space<vmem>>, vector<1x1x512xf32>
    %266 = vector.shape_cast %265 : vector<1x1x512xf32> to vector<1x512xf32>
    %267 = vector.extract_strided_slice %225 {offsets = [0, 15], sizes = [8, 497], strides = [1, 1]} : vector<8x512xf32> to vector<8x497xf32>
    %268 = vector.extract_strided_slice %225 {offsets = [0, 0], sizes = [8, 15], strides = [1, 1]} : vector<8x512xf32> to vector<8x15xf32>
    %269 = tpu.concatenate %267, %268 in 1 : vector<8x497xf32>, vector<8x15xf32> -> vector<8x512xf32>
    %270 = vector.broadcast %266 : vector<1x512xf32> to vector<8x512xf32>
    %271 = arith.mulf %270, %269 : vector<8x512xf32>
    %c7_151 = arith.constant 7 : index
    %c0_152 = arith.constant 0 : index
    %c0_153 = arith.constant 0 : index
    %272 = vector.load %arg13[%c7_151, %c0_152, %c0_153] : memref<9x1x512xf32, #tpu.memory_space<vmem>>, vector<1x1x512xf32>
    %273 = vector.shape_cast %272 : vector<1x1x512xf32> to vector<1x512xf32>
    %274 = vector.extract_strided_slice %225 {offsets = [0, 16], sizes = [8, 496], strides = [1, 1]} : vector<8x512xf32> to vector<8x496xf32>
    %275 = vector.extract_strided_slice %225 {offsets = [0, 0], sizes = [8, 16], strides = [1, 1]} : vector<8x512xf32> to vector<8x16xf32>
    %276 = tpu.concatenate %274, %275 in 1 : vector<8x496xf32>, vector<8x16xf32> -> vector<8x512xf32>
    %277 = vector.broadcast %273 : vector<1x512xf32> to vector<8x512xf32>
    %278 = arith.mulf %277, %276 : vector<8x512xf32>
    %c8_154 = arith.constant 8 : index
    %c0_155 = arith.constant 0 : index
    %c0_156 = arith.constant 0 : index
    %279 = vector.load %arg13[%c8_154, %c0_155, %c0_156] : memref<9x1x512xf32, #tpu.memory_space<vmem>>, vector<1x1x512xf32>
    %280 = vector.shape_cast %279 : vector<1x1x512xf32> to vector<1x512xf32>
    %281 = vector.extract_strided_slice %225 {offsets = [0, 17], sizes = [8, 495], strides = [1, 1]} : vector<8x512xf32> to vector<8x495xf32>
    %282 = vector.extract_strided_slice %225 {offsets = [0, 0], sizes = [8, 17], strides = [1, 1]} : vector<8x512xf32> to vector<8x17xf32>
    %283 = tpu.concatenate %281, %282 in 1 : vector<8x495xf32>, vector<8x17xf32> -> vector<8x512xf32>
    %284 = vector.broadcast %280 : vector<1x512xf32> to vector<8x512xf32>
    %285 = arith.mulf %284, %283 : vector<8x512xf32>
    %286 = tpu.concatenate %232, %239, %246, %253, %257, %264, %271, %278, %285 in 0 : vector<8x512xf32>, vector<8x512xf32>, vector<8x512xf32>, vector<8x512xf32>, vector<8x512xf32>, vector<8x512xf32>, vector<8x512xf32>, vector<8x512xf32>, vector<8x512xf32> -> vector<72x512xf32>
    %c2_157 = arith.constant 2 : index
    %c0_158 = arith.constant 0 : index
    %c0_159 = arith.constant 0 : index
    %287 = vector.load %arg6[%c2_157, %c0_158, %c0_159] : memref<9x8x72xf32, #tpu.memory_space<vmem>>, vector<1x8x72xf32>
    %288 = vector.shape_cast %287 : vector<1x8x72xf32> to vector<8x72xf32>
    %cst_160 = arith.constant dense<0.000000e+00> : vector<8x512xf32>
    %289 = tpu.matmul %288, %286, %cst_160 {dimension_numbers = #tpu.dot_dimension_numbers<[1], [0], [0], [1], [0, 0, 1, 1], [], []>} : vector<8x72xf32>, vector<72x512xf32>, vector<8x512xf32> -> vector<8x512xf32>
    %c2_161 = arith.constant 2 : index
    %c0_162 = arith.constant 0 : index
    %c0_163 = arith.constant 0 : index
    %290 = vector.load %arg7[%c2_161, %c0_162, %c0_163] : memref<9x8x1xf32, #tpu.memory_space<vmem>>, vector<1x8x1xf32>
    %291 = vector.shape_cast %290 : vector<1x8x1xf32> to vector<8x1xf32>
    %292 = vector.broadcast %291 : vector<8x1xf32> to vector<8x512xf32>
    %293 = arith.mulf %289, %292 : vector<8x512xf32>
    %c2_164 = arith.constant 2 : index
    %c0_165 = arith.constant 0 : index
    %c0_166 = arith.constant 0 : index
    %294 = vector.load %arg8[%c2_164, %c0_165, %c0_166] : memref<9x8x1xf32, #tpu.memory_space<vmem>>, vector<1x8x1xf32>
    %295 = vector.shape_cast %294 : vector<1x8x1xf32> to vector<8x1xf32>
    %296 = vector.broadcast %295 : vector<8x1xf32> to vector<8x512xf32>
    %297 = arith.addf %293, %296 : vector<8x512xf32>
    %cst_167 = arith.constant 0.000000e+00 : f32
    %298 = vector.broadcast %cst_167 : f32 to vector<8x512xf32>
    %299 = arith.maximumf %297, %298 : vector<8x512xf32>
    %c2_168 = arith.constant 2 : index
    %c0_169 = arith.constant 0 : index
    %c0_170 = arith.constant 0 : index
    %300 = vector.load %arg9[%c2_168, %c0_169, %c0_170] : memref<9x8x8xf32, #tpu.memory_space<vmem>>, vector<1x8x8xf32>
    %301 = vector.shape_cast %300 : vector<1x8x8xf32> to vector<8x8xf32>
    %cst_171 = arith.constant dense<0.000000e+00> : vector<8x512xf32>
    %302 = tpu.matmul %301, %299, %cst_171 {dimension_numbers = #tpu.dot_dimension_numbers<[1], [0], [0], [1], [0, 0, 1, 1], [], []>} : vector<8x8xf32>, vector<8x512xf32>, vector<8x512xf32> -> vector<8x512xf32>
    %303 = arith.addf %302, %202 : vector<8x512xf32>
    %c0_172 = arith.constant 0 : index
    %c0_173 = arith.constant 0 : index
    %c0_174 = arith.constant 0 : index
    %304 = vector.load %arg13[%c0_172, %c0_173, %c0_174] : memref<9x1x512xf32, #tpu.memory_space<vmem>>, vector<1x1x512xf32>
    %305 = vector.shape_cast %304 : vector<1x1x512xf32> to vector<1x512xf32>
    %cst_175 = arith.constant 0.000000e+00 : f32
    %306 = vector.broadcast %cst_175 : f32 to vector<1x512xf32>
    %307 = arith.cmpf one, %305, %306 : vector<1x512xf32>
    %308 = vector.extract_strided_slice %101 {offsets = [0, 495], sizes = [8, 17], strides = [1, 1]} : vector<8x512xf32> to vector<8x17xf32>
    %309 = vector.extract_strided_slice %101 {offsets = [0, 0], sizes = [8, 495], strides = [1, 1]} : vector<8x512xf32> to vector<8x495xf32>
    %310 = tpu.concatenate %308, %309 in 1 : vector<8x17xf32>, vector<8x495xf32> -> vector<8x512xf32>
    %cst_176 = arith.constant -1.000000e+30 : f32
    %311 = vector.shape_cast %307 : vector<1x512xi1> to vector<1x512xi1>
    %312 = vector.broadcast %311 : vector<1x512xi1> to vector<8x512xi1>
    %313 = vector.broadcast %cst_176 : f32 to vector<8x512xf32>
    %314 = arith.select %312, %310, %313 : vector<8x512xi1>, vector<8x512xf32>
    %c1_177 = arith.constant 1 : index
    %c0_178 = arith.constant 0 : index
    %c0_179 = arith.constant 0 : index
    %315 = vector.load %arg13[%c1_177, %c0_178, %c0_179] : memref<9x1x512xf32, #tpu.memory_space<vmem>>, vector<1x1x512xf32>
    %316 = vector.shape_cast %315 : vector<1x1x512xf32> to vector<1x512xf32>
    %cst_180 = arith.constant 0.000000e+00 : f32
    %317 = vector.broadcast %cst_180 : f32 to vector<1x512xf32>
    %318 = arith.cmpf one, %316, %317 : vector<1x512xf32>
    %319 = vector.extract_strided_slice %101 {offsets = [0, 496], sizes = [8, 16], strides = [1, 1]} : vector<8x512xf32> to vector<8x16xf32>
    %320 = vector.extract_strided_slice %101 {offsets = [0, 0], sizes = [8, 496], strides = [1, 1]} : vector<8x512xf32> to vector<8x496xf32>
    %321 = tpu.concatenate %319, %320 in 1 : vector<8x16xf32>, vector<8x496xf32> -> vector<8x512xf32>
    %cst_181 = arith.constant -1.000000e+30 : f32
    %322 = vector.shape_cast %318 : vector<1x512xi1> to vector<1x512xi1>
    %323 = vector.broadcast %322 : vector<1x512xi1> to vector<8x512xi1>
    %324 = vector.broadcast %cst_181 : f32 to vector<8x512xf32>
    %325 = arith.select %323, %321, %324 : vector<8x512xi1>, vector<8x512xf32>
    %c2_182 = arith.constant 2 : index
    %c0_183 = arith.constant 0 : index
    %c0_184 = arith.constant 0 : index
    %326 = vector.load %arg13[%c2_182, %c0_183, %c0_184] : memref<9x1x512xf32, #tpu.memory_space<vmem>>, vector<1x1x512xf32>
    %327 = vector.shape_cast %326 : vector<1x1x512xf32> to vector<1x512xf32>
    %cst_185 = arith.constant 0.000000e+00 : f32
    %328 = vector.broadcast %cst_185 : f32 to vector<1x512xf32>
    %329 = arith.cmpf one, %327, %328 : vector<1x512xf32>
    %330 = vector.extract_strided_slice %101 {offsets = [0, 497], sizes = [8, 15], strides = [1, 1]} : vector<8x512xf32> to vector<8x15xf32>
    %331 = vector.extract_strided_slice %101 {offsets = [0, 0], sizes = [8, 497], strides = [1, 1]} : vector<8x512xf32> to vector<8x497xf32>
    %332 = tpu.concatenate %330, %331 in 1 : vector<8x15xf32>, vector<8x497xf32> -> vector<8x512xf32>
    %cst_186 = arith.constant -1.000000e+30 : f32
    %333 = vector.shape_cast %329 : vector<1x512xi1> to vector<1x512xi1>
    %334 = vector.broadcast %333 : vector<1x512xi1> to vector<8x512xi1>
    %335 = vector.broadcast %cst_186 : f32 to vector<8x512xf32>
    %336 = arith.select %334, %332, %335 : vector<8x512xi1>, vector<8x512xf32>
    %c3_187 = arith.constant 3 : index
    %c0_188 = arith.constant 0 : index
    %c0_189 = arith.constant 0 : index
    %337 = vector.load %arg13[%c3_187, %c0_188, %c0_189] : memref<9x1x512xf32, #tpu.memory_space<vmem>>, vector<1x1x512xf32>
    %338 = vector.shape_cast %337 : vector<1x1x512xf32> to vector<1x512xf32>
    %cst_190 = arith.constant 0.000000e+00 : f32
    %339 = vector.broadcast %cst_190 : f32 to vector<1x512xf32>
    %340 = arith.cmpf one, %338, %339 : vector<1x512xf32>
    %341 = vector.extract_strided_slice %101 {offsets = [0, 511], sizes = [8, 1], strides = [1, 1]} : vector<8x512xf32> to vector<8x1xf32>
    %342 = vector.extract_strided_slice %101 {offsets = [0, 0], sizes = [8, 511], strides = [1, 1]} : vector<8x512xf32> to vector<8x511xf32>
    %343 = tpu.concatenate %341, %342 in 1 : vector<8x1xf32>, vector<8x511xf32> -> vector<8x512xf32>
    %cst_191 = arith.constant -1.000000e+30 : f32
    %344 = vector.shape_cast %340 : vector<1x512xi1> to vector<1x512xi1>
    %345 = vector.broadcast %344 : vector<1x512xi1> to vector<8x512xi1>
    %346 = vector.broadcast %cst_191 : f32 to vector<8x512xf32>
    %347 = arith.select %345, %343, %346 : vector<8x512xi1>, vector<8x512xf32>
    %c4_192 = arith.constant 4 : index
    %c0_193 = arith.constant 0 : index
    %c0_194 = arith.constant 0 : index
    %348 = vector.load %arg13[%c4_192, %c0_193, %c0_194] : memref<9x1x512xf32, #tpu.memory_space<vmem>>, vector<1x1x512xf32>
    %349 = vector.shape_cast %348 : vector<1x1x512xf32> to vector<1x512xf32>
    %cst_195 = arith.constant 0.000000e+00 : f32
    %350 = vector.broadcast %cst_195 : f32 to vector<1x512xf32>
    %351 = arith.cmpf one, %349, %350 : vector<1x512xf32>
    %cst_196 = arith.constant -1.000000e+30 : f32
    %352 = vector.shape_cast %351 : vector<1x512xi1> to vector<1x512xi1>
    %353 = vector.broadcast %352 : vector<1x512xi1> to vector<8x512xi1>
    %354 = vector.broadcast %cst_196 : f32 to vector<8x512xf32>
    %355 = arith.select %353, %101, %354 : vector<8x512xi1>, vector<8x512xf32>
    %c5_197 = arith.constant 5 : index
    %c0_198 = arith.constant 0 : index
    %c0_199 = arith.constant 0 : index
    %356 = vector.load %arg13[%c5_197, %c0_198, %c0_199] : memref<9x1x512xf32, #tpu.memory_space<vmem>>, vector<1x1x512xf32>
    %357 = vector.shape_cast %356 : vector<1x1x512xf32> to vector<1x512xf32>
    %cst_200 = arith.constant 0.000000e+00 : f32
    %358 = vector.broadcast %cst_200 : f32 to vector<1x512xf32>
    %359 = arith.cmpf one, %357, %358 : vector<1x512xf32>
    %360 = vector.extract_strided_slice %101 {offsets = [0, 1], sizes = [8, 511], strides = [1, 1]} : vector<8x512xf32> to vector<8x511xf32>
    %361 = vector.extract_strided_slice %101 {offsets = [0, 0], sizes = [8, 1], strides = [1, 1]} : vector<8x512xf32> to vector<8x1xf32>
    %362 = tpu.concatenate %360, %361 in 1 : vector<8x511xf32>, vector<8x1xf32> -> vector<8x512xf32>
    %cst_201 = arith.constant -1.000000e+30 : f32
    %363 = vector.shape_cast %359 : vector<1x512xi1> to vector<1x512xi1>
    %364 = vector.broadcast %363 : vector<1x512xi1> to vector<8x512xi1>
    %365 = vector.broadcast %cst_201 : f32 to vector<8x512xf32>
    %366 = arith.select %364, %362, %365 : vector<8x512xi1>, vector<8x512xf32>
    %c6_202 = arith.constant 6 : index
    %c0_203 = arith.constant 0 : index
    %c0_204 = arith.constant 0 : index
    %367 = vector.load %arg13[%c6_202, %c0_203, %c0_204] : memref<9x1x512xf32, #tpu.memory_space<vmem>>, vector<1x1x512xf32>
    %368 = vector.shape_cast %367 : vector<1x1x512xf32> to vector<1x512xf32>
    %cst_205 = arith.constant 0.000000e+00 : f32
    %369 = vector.broadcast %cst_205 : f32 to vector<1x512xf32>
    %370 = arith.cmpf one, %368, %369 : vector<1x512xf32>
    %371 = vector.extract_strided_slice %101 {offsets = [0, 15], sizes = [8, 497], strides = [1, 1]} : vector<8x512xf32> to vector<8x497xf32>
    %372 = vector.extract_strided_slice %101 {offsets = [0, 0], sizes = [8, 15], strides = [1, 1]} : vector<8x512xf32> to vector<8x15xf32>
    %373 = tpu.concatenate %371, %372 in 1 : vector<8x497xf32>, vector<8x15xf32> -> vector<8x512xf32>
    %cst_206 = arith.constant -1.000000e+30 : f32
    %374 = vector.shape_cast %370 : vector<1x512xi1> to vector<1x512xi1>
    %375 = vector.broadcast %374 : vector<1x512xi1> to vector<8x512xi1>
    %376 = vector.broadcast %cst_206 : f32 to vector<8x512xf32>
    %377 = arith.select %375, %373, %376 : vector<8x512xi1>, vector<8x512xf32>
    %c7_207 = arith.constant 7 : index
    %c0_208 = arith.constant 0 : index
    %c0_209 = arith.constant 0 : index
    %378 = vector.load %arg13[%c7_207, %c0_208, %c0_209] : memref<9x1x512xf32, #tpu.memory_space<vmem>>, vector<1x1x512xf32>
    %379 = vector.shape_cast %378 : vector<1x1x512xf32> to vector<1x512xf32>
    %cst_210 = arith.constant 0.000000e+00 : f32
    %380 = vector.broadcast %cst_210 : f32 to vector<1x512xf32>
    %381 = arith.cmpf one, %379, %380 : vector<1x512xf32>
    %382 = vector.extract_strided_slice %101 {offsets = [0, 16], sizes = [8, 496], strides = [1, 1]} : vector<8x512xf32> to vector<8x496xf32>
    %383 = vector.extract_strided_slice %101 {offsets = [0, 0], sizes = [8, 16], strides = [1, 1]} : vector<8x512xf32> to vector<8x16xf32>
    %384 = tpu.concatenate %382, %383 in 1 : vector<8x496xf32>, vector<8x16xf32> -> vector<8x512xf32>
    %cst_211 = arith.constant -1.000000e+30 : f32
    %385 = vector.shape_cast %381 : vector<1x512xi1> to vector<1x512xi1>
    %386 = vector.broadcast %385 : vector<1x512xi1> to vector<8x512xi1>
    %387 = vector.broadcast %cst_211 : f32 to vector<8x512xf32>
    %388 = arith.select %386, %384, %387 : vector<8x512xi1>, vector<8x512xf32>
    %c8_212 = arith.constant 8 : index
    %c0_213 = arith.constant 0 : index
    %c0_214 = arith.constant 0 : index
    %389 = vector.load %arg13[%c8_212, %c0_213, %c0_214] : memref<9x1x512xf32, #tpu.memory_space<vmem>>, vector<1x1x512xf32>
    %390 = vector.shape_cast %389 : vector<1x1x512xf32> to vector<1x512xf32>
    %cst_215 = arith.constant 0.000000e+00 : f32
    %391 = vector.broadcast %cst_215 : f32 to vector<1x512xf32>
    %392 = arith.cmpf one, %390, %391 : vector<1x512xf32>
    %393 = vector.extract_strided_slice %101 {offsets = [0, 17], sizes = [8, 495], strides = [1, 1]} : vector<8x512xf32> to vector<8x495xf32>
    %394 = vector.extract_strided_slice %101 {offsets = [0, 0], sizes = [8, 17], strides = [1, 1]} : vector<8x512xf32> to vector<8x17xf32>
    %395 = tpu.concatenate %393, %394 in 1 : vector<8x495xf32>, vector<8x17xf32> -> vector<8x512xf32>
    %cst_216 = arith.constant -1.000000e+30 : f32
    %396 = vector.shape_cast %392 : vector<1x512xi1> to vector<1x512xi1>
    %397 = vector.broadcast %396 : vector<1x512xi1> to vector<8x512xi1>
    %398 = vector.broadcast %cst_216 : f32 to vector<8x512xf32>
    %399 = arith.select %397, %395, %398 : vector<8x512xi1>, vector<8x512xf32>
    %400 = arith.maximumf %314, %325 : vector<8x512xf32>
    %401 = arith.maximumf %336, %347 : vector<8x512xf32>
    %402 = arith.maximumf %355, %366 : vector<8x512xf32>
    %403 = arith.maximumf %377, %388 : vector<8x512xf32>
    %404 = arith.maximumf %400, %401 : vector<8x512xf32>
    %405 = arith.maximumf %402, %403 : vector<8x512xf32>
    %406 = arith.maximumf %404, %405 : vector<8x512xf32>
    %407 = arith.maximumf %406, %399 : vector<8x512xf32>
    %c0_217 = arith.constant 0 : index
    %c0_218 = arith.constant 0 : index
    %408 = vector.load %arg16[%c0_217, %c0_218] : memref<512x128xf32, #tpu.memory_space<vmem>>, vector<512x128xf32>
    %cst_219 = arith.constant dense<0.000000e+00> : vector<8x128xf32>
    %409 = tpu.matmul %407, %408, %cst_219 {dimension_numbers = #tpu.dot_dimension_numbers<[1], [0], [0], [1], [0, 0, 1, 1], [], []>} : vector<8x512xf32>, vector<512x128xf32>, vector<8x128xf32> -> vector<8x128xf32>
    %c3_220 = arith.constant 3 : index
    %c0_221 = arith.constant 0 : index
    %c0_222 = arith.constant 0 : index
    %410 = vector.load %arg1[%c3_220, %c0_221, %c0_222] : memref<9x8x1xf32, #tpu.memory_space<vmem>>, vector<1x8x1xf32>
    %411 = vector.shape_cast %410 : vector<1x8x1xf32> to vector<8x1xf32>
    %412 = vector.broadcast %411 : vector<8x1xf32> to vector<8x128xf32>
    %413 = arith.mulf %409, %412 : vector<8x128xf32>
    %c3_223 = arith.constant 3 : index
    %c0_224 = arith.constant 0 : index
    %c0_225 = arith.constant 0 : index
    %414 = vector.load %arg2[%c3_223, %c0_224, %c0_225] : memref<9x8x1xf32, #tpu.memory_space<vmem>>, vector<1x8x1xf32>
    %415 = vector.shape_cast %414 : vector<1x8x1xf32> to vector<8x1xf32>
    %416 = vector.broadcast %415 : vector<8x1xf32> to vector<8x128xf32>
    %417 = arith.addf %413, %416 : vector<8x128xf32>
    %cst_226 = arith.constant 0.000000e+00 : f32
    %418 = vector.broadcast %cst_226 : f32 to vector<8x128xf32>
    %419 = arith.maximumf %417, %418 : vector<8x128xf32>
    %c3_227 = arith.constant 3 : index
    %c0_228 = arith.constant 0 : index
    %c0_229 = arith.constant 0 : index
    %420 = vector.load %arg3[%c3_227, %c0_228, %c0_229] : memref<9x8x8xf32, #tpu.memory_space<vmem>>, vector<1x8x8xf32>
    %421 = vector.shape_cast %420 : vector<1x8x8xf32> to vector<8x8xf32>
    %cst_230 = arith.constant dense<0.000000e+00> : vector<8x128xf32>
    %422 = tpu.matmul %421, %419, %cst_230 {dimension_numbers = #tpu.dot_dimension_numbers<[1], [0], [0], [1], [0, 0, 1, 1], [], []>} : vector<8x8xf32>, vector<8x128xf32>, vector<8x128xf32> -> vector<8x128xf32>
    %c3_231 = arith.constant 3 : index
    %c0_232 = arith.constant 0 : index
    %c0_233 = arith.constant 0 : index
    %423 = vector.load %arg4[%c3_231, %c0_232, %c0_233] : memref<9x8x1xf32, #tpu.memory_space<vmem>>, vector<1x8x1xf32>
    %424 = vector.shape_cast %423 : vector<1x8x1xf32> to vector<8x1xf32>
    %425 = vector.broadcast %424 : vector<8x1xf32> to vector<8x128xf32>
    %426 = arith.mulf %422, %425 : vector<8x128xf32>
    %c3_234 = arith.constant 3 : index
    %c0_235 = arith.constant 0 : index
    %c0_236 = arith.constant 0 : index
    %427 = vector.load %arg5[%c3_234, %c0_235, %c0_236] : memref<9x8x1xf32, #tpu.memory_space<vmem>>, vector<1x8x1xf32>
    %428 = vector.shape_cast %427 : vector<1x8x1xf32> to vector<8x1xf32>
    %429 = vector.broadcast %428 : vector<8x1xf32> to vector<8x128xf32>
    %430 = arith.addf %426, %429 : vector<8x128xf32>
    %cst_237 = arith.constant 0.000000e+00 : f32
    %431 = vector.broadcast %cst_237 : f32 to vector<8x128xf32>
    %432 = arith.maximumf %430, %431 : vector<8x128xf32>
    %c0_238 = arith.constant 0 : index
    %c0_239 = arith.constant 0 : index
    %c0_240 = arith.constant 0 : index
    %433 = vector.load %arg14[%c0_238, %c0_239, %c0_240] : memref<9x1x128xf32, #tpu.memory_space<vmem>>, vector<1x1x128xf32>
    %434 = vector.shape_cast %433 : vector<1x1x128xf32> to vector<1x128xf32>
    %435 = vector.extract_strided_slice %432 {offsets = [0, 119], sizes = [8, 9], strides = [1, 1]} : vector<8x128xf32> to vector<8x9xf32>
    %436 = vector.extract_strided_slice %432 {offsets = [0, 0], sizes = [8, 119], strides = [1, 1]} : vector<8x128xf32> to vector<8x119xf32>
    %437 = tpu.concatenate %435, %436 in 1 : vector<8x9xf32>, vector<8x119xf32> -> vector<8x128xf32>
    %438 = vector.broadcast %434 : vector<1x128xf32> to vector<8x128xf32>
    %439 = arith.mulf %438, %437 : vector<8x128xf32>
    %c1_241 = arith.constant 1 : index
    %c0_242 = arith.constant 0 : index
    %c0_243 = arith.constant 0 : index
    %440 = vector.load %arg14[%c1_241, %c0_242, %c0_243] : memref<9x1x128xf32, #tpu.memory_space<vmem>>, vector<1x1x128xf32>
    %441 = vector.shape_cast %440 : vector<1x1x128xf32> to vector<1x128xf32>
    %442 = vector.extract_strided_slice %432 {offsets = [0, 120], sizes = [8, 8], strides = [1, 1]} : vector<8x128xf32> to vector<8x8xf32>
    %443 = vector.extract_strided_slice %432 {offsets = [0, 0], sizes = [8, 120], strides = [1, 1]} : vector<8x128xf32> to vector<8x120xf32>
    %444 = tpu.concatenate %442, %443 in 1 : vector<8x8xf32>, vector<8x120xf32> -> vector<8x128xf32>
    %445 = vector.broadcast %441 : vector<1x128xf32> to vector<8x128xf32>
    %446 = arith.mulf %445, %444 : vector<8x128xf32>
    %c2_244 = arith.constant 2 : index
    %c0_245 = arith.constant 0 : index
    %c0_246 = arith.constant 0 : index
    %447 = vector.load %arg14[%c2_244, %c0_245, %c0_246] : memref<9x1x128xf32, #tpu.memory_space<vmem>>, vector<1x1x128xf32>
    %448 = vector.shape_cast %447 : vector<1x1x128xf32> to vector<1x128xf32>
    %449 = vector.extract_strided_slice %432 {offsets = [0, 121], sizes = [8, 7], strides = [1, 1]} : vector<8x128xf32> to vector<8x7xf32>
    %450 = vector.extract_strided_slice %432 {offsets = [0, 0], sizes = [8, 121], strides = [1, 1]} : vector<8x128xf32> to vector<8x121xf32>
    %451 = tpu.concatenate %449, %450 in 1 : vector<8x7xf32>, vector<8x121xf32> -> vector<8x128xf32>
    %452 = vector.broadcast %448 : vector<1x128xf32> to vector<8x128xf32>
    %453 = arith.mulf %452, %451 : vector<8x128xf32>
    %c3_247 = arith.constant 3 : index
    %c0_248 = arith.constant 0 : index
    %c0_249 = arith.constant 0 : index
    %454 = vector.load %arg14[%c3_247, %c0_248, %c0_249] : memref<9x1x128xf32, #tpu.memory_space<vmem>>, vector<1x1x128xf32>
    %455 = vector.shape_cast %454 : vector<1x1x128xf32> to vector<1x128xf32>
    %456 = vector.extract_strided_slice %432 {offsets = [0, 127], sizes = [8, 1], strides = [1, 1]} : vector<8x128xf32> to vector<8x1xf32>
    %457 = vector.extract_strided_slice %432 {offsets = [0, 0], sizes = [8, 127], strides = [1, 1]} : vector<8x128xf32> to vector<8x127xf32>
    %458 = tpu.concatenate %456, %457 in 1 : vector<8x1xf32>, vector<8x127xf32> -> vector<8x128xf32>
    %459 = vector.broadcast %455 : vector<1x128xf32> to vector<8x128xf32>
    %460 = arith.mulf %459, %458 : vector<8x128xf32>
    %c4_250 = arith.constant 4 : index
    %c0_251 = arith.constant 0 : index
    %c0_252 = arith.constant 0 : index
    %461 = vector.load %arg14[%c4_250, %c0_251, %c0_252] : memref<9x1x128xf32, #tpu.memory_space<vmem>>, vector<1x1x128xf32>
    %462 = vector.shape_cast %461 : vector<1x1x128xf32> to vector<1x128xf32>
    %463 = vector.broadcast %462 : vector<1x128xf32> to vector<8x128xf32>
    %464 = arith.mulf %463, %432 : vector<8x128xf32>
    %c5_253 = arith.constant 5 : index
    %c0_254 = arith.constant 0 : index
    %c0_255 = arith.constant 0 : index
    %465 = vector.load %arg14[%c5_253, %c0_254, %c0_255] : memref<9x1x128xf32, #tpu.memory_space<vmem>>, vector<1x1x128xf32>
    %466 = vector.shape_cast %465 : vector<1x1x128xf32> to vector<1x128xf32>
    %467 = vector.extract_strided_slice %432 {offsets = [0, 1], sizes = [8, 127], strides = [1, 1]} : vector<8x128xf32> to vector<8x127xf32>
    %468 = vector.extract_strided_slice %432 {offsets = [0, 0], sizes = [8, 1], strides = [1, 1]} : vector<8x128xf32> to vector<8x1xf32>
    %469 = tpu.concatenate %467, %468 in 1 : vector<8x127xf32>, vector<8x1xf32> -> vector<8x128xf32>
    %470 = vector.broadcast %466 : vector<1x128xf32> to vector<8x128xf32>
    %471 = arith.mulf %470, %469 : vector<8x128xf32>
    %c6_256 = arith.constant 6 : index
    %c0_257 = arith.constant 0 : index
    %c0_258 = arith.constant 0 : index
    %472 = vector.load %arg14[%c6_256, %c0_257, %c0_258] : memref<9x1x128xf32, #tpu.memory_space<vmem>>, vector<1x1x128xf32>
    %473 = vector.shape_cast %472 : vector<1x1x128xf32> to vector<1x128xf32>
    %474 = vector.extract_strided_slice %432 {offsets = [0, 7], sizes = [8, 121], strides = [1, 1]} : vector<8x128xf32> to vector<8x121xf32>
    %475 = vector.extract_strided_slice %432 {offsets = [0, 0], sizes = [8, 7], strides = [1, 1]} : vector<8x128xf32> to vector<8x7xf32>
    %476 = tpu.concatenate %474, %475 in 1 : vector<8x121xf32>, vector<8x7xf32> -> vector<8x128xf32>
    %477 = vector.broadcast %473 : vector<1x128xf32> to vector<8x128xf32>
    %478 = arith.mulf %477, %476 : vector<8x128xf32>
    %c7_259 = arith.constant 7 : index
    %c0_260 = arith.constant 0 : index
    %c0_261 = arith.constant 0 : index
    %479 = vector.load %arg14[%c7_259, %c0_260, %c0_261] : memref<9x1x128xf32, #tpu.memory_space<vmem>>, vector<1x1x128xf32>
    %480 = vector.shape_cast %479 : vector<1x1x128xf32> to vector<1x128xf32>
    %481 = vector.extract_strided_slice %432 {offsets = [0, 8], sizes = [8, 120], strides = [1, 1]} : vector<8x128xf32> to vector<8x120xf32>
    %482 = vector.extract_strided_slice %432 {offsets = [0, 0], sizes = [8, 8], strides = [1, 1]} : vector<8x128xf32> to vector<8x8xf32>
    %483 = tpu.concatenate %481, %482 in 1 : vector<8x120xf32>, vector<8x8xf32> -> vector<8x128xf32>
    %484 = vector.broadcast %480 : vector<1x128xf32> to vector<8x128xf32>
    %485 = arith.mulf %484, %483 : vector<8x128xf32>
    %c8_262 = arith.constant 8 : index
    %c0_263 = arith.constant 0 : index
    %c0_264 = arith.constant 0 : index
    %486 = vector.load %arg14[%c8_262, %c0_263, %c0_264] : memref<9x1x128xf32, #tpu.memory_space<vmem>>, vector<1x1x128xf32>
    %487 = vector.shape_cast %486 : vector<1x1x128xf32> to vector<1x128xf32>
    %488 = vector.extract_strided_slice %432 {offsets = [0, 9], sizes = [8, 119], strides = [1, 1]} : vector<8x128xf32> to vector<8x119xf32>
    %489 = vector.extract_strided_slice %432 {offsets = [0, 0], sizes = [8, 9], strides = [1, 1]} : vector<8x128xf32> to vector<8x9xf32>
    %490 = tpu.concatenate %488, %489 in 1 : vector<8x119xf32>, vector<8x9xf32> -> vector<8x128xf32>
    %491 = vector.broadcast %487 : vector<1x128xf32> to vector<8x128xf32>
    %492 = arith.mulf %491, %490 : vector<8x128xf32>
    %493 = tpu.concatenate %439, %446, %453, %460, %464, %471, %478, %485, %492 in 0 : vector<8x128xf32>, vector<8x128xf32>, vector<8x128xf32>, vector<8x128xf32>, vector<8x128xf32>, vector<8x128xf32>, vector<8x128xf32>, vector<8x128xf32>, vector<8x128xf32> -> vector<72x128xf32>
    %c3_265 = arith.constant 3 : index
    %c0_266 = arith.constant 0 : index
    %c0_267 = arith.constant 0 : index
    %494 = vector.load %arg6[%c3_265, %c0_266, %c0_267] : memref<9x8x72xf32, #tpu.memory_space<vmem>>, vector<1x8x72xf32>
    %495 = vector.shape_cast %494 : vector<1x8x72xf32> to vector<8x72xf32>
    %cst_268 = arith.constant dense<0.000000e+00> : vector<8x128xf32>
    %496 = tpu.matmul %495, %493, %cst_268 {dimension_numbers = #tpu.dot_dimension_numbers<[1], [0], [0], [1], [0, 0, 1, 1], [], []>} : vector<8x72xf32>, vector<72x128xf32>, vector<8x128xf32> -> vector<8x128xf32>
    %c3_269 = arith.constant 3 : index
    %c0_270 = arith.constant 0 : index
    %c0_271 = arith.constant 0 : index
    %497 = vector.load %arg7[%c3_269, %c0_270, %c0_271] : memref<9x8x1xf32, #tpu.memory_space<vmem>>, vector<1x8x1xf32>
    %498 = vector.shape_cast %497 : vector<1x8x1xf32> to vector<8x1xf32>
    %499 = vector.broadcast %498 : vector<8x1xf32> to vector<8x128xf32>
    %500 = arith.mulf %496, %499 : vector<8x128xf32>
    %c3_272 = arith.constant 3 : index
    %c0_273 = arith.constant 0 : index
    %c0_274 = arith.constant 0 : index
    %501 = vector.load %arg8[%c3_272, %c0_273, %c0_274] : memref<9x8x1xf32, #tpu.memory_space<vmem>>, vector<1x8x1xf32>
    %502 = vector.shape_cast %501 : vector<1x8x1xf32> to vector<8x1xf32>
    %503 = vector.broadcast %502 : vector<8x1xf32> to vector<8x128xf32>
    %504 = arith.addf %500, %503 : vector<8x128xf32>
    %cst_275 = arith.constant 0.000000e+00 : f32
    %505 = vector.broadcast %cst_275 : f32 to vector<8x128xf32>
    %506 = arith.maximumf %504, %505 : vector<8x128xf32>
    %c3_276 = arith.constant 3 : index
    %c0_277 = arith.constant 0 : index
    %c0_278 = arith.constant 0 : index
    %507 = vector.load %arg9[%c3_276, %c0_277, %c0_278] : memref<9x8x8xf32, #tpu.memory_space<vmem>>, vector<1x8x8xf32>
    %508 = vector.shape_cast %507 : vector<1x8x8xf32> to vector<8x8xf32>
    %cst_279 = arith.constant dense<0.000000e+00> : vector<8x128xf32>
    %509 = tpu.matmul %508, %506, %cst_279 {dimension_numbers = #tpu.dot_dimension_numbers<[1], [0], [0], [1], [0, 0, 1, 1], [], []>} : vector<8x8xf32>, vector<8x128xf32>, vector<8x128xf32> -> vector<8x128xf32>
    %510 = arith.addf %509, %409 : vector<8x128xf32>
    %c4_280 = arith.constant 4 : index
    %c0_281 = arith.constant 0 : index
    %c0_282 = arith.constant 0 : index
    %511 = vector.load %arg1[%c4_280, %c0_281, %c0_282] : memref<9x8x1xf32, #tpu.memory_space<vmem>>, vector<1x8x1xf32>
    %512 = vector.shape_cast %511 : vector<1x8x1xf32> to vector<8x1xf32>
    %513 = vector.broadcast %512 : vector<8x1xf32> to vector<8x128xf32>
    %514 = arith.mulf %510, %513 : vector<8x128xf32>
    %c4_283 = arith.constant 4 : index
    %c0_284 = arith.constant 0 : index
    %c0_285 = arith.constant 0 : index
    %515 = vector.load %arg2[%c4_283, %c0_284, %c0_285] : memref<9x8x1xf32, #tpu.memory_space<vmem>>, vector<1x8x1xf32>
    %516 = vector.shape_cast %515 : vector<1x8x1xf32> to vector<8x1xf32>
    %517 = vector.broadcast %516 : vector<8x1xf32> to vector<8x128xf32>
    %518 = arith.addf %514, %517 : vector<8x128xf32>
    %cst_286 = arith.constant 0.000000e+00 : f32
    %519 = vector.broadcast %cst_286 : f32 to vector<8x128xf32>
    %520 = arith.maximumf %518, %519 : vector<8x128xf32>
    %c4_287 = arith.constant 4 : index
    %c0_288 = arith.constant 0 : index
    %c0_289 = arith.constant 0 : index
    %521 = vector.load %arg3[%c4_287, %c0_288, %c0_289] : memref<9x8x8xf32, #tpu.memory_space<vmem>>, vector<1x8x8xf32>
    %522 = vector.shape_cast %521 : vector<1x8x8xf32> to vector<8x8xf32>
    %cst_290 = arith.constant dense<0.000000e+00> : vector<8x128xf32>
    %523 = tpu.matmul %522, %520, %cst_290 {dimension_numbers = #tpu.dot_dimension_numbers<[1], [0], [0], [1], [0, 0, 1, 1], [], []>} : vector<8x8xf32>, vector<8x128xf32>, vector<8x128xf32> -> vector<8x128xf32>
    %c4_291 = arith.constant 4 : index
    %c0_292 = arith.constant 0 : index
    %c0_293 = arith.constant 0 : index
    %524 = vector.load %arg4[%c4_291, %c0_292, %c0_293] : memref<9x8x1xf32, #tpu.memory_space<vmem>>, vector<1x8x1xf32>
    %525 = vector.shape_cast %524 : vector<1x8x1xf32> to vector<8x1xf32>
    %526 = vector.broadcast %525 : vector<8x1xf32> to vector<8x128xf32>
    %527 = arith.mulf %523, %526 : vector<8x128xf32>
    %c4_294 = arith.constant 4 : index
    %c0_295 = arith.constant 0 : index
    %c0_296 = arith.constant 0 : index
    %528 = vector.load %arg5[%c4_294, %c0_295, %c0_296] : memref<9x8x1xf32, #tpu.memory_space<vmem>>, vector<1x8x1xf32>
    %529 = vector.shape_cast %528 : vector<1x8x1xf32> to vector<8x1xf32>
    %530 = vector.broadcast %529 : vector<8x1xf32> to vector<8x128xf32>
    %531 = arith.addf %527, %530 : vector<8x128xf32>
    %cst_297 = arith.constant 0.000000e+00 : f32
    %532 = vector.broadcast %cst_297 : f32 to vector<8x128xf32>
    %533 = arith.maximumf %531, %532 : vector<8x128xf32>
    %c0_298 = arith.constant 0 : index
    %c0_299 = arith.constant 0 : index
    %c0_300 = arith.constant 0 : index
    %534 = vector.load %arg14[%c0_298, %c0_299, %c0_300] : memref<9x1x128xf32, #tpu.memory_space<vmem>>, vector<1x1x128xf32>
    %535 = vector.shape_cast %534 : vector<1x1x128xf32> to vector<1x128xf32>
    %536 = vector.extract_strided_slice %533 {offsets = [0, 119], sizes = [8, 9], strides = [1, 1]} : vector<8x128xf32> to vector<8x9xf32>
    %537 = vector.extract_strided_slice %533 {offsets = [0, 0], sizes = [8, 119], strides = [1, 1]} : vector<8x128xf32> to vector<8x119xf32>
    %538 = tpu.concatenate %536, %537 in 1 : vector<8x9xf32>, vector<8x119xf32> -> vector<8x128xf32>
    %539 = vector.broadcast %535 : vector<1x128xf32> to vector<8x128xf32>
    %540 = arith.mulf %539, %538 : vector<8x128xf32>
    %c1_301 = arith.constant 1 : index
    %c0_302 = arith.constant 0 : index
    %c0_303 = arith.constant 0 : index
    %541 = vector.load %arg14[%c1_301, %c0_302, %c0_303] : memref<9x1x128xf32, #tpu.memory_space<vmem>>, vector<1x1x128xf32>
    %542 = vector.shape_cast %541 : vector<1x1x128xf32> to vector<1x128xf32>
    %543 = vector.extract_strided_slice %533 {offsets = [0, 120], sizes = [8, 8], strides = [1, 1]} : vector<8x128xf32> to vector<8x8xf32>
    %544 = vector.extract_strided_slice %533 {offsets = [0, 0], sizes = [8, 120], strides = [1, 1]} : vector<8x128xf32> to vector<8x120xf32>
    %545 = tpu.concatenate %543, %544 in 1 : vector<8x8xf32>, vector<8x120xf32> -> vector<8x128xf32>
    %546 = vector.broadcast %542 : vector<1x128xf32> to vector<8x128xf32>
    %547 = arith.mulf %546, %545 : vector<8x128xf32>
    %c2_304 = arith.constant 2 : index
    %c0_305 = arith.constant 0 : index
    %c0_306 = arith.constant 0 : index
    %548 = vector.load %arg14[%c2_304, %c0_305, %c0_306] : memref<9x1x128xf32, #tpu.memory_space<vmem>>, vector<1x1x128xf32>
    %549 = vector.shape_cast %548 : vector<1x1x128xf32> to vector<1x128xf32>
    %550 = vector.extract_strided_slice %533 {offsets = [0, 121], sizes = [8, 7], strides = [1, 1]} : vector<8x128xf32> to vector<8x7xf32>
    %551 = vector.extract_strided_slice %533 {offsets = [0, 0], sizes = [8, 121], strides = [1, 1]} : vector<8x128xf32> to vector<8x121xf32>
    %552 = tpu.concatenate %550, %551 in 1 : vector<8x7xf32>, vector<8x121xf32> -> vector<8x128xf32>
    %553 = vector.broadcast %549 : vector<1x128xf32> to vector<8x128xf32>
    %554 = arith.mulf %553, %552 : vector<8x128xf32>
    %c3_307 = arith.constant 3 : index
    %c0_308 = arith.constant 0 : index
    %c0_309 = arith.constant 0 : index
    %555 = vector.load %arg14[%c3_307, %c0_308, %c0_309] : memref<9x1x128xf32, #tpu.memory_space<vmem>>, vector<1x1x128xf32>
    %556 = vector.shape_cast %555 : vector<1x1x128xf32> to vector<1x128xf32>
    %557 = vector.extract_strided_slice %533 {offsets = [0, 127], sizes = [8, 1], strides = [1, 1]} : vector<8x128xf32> to vector<8x1xf32>
    %558 = vector.extract_strided_slice %533 {offsets = [0, 0], sizes = [8, 127], strides = [1, 1]} : vector<8x128xf32> to vector<8x127xf32>
    %559 = tpu.concatenate %557, %558 in 1 : vector<8x1xf32>, vector<8x127xf32> -> vector<8x128xf32>
    %560 = vector.broadcast %556 : vector<1x128xf32> to vector<8x128xf32>
    %561 = arith.mulf %560, %559 : vector<8x128xf32>
    %c4_310 = arith.constant 4 : index
    %c0_311 = arith.constant 0 : index
    %c0_312 = arith.constant 0 : index
    %562 = vector.load %arg14[%c4_310, %c0_311, %c0_312] : memref<9x1x128xf32, #tpu.memory_space<vmem>>, vector<1x1x128xf32>
    %563 = vector.shape_cast %562 : vector<1x1x128xf32> to vector<1x128xf32>
    %564 = vector.broadcast %563 : vector<1x128xf32> to vector<8x128xf32>
    %565 = arith.mulf %564, %533 : vector<8x128xf32>
    %c5_313 = arith.constant 5 : index
    %c0_314 = arith.constant 0 : index
    %c0_315 = arith.constant 0 : index
    %566 = vector.load %arg14[%c5_313, %c0_314, %c0_315] : memref<9x1x128xf32, #tpu.memory_space<vmem>>, vector<1x1x128xf32>
    %567 = vector.shape_cast %566 : vector<1x1x128xf32> to vector<1x128xf32>
    %568 = vector.extract_strided_slice %533 {offsets = [0, 1], sizes = [8, 127], strides = [1, 1]} : vector<8x128xf32> to vector<8x127xf32>
    %569 = vector.extract_strided_slice %533 {offsets = [0, 0], sizes = [8, 1], strides = [1, 1]} : vector<8x128xf32> to vector<8x1xf32>
    %570 = tpu.concatenate %568, %569 in 1 : vector<8x127xf32>, vector<8x1xf32> -> vector<8x128xf32>
    %571 = vector.broadcast %567 : vector<1x128xf32> to vector<8x128xf32>
    %572 = arith.mulf %571, %570 : vector<8x128xf32>
    %c6_316 = arith.constant 6 : index
    %c0_317 = arith.constant 0 : index
    %c0_318 = arith.constant 0 : index
    %573 = vector.load %arg14[%c6_316, %c0_317, %c0_318] : memref<9x1x128xf32, #tpu.memory_space<vmem>>, vector<1x1x128xf32>
    %574 = vector.shape_cast %573 : vector<1x1x128xf32> to vector<1x128xf32>
    %575 = vector.extract_strided_slice %533 {offsets = [0, 7], sizes = [8, 121], strides = [1, 1]} : vector<8x128xf32> to vector<8x121xf32>
    %576 = vector.extract_strided_slice %533 {offsets = [0, 0], sizes = [8, 7], strides = [1, 1]} : vector<8x128xf32> to vector<8x7xf32>
    %577 = tpu.concatenate %575, %576 in 1 : vector<8x121xf32>, vector<8x7xf32> -> vector<8x128xf32>
    %578 = vector.broadcast %574 : vector<1x128xf32> to vector<8x128xf32>
    %579 = arith.mulf %578, %577 : vector<8x128xf32>
    %c7_319 = arith.constant 7 : index
    %c0_320 = arith.constant 0 : index
    %c0_321 = arith.constant 0 : index
    %580 = vector.load %arg14[%c7_319, %c0_320, %c0_321] : memref<9x1x128xf32, #tpu.memory_space<vmem>>, vector<1x1x128xf32>
    %581 = vector.shape_cast %580 : vector<1x1x128xf32> to vector<1x128xf32>
    %582 = vector.extract_strided_slice %533 {offsets = [0, 8], sizes = [8, 120], strides = [1, 1]} : vector<8x128xf32> to vector<8x120xf32>
    %583 = vector.extract_strided_slice %533 {offsets = [0, 0], sizes = [8, 8], strides = [1, 1]} : vector<8x128xf32> to vector<8x8xf32>
    %584 = tpu.concatenate %582, %583 in 1 : vector<8x120xf32>, vector<8x8xf32> -> vector<8x128xf32>
    %585 = vector.broadcast %581 : vector<1x128xf32> to vector<8x128xf32>
    %586 = arith.mulf %585, %584 : vector<8x128xf32>
    %c8_322 = arith.constant 8 : index
    %c0_323 = arith.constant 0 : index
    %c0_324 = arith.constant 0 : index
    %587 = vector.load %arg14[%c8_322, %c0_323, %c0_324] : memref<9x1x128xf32, #tpu.memory_space<vmem>>, vector<1x1x128xf32>
    %588 = vector.shape_cast %587 : vector<1x1x128xf32> to vector<1x128xf32>
    %589 = vector.extract_strided_slice %533 {offsets = [0, 9], sizes = [8, 119], strides = [1, 1]} : vector<8x128xf32> to vector<8x119xf32>
    %590 = vector.extract_strided_slice %533 {offsets = [0, 0], sizes = [8, 9], strides = [1, 1]} : vector<8x128xf32> to vector<8x9xf32>
    %591 = tpu.concatenate %589, %590 in 1 : vector<8x119xf32>, vector<8x9xf32> -> vector<8x128xf32>
    %592 = vector.broadcast %588 : vector<1x128xf32> to vector<8x128xf32>
    %593 = arith.mulf %592, %591 : vector<8x128xf32>
    %594 = tpu.concatenate %540, %547, %554, %561, %565, %572, %579, %586, %593 in 0 : vector<8x128xf32>, vector<8x128xf32>, vector<8x128xf32>, vector<8x128xf32>, vector<8x128xf32>, vector<8x128xf32>, vector<8x128xf32>, vector<8x128xf32>, vector<8x128xf32> -> vector<72x128xf32>
    %c4_325 = arith.constant 4 : index
    %c0_326 = arith.constant 0 : index
    %c0_327 = arith.constant 0 : index
    %595 = vector.load %arg6[%c4_325, %c0_326, %c0_327] : memref<9x8x72xf32, #tpu.memory_space<vmem>>, vector<1x8x72xf32>
    %596 = vector.shape_cast %595 : vector<1x8x72xf32> to vector<8x72xf32>
    %cst_328 = arith.constant dense<0.000000e+00> : vector<8x128xf32>
    %597 = tpu.matmul %596, %594, %cst_328 {dimension_numbers = #tpu.dot_dimension_numbers<[1], [0], [0], [1], [0, 0, 1, 1], [], []>} : vector<8x72xf32>, vector<72x128xf32>, vector<8x128xf32> -> vector<8x128xf32>
    %c4_329 = arith.constant 4 : index
    %c0_330 = arith.constant 0 : index
    %c0_331 = arith.constant 0 : index
    %598 = vector.load %arg7[%c4_329, %c0_330, %c0_331] : memref<9x8x1xf32, #tpu.memory_space<vmem>>, vector<1x8x1xf32>
    %599 = vector.shape_cast %598 : vector<1x8x1xf32> to vector<8x1xf32>
    %600 = vector.broadcast %599 : vector<8x1xf32> to vector<8x128xf32>
    %601 = arith.mulf %597, %600 : vector<8x128xf32>
    %c4_332 = arith.constant 4 : index
    %c0_333 = arith.constant 0 : index
    %c0_334 = arith.constant 0 : index
    %602 = vector.load %arg8[%c4_332, %c0_333, %c0_334] : memref<9x8x1xf32, #tpu.memory_space<vmem>>, vector<1x8x1xf32>
    %603 = vector.shape_cast %602 : vector<1x8x1xf32> to vector<8x1xf32>
    %604 = vector.broadcast %603 : vector<8x1xf32> to vector<8x128xf32>
    %605 = arith.addf %601, %604 : vector<8x128xf32>
    %cst_335 = arith.constant 0.000000e+00 : f32
    %606 = vector.broadcast %cst_335 : f32 to vector<8x128xf32>
    %607 = arith.maximumf %605, %606 : vector<8x128xf32>
    %c4_336 = arith.constant 4 : index
    %c0_337 = arith.constant 0 : index
    %c0_338 = arith.constant 0 : index
    %608 = vector.load %arg9[%c4_336, %c0_337, %c0_338] : memref<9x8x8xf32, #tpu.memory_space<vmem>>, vector<1x8x8xf32>
    %609 = vector.shape_cast %608 : vector<1x8x8xf32> to vector<8x8xf32>
    %cst_339 = arith.constant dense<0.000000e+00> : vector<8x128xf32>
    %610 = tpu.matmul %609, %607, %cst_339 {dimension_numbers = #tpu.dot_dimension_numbers<[1], [0], [0], [1], [0, 0, 1, 1], [], []>} : vector<8x8xf32>, vector<8x128xf32>, vector<8x128xf32> -> vector<8x128xf32>
    %611 = arith.addf %610, %510 : vector<8x128xf32>
    %c0_340 = arith.constant 0 : index
    %c0_341 = arith.constant 0 : index
    %c0_342 = arith.constant 0 : index
    %612 = vector.load %arg14[%c0_340, %c0_341, %c0_342] : memref<9x1x128xf32, #tpu.memory_space<vmem>>, vector<1x1x128xf32>
    %613 = vector.shape_cast %612 : vector<1x1x128xf32> to vector<1x128xf32>
    %cst_343 = arith.constant 0.000000e+00 : f32
    %614 = vector.broadcast %cst_343 : f32 to vector<1x128xf32>
    %615 = arith.cmpf one, %613, %614 : vector<1x128xf32>
    %616 = vector.extract_strided_slice %510 {offsets = [0, 119], sizes = [8, 9], strides = [1, 1]} : vector<8x128xf32> to vector<8x9xf32>
    %617 = vector.extract_strided_slice %510 {offsets = [0, 0], sizes = [8, 119], strides = [1, 1]} : vector<8x128xf32> to vector<8x119xf32>
    %618 = tpu.concatenate %616, %617 in 1 : vector<8x9xf32>, vector<8x119xf32> -> vector<8x128xf32>
    %cst_344 = arith.constant -1.000000e+30 : f32
    %619 = vector.shape_cast %615 : vector<1x128xi1> to vector<1x128xi1>
    %620 = vector.broadcast %619 : vector<1x128xi1> to vector<8x128xi1>
    %621 = vector.broadcast %cst_344 : f32 to vector<8x128xf32>
    %622 = arith.select %620, %618, %621 : vector<8x128xi1>, vector<8x128xf32>
    %c1_345 = arith.constant 1 : index
    %c0_346 = arith.constant 0 : index
    %c0_347 = arith.constant 0 : index
    %623 = vector.load %arg14[%c1_345, %c0_346, %c0_347] : memref<9x1x128xf32, #tpu.memory_space<vmem>>, vector<1x1x128xf32>
    %624 = vector.shape_cast %623 : vector<1x1x128xf32> to vector<1x128xf32>
    %cst_348 = arith.constant 0.000000e+00 : f32
    %625 = vector.broadcast %cst_348 : f32 to vector<1x128xf32>
    %626 = arith.cmpf one, %624, %625 : vector<1x128xf32>
    %627 = vector.extract_strided_slice %510 {offsets = [0, 120], sizes = [8, 8], strides = [1, 1]} : vector<8x128xf32> to vector<8x8xf32>
    %628 = vector.extract_strided_slice %510 {offsets = [0, 0], sizes = [8, 120], strides = [1, 1]} : vector<8x128xf32> to vector<8x120xf32>
    %629 = tpu.concatenate %627, %628 in 1 : vector<8x8xf32>, vector<8x120xf32> -> vector<8x128xf32>
    %cst_349 = arith.constant -1.000000e+30 : f32
    %630 = vector.shape_cast %626 : vector<1x128xi1> to vector<1x128xi1>
    %631 = vector.broadcast %630 : vector<1x128xi1> to vector<8x128xi1>
    %632 = vector.broadcast %cst_349 : f32 to vector<8x128xf32>
    %633 = arith.select %631, %629, %632 : vector<8x128xi1>, vector<8x128xf32>
    %c2_350 = arith.constant 2 : index
    %c0_351 = arith.constant 0 : index
    %c0_352 = arith.constant 0 : index
    %634 = vector.load %arg14[%c2_350, %c0_351, %c0_352] : memref<9x1x128xf32, #tpu.memory_space<vmem>>, vector<1x1x128xf32>
    %635 = vector.shape_cast %634 : vector<1x1x128xf32> to vector<1x128xf32>
    %cst_353 = arith.constant 0.000000e+00 : f32
    %636 = vector.broadcast %cst_353 : f32 to vector<1x128xf32>
    %637 = arith.cmpf one, %635, %636 : vector<1x128xf32>
    %638 = vector.extract_strided_slice %510 {offsets = [0, 121], sizes = [8, 7], strides = [1, 1]} : vector<8x128xf32> to vector<8x7xf32>
    %639 = vector.extract_strided_slice %510 {offsets = [0, 0], sizes = [8, 121], strides = [1, 1]} : vector<8x128xf32> to vector<8x121xf32>
    %640 = tpu.concatenate %638, %639 in 1 : vector<8x7xf32>, vector<8x121xf32> -> vector<8x128xf32>
    %cst_354 = arith.constant -1.000000e+30 : f32
    %641 = vector.shape_cast %637 : vector<1x128xi1> to vector<1x128xi1>
    %642 = vector.broadcast %641 : vector<1x128xi1> to vector<8x128xi1>
    %643 = vector.broadcast %cst_354 : f32 to vector<8x128xf32>
    %644 = arith.select %642, %640, %643 : vector<8x128xi1>, vector<8x128xf32>
    %c3_355 = arith.constant 3 : index
    %c0_356 = arith.constant 0 : index
    %c0_357 = arith.constant 0 : index
    %645 = vector.load %arg14[%c3_355, %c0_356, %c0_357] : memref<9x1x128xf32, #tpu.memory_space<vmem>>, vector<1x1x128xf32>
    %646 = vector.shape_cast %645 : vector<1x1x128xf32> to vector<1x128xf32>
    %cst_358 = arith.constant 0.000000e+00 : f32
    %647 = vector.broadcast %cst_358 : f32 to vector<1x128xf32>
    %648 = arith.cmpf one, %646, %647 : vector<1x128xf32>
    %649 = vector.extract_strided_slice %510 {offsets = [0, 127], sizes = [8, 1], strides = [1, 1]} : vector<8x128xf32> to vector<8x1xf32>
    %650 = vector.extract_strided_slice %510 {offsets = [0, 0], sizes = [8, 127], strides = [1, 1]} : vector<8x128xf32> to vector<8x127xf32>
    %651 = tpu.concatenate %649, %650 in 1 : vector<8x1xf32>, vector<8x127xf32> -> vector<8x128xf32>
    %cst_359 = arith.constant -1.000000e+30 : f32
    %652 = vector.shape_cast %648 : vector<1x128xi1> to vector<1x128xi1>
    %653 = vector.broadcast %652 : vector<1x128xi1> to vector<8x128xi1>
    %654 = vector.broadcast %cst_359 : f32 to vector<8x128xf32>
    %655 = arith.select %653, %651, %654 : vector<8x128xi1>, vector<8x128xf32>
    %c4_360 = arith.constant 4 : index
    %c0_361 = arith.constant 0 : index
    %c0_362 = arith.constant 0 : index
    %656 = vector.load %arg14[%c4_360, %c0_361, %c0_362] : memref<9x1x128xf32, #tpu.memory_space<vmem>>, vector<1x1x128xf32>
    %657 = vector.shape_cast %656 : vector<1x1x128xf32> to vector<1x128xf32>
    %cst_363 = arith.constant 0.000000e+00 : f32
    %658 = vector.broadcast %cst_363 : f32 to vector<1x128xf32>
    %659 = arith.cmpf one, %657, %658 : vector<1x128xf32>
    %cst_364 = arith.constant -1.000000e+30 : f32
    %660 = vector.shape_cast %659 : vector<1x128xi1> to vector<1x128xi1>
    %661 = vector.broadcast %660 : vector<1x128xi1> to vector<8x128xi1>
    %662 = vector.broadcast %cst_364 : f32 to vector<8x128xf32>
    %663 = arith.select %661, %510, %662 : vector<8x128xi1>, vector<8x128xf32>
    %c5_365 = arith.constant 5 : index
    %c0_366 = arith.constant 0 : index
    %c0_367 = arith.constant 0 : index
    %664 = vector.load %arg14[%c5_365, %c0_366, %c0_367] : memref<9x1x128xf32, #tpu.memory_space<vmem>>, vector<1x1x128xf32>
    %665 = vector.shape_cast %664 : vector<1x1x128xf32> to vector<1x128xf32>
    %cst_368 = arith.constant 0.000000e+00 : f32
    %666 = vector.broadcast %cst_368 : f32 to vector<1x128xf32>
    %667 = arith.cmpf one, %665, %666 : vector<1x128xf32>
    %668 = vector.extract_strided_slice %510 {offsets = [0, 1], sizes = [8, 127], strides = [1, 1]} : vector<8x128xf32> to vector<8x127xf32>
    %669 = vector.extract_strided_slice %510 {offsets = [0, 0], sizes = [8, 1], strides = [1, 1]} : vector<8x128xf32> to vector<8x1xf32>
    %670 = tpu.concatenate %668, %669 in 1 : vector<8x127xf32>, vector<8x1xf32> -> vector<8x128xf32>
    %cst_369 = arith.constant -1.000000e+30 : f32
    %671 = vector.shape_cast %667 : vector<1x128xi1> to vector<1x128xi1>
    %672 = vector.broadcast %671 : vector<1x128xi1> to vector<8x128xi1>
    %673 = vector.broadcast %cst_369 : f32 to vector<8x128xf32>
    %674 = arith.select %672, %670, %673 : vector<8x128xi1>, vector<8x128xf32>
    %c6_370 = arith.constant 6 : index
    %c0_371 = arith.constant 0 : index
    %c0_372 = arith.constant 0 : index
    %675 = vector.load %arg14[%c6_370, %c0_371, %c0_372] : memref<9x1x128xf32, #tpu.memory_space<vmem>>, vector<1x1x128xf32>
    %676 = vector.shape_cast %675 : vector<1x1x128xf32> to vector<1x128xf32>
    %cst_373 = arith.constant 0.000000e+00 : f32
    %677 = vector.broadcast %cst_373 : f32 to vector<1x128xf32>
    %678 = arith.cmpf one, %676, %677 : vector<1x128xf32>
    %679 = vector.extract_strided_slice %510 {offsets = [0, 7], sizes = [8, 121], strides = [1, 1]} : vector<8x128xf32> to vector<8x121xf32>
    %680 = vector.extract_strided_slice %510 {offsets = [0, 0], sizes = [8, 7], strides = [1, 1]} : vector<8x128xf32> to vector<8x7xf32>
    %681 = tpu.concatenate %679, %680 in 1 : vector<8x121xf32>, vector<8x7xf32> -> vector<8x128xf32>
    %cst_374 = arith.constant -1.000000e+30 : f32
    %682 = vector.shape_cast %678 : vector<1x128xi1> to vector<1x128xi1>
    %683 = vector.broadcast %682 : vector<1x128xi1> to vector<8x128xi1>
    %684 = vector.broadcast %cst_374 : f32 to vector<8x128xf32>
    %685 = arith.select %683, %681, %684 : vector<8x128xi1>, vector<8x128xf32>
    %c7_375 = arith.constant 7 : index
    %c0_376 = arith.constant 0 : index
    %c0_377 = arith.constant 0 : index
    %686 = vector.load %arg14[%c7_375, %c0_376, %c0_377] : memref<9x1x128xf32, #tpu.memory_space<vmem>>, vector<1x1x128xf32>
    %687 = vector.shape_cast %686 : vector<1x1x128xf32> to vector<1x128xf32>
    %cst_378 = arith.constant 0.000000e+00 : f32
    %688 = vector.broadcast %cst_378 : f32 to vector<1x128xf32>
    %689 = arith.cmpf one, %687, %688 : vector<1x128xf32>
    %690 = vector.extract_strided_slice %510 {offsets = [0, 8], sizes = [8, 120], strides = [1, 1]} : vector<8x128xf32> to vector<8x120xf32>
    %691 = vector.extract_strided_slice %510 {offsets = [0, 0], sizes = [8, 8], strides = [1, 1]} : vector<8x128xf32> to vector<8x8xf32>
    %692 = tpu.concatenate %690, %691 in 1 : vector<8x120xf32>, vector<8x8xf32> -> vector<8x128xf32>
    %cst_379 = arith.constant -1.000000e+30 : f32
    %693 = vector.shape_cast %689 : vector<1x128xi1> to vector<1x128xi1>
    %694 = vector.broadcast %693 : vector<1x128xi1> to vector<8x128xi1>
    %695 = vector.broadcast %cst_379 : f32 to vector<8x128xf32>
    %696 = arith.select %694, %692, %695 : vector<8x128xi1>, vector<8x128xf32>
    %c8_380 = arith.constant 8 : index
    %c0_381 = arith.constant 0 : index
    %c0_382 = arith.constant 0 : index
    %697 = vector.load %arg14[%c8_380, %c0_381, %c0_382] : memref<9x1x128xf32, #tpu.memory_space<vmem>>, vector<1x1x128xf32>
    %698 = vector.shape_cast %697 : vector<1x1x128xf32> to vector<1x128xf32>
    %cst_383 = arith.constant 0.000000e+00 : f32
    %699 = vector.broadcast %cst_383 : f32 to vector<1x128xf32>
    %700 = arith.cmpf one, %698, %699 : vector<1x128xf32>
    %701 = vector.extract_strided_slice %510 {offsets = [0, 9], sizes = [8, 119], strides = [1, 1]} : vector<8x128xf32> to vector<8x119xf32>
    %702 = vector.extract_strided_slice %510 {offsets = [0, 0], sizes = [8, 9], strides = [1, 1]} : vector<8x128xf32> to vector<8x9xf32>
    %703 = tpu.concatenate %701, %702 in 1 : vector<8x119xf32>, vector<8x9xf32> -> vector<8x128xf32>
    %cst_384 = arith.constant -1.000000e+30 : f32
    %704 = vector.shape_cast %700 : vector<1x128xi1> to vector<1x128xi1>
    %705 = vector.broadcast %704 : vector<1x128xi1> to vector<8x128xi1>
    %706 = vector.broadcast %cst_384 : f32 to vector<8x128xf32>
    %707 = arith.select %705, %703, %706 : vector<8x128xi1>, vector<8x128xf32>
    %708 = arith.maximumf %622, %633 : vector<8x128xf32>
    %709 = arith.maximumf %644, %655 : vector<8x128xf32>
    %710 = arith.maximumf %663, %674 : vector<8x128xf32>
    %711 = arith.maximumf %685, %696 : vector<8x128xf32>
    %712 = arith.maximumf %708, %709 : vector<8x128xf32>
    %713 = arith.maximumf %710, %711 : vector<8x128xf32>
    %714 = arith.maximumf %712, %713 : vector<8x128xf32>
    %715 = arith.maximumf %714, %707 : vector<8x128xf32>
    %c0_385 = arith.constant 0 : index
    %c0_386 = arith.constant 0 : index
    %716 = vector.load %arg17[%c0_385, %c0_386] : memref<128x32xf32, #tpu.memory_space<vmem>>, vector<128x32xf32>
    %cst_387 = arith.constant dense<0.000000e+00> : vector<8x32xf32>
    %717 = tpu.matmul %715, %716, %cst_387 {dimension_numbers = #tpu.dot_dimension_numbers<[1], [0], [0], [1], [0, 0, 1, 1], [], []>} : vector<8x128xf32>, vector<128x32xf32>, vector<8x32xf32> -> vector<8x32xf32>
    %c5_388 = arith.constant 5 : index
    %c0_389 = arith.constant 0 : index
    %c0_390 = arith.constant 0 : index
    %718 = vector.load %arg1[%c5_388, %c0_389, %c0_390] : memref<9x8x1xf32, #tpu.memory_space<vmem>>, vector<1x8x1xf32>
    %719 = vector.shape_cast %718 : vector<1x8x1xf32> to vector<8x1xf32>
    %720 = vector.broadcast %719 : vector<8x1xf32> to vector<8x32xf32>
    %721 = arith.mulf %717, %720 : vector<8x32xf32>
    %c5_391 = arith.constant 5 : index
    %c0_392 = arith.constant 0 : index
    %c0_393 = arith.constant 0 : index
    %722 = vector.load %arg2[%c5_391, %c0_392, %c0_393] : memref<9x8x1xf32, #tpu.memory_space<vmem>>, vector<1x8x1xf32>
    %723 = vector.shape_cast %722 : vector<1x8x1xf32> to vector<8x1xf32>
    %724 = vector.broadcast %723 : vector<8x1xf32> to vector<8x32xf32>
    %725 = arith.addf %721, %724 : vector<8x32xf32>
    %cst_394 = arith.constant 0.000000e+00 : f32
    %726 = vector.broadcast %cst_394 : f32 to vector<8x32xf32>
    %727 = arith.maximumf %725, %726 : vector<8x32xf32>
    %c5_395 = arith.constant 5 : index
    %c0_396 = arith.constant 0 : index
    %c0_397 = arith.constant 0 : index
    %728 = vector.load %arg3[%c5_395, %c0_396, %c0_397] : memref<9x8x8xf32, #tpu.memory_space<vmem>>, vector<1x8x8xf32>
    %729 = vector.shape_cast %728 : vector<1x8x8xf32> to vector<8x8xf32>
    %cst_398 = arith.constant dense<0.000000e+00> : vector<8x32xf32>
    %730 = tpu.matmul %729, %727, %cst_398 {dimension_numbers = #tpu.dot_dimension_numbers<[1], [0], [0], [1], [0, 0, 1, 1], [], []>} : vector<8x8xf32>, vector<8x32xf32>, vector<8x32xf32> -> vector<8x32xf32>
    %c5_399 = arith.constant 5 : index
    %c0_400 = arith.constant 0 : index
    %c0_401 = arith.constant 0 : index
    %731 = vector.load %arg4[%c5_399, %c0_400, %c0_401] : memref<9x8x1xf32, #tpu.memory_space<vmem>>, vector<1x8x1xf32>
    %732 = vector.shape_cast %731 : vector<1x8x1xf32> to vector<8x1xf32>
    %733 = vector.broadcast %732 : vector<8x1xf32> to vector<8x32xf32>
    %734 = arith.mulf %730, %733 : vector<8x32xf32>
    %c5_402 = arith.constant 5 : index
    %c0_403 = arith.constant 0 : index
    %c0_404 = arith.constant 0 : index
    %735 = vector.load %arg5[%c5_402, %c0_403, %c0_404] : memref<9x8x1xf32, #tpu.memory_space<vmem>>, vector<1x8x1xf32>
    %736 = vector.shape_cast %735 : vector<1x8x1xf32> to vector<8x1xf32>
    %737 = vector.broadcast %736 : vector<8x1xf32> to vector<8x32xf32>
    %738 = arith.addf %734, %737 : vector<8x32xf32>
    %cst_405 = arith.constant 0.000000e+00 : f32
    %739 = vector.broadcast %cst_405 : f32 to vector<8x32xf32>
    %740 = arith.maximumf %738, %739 : vector<8x32xf32>
    %c0_406 = arith.constant 0 : index
    %c0_407 = arith.constant 0 : index
    %c0_408 = arith.constant 0 : index
    %741 = vector.load %arg15[%c0_406, %c0_407, %c0_408] : memref<9x1x32xf32, #tpu.memory_space<vmem>>, vector<1x1x32xf32>
    %742 = vector.shape_cast %741 : vector<1x1x32xf32> to vector<1x32xf32>
    %743 = vector.extract_strided_slice %740 {offsets = [0, 27], sizes = [8, 5], strides = [1, 1]} : vector<8x32xf32> to vector<8x5xf32>
    %744 = vector.extract_strided_slice %740 {offsets = [0, 0], sizes = [8, 27], strides = [1, 1]} : vector<8x32xf32> to vector<8x27xf32>
    %745 = tpu.concatenate %743, %744 in 1 : vector<8x5xf32>, vector<8x27xf32> -> vector<8x32xf32>
    %746 = vector.broadcast %742 : vector<1x32xf32> to vector<8x32xf32>
    %747 = arith.mulf %746, %745 : vector<8x32xf32>
    %c1_409 = arith.constant 1 : index
    %c0_410 = arith.constant 0 : index
    %c0_411 = arith.constant 0 : index
    %748 = vector.load %arg15[%c1_409, %c0_410, %c0_411] : memref<9x1x32xf32, #tpu.memory_space<vmem>>, vector<1x1x32xf32>
    %749 = vector.shape_cast %748 : vector<1x1x32xf32> to vector<1x32xf32>
    %750 = vector.extract_strided_slice %740 {offsets = [0, 28], sizes = [8, 4], strides = [1, 1]} : vector<8x32xf32> to vector<8x4xf32>
    %751 = vector.extract_strided_slice %740 {offsets = [0, 0], sizes = [8, 28], strides = [1, 1]} : vector<8x32xf32> to vector<8x28xf32>
    %752 = tpu.concatenate %750, %751 in 1 : vector<8x4xf32>, vector<8x28xf32> -> vector<8x32xf32>
    %753 = vector.broadcast %749 : vector<1x32xf32> to vector<8x32xf32>
    %754 = arith.mulf %753, %752 : vector<8x32xf32>
    %c2_412 = arith.constant 2 : index
    %c0_413 = arith.constant 0 : index
    %c0_414 = arith.constant 0 : index
    %755 = vector.load %arg15[%c2_412, %c0_413, %c0_414] : memref<9x1x32xf32, #tpu.memory_space<vmem>>, vector<1x1x32xf32>
    %756 = vector.shape_cast %755 : vector<1x1x32xf32> to vector<1x32xf32>
    %757 = vector.extract_strided_slice %740 {offsets = [0, 29], sizes = [8, 3], strides = [1, 1]} : vector<8x32xf32> to vector<8x3xf32>
    %758 = vector.extract_strided_slice %740 {offsets = [0, 0], sizes = [8, 29], strides = [1, 1]} : vector<8x32xf32> to vector<8x29xf32>
    %759 = tpu.concatenate %757, %758 in 1 : vector<8x3xf32>, vector<8x29xf32> -> vector<8x32xf32>
    %760 = vector.broadcast %756 : vector<1x32xf32> to vector<8x32xf32>
    %761 = arith.mulf %760, %759 : vector<8x32xf32>
    %c3_415 = arith.constant 3 : index
    %c0_416 = arith.constant 0 : index
    %c0_417 = arith.constant 0 : index
    %762 = vector.load %arg15[%c3_415, %c0_416, %c0_417] : memref<9x1x32xf32, #tpu.memory_space<vmem>>, vector<1x1x32xf32>
    %763 = vector.shape_cast %762 : vector<1x1x32xf32> to vector<1x32xf32>
    %764 = vector.extract_strided_slice %740 {offsets = [0, 31], sizes = [8, 1], strides = [1, 1]} : vector<8x32xf32> to vector<8x1xf32>
    %765 = vector.extract_strided_slice %740 {offsets = [0, 0], sizes = [8, 31], strides = [1, 1]} : vector<8x32xf32> to vector<8x31xf32>
    %766 = tpu.concatenate %764, %765 in 1 : vector<8x1xf32>, vector<8x31xf32> -> vector<8x32xf32>
    %767 = vector.broadcast %763 : vector<1x32xf32> to vector<8x32xf32>
    %768 = arith.mulf %767, %766 : vector<8x32xf32>
    %c4_418 = arith.constant 4 : index
    %c0_419 = arith.constant 0 : index
    %c0_420 = arith.constant 0 : index
    %769 = vector.load %arg15[%c4_418, %c0_419, %c0_420] : memref<9x1x32xf32, #tpu.memory_space<vmem>>, vector<1x1x32xf32>
    %770 = vector.shape_cast %769 : vector<1x1x32xf32> to vector<1x32xf32>
    %771 = vector.broadcast %770 : vector<1x32xf32> to vector<8x32xf32>
    %772 = arith.mulf %771, %740 : vector<8x32xf32>
    %c5_421 = arith.constant 5 : index
    %c0_422 = arith.constant 0 : index
    %c0_423 = arith.constant 0 : index
    %773 = vector.load %arg15[%c5_421, %c0_422, %c0_423] : memref<9x1x32xf32, #tpu.memory_space<vmem>>, vector<1x1x32xf32>
    %774 = vector.shape_cast %773 : vector<1x1x32xf32> to vector<1x32xf32>
    %775 = vector.extract_strided_slice %740 {offsets = [0, 1], sizes = [8, 31], strides = [1, 1]} : vector<8x32xf32> to vector<8x31xf32>
    %776 = vector.extract_strided_slice %740 {offsets = [0, 0], sizes = [8, 1], strides = [1, 1]} : vector<8x32xf32> to vector<8x1xf32>
    %777 = tpu.concatenate %775, %776 in 1 : vector<8x31xf32>, vector<8x1xf32> -> vector<8x32xf32>
    %778 = vector.broadcast %774 : vector<1x32xf32> to vector<8x32xf32>
    %779 = arith.mulf %778, %777 : vector<8x32xf32>
    %c6_424 = arith.constant 6 : index
    %c0_425 = arith.constant 0 : index
    %c0_426 = arith.constant 0 : index
    %780 = vector.load %arg15[%c6_424, %c0_425, %c0_426] : memref<9x1x32xf32, #tpu.memory_space<vmem>>, vector<1x1x32xf32>
    %781 = vector.shape_cast %780 : vector<1x1x32xf32> to vector<1x32xf32>
    %782 = vector.extract_strided_slice %740 {offsets = [0, 3], sizes = [8, 29], strides = [1, 1]} : vector<8x32xf32> to vector<8x29xf32>
    %783 = vector.extract_strided_slice %740 {offsets = [0, 0], sizes = [8, 3], strides = [1, 1]} : vector<8x32xf32> to vector<8x3xf32>
    %784 = tpu.concatenate %782, %783 in 1 : vector<8x29xf32>, vector<8x3xf32> -> vector<8x32xf32>
    %785 = vector.broadcast %781 : vector<1x32xf32> to vector<8x32xf32>
    %786 = arith.mulf %785, %784 : vector<8x32xf32>
    %c7_427 = arith.constant 7 : index
    %c0_428 = arith.constant 0 : index
    %c0_429 = arith.constant 0 : index
    %787 = vector.load %arg15[%c7_427, %c0_428, %c0_429] : memref<9x1x32xf32, #tpu.memory_space<vmem>>, vector<1x1x32xf32>
    %788 = vector.shape_cast %787 : vector<1x1x32xf32> to vector<1x32xf32>
    %789 = vector.extract_strided_slice %740 {offsets = [0, 4], sizes = [8, 28], strides = [1, 1]} : vector<8x32xf32> to vector<8x28xf32>
    %790 = vector.extract_strided_slice %740 {offsets = [0, 0], sizes = [8, 4], strides = [1, 1]} : vector<8x32xf32> to vector<8x4xf32>
    %791 = tpu.concatenate %789, %790 in 1 : vector<8x28xf32>, vector<8x4xf32> -> vector<8x32xf32>
    %792 = vector.broadcast %788 : vector<1x32xf32> to vector<8x32xf32>
    %793 = arith.mulf %792, %791 : vector<8x32xf32>
    %c8_430 = arith.constant 8 : index
    %c0_431 = arith.constant 0 : index
    %c0_432 = arith.constant 0 : index
    %794 = vector.load %arg15[%c8_430, %c0_431, %c0_432] : memref<9x1x32xf32, #tpu.memory_space<vmem>>, vector<1x1x32xf32>
    %795 = vector.shape_cast %794 : vector<1x1x32xf32> to vector<1x32xf32>
    %796 = vector.extract_strided_slice %740 {offsets = [0, 5], sizes = [8, 27], strides = [1, 1]} : vector<8x32xf32> to vector<8x27xf32>
    %797 = vector.extract_strided_slice %740 {offsets = [0, 0], sizes = [8, 5], strides = [1, 1]} : vector<8x32xf32> to vector<8x5xf32>
    %798 = tpu.concatenate %796, %797 in 1 : vector<8x27xf32>, vector<8x5xf32> -> vector<8x32xf32>
    %799 = vector.broadcast %795 : vector<1x32xf32> to vector<8x32xf32>
    %800 = arith.mulf %799, %798 : vector<8x32xf32>
    %801 = tpu.concatenate %747, %754, %761, %768, %772, %779, %786, %793, %800 in 0 : vector<8x32xf32>, vector<8x32xf32>, vector<8x32xf32>, vector<8x32xf32>, vector<8x32xf32>, vector<8x32xf32>, vector<8x32xf32>, vector<8x32xf32>, vector<8x32xf32> -> vector<72x32xf32>
    %c5_433 = arith.constant 5 : index
    %c0_434 = arith.constant 0 : index
    %c0_435 = arith.constant 0 : index
    %802 = vector.load %arg6[%c5_433, %c0_434, %c0_435] : memref<9x8x72xf32, #tpu.memory_space<vmem>>, vector<1x8x72xf32>
    %803 = vector.shape_cast %802 : vector<1x8x72xf32> to vector<8x72xf32>
    %cst_436 = arith.constant dense<0.000000e+00> : vector<8x32xf32>
    %804 = tpu.matmul %803, %801, %cst_436 {dimension_numbers = #tpu.dot_dimension_numbers<[1], [0], [0], [1], [0, 0, 1, 1], [], []>} : vector<8x72xf32>, vector<72x32xf32>, vector<8x32xf32> -> vector<8x32xf32>
    %c5_437 = arith.constant 5 : index
    %c0_438 = arith.constant 0 : index
    %c0_439 = arith.constant 0 : index
    %805 = vector.load %arg7[%c5_437, %c0_438, %c0_439] : memref<9x8x1xf32, #tpu.memory_space<vmem>>, vector<1x8x1xf32>
    %806 = vector.shape_cast %805 : vector<1x8x1xf32> to vector<8x1xf32>
    %807 = vector.broadcast %806 : vector<8x1xf32> to vector<8x32xf32>
    %808 = arith.mulf %804, %807 : vector<8x32xf32>
    %c5_440 = arith.constant 5 : index
    %c0_441 = arith.constant 0 : index
    %c0_442 = arith.constant 0 : index
    %809 = vector.load %arg8[%c5_440, %c0_441, %c0_442] : memref<9x8x1xf32, #tpu.memory_space<vmem>>, vector<1x8x1xf32>
    %810 = vector.shape_cast %809 : vector<1x8x1xf32> to vector<8x1xf32>
    %811 = vector.broadcast %810 : vector<8x1xf32> to vector<8x32xf32>
    %812 = arith.addf %808, %811 : vector<8x32xf32>
    %cst_443 = arith.constant 0.000000e+00 : f32
    %813 = vector.broadcast %cst_443 : f32 to vector<8x32xf32>
    %814 = arith.maximumf %812, %813 : vector<8x32xf32>
    %c5_444 = arith.constant 5 : index
    %c0_445 = arith.constant 0 : index
    %c0_446 = arith.constant 0 : index
    %815 = vector.load %arg9[%c5_444, %c0_445, %c0_446] : memref<9x8x8xf32, #tpu.memory_space<vmem>>, vector<1x8x8xf32>
    %816 = vector.shape_cast %815 : vector<1x8x8xf32> to vector<8x8xf32>
    %cst_447 = arith.constant dense<0.000000e+00> : vector<8x32xf32>
    %817 = tpu.matmul %816, %814, %cst_447 {dimension_numbers = #tpu.dot_dimension_numbers<[1], [0], [0], [1], [0, 0, 1, 1], [], []>} : vector<8x8xf32>, vector<8x32xf32>, vector<8x32xf32> -> vector<8x32xf32>
    %818 = arith.addf %817, %717 : vector<8x32xf32>
    %c6_448 = arith.constant 6 : index
    %c0_449 = arith.constant 0 : index
    %c0_450 = arith.constant 0 : index
    %819 = vector.load %arg1[%c6_448, %c0_449, %c0_450] : memref<9x8x1xf32, #tpu.memory_space<vmem>>, vector<1x8x1xf32>
    %820 = vector.shape_cast %819 : vector<1x8x1xf32> to vector<8x1xf32>
    %821 = vector.broadcast %820 : vector<8x1xf32> to vector<8x32xf32>
    %822 = arith.mulf %818, %821 : vector<8x32xf32>
    %c6_451 = arith.constant 6 : index
    %c0_452 = arith.constant 0 : index
    %c0_453 = arith.constant 0 : index
    %823 = vector.load %arg2[%c6_451, %c0_452, %c0_453] : memref<9x8x1xf32, #tpu.memory_space<vmem>>, vector<1x8x1xf32>
    %824 = vector.shape_cast %823 : vector<1x8x1xf32> to vector<8x1xf32>
    %825 = vector.broadcast %824 : vector<8x1xf32> to vector<8x32xf32>
    %826 = arith.addf %822, %825 : vector<8x32xf32>
    %cst_454 = arith.constant 0.000000e+00 : f32
    %827 = vector.broadcast %cst_454 : f32 to vector<8x32xf32>
    %828 = arith.maximumf %826, %827 : vector<8x32xf32>
    %c6_455 = arith.constant 6 : index
    %c0_456 = arith.constant 0 : index
    %c0_457 = arith.constant 0 : index
    %829 = vector.load %arg3[%c6_455, %c0_456, %c0_457] : memref<9x8x8xf32, #tpu.memory_space<vmem>>, vector<1x8x8xf32>
    %830 = vector.shape_cast %829 : vector<1x8x8xf32> to vector<8x8xf32>
    %cst_458 = arith.constant dense<0.000000e+00> : vector<8x32xf32>
    %831 = tpu.matmul %830, %828, %cst_458 {dimension_numbers = #tpu.dot_dimension_numbers<[1], [0], [0], [1], [0, 0, 1, 1], [], []>} : vector<8x8xf32>, vector<8x32xf32>, vector<8x32xf32> -> vector<8x32xf32>
    %c6_459 = arith.constant 6 : index
    %c0_460 = arith.constant 0 : index
    %c0_461 = arith.constant 0 : index
    %832 = vector.load %arg4[%c6_459, %c0_460, %c0_461] : memref<9x8x1xf32, #tpu.memory_space<vmem>>, vector<1x8x1xf32>
    %833 = vector.shape_cast %832 : vector<1x8x1xf32> to vector<8x1xf32>
    %834 = vector.broadcast %833 : vector<8x1xf32> to vector<8x32xf32>
    %835 = arith.mulf %831, %834 : vector<8x32xf32>
    %c6_462 = arith.constant 6 : index
    %c0_463 = arith.constant 0 : index
    %c0_464 = arith.constant 0 : index
    %836 = vector.load %arg5[%c6_462, %c0_463, %c0_464] : memref<9x8x1xf32, #tpu.memory_space<vmem>>, vector<1x8x1xf32>
    %837 = vector.shape_cast %836 : vector<1x8x1xf32> to vector<8x1xf32>
    %838 = vector.broadcast %837 : vector<8x1xf32> to vector<8x32xf32>
    %839 = arith.addf %835, %838 : vector<8x32xf32>
    %cst_465 = arith.constant 0.000000e+00 : f32
    %840 = vector.broadcast %cst_465 : f32 to vector<8x32xf32>
    %841 = arith.maximumf %839, %840 : vector<8x32xf32>
    %c0_466 = arith.constant 0 : index
    %c0_467 = arith.constant 0 : index
    %c0_468 = arith.constant 0 : index
    %842 = vector.load %arg15[%c0_466, %c0_467, %c0_468] : memref<9x1x32xf32, #tpu.memory_space<vmem>>, vector<1x1x32xf32>
    %843 = vector.shape_cast %842 : vector<1x1x32xf32> to vector<1x32xf32>
    %844 = vector.extract_strided_slice %841 {offsets = [0, 27], sizes = [8, 5], strides = [1, 1]} : vector<8x32xf32> to vector<8x5xf32>
    %845 = vector.extract_strided_slice %841 {offsets = [0, 0], sizes = [8, 27], strides = [1, 1]} : vector<8x32xf32> to vector<8x27xf32>
    %846 = tpu.concatenate %844, %845 in 1 : vector<8x5xf32>, vector<8x27xf32> -> vector<8x32xf32>
    %847 = vector.broadcast %843 : vector<1x32xf32> to vector<8x32xf32>
    %848 = arith.mulf %847, %846 : vector<8x32xf32>
    %c1_469 = arith.constant 1 : index
    %c0_470 = arith.constant 0 : index
    %c0_471 = arith.constant 0 : index
    %849 = vector.load %arg15[%c1_469, %c0_470, %c0_471] : memref<9x1x32xf32, #tpu.memory_space<vmem>>, vector<1x1x32xf32>
    %850 = vector.shape_cast %849 : vector<1x1x32xf32> to vector<1x32xf32>
    %851 = vector.extract_strided_slice %841 {offsets = [0, 28], sizes = [8, 4], strides = [1, 1]} : vector<8x32xf32> to vector<8x4xf32>
    %852 = vector.extract_strided_slice %841 {offsets = [0, 0], sizes = [8, 28], strides = [1, 1]} : vector<8x32xf32> to vector<8x28xf32>
    %853 = tpu.concatenate %851, %852 in 1 : vector<8x4xf32>, vector<8x28xf32> -> vector<8x32xf32>
    %854 = vector.broadcast %850 : vector<1x32xf32> to vector<8x32xf32>
    %855 = arith.mulf %854, %853 : vector<8x32xf32>
    %c2_472 = arith.constant 2 : index
    %c0_473 = arith.constant 0 : index
    %c0_474 = arith.constant 0 : index
    %856 = vector.load %arg15[%c2_472, %c0_473, %c0_474] : memref<9x1x32xf32, #tpu.memory_space<vmem>>, vector<1x1x32xf32>
    %857 = vector.shape_cast %856 : vector<1x1x32xf32> to vector<1x32xf32>
    %858 = vector.extract_strided_slice %841 {offsets = [0, 29], sizes = [8, 3], strides = [1, 1]} : vector<8x32xf32> to vector<8x3xf32>
    %859 = vector.extract_strided_slice %841 {offsets = [0, 0], sizes = [8, 29], strides = [1, 1]} : vector<8x32xf32> to vector<8x29xf32>
    %860 = tpu.concatenate %858, %859 in 1 : vector<8x3xf32>, vector<8x29xf32> -> vector<8x32xf32>
    %861 = vector.broadcast %857 : vector<1x32xf32> to vector<8x32xf32>
    %862 = arith.mulf %861, %860 : vector<8x32xf32>
    %c3_475 = arith.constant 3 : index
    %c0_476 = arith.constant 0 : index
    %c0_477 = arith.constant 0 : index
    %863 = vector.load %arg15[%c3_475, %c0_476, %c0_477] : memref<9x1x32xf32, #tpu.memory_space<vmem>>, vector<1x1x32xf32>
    %864 = vector.shape_cast %863 : vector<1x1x32xf32> to vector<1x32xf32>
    %865 = vector.extract_strided_slice %841 {offsets = [0, 31], sizes = [8, 1], strides = [1, 1]} : vector<8x32xf32> to vector<8x1xf32>
    %866 = vector.extract_strided_slice %841 {offsets = [0, 0], sizes = [8, 31], strides = [1, 1]} : vector<8x32xf32> to vector<8x31xf32>
    %867 = tpu.concatenate %865, %866 in 1 : vector<8x1xf32>, vector<8x31xf32> -> vector<8x32xf32>
    %868 = vector.broadcast %864 : vector<1x32xf32> to vector<8x32xf32>
    %869 = arith.mulf %868, %867 : vector<8x32xf32>
    %c4_478 = arith.constant 4 : index
    %c0_479 = arith.constant 0 : index
    %c0_480 = arith.constant 0 : index
    %870 = vector.load %arg15[%c4_478, %c0_479, %c0_480] : memref<9x1x32xf32, #tpu.memory_space<vmem>>, vector<1x1x32xf32>
    %871 = vector.shape_cast %870 : vector<1x1x32xf32> to vector<1x32xf32>
    %872 = vector.broadcast %871 : vector<1x32xf32> to vector<8x32xf32>
    %873 = arith.mulf %872, %841 : vector<8x32xf32>
    %c5_481 = arith.constant 5 : index
    %c0_482 = arith.constant 0 : index
    %c0_483 = arith.constant 0 : index
    %874 = vector.load %arg15[%c5_481, %c0_482, %c0_483] : memref<9x1x32xf32, #tpu.memory_space<vmem>>, vector<1x1x32xf32>
    %875 = vector.shape_cast %874 : vector<1x1x32xf32> to vector<1x32xf32>
    %876 = vector.extract_strided_slice %841 {offsets = [0, 1], sizes = [8, 31], strides = [1, 1]} : vector<8x32xf32> to vector<8x31xf32>
    %877 = vector.extract_strided_slice %841 {offsets = [0, 0], sizes = [8, 1], strides = [1, 1]} : vector<8x32xf32> to vector<8x1xf32>
    %878 = tpu.concatenate %876, %877 in 1 : vector<8x31xf32>, vector<8x1xf32> -> vector<8x32xf32>
    %879 = vector.broadcast %875 : vector<1x32xf32> to vector<8x32xf32>
    %880 = arith.mulf %879, %878 : vector<8x32xf32>
    %c6_484 = arith.constant 6 : index
    %c0_485 = arith.constant 0 : index
    %c0_486 = arith.constant 0 : index
    %881 = vector.load %arg15[%c6_484, %c0_485, %c0_486] : memref<9x1x32xf32, #tpu.memory_space<vmem>>, vector<1x1x32xf32>
    %882 = vector.shape_cast %881 : vector<1x1x32xf32> to vector<1x32xf32>
    %883 = vector.extract_strided_slice %841 {offsets = [0, 3], sizes = [8, 29], strides = [1, 1]} : vector<8x32xf32> to vector<8x29xf32>
    %884 = vector.extract_strided_slice %841 {offsets = [0, 0], sizes = [8, 3], strides = [1, 1]} : vector<8x32xf32> to vector<8x3xf32>
    %885 = tpu.concatenate %883, %884 in 1 : vector<8x29xf32>, vector<8x3xf32> -> vector<8x32xf32>
    %886 = vector.broadcast %882 : vector<1x32xf32> to vector<8x32xf32>
    %887 = arith.mulf %886, %885 : vector<8x32xf32>
    %c7_487 = arith.constant 7 : index
    %c0_488 = arith.constant 0 : index
    %c0_489 = arith.constant 0 : index
    %888 = vector.load %arg15[%c7_487, %c0_488, %c0_489] : memref<9x1x32xf32, #tpu.memory_space<vmem>>, vector<1x1x32xf32>
    %889 = vector.shape_cast %888 : vector<1x1x32xf32> to vector<1x32xf32>
    %890 = vector.extract_strided_slice %841 {offsets = [0, 4], sizes = [8, 28], strides = [1, 1]} : vector<8x32xf32> to vector<8x28xf32>
    %891 = vector.extract_strided_slice %841 {offsets = [0, 0], sizes = [8, 4], strides = [1, 1]} : vector<8x32xf32> to vector<8x4xf32>
    %892 = tpu.concatenate %890, %891 in 1 : vector<8x28xf32>, vector<8x4xf32> -> vector<8x32xf32>
    %893 = vector.broadcast %889 : vector<1x32xf32> to vector<8x32xf32>
    %894 = arith.mulf %893, %892 : vector<8x32xf32>
    %c8_490 = arith.constant 8 : index
    %c0_491 = arith.constant 0 : index
    %c0_492 = arith.constant 0 : index
    %895 = vector.load %arg15[%c8_490, %c0_491, %c0_492] : memref<9x1x32xf32, #tpu.memory_space<vmem>>, vector<1x1x32xf32>
    %896 = vector.shape_cast %895 : vector<1x1x32xf32> to vector<1x32xf32>
    %897 = vector.extract_strided_slice %841 {offsets = [0, 5], sizes = [8, 27], strides = [1, 1]} : vector<8x32xf32> to vector<8x27xf32>
    %898 = vector.extract_strided_slice %841 {offsets = [0, 0], sizes = [8, 5], strides = [1, 1]} : vector<8x32xf32> to vector<8x5xf32>
    %899 = tpu.concatenate %897, %898 in 1 : vector<8x27xf32>, vector<8x5xf32> -> vector<8x32xf32>
    %900 = vector.broadcast %896 : vector<1x32xf32> to vector<8x32xf32>
    %901 = arith.mulf %900, %899 : vector<8x32xf32>
    %902 = tpu.concatenate %848, %855, %862, %869, %873, %880, %887, %894, %901 in 0 : vector<8x32xf32>, vector<8x32xf32>, vector<8x32xf32>, vector<8x32xf32>, vector<8x32xf32>, vector<8x32xf32>, vector<8x32xf32>, vector<8x32xf32>, vector<8x32xf32> -> vector<72x32xf32>
    %c6_493 = arith.constant 6 : index
    %c0_494 = arith.constant 0 : index
    %c0_495 = arith.constant 0 : index
    %903 = vector.load %arg6[%c6_493, %c0_494, %c0_495] : memref<9x8x72xf32, #tpu.memory_space<vmem>>, vector<1x8x72xf32>
    %904 = vector.shape_cast %903 : vector<1x8x72xf32> to vector<8x72xf32>
    %cst_496 = arith.constant dense<0.000000e+00> : vector<8x32xf32>
    %905 = tpu.matmul %904, %902, %cst_496 {dimension_numbers = #tpu.dot_dimension_numbers<[1], [0], [0], [1], [0, 0, 1, 1], [], []>} : vector<8x72xf32>, vector<72x32xf32>, vector<8x32xf32> -> vector<8x32xf32>
    %c6_497 = arith.constant 6 : index
    %c0_498 = arith.constant 0 : index
    %c0_499 = arith.constant 0 : index
    %906 = vector.load %arg7[%c6_497, %c0_498, %c0_499] : memref<9x8x1xf32, #tpu.memory_space<vmem>>, vector<1x8x1xf32>
    %907 = vector.shape_cast %906 : vector<1x8x1xf32> to vector<8x1xf32>
    %908 = vector.broadcast %907 : vector<8x1xf32> to vector<8x32xf32>
    %909 = arith.mulf %905, %908 : vector<8x32xf32>
    %c6_500 = arith.constant 6 : index
    %c0_501 = arith.constant 0 : index
    %c0_502 = arith.constant 0 : index
    %910 = vector.load %arg8[%c6_500, %c0_501, %c0_502] : memref<9x8x1xf32, #tpu.memory_space<vmem>>, vector<1x8x1xf32>
    %911 = vector.shape_cast %910 : vector<1x8x1xf32> to vector<8x1xf32>
    %912 = vector.broadcast %911 : vector<8x1xf32> to vector<8x32xf32>
    %913 = arith.addf %909, %912 : vector<8x32xf32>
    %cst_503 = arith.constant 0.000000e+00 : f32
    %914 = vector.broadcast %cst_503 : f32 to vector<8x32xf32>
    %915 = arith.maximumf %913, %914 : vector<8x32xf32>
    %c6_504 = arith.constant 6 : index
    %c0_505 = arith.constant 0 : index
    %c0_506 = arith.constant 0 : index
    %916 = vector.load %arg9[%c6_504, %c0_505, %c0_506] : memref<9x8x8xf32, #tpu.memory_space<vmem>>, vector<1x8x8xf32>
    %917 = vector.shape_cast %916 : vector<1x8x8xf32> to vector<8x8xf32>
    %cst_507 = arith.constant dense<0.000000e+00> : vector<8x32xf32>
    %918 = tpu.matmul %917, %915, %cst_507 {dimension_numbers = #tpu.dot_dimension_numbers<[1], [0], [0], [1], [0, 0, 1, 1], [], []>} : vector<8x8xf32>, vector<8x32xf32>, vector<8x32xf32> -> vector<8x32xf32>
    %919 = arith.addf %918, %818 : vector<8x32xf32>
    %c0_508 = arith.constant 0 : index
    %c0_509 = arith.constant 0 : index
    %920 = vector.load %arg18[%c0_508, %c0_509] : memref<32x128xf32, #tpu.memory_space<vmem>>, vector<32x128xf32>
    %cst_510 = arith.constant dense<0.000000e+00> : vector<8x128xf32>
    %921 = tpu.matmul %919, %920, %cst_510 {dimension_numbers = #tpu.dot_dimension_numbers<[1], [0], [0], [1], [0, 0, 1, 1], [], []>} : vector<8x32xf32>, vector<32x128xf32>, vector<8x128xf32> -> vector<8x128xf32>
    %922 = arith.addf %921, %510 : vector<8x128xf32>
    %923 = arith.addf %922, %611 : vector<8x128xf32>
    %c7_511 = arith.constant 7 : index
    %c0_512 = arith.constant 0 : index
    %c0_513 = arith.constant 0 : index
    %924 = vector.load %arg1[%c7_511, %c0_512, %c0_513] : memref<9x8x1xf32, #tpu.memory_space<vmem>>, vector<1x8x1xf32>
    %925 = vector.shape_cast %924 : vector<1x8x1xf32> to vector<8x1xf32>
    %926 = vector.broadcast %925 : vector<8x1xf32> to vector<8x128xf32>
    %927 = arith.mulf %923, %926 : vector<8x128xf32>
    %c7_514 = arith.constant 7 : index
    %c0_515 = arith.constant 0 : index
    %c0_516 = arith.constant 0 : index
    %928 = vector.load %arg2[%c7_514, %c0_515, %c0_516] : memref<9x8x1xf32, #tpu.memory_space<vmem>>, vector<1x8x1xf32>
    %929 = vector.shape_cast %928 : vector<1x8x1xf32> to vector<8x1xf32>
    %930 = vector.broadcast %929 : vector<8x1xf32> to vector<8x128xf32>
    %931 = arith.addf %927, %930 : vector<8x128xf32>
    %cst_517 = arith.constant 0.000000e+00 : f32
    %932 = vector.broadcast %cst_517 : f32 to vector<8x128xf32>
    %933 = arith.maximumf %931, %932 : vector<8x128xf32>
    %c7_518 = arith.constant 7 : index
    %c0_519 = arith.constant 0 : index
    %c0_520 = arith.constant 0 : index
    %934 = vector.load %arg3[%c7_518, %c0_519, %c0_520] : memref<9x8x8xf32, #tpu.memory_space<vmem>>, vector<1x8x8xf32>
    %935 = vector.shape_cast %934 : vector<1x8x8xf32> to vector<8x8xf32>
    %cst_521 = arith.constant dense<0.000000e+00> : vector<8x128xf32>
    %936 = tpu.matmul %935, %933, %cst_521 {dimension_numbers = #tpu.dot_dimension_numbers<[1], [0], [0], [1], [0, 0, 1, 1], [], []>} : vector<8x8xf32>, vector<8x128xf32>, vector<8x128xf32> -> vector<8x128xf32>
    %c7_522 = arith.constant 7 : index
    %c0_523 = arith.constant 0 : index
    %c0_524 = arith.constant 0 : index
    %937 = vector.load %arg4[%c7_522, %c0_523, %c0_524] : memref<9x8x1xf32, #tpu.memory_space<vmem>>, vector<1x8x1xf32>
    %938 = vector.shape_cast %937 : vector<1x8x1xf32> to vector<8x1xf32>
    %939 = vector.broadcast %938 : vector<8x1xf32> to vector<8x128xf32>
    %940 = arith.mulf %936, %939 : vector<8x128xf32>
    %c7_525 = arith.constant 7 : index
    %c0_526 = arith.constant 0 : index
    %c0_527 = arith.constant 0 : index
    %941 = vector.load %arg5[%c7_525, %c0_526, %c0_527] : memref<9x8x1xf32, #tpu.memory_space<vmem>>, vector<1x8x1xf32>
    %942 = vector.shape_cast %941 : vector<1x8x1xf32> to vector<8x1xf32>
    %943 = vector.broadcast %942 : vector<8x1xf32> to vector<8x128xf32>
    %944 = arith.addf %940, %943 : vector<8x128xf32>
    %cst_528 = arith.constant 0.000000e+00 : f32
    %945 = vector.broadcast %cst_528 : f32 to vector<8x128xf32>
    %946 = arith.maximumf %944, %945 : vector<8x128xf32>
    %c0_529 = arith.constant 0 : index
    %c0_530 = arith.constant 0 : index
    %c0_531 = arith.constant 0 : index
    %947 = vector.load %arg14[%c0_529, %c0_530, %c0_531] : memref<9x1x128xf32, #tpu.memory_space<vmem>>, vector<1x1x128xf32>
    %948 = vector.shape_cast %947 : vector<1x1x128xf32> to vector<1x128xf32>
    %949 = vector.extract_strided_slice %946 {offsets = [0, 119], sizes = [8, 9], strides = [1, 1]} : vector<8x128xf32> to vector<8x9xf32>
    %950 = vector.extract_strided_slice %946 {offsets = [0, 0], sizes = [8, 119], strides = [1, 1]} : vector<8x128xf32> to vector<8x119xf32>
    %951 = tpu.concatenate %949, %950 in 1 : vector<8x9xf32>, vector<8x119xf32> -> vector<8x128xf32>
    %952 = vector.broadcast %948 : vector<1x128xf32> to vector<8x128xf32>
    %953 = arith.mulf %952, %951 : vector<8x128xf32>
    %c1_532 = arith.constant 1 : index
    %c0_533 = arith.constant 0 : index
    %c0_534 = arith.constant 0 : index
    %954 = vector.load %arg14[%c1_532, %c0_533, %c0_534] : memref<9x1x128xf32, #tpu.memory_space<vmem>>, vector<1x1x128xf32>
    %955 = vector.shape_cast %954 : vector<1x1x128xf32> to vector<1x128xf32>
    %956 = vector.extract_strided_slice %946 {offsets = [0, 120], sizes = [8, 8], strides = [1, 1]} : vector<8x128xf32> to vector<8x8xf32>
    %957 = vector.extract_strided_slice %946 {offsets = [0, 0], sizes = [8, 120], strides = [1, 1]} : vector<8x128xf32> to vector<8x120xf32>
    %958 = tpu.concatenate %956, %957 in 1 : vector<8x8xf32>, vector<8x120xf32> -> vector<8x128xf32>
    %959 = vector.broadcast %955 : vector<1x128xf32> to vector<8x128xf32>
    %960 = arith.mulf %959, %958 : vector<8x128xf32>
    %c2_535 = arith.constant 2 : index
    %c0_536 = arith.constant 0 : index
    %c0_537 = arith.constant 0 : index
    %961 = vector.load %arg14[%c2_535, %c0_536, %c0_537] : memref<9x1x128xf32, #tpu.memory_space<vmem>>, vector<1x1x128xf32>
    %962 = vector.shape_cast %961 : vector<1x1x128xf32> to vector<1x128xf32>
    %963 = vector.extract_strided_slice %946 {offsets = [0, 121], sizes = [8, 7], strides = [1, 1]} : vector<8x128xf32> to vector<8x7xf32>
    %964 = vector.extract_strided_slice %946 {offsets = [0, 0], sizes = [8, 121], strides = [1, 1]} : vector<8x128xf32> to vector<8x121xf32>
    %965 = tpu.concatenate %963, %964 in 1 : vector<8x7xf32>, vector<8x121xf32> -> vector<8x128xf32>
    %966 = vector.broadcast %962 : vector<1x128xf32> to vector<8x128xf32>
    %967 = arith.mulf %966, %965 : vector<8x128xf32>
    %c3_538 = arith.constant 3 : index
    %c0_539 = arith.constant 0 : index
    %c0_540 = arith.constant 0 : index
    %968 = vector.load %arg14[%c3_538, %c0_539, %c0_540] : memref<9x1x128xf32, #tpu.memory_space<vmem>>, vector<1x1x128xf32>
    %969 = vector.shape_cast %968 : vector<1x1x128xf32> to vector<1x128xf32>
    %970 = vector.extract_strided_slice %946 {offsets = [0, 127], sizes = [8, 1], strides = [1, 1]} : vector<8x128xf32> to vector<8x1xf32>
    %971 = vector.extract_strided_slice %946 {offsets = [0, 0], sizes = [8, 127], strides = [1, 1]} : vector<8x128xf32> to vector<8x127xf32>
    %972 = tpu.concatenate %970, %971 in 1 : vector<8x1xf32>, vector<8x127xf32> -> vector<8x128xf32>
    %973 = vector.broadcast %969 : vector<1x128xf32> to vector<8x128xf32>
    %974 = arith.mulf %973, %972 : vector<8x128xf32>
    %c4_541 = arith.constant 4 : index
    %c0_542 = arith.constant 0 : index
    %c0_543 = arith.constant 0 : index
    %975 = vector.load %arg14[%c4_541, %c0_542, %c0_543] : memref<9x1x128xf32, #tpu.memory_space<vmem>>, vector<1x1x128xf32>
    %976 = vector.shape_cast %975 : vector<1x1x128xf32> to vector<1x128xf32>
    %977 = vector.broadcast %976 : vector<1x128xf32> to vector<8x128xf32>
    %978 = arith.mulf %977, %946 : vector<8x128xf32>
    %c5_544 = arith.constant 5 : index
    %c0_545 = arith.constant 0 : index
    %c0_546 = arith.constant 0 : index
    %979 = vector.load %arg14[%c5_544, %c0_545, %c0_546] : memref<9x1x128xf32, #tpu.memory_space<vmem>>, vector<1x1x128xf32>
    %980 = vector.shape_cast %979 : vector<1x1x128xf32> to vector<1x128xf32>
    %981 = vector.extract_strided_slice %946 {offsets = [0, 1], sizes = [8, 127], strides = [1, 1]} : vector<8x128xf32> to vector<8x127xf32>
    %982 = vector.extract_strided_slice %946 {offsets = [0, 0], sizes = [8, 1], strides = [1, 1]} : vector<8x128xf32> to vector<8x1xf32>
    %983 = tpu.concatenate %981, %982 in 1 : vector<8x127xf32>, vector<8x1xf32> -> vector<8x128xf32>
    %984 = vector.broadcast %980 : vector<1x128xf32> to vector<8x128xf32>
    %985 = arith.mulf %984, %983 : vector<8x128xf32>
    %c6_547 = arith.constant 6 : index
    %c0_548 = arith.constant 0 : index
    %c0_549 = arith.constant 0 : index
    %986 = vector.load %arg14[%c6_547, %c0_548, %c0_549] : memref<9x1x128xf32, #tpu.memory_space<vmem>>, vector<1x1x128xf32>
    %987 = vector.shape_cast %986 : vector<1x1x128xf32> to vector<1x128xf32>
    %988 = vector.extract_strided_slice %946 {offsets = [0, 7], sizes = [8, 121], strides = [1, 1]} : vector<8x128xf32> to vector<8x121xf32>
    %989 = vector.extract_strided_slice %946 {offsets = [0, 0], sizes = [8, 7], strides = [1, 1]} : vector<8x128xf32> to vector<8x7xf32>
    %990 = tpu.concatenate %988, %989 in 1 : vector<8x121xf32>, vector<8x7xf32> -> vector<8x128xf32>
    %991 = vector.broadcast %987 : vector<1x128xf32> to vector<8x128xf32>
    %992 = arith.mulf %991, %990 : vector<8x128xf32>
    %c7_550 = arith.constant 7 : index
    %c0_551 = arith.constant 0 : index
    %c0_552 = arith.constant 0 : index
    %993 = vector.load %arg14[%c7_550, %c0_551, %c0_552] : memref<9x1x128xf32, #tpu.memory_space<vmem>>, vector<1x1x128xf32>
    %994 = vector.shape_cast %993 : vector<1x1x128xf32> to vector<1x128xf32>
    %995 = vector.extract_strided_slice %946 {offsets = [0, 8], sizes = [8, 120], strides = [1, 1]} : vector<8x128xf32> to vector<8x120xf32>
    %996 = vector.extract_strided_slice %946 {offsets = [0, 0], sizes = [8, 8], strides = [1, 1]} : vector<8x128xf32> to vector<8x8xf32>
    %997 = tpu.concatenate %995, %996 in 1 : vector<8x120xf32>, vector<8x8xf32> -> vector<8x128xf32>
    %998 = vector.broadcast %994 : vector<1x128xf32> to vector<8x128xf32>
    %999 = arith.mulf %998, %997 : vector<8x128xf32>
    %c8_553 = arith.constant 8 : index
    %c0_554 = arith.constant 0 : index
    %c0_555 = arith.constant 0 : index
    %1000 = vector.load %arg14[%c8_553, %c0_554, %c0_555] : memref<9x1x128xf32, #tpu.memory_space<vmem>>, vector<1x1x128xf32>
    %1001 = vector.shape_cast %1000 : vector<1x1x128xf32> to vector<1x128xf32>
    %1002 = vector.extract_strided_slice %946 {offsets = [0, 9], sizes = [8, 119], strides = [1, 1]} : vector<8x128xf32> to vector<8x119xf32>
    %1003 = vector.extract_strided_slice %946 {offsets = [0, 0], sizes = [8, 9], strides = [1, 1]} : vector<8x128xf32> to vector<8x9xf32>
    %1004 = tpu.concatenate %1002, %1003 in 1 : vector<8x119xf32>, vector<8x9xf32> -> vector<8x128xf32>
    %1005 = vector.broadcast %1001 : vector<1x128xf32> to vector<8x128xf32>
    %1006 = arith.mulf %1005, %1004 : vector<8x128xf32>
    %1007 = tpu.concatenate %953, %960, %967, %974, %978, %985, %992, %999, %1006 in 0 : vector<8x128xf32>, vector<8x128xf32>, vector<8x128xf32>, vector<8x128xf32>, vector<8x128xf32>, vector<8x128xf32>, vector<8x128xf32>, vector<8x128xf32>, vector<8x128xf32> -> vector<72x128xf32>
    %c7_556 = arith.constant 7 : index
    %c0_557 = arith.constant 0 : index
    %c0_558 = arith.constant 0 : index
    %1008 = vector.load %arg6[%c7_556, %c0_557, %c0_558] : memref<9x8x72xf32, #tpu.memory_space<vmem>>, vector<1x8x72xf32>
    %1009 = vector.shape_cast %1008 : vector<1x8x72xf32> to vector<8x72xf32>
    %cst_559 = arith.constant dense<0.000000e+00> : vector<8x128xf32>
    %1010 = tpu.matmul %1009, %1007, %cst_559 {dimension_numbers = #tpu.dot_dimension_numbers<[1], [0], [0], [1], [0, 0, 1, 1], [], []>} : vector<8x72xf32>, vector<72x128xf32>, vector<8x128xf32> -> vector<8x128xf32>
    %c7_560 = arith.constant 7 : index
    %c0_561 = arith.constant 0 : index
    %c0_562 = arith.constant 0 : index
    %1011 = vector.load %arg7[%c7_560, %c0_561, %c0_562] : memref<9x8x1xf32, #tpu.memory_space<vmem>>, vector<1x8x1xf32>
    %1012 = vector.shape_cast %1011 : vector<1x8x1xf32> to vector<8x1xf32>
    %1013 = vector.broadcast %1012 : vector<8x1xf32> to vector<8x128xf32>
    %1014 = arith.mulf %1010, %1013 : vector<8x128xf32>
    %c7_563 = arith.constant 7 : index
    %c0_564 = arith.constant 0 : index
    %c0_565 = arith.constant 0 : index
    %1015 = vector.load %arg8[%c7_563, %c0_564, %c0_565] : memref<9x8x1xf32, #tpu.memory_space<vmem>>, vector<1x8x1xf32>
    %1016 = vector.shape_cast %1015 : vector<1x8x1xf32> to vector<8x1xf32>
    %1017 = vector.broadcast %1016 : vector<8x1xf32> to vector<8x128xf32>
    %1018 = arith.addf %1014, %1017 : vector<8x128xf32>
    %cst_566 = arith.constant 0.000000e+00 : f32
    %1019 = vector.broadcast %cst_566 : f32 to vector<8x128xf32>
    %1020 = arith.maximumf %1018, %1019 : vector<8x128xf32>
    %c7_567 = arith.constant 7 : index
    %c0_568 = arith.constant 0 : index
    %c0_569 = arith.constant 0 : index
    %1021 = vector.load %arg9[%c7_567, %c0_568, %c0_569] : memref<9x8x8xf32, #tpu.memory_space<vmem>>, vector<1x8x8xf32>
    %1022 = vector.shape_cast %1021 : vector<1x8x8xf32> to vector<8x8xf32>
    %cst_570 = arith.constant dense<0.000000e+00> : vector<8x128xf32>
    %1023 = tpu.matmul %1022, %1020, %cst_570 {dimension_numbers = #tpu.dot_dimension_numbers<[1], [0], [0], [1], [0, 0, 1, 1], [], []>} : vector<8x8xf32>, vector<8x128xf32>, vector<8x128xf32> -> vector<8x128xf32>
    %1024 = arith.addf %1023, %923 : vector<8x128xf32>
    %c0_571 = arith.constant 0 : index
    %c0_572 = arith.constant 0 : index
    %1025 = vector.load %arg19[%c0_571, %c0_572] : memref<128x512xf32, #tpu.memory_space<vmem>>, vector<128x512xf32>
    %cst_573 = arith.constant dense<0.000000e+00> : vector<8x512xf32>
    %1026 = tpu.matmul %1024, %1025, %cst_573 {dimension_numbers = #tpu.dot_dimension_numbers<[1], [0], [0], [1], [0, 0, 1, 1], [], []>} : vector<8x128xf32>, vector<128x512xf32>, vector<8x512xf32> -> vector<8x512xf32>
    %1027 = arith.addf %1026, %303 : vector<8x512xf32>
    %c0_574 = arith.constant 0 : index
    %c0_575 = arith.constant 0 : index
    %c0_576 = arith.constant 0 : index
    %1028 = vector.load %arg12[%c0_574, %c0_575, %c0_576] : memref<2x8x8xf32, #tpu.memory_space<vmem>>, vector<1x8x8xf32>
    %1029 = vector.shape_cast %1028 : vector<1x8x8xf32> to vector<8x8xf32>
    %c0_577 = arith.constant 0 : index
    %c0_578 = arith.constant 0 : index
    %c0_579 = arith.constant 0 : index
    %1030 = vector.load %arg10[%c0_577, %c0_578, %c0_579] : memref<2x8x1xf32, #tpu.memory_space<vmem>>, vector<1x8x1xf32>
    %1031 = vector.shape_cast %1030 : vector<1x8x1xf32> to vector<8x1xf32>
    %1032 = vector.broadcast %1031 : vector<8x1xf32> to vector<8x512xf32>
    %1033 = arith.mulf %1027, %1032 : vector<8x512xf32>
    %c0_580 = arith.constant 0 : index
    %c0_581 = arith.constant 0 : index
    %c0_582 = arith.constant 0 : index
    %1034 = vector.load %arg11[%c0_580, %c0_581, %c0_582] : memref<2x8x1xf32, #tpu.memory_space<vmem>>, vector<1x8x1xf32>
    %1035 = vector.shape_cast %1034 : vector<1x8x1xf32> to vector<8x1xf32>
    %1036 = vector.broadcast %1035 : vector<8x1xf32> to vector<8x512xf32>
    %1037 = arith.addf %1033, %1036 : vector<8x512xf32>
    %cst_583 = arith.constant 0.000000e+00 : f32
    %1038 = vector.broadcast %cst_583 : f32 to vector<8x512xf32>
    %1039 = arith.maximumf %1037, %1038 : vector<8x512xf32>
    %cst_584 = arith.constant dense<0.000000e+00> : vector<8x512xf32>
    %1040 = tpu.matmul %1029, %1039, %cst_584 {dimension_numbers = #tpu.dot_dimension_numbers<[1], [0], [0], [1], [0, 0, 1, 1], [], []>} : vector<8x8xf32>, vector<8x512xf32>, vector<8x512xf32> -> vector<8x512xf32>
    %c1_585 = arith.constant 1 : index
    %c0_586 = arith.constant 0 : index
    %c0_587 = arith.constant 0 : index
    %1041 = vector.load %arg12[%c1_585, %c0_586, %c0_587] : memref<2x8x8xf32, #tpu.memory_space<vmem>>, vector<1x8x8xf32>
    %1042 = vector.shape_cast %1041 : vector<1x8x8xf32> to vector<8x8xf32>
    %c1_588 = arith.constant 1 : index
    %c0_589 = arith.constant 0 : index
    %c0_590 = arith.constant 0 : index
    %1043 = vector.load %arg10[%c1_588, %c0_589, %c0_590] : memref<2x8x1xf32, #tpu.memory_space<vmem>>, vector<1x8x1xf32>
    %1044 = vector.shape_cast %1043 : vector<1x8x1xf32> to vector<8x1xf32>
    %1045 = vector.broadcast %1044 : vector<8x1xf32> to vector<8x512xf32>
    %1046 = arith.mulf %1040, %1045 : vector<8x512xf32>
    %c1_591 = arith.constant 1 : index
    %c0_592 = arith.constant 0 : index
    %c0_593 = arith.constant 0 : index
    %1047 = vector.load %arg11[%c1_591, %c0_592, %c0_593] : memref<2x8x1xf32, #tpu.memory_space<vmem>>, vector<1x8x1xf32>
    %1048 = vector.shape_cast %1047 : vector<1x8x1xf32> to vector<8x1xf32>
    %1049 = vector.broadcast %1048 : vector<8x1xf32> to vector<8x512xf32>
    %1050 = arith.addf %1046, %1049 : vector<8x512xf32>
    %cst_594 = arith.constant 0.000000e+00 : f32
    %1051 = vector.broadcast %cst_594 : f32 to vector<8x512xf32>
    %1052 = arith.maximumf %1050, %1051 : vector<8x512xf32>
    %cst_595 = arith.constant dense<0.000000e+00> : vector<8x512xf32>
    %1053 = tpu.matmul %1042, %1052, %cst_595 {dimension_numbers = #tpu.dot_dimension_numbers<[1], [0], [0], [1], [0, 0, 1, 1], [], []>} : vector<8x8xf32>, vector<8x512xf32>, vector<8x512xf32> -> vector<8x512xf32>
    %cst_596 = arith.constant 0.000000e+00 : f32
    %1054 = vector.broadcast %cst_596 : f32 to vector<8x512xf32>
    %1055 = arith.subf %1054, %1053 : vector<8x512xf32>
    %1056 = math.exp %1055 : vector<8x512xf32>
    %cst_597 = arith.constant 1.000000e+00 : f32
    %1057 = vector.broadcast %cst_597 : f32 to vector<8x512xf32>
    %1058 = arith.addf %1057, %1056 : vector<8x512xf32>
    %cst_598 = arith.constant 1.000000e+00 : f32
    %1059 = vector.broadcast %cst_598 : f32 to vector<8x512xf32>
    %1060 = arith.divf %1059, %1058 : vector<8x512xf32>
    %cst_599 = arith.constant 1.000000e+00 : f32
    %1061 = vector.broadcast %cst_599 : f32 to vector<8x512xf32>
    %1062 = arith.addf %1061, %1060 : vector<8x512xf32>
    %1063 = arith.mulf %1062, %303 : vector<8x512xf32>
    %c8_600 = arith.constant 8 : index
    %c0_601 = arith.constant 0 : index
    %c0_602 = arith.constant 0 : index
    %1064 = vector.load %arg1[%c8_600, %c0_601, %c0_602] : memref<9x8x1xf32, #tpu.memory_space<vmem>>, vector<1x8x1xf32>
    %1065 = vector.shape_cast %1064 : vector<1x8x1xf32> to vector<8x1xf32>
    %1066 = vector.broadcast %1065 : vector<8x1xf32> to vector<8x512xf32>
    %1067 = arith.mulf %1063, %1066 : vector<8x512xf32>
    %c8_603 = arith.constant 8 : index
    %c0_604 = arith.constant 0 : index
    %c0_605 = arith.constant 0 : index
    %1068 = vector.load %arg2[%c8_603, %c0_604, %c0_605] : memref<9x8x1xf32, #tpu.memory_space<vmem>>, vector<1x8x1xf32>
    %1069 = vector.shape_cast %1068 : vector<1x8x1xf32> to vector<8x1xf32>
    %1070 = vector.broadcast %1069 : vector<8x1xf32> to vector<8x512xf32>
    %1071 = arith.addf %1067, %1070 : vector<8x512xf32>
    %cst_606 = arith.constant 0.000000e+00 : f32
    %1072 = vector.broadcast %cst_606 : f32 to vector<8x512xf32>
    %1073 = arith.maximumf %1071, %1072 : vector<8x512xf32>
    %c8_607 = arith.constant 8 : index
    %c0_608 = arith.constant 0 : index
    %c0_609 = arith.constant 0 : index
    %1074 = vector.load %arg3[%c8_607, %c0_608, %c0_609] : memref<9x8x8xf32, #tpu.memory_space<vmem>>, vector<1x8x8xf32>
    %1075 = vector.shape_cast %1074 : vector<1x8x8xf32> to vector<8x8xf32>
    %cst_610 = arith.constant dense<0.000000e+00> : vector<8x512xf32>
    %1076 = tpu.matmul %1075, %1073, %cst_610 {dimension_numbers = #tpu.dot_dimension_numbers<[1], [0], [0], [1], [0, 0, 1, 1], [], []>} : vector<8x8xf32>, vector<8x512xf32>, vector<8x512xf32> -> vector<8x512xf32>
    %c8_611 = arith.constant 8 : index
    %c0_612 = arith.constant 0 : index
    %c0_613 = arith.constant 0 : index
    %1077 = vector.load %arg4[%c8_611, %c0_612, %c0_613] : memref<9x8x1xf32, #tpu.memory_space<vmem>>, vector<1x8x1xf32>
    %1078 = vector.shape_cast %1077 : vector<1x8x1xf32> to vector<8x1xf32>
    %1079 = vector.broadcast %1078 : vector<8x1xf32> to vector<8x512xf32>
    %1080 = arith.mulf %1076, %1079 : vector<8x512xf32>
    %c8_614 = arith.constant 8 : index
    %c0_615 = arith.constant 0 : index
    %c0_616 = arith.constant 0 : index
    %1081 = vector.load %arg5[%c8_614, %c0_615, %c0_616] : memref<9x8x1xf32, #tpu.memory_space<vmem>>, vector<1x8x1xf32>
    %1082 = vector.shape_cast %1081 : vector<1x8x1xf32> to vector<8x1xf32>
    %1083 = vector.broadcast %1082 : vector<8x1xf32> to vector<8x512xf32>
    %1084 = arith.addf %1080, %1083 : vector<8x512xf32>
    %cst_617 = arith.constant 0.000000e+00 : f32
    %1085 = vector.broadcast %cst_617 : f32 to vector<8x512xf32>
    %1086 = arith.maximumf %1084, %1085 : vector<8x512xf32>
    %c0_618 = arith.constant 0 : index
    %c0_619 = arith.constant 0 : index
    %c0_620 = arith.constant 0 : index
    %1087 = vector.load %arg13[%c0_618, %c0_619, %c0_620] : memref<9x1x512xf32, #tpu.memory_space<vmem>>, vector<1x1x512xf32>
    %1088 = vector.shape_cast %1087 : vector<1x1x512xf32> to vector<1x512xf32>
    %1089 = vector.extract_strided_slice %1086 {offsets = [0, 495], sizes = [8, 17], strides = [1, 1]} : vector<8x512xf32> to vector<8x17xf32>
    %1090 = vector.extract_strided_slice %1086 {offsets = [0, 0], sizes = [8, 495], strides = [1, 1]} : vector<8x512xf32> to vector<8x495xf32>
    %1091 = tpu.concatenate %1089, %1090 in 1 : vector<8x17xf32>, vector<8x495xf32> -> vector<8x512xf32>
    %1092 = vector.broadcast %1088 : vector<1x512xf32> to vector<8x512xf32>
    %1093 = arith.mulf %1092, %1091 : vector<8x512xf32>
    %c1_621 = arith.constant 1 : index
    %c0_622 = arith.constant 0 : index
    %c0_623 = arith.constant 0 : index
    %1094 = vector.load %arg13[%c1_621, %c0_622, %c0_623] : memref<9x1x512xf32, #tpu.memory_space<vmem>>, vector<1x1x512xf32>
    %1095 = vector.shape_cast %1094 : vector<1x1x512xf32> to vector<1x512xf32>
    %1096 = vector.extract_strided_slice %1086 {offsets = [0, 496], sizes = [8, 16], strides = [1, 1]} : vector<8x512xf32> to vector<8x16xf32>
    %1097 = vector.extract_strided_slice %1086 {offsets = [0, 0], sizes = [8, 496], strides = [1, 1]} : vector<8x512xf32> to vector<8x496xf32>
    %1098 = tpu.concatenate %1096, %1097 in 1 : vector<8x16xf32>, vector<8x496xf32> -> vector<8x512xf32>
    %1099 = vector.broadcast %1095 : vector<1x512xf32> to vector<8x512xf32>
    %1100 = arith.mulf %1099, %1098 : vector<8x512xf32>
    %c2_624 = arith.constant 2 : index
    %c0_625 = arith.constant 0 : index
    %c0_626 = arith.constant 0 : index
    %1101 = vector.load %arg13[%c2_624, %c0_625, %c0_626] : memref<9x1x512xf32, #tpu.memory_space<vmem>>, vector<1x1x512xf32>
    %1102 = vector.shape_cast %1101 : vector<1x1x512xf32> to vector<1x512xf32>
    %1103 = vector.extract_strided_slice %1086 {offsets = [0, 497], sizes = [8, 15], strides = [1, 1]} : vector<8x512xf32> to vector<8x15xf32>
    %1104 = vector.extract_strided_slice %1086 {offsets = [0, 0], sizes = [8, 497], strides = [1, 1]} : vector<8x512xf32> to vector<8x497xf32>
    %1105 = tpu.concatenate %1103, %1104 in 1 : vector<8x15xf32>, vector<8x497xf32> -> vector<8x512xf32>
    %1106 = vector.broadcast %1102 : vector<1x512xf32> to vector<8x512xf32>
    %1107 = arith.mulf %1106, %1105 : vector<8x512xf32>
    %c3_627 = arith.constant 3 : index
    %c0_628 = arith.constant 0 : index
    %c0_629 = arith.constant 0 : index
    %1108 = vector.load %arg13[%c3_627, %c0_628, %c0_629] : memref<9x1x512xf32, #tpu.memory_space<vmem>>, vector<1x1x512xf32>
    %1109 = vector.shape_cast %1108 : vector<1x1x512xf32> to vector<1x512xf32>
    %1110 = vector.extract_strided_slice %1086 {offsets = [0, 511], sizes = [8, 1], strides = [1, 1]} : vector<8x512xf32> to vector<8x1xf32>
    %1111 = vector.extract_strided_slice %1086 {offsets = [0, 0], sizes = [8, 511], strides = [1, 1]} : vector<8x512xf32> to vector<8x511xf32>
    %1112 = tpu.concatenate %1110, %1111 in 1 : vector<8x1xf32>, vector<8x511xf32> -> vector<8x512xf32>
    %1113 = vector.broadcast %1109 : vector<1x512xf32> to vector<8x512xf32>
    %1114 = arith.mulf %1113, %1112 : vector<8x512xf32>
    %c4_630 = arith.constant 4 : index
    %c0_631 = arith.constant 0 : index
    %c0_632 = arith.constant 0 : index
    %1115 = vector.load %arg13[%c4_630, %c0_631, %c0_632] : memref<9x1x512xf32, #tpu.memory_space<vmem>>, vector<1x1x512xf32>
    %1116 = vector.shape_cast %1115 : vector<1x1x512xf32> to vector<1x512xf32>
    %1117 = vector.broadcast %1116 : vector<1x512xf32> to vector<8x512xf32>
    %1118 = arith.mulf %1117, %1086 : vector<8x512xf32>
    %c5_633 = arith.constant 5 : index
    %c0_634 = arith.constant 0 : index
    %c0_635 = arith.constant 0 : index
    %1119 = vector.load %arg13[%c5_633, %c0_634, %c0_635] : memref<9x1x512xf32, #tpu.memory_space<vmem>>, vector<1x1x512xf32>
    %1120 = vector.shape_cast %1119 : vector<1x1x512xf32> to vector<1x512xf32>
    %1121 = vector.extract_strided_slice %1086 {offsets = [0, 1], sizes = [8, 511], strides = [1, 1]} : vector<8x512xf32> to vector<8x511xf32>
    %1122 = vector.extract_strided_slice %1086 {offsets = [0, 0], sizes = [8, 1], strides = [1, 1]} : vector<8x512xf32> to vector<8x1xf32>
    %1123 = tpu.concatenate %1121, %1122 in 1 : vector<8x511xf32>, vector<8x1xf32> -> vector<8x512xf32>
    %1124 = vector.broadcast %1120 : vector<1x512xf32> to vector<8x512xf32>
    %1125 = arith.mulf %1124, %1123 : vector<8x512xf32>
    %c6_636 = arith.constant 6 : index
    %c0_637 = arith.constant 0 : index
    %c0_638 = arith.constant 0 : index
    %1126 = vector.load %arg13[%c6_636, %c0_637, %c0_638] : memref<9x1x512xf32, #tpu.memory_space<vmem>>, vector<1x1x512xf32>
    %1127 = vector.shape_cast %1126 : vector<1x1x512xf32> to vector<1x512xf32>
    %1128 = vector.extract_strided_slice %1086 {offsets = [0, 15], sizes = [8, 497], strides = [1, 1]} : vector<8x512xf32> to vector<8x497xf32>
    %1129 = vector.extract_strided_slice %1086 {offsets = [0, 0], sizes = [8, 15], strides = [1, 1]} : vector<8x512xf32> to vector<8x15xf32>
    %1130 = tpu.concatenate %1128, %1129 in 1 : vector<8x497xf32>, vector<8x15xf32> -> vector<8x512xf32>
    %1131 = vector.broadcast %1127 : vector<1x512xf32> to vector<8x512xf32>
    %1132 = arith.mulf %1131, %1130 : vector<8x512xf32>
    %c7_639 = arith.constant 7 : index
    %c0_640 = arith.constant 0 : index
    %c0_641 = arith.constant 0 : index
    %1133 = vector.load %arg13[%c7_639, %c0_640, %c0_641] : memref<9x1x512xf32, #tpu.memory_space<vmem>>, vector<1x1x512xf32>
    %1134 = vector.shape_cast %1133 : vector<1x1x512xf32> to vector<1x512xf32>
    %1135 = vector.extract_strided_slice %1086 {offsets = [0, 16], sizes = [8, 496], strides = [1, 1]} : vector<8x512xf32> to vector<8x496xf32>
    %1136 = vector.extract_strided_slice %1086 {offsets = [0, 0], sizes = [8, 16], strides = [1, 1]} : vector<8x512xf32> to vector<8x16xf32>
    %1137 = tpu.concatenate %1135, %1136 in 1 : vector<8x496xf32>, vector<8x16xf32> -> vector<8x512xf32>
    %1138 = vector.broadcast %1134 : vector<1x512xf32> to vector<8x512xf32>
    %1139 = arith.mulf %1138, %1137 : vector<8x512xf32>
    %c8_642 = arith.constant 8 : index
    %c0_643 = arith.constant 0 : index
    %c0_644 = arith.constant 0 : index
    %1140 = vector.load %arg13[%c8_642, %c0_643, %c0_644] : memref<9x1x512xf32, #tpu.memory_space<vmem>>, vector<1x1x512xf32>
    %1141 = vector.shape_cast %1140 : vector<1x1x512xf32> to vector<1x512xf32>
    %1142 = vector.extract_strided_slice %1086 {offsets = [0, 17], sizes = [8, 495], strides = [1, 1]} : vector<8x512xf32> to vector<8x495xf32>
    %1143 = vector.extract_strided_slice %1086 {offsets = [0, 0], sizes = [8, 17], strides = [1, 1]} : vector<8x512xf32> to vector<8x17xf32>
    %1144 = tpu.concatenate %1142, %1143 in 1 : vector<8x495xf32>, vector<8x17xf32> -> vector<8x512xf32>
    %1145 = vector.broadcast %1141 : vector<1x512xf32> to vector<8x512xf32>
    %1146 = arith.mulf %1145, %1144 : vector<8x512xf32>
    %1147 = tpu.concatenate %1093, %1100, %1107, %1114, %1118, %1125, %1132, %1139, %1146 in 0 : vector<8x512xf32>, vector<8x512xf32>, vector<8x512xf32>, vector<8x512xf32>, vector<8x512xf32>, vector<8x512xf32>, vector<8x512xf32>, vector<8x512xf32>, vector<8x512xf32> -> vector<72x512xf32>
    %c8_645 = arith.constant 8 : index
    %c0_646 = arith.constant 0 : index
    %c0_647 = arith.constant 0 : index
    %1148 = vector.load %arg6[%c8_645, %c0_646, %c0_647] : memref<9x8x72xf32, #tpu.memory_space<vmem>>, vector<1x8x72xf32>
    %1149 = vector.shape_cast %1148 : vector<1x8x72xf32> to vector<8x72xf32>
    %cst_648 = arith.constant dense<0.000000e+00> : vector<8x512xf32>
    %1150 = tpu.matmul %1149, %1147, %cst_648 {dimension_numbers = #tpu.dot_dimension_numbers<[1], [0], [0], [1], [0, 0, 1, 1], [], []>} : vector<8x72xf32>, vector<72x512xf32>, vector<8x512xf32> -> vector<8x512xf32>
    %c8_649 = arith.constant 8 : index
    %c0_650 = arith.constant 0 : index
    %c0_651 = arith.constant 0 : index
    %1151 = vector.load %arg7[%c8_649, %c0_650, %c0_651] : memref<9x8x1xf32, #tpu.memory_space<vmem>>, vector<1x8x1xf32>
    %1152 = vector.shape_cast %1151 : vector<1x8x1xf32> to vector<8x1xf32>
    %1153 = vector.broadcast %1152 : vector<8x1xf32> to vector<8x512xf32>
    %1154 = arith.mulf %1150, %1153 : vector<8x512xf32>
    %c8_652 = arith.constant 8 : index
    %c0_653 = arith.constant 0 : index
    %c0_654 = arith.constant 0 : index
    %1155 = vector.load %arg8[%c8_652, %c0_653, %c0_654] : memref<9x8x1xf32, #tpu.memory_space<vmem>>, vector<1x8x1xf32>
    %1156 = vector.shape_cast %1155 : vector<1x8x1xf32> to vector<8x1xf32>
    %1157 = vector.broadcast %1156 : vector<8x1xf32> to vector<8x512xf32>
    %1158 = arith.addf %1154, %1157 : vector<8x512xf32>
    %cst_655 = arith.constant 0.000000e+00 : f32
    %1159 = vector.broadcast %cst_655 : f32 to vector<8x512xf32>
    %1160 = arith.maximumf %1158, %1159 : vector<8x512xf32>
    %c8_656 = arith.constant 8 : index
    %c0_657 = arith.constant 0 : index
    %c0_658 = arith.constant 0 : index
    %1161 = vector.load %arg9[%c8_656, %c0_657, %c0_658] : memref<9x8x8xf32, #tpu.memory_space<vmem>>, vector<1x8x8xf32>
    %1162 = vector.shape_cast %1161 : vector<1x8x8xf32> to vector<8x8xf32>
    %cst_659 = arith.constant dense<0.000000e+00> : vector<8x512xf32>
    %1163 = tpu.matmul %1162, %1160, %cst_659 {dimension_numbers = #tpu.dot_dimension_numbers<[1], [0], [0], [1], [0, 0, 1, 1], [], []>} : vector<8x8xf32>, vector<8x512xf32>, vector<8x512xf32> -> vector<8x512xf32>
    %1164 = arith.addf %1163, %1063 : vector<8x512xf32>
    %c0_660 = arith.constant 0 : index
    %c0_661 = arith.constant 0 : index
    %1165 = vector.load %arg20[%c0_660, %c0_661] : memref<8x512xf32, #tpu.memory_space<vmem>>, vector<8x512xf32>
    tpu.vector_store %arg20[%c0_660, %c0_661], %1164 {strides = array<i32>} : memref<8x512xf32, #tpu.memory_space<vmem>>, vector<8x512xf32>,
    return
  }
}

</mosaic_0001>

<llo_original>
// kernel: attention_module_stage2.1
$region0: #{attention_module_stage2.1}
  #allocation0 [shape = 'u32[]', space=smem, size = 0x4, offset = 0x4, fixed_abs, tag = 'smem constant byte address 0x4 - core index']
  #allocation1 [shape = 'u32[72,128]{1,0:T(1,128)}', space=vmem, size = 0x9000, scoped, tag = 'internal scratch']
  %s0 = inlined_call_operand.vmem [shape: f32[8,512], index: 0, kind: input, shape index: {}]
  %s1 = inlined_call_operand.vmem [shape: f32[9,8,1], index: 1, kind: input, shape index: {}]
  %s2 = inlined_call_operand.vmem [shape: f32[9,8,1], index: 2, kind: input, shape index: {}]
  %s3 = inlined_call_operand.vmem [shape: f32[9,8,8], index: 3, kind: input, shape index: {}]
  %s4 = inlined_call_operand.vmem [shape: f32[9,8,1], index: 4, kind: input, shape index: {}]
  %s5 = inlined_call_operand.vmem [shape: f32[9,8,1], index: 5, kind: input, shape index: {}]
  %s6 = inlined_call_operand.vmem [shape: f32[9,8,72], index: 6, kind: input, shape index: {}]
  %s7 = inlined_call_operand.vmem [shape: f32[9,8,1], index: 7, kind: input, shape index: {}]
  %s8 = inlined_call_operand.vmem [shape: f32[9,8,1], index: 8, kind: input, shape index: {}]
  %s9 = inlined_call_operand.vmem [shape: f32[9,8,8], index: 9, kind: input, shape index: {}]
  %s10 = inlined_call_operand.vmem [shape: f32[2,8,1], index: 10, kind: input, shape index: {}]
  %s11 = inlined_call_operand.vmem [shape: f32[2,8,1], index: 11, kind: input, shape index: {}]
  %s12 = inlined_call_operand.vmem [shape: f32[2,8,8], index: 12, kind: input, shape index: {}]
  %s13 = inlined_call_operand.vmem [shape: f32[9,1,512], index: 13, kind: input, shape index: {}]
  %s14 = inlined_call_operand.vmem [shape: f32[9,1,128], index: 14, kind: input, shape index: {}]
  %s15 = inlined_call_operand.vmem [shape: f32[9,1,32], index: 15, kind: input, shape index: {}]
  %s16 = inlined_call_operand.vmem [shape: f32[512,128], index: 16, kind: input, shape index: {}]
  %s17 = inlined_call_operand.vmem [shape: f32[128,32], index: 17, kind: input, shape index: {}]
  %s18 = inlined_call_operand.vmem [shape: f32[32,128], index: 18, kind: input, shape index: {}]
  %s19 = inlined_call_operand.hbm [shape: f32[128,512], index: 19, kind: input, shape index: {}]
  %s20 = inlined_call_operand.vmem [shape: f32[8,512], index: 20, kind: output, shape index: {}]
  %s21 = sld [smem:[#allocation0]]
  $region94: #{attention_module_stage2.1} parent=0
    _
  %s23 = ssub.s32 1, %s21
  %s24 = scalar_select 0, %s23, %s21
  $region1: #{attention_module_stage2.1} parent=0
    #allocation2 [shape = 'u8[262144]{0}', space=vmem, size = 0x40000, scoped, tag = 'input window, operand 19, single buffered']
    #allocation3 [shape = 's32[1]{0}', space=sflag, size = 0x4, scoped, tag = 'scoped memory for attention_module_stage2.1']
    %25 = vsyncpa [#allocation3], 0
    // Predicated region
    $region2: #{attention_module_stage2.1} parent=1 // pred_check
      _
    $region3: #{attention_module_stage2.1} parent=1 // pred_check_branch
      %27 = sbr.rel (0) target = $region5
    $region4: #{attention_module_stage2.1} parent=1 // pred_region
      _
    $region5: #{attention_module_stage2.1} parent=1 // pred_fallthru
      _
    // Predicated region
    $region6: #{attention_module_stage2.1} parent=1 // pred_check
      _
    $region7: #{attention_module_stage2.1} parent=1 // pred_check_branch
      %29 = sbr.rel (0) target = $region9
    $region8: #{attention_module_stage2.1} parent=1 // pred_region
      _
    $region9: #{attention_module_stage2.1} parent=1 // pred_fallthru
      _
    // Predicated region
    $region10: #{attention_module_stage2.1} parent=1 // pred_check
      _
    $region11: #{attention_module_stage2.1} parent=1 // pred_check_branch
      %31 = sbr.rel (0) target = $region13
    $region12: #{attention_module_stage2.1} parent=1 // pred_region
      _
    $region13: #{attention_module_stage2.1} parent=1 // pred_fallthru
      _
    // Predicated region
    $region14: #{attention_module_stage2.1} parent=1 // pred_check
      _
    $region15: #{attention_module_stage2.1} parent=1 // pred_check_branch
      %33 = sbr.rel (0) target = $region17
    $region16: #{attention_module_stage2.1} parent=1 // pred_region
      _
    $region17: #{attention_module_stage2.1} parent=1 // pred_fallthru
      _
    // Predicated region
    $region18: #{attention_module_stage2.1} parent=1 // pred_check
      _
    $region19: #{attention_module_stage2.1} parent=1 // pred_check_branch
      %35 = sbr.rel (0) target = $region21
    $region20: #{attention_module_stage2.1} parent=1 // pred_region
      _
    $region21: #{attention_module_stage2.1} parent=1 // pred_fallthru
      _
    // Predicated region
    $region22: #{attention_module_stage2.1} parent=1 // pred_check
      _
    $region23: #{attention_module_stage2.1} parent=1 // pred_check_branch
      %37 = sbr.rel (0) target = $region25
    $region24: #{attention_module_stage2.1} parent=1 // pred_region
      _
    $region25: #{attention_module_stage2.1} parent=1 // pred_fallthru
      _
    // Predicated region
    $region26: #{attention_module_stage2.1} parent=1 // pred_check
      _
    $region27: #{attention_module_stage2.1} parent=1 // pred_check_branch
      %39 = sbr.rel (0) target = $region29
    $region28: #{attention_module_stage2.1} parent=1 // pred_region
      _
    $region29: #{attention_module_stage2.1} parent=1 // pred_fallthru
      _
    // Predicated region
    $region30: #{attention_module_stage2.1} parent=1 // pred_check
      _
    $region31: #{attention_module_stage2.1} parent=1 // pred_check_branch
      %41 = sbr.rel (0) target = $region33
    $region32: #{attention_module_stage2.1} parent=1 // pred_region
      _
    $region33: #{attention_module_stage2.1} parent=1 // pred_fallthru
      _
    // Predicated region
    $region34: #{attention_module_stage2.1} parent=1 // pred_check
      _
    $region35: #{attention_module_stage2.1} parent=1 // pred_check_branch
      %43 = sbr.rel (0) target = $region37
    $region36: #{attention_module_stage2.1} parent=1 // pred_region
      _
    $region37: #{attention_module_stage2.1} parent=1 // pred_fallthru
      _
    // Predicated region
    $region38: #{attention_module_stage2.1} parent=1 // pred_check
      _
    $region39: #{attention_module_stage2.1} parent=1 // pred_check_branch
      %45 = sbr.rel (0) target = $region41
    $region40: #{attention_module_stage2.1} parent=1 // pred_region
      _
    $region41: #{attention_module_stage2.1} parent=1 // pred_fallthru
      _
    // Predicated region
    $region42: #{attention_module_stage2.1} parent=1 // pred_check
      _
    $region43: #{attention_module_stage2.1} parent=1 // pred_check_branch
      %47 = sbr.rel (0) target = $region45
    $region44: #{attention_module_stage2.1} parent=1 // pred_region
      _
    $region45: #{attention_module_stage2.1} parent=1 // pred_fallthru
      _
    // Predicated region
    $region46: #{attention_module_stage2.1} parent=1 // pred_check
      _
    $region47: #{attention_module_stage2.1} parent=1 // pred_check_branch
      %49 = sbr.rel (0) target = $region49
    $region48: #{attention_module_stage2.1} parent=1 // pred_region
      _
    $region49: #{attention_module_stage2.1} parent=1 // pred_fallthru
      _
    // Predicated region
    $region50: #{attention_module_stage2.1} parent=1 // pred_check
      _
    $region51: #{attention_module_stage2.1} parent=1 // pred_check_branch
      %51 = sbr.rel (0) target = $region53
    $region52: #{attention_module_stage2.1} parent=1 // pred_region
      _
    $region53: #{attention_module_stage2.1} parent=1 // pred_fallthru
      _
    // Predicated region
    $region54: #{attention_module_stage2.1} parent=1 // pred_check
      _
    $region55: #{attention_module_stage2.1} parent=1 // pred_check_branch
      %53 = sbr.rel (0) target = $region57
    $region56: #{attention_module_stage2.1} parent=1 // pred_region
      _
    $region57: #{attention_module_stage2.1} parent=1 // pred_fallthru
      _
    // Predicated region
    $region58: #{attention_module_stage2.1} parent=1 // pred_check
      _
    $region59: #{attention_module_stage2.1} parent=1 // pred_check_branch
      %55 = sbr.rel (0) target = $region61
    $region60: #{attention_module_stage2.1} parent=1 // pred_region
      _
    $region61: #{attention_module_stage2.1} parent=1 // pred_fallthru
      _
    // Predicated region
    $region62: #{attention_module_stage2.1} parent=1 // pred_check
      _
    $region63: #{attention_module_stage2.1} parent=1 // pred_check_branch
      %57 = sbr.rel (0) target = $region65
    $region64: #{attention_module_stage2.1} parent=1 // pred_region
      _
    $region65: #{attention_module_stage2.1} parent=1 // pred_fallthru
      _
    // Predicated region
    $region66: #{attention_module_stage2.1} parent=1 // pred_check
      _
    $region67: #{attention_module_stage2.1} parent=1 // pred_check_branch
      %59 = sbr.rel (0) target = $region69
    $region68: #{attention_module_stage2.1} parent=1 // pred_region
      _
    $region69: #{attention_module_stage2.1} parent=1 // pred_fallthru
      _
    // Predicated region
    $region70: #{attention_module_stage2.1} parent=1 // pred_check
      _
    $region71: #{attention_module_stage2.1} parent=1 // pred_check_branch
      %61 = sbr.rel (0) target = $region73
    $region72: #{attention_module_stage2.1} parent=1 // pred_region
      _
    $region73: #{attention_module_stage2.1} parent=1 // pred_fallthru
      _
    // Predicated region
    $region74: #{attention_module_stage2.1} parent=1 // pred_check
      _
    $region75: #{attention_module_stage2.1} parent=1 // pred_check_branch
      %63 = sbr.rel (0) target = $region77
    $region76: #{attention_module_stage2.1} parent=1 // pred_region
      _
    $region77: #{attention_module_stage2.1} parent=1 // pred_fallthru
      _
    // Predicated region
    $region78: #{attention_module_stage2.1} parent=1 // pred_check
      _
    $region79: #{attention_module_stage2.1} parent=1 // pred_check_branch
      %65 = sbr.rel (0) target = $region81
    $region80: #{attention_module_stage2.1} parent=1 // pred_region
      %67 = vsyncadd [#allocation3], 0
      %s68 = sshll.u32 %s19, 4
      %s69 = int_to_ptr.hbm [resolvable:$true] %s68
      %s70 = sshll.u32 [#allocation2], 4
      %s71 = int_to_ptr.vmem [resolvable:$true] %s70
      %76 = dma.hbm_to_vmem [thread:$0]  %s69, 8192, %s71, [#allocation3], 512, 512, 32
    $region81: #{attention_module_stage2.1} parent=1 // pred_fallthru
      _
    // Predicated region
    $region82: #{attention_module_stage2.1} parent=1 // pred_check
      _
    $region83: #{attention_module_stage2.1} parent=1 // pred_check_branch
      %78 = sbr.rel (0) target = $region85
    $region84: #{attention_module_stage2.1} parent=1 // pred_region
      %80 = dma.done [#allocation3], 8192
    $region85: #{attention_module_stage2.1} parent=1 // pred_fallthru
      _
    %v81 = vld [vmem:[%s0] sm:$0xff]
    %v82 = vld [vmem:[%s0 + $0x8] sm:$0xff]
    %v83 = vld [vmem:[%s0 + $0x10] sm:$0xff]
    %v84 = vld [vmem:[%s0 + $0x18] sm:$0xff]
    %v85 = vld [vmem:[%s1] sm:$0xff]
    %87 = vset.pattern.permute.xlu0 0
    %88 = vperm.xlu0 %87, %v85
    %v89 = vpop.permute.xlu0 %88
    %v91 = vmul.f32 %v81, %v89
    %v92 = vmul.f32 %v82, %v89
    %v93 = vmul.f32 %v83, %v89
    %v94 = vmul.f32 %v84, %v89
    %v95 = vld [vmem:[%s2] sm:$0xff]
    %97 = vset.pattern.permute.xlu0 0
    %98 = vperm.xlu0 %97, %v95
    %v99 = vpop.permute.xlu0 %98
    %v101 = vadd.f32 %v91, %v99
    %v102 = vadd.f32 %v92, %v99
    %v103 = vadd.f32 %v93, %v99
    %v104 = vadd.f32 %v94, %v99
    %v105 = vmax.f32 %v101, 0.0
    %v106 = vmax.f32 %v102, 0.0
    %v107 = vmax.f32 %v103, 0.0
    %v108 = vmax.f32 %v104, 0.0
    %v109 = vld [vmem:[%s3] sm:$0xff]
    %vm110 = vcmask 64512
    %v112 = vsel %vm110, %v109, 0
    %114 = vmatpush.msra.mxu0 0.0
    %115 = vmatpush.msra.mxu0 0.0
    %116 = vmatpush.msra.mxu0 0.0
    %117 = vmatpush.msra.mxu0 0.0
    %118 = vmatpush.msra.mxu0 0.0
    %119 = vmatpush.msra.mxu0 0.0
    %120 = vmatpush.msra.mxu0 0.0
    %121 = vmatpush.msra.mxu0 0.0
    %122 = vmatpush.msra.mxu0 0.0
    %123 = vmatpush.msra.mxu0 0.0
    %124 = vmatpush.msra.mxu0 0.0
    %125 = vmatpush.msra.mxu0 0.0
    %126 = vmatpush.msra.mxu0 0.0
    %127 = vmatpush.msra.mxu0 0.0
    %128 = vmatpush.msra.mxu0 0.0
    %129 = vmatpush.msra.mxu0 %v105
    %130 = vmatmul.f32.gmra.mxu0 %v112
    %v131 = vpop.f32.mrf.mxu0
    %v132 = vadd.f32 0.0, %v131
    %133 = vdwg.mxu0
    %134 = vmatpush.msra.mxu0 0.0
    %135 = vmatpush.msra.mxu0 0.0
    %136 = vmatpush.msra.mxu0 0.0
    %137 = vmatpush.msra.mxu0 0.0
    %138 = vmatpush.msra.mxu0 0.0
    %139 = vmatpush.msra.mxu0 0.0
    %140 = vmatpush.msra.mxu0 0.0
    %141 = vmatpush.msra.mxu0 0.0
    %142 = vmatpush.msra.mxu0 0.0
    %143 = vmatpush.msra.mxu0 0.0
    %144 = vmatpush.msra.mxu0 0.0
    %145 = vmatpush.msra.mxu0 0.0
    %146 = vmatpush.msra.mxu0 0.0
    %147 = vmatpush.msra.mxu0 0.0
    %148 = vmatpush.msra.mxu0 0.0
    %149 = vmatpush.msra.mxu0 %v106
    %150 = vmatmul.f32.gmra.mxu0 %v112
    %v151 = vpop.f32.mrf.mxu0
    %v152 = vadd.f32 0.0, %v151
    %153 = vdwg.mxu0
    %154 = vmatpush.msra.mxu0 0.0
    %155 = vmatpush.msra.mxu0 0.0
    %156 = vmatpush.msra.mxu0 0.0
    %157 = vmatpush.msra.mxu0 0.0
    %158 = vmatpush.msra.mxu0 0.0
    %159 = vmatpush.msra.mxu0 0.0
    %160 = vmatpush.msra.mxu0 0.0
    %161 = vmatpush.msra.mxu0 0.0
    %162 = vmatpush.msra.mxu0 0.0
    %163 = vmatpush.msra.mxu0 0.0
    %164 = vmatpush.msra.mxu0 0.0
    %165 = vmatpush.msra.mxu0 0.0
    %166 = vmatpush.msra.mxu0 0.0
    %167 = vmatpush.msra.mxu0 0.0
    %168 = vmatpush.msra.mxu0 0.0
    %169 = vmatpush.msra.mxu0 %v107
    %170 = vmatmul.f32.gmra.mxu0 %v112
    %v171 = vpop.f32.mrf.mxu0
    %v172 = vadd.f32 0.0, %v171
    %173 = vdwg.mxu0
    %174 = vmatpush.msra.mxu0 0.0
    %175 = vmatpush.msra.mxu0 0.0
    %176 = vmatpush.msra.mxu0 0.0
    %177 = vmatpush.msra.mxu0 0.0
    %178 = vmatpush.msra.mxu0 0.0
    %179 = vmatpush.msra.mxu0 0.0
    %180 = vmatpush.msra.mxu0 0.0
    %181 = vmatpush.msra.mxu0 0.0
    %182 = vmatpush.msra.mxu0 0.0
    %183 = vmatpush.msra.mxu0 0.0
    %184 = vmatpush.msra.mxu0 0.0
    %185 = vmatpush.msra.mxu0 0.0
    %186 = vmatpush.msra.mxu0 0.0
    %187 = vmatpush.msra.mxu0 0.0
    %188 = vmatpush.msra.mxu0 0.0
    %189 = vmatpush.msra.mxu0 %v108
    %190 = vmatmul.f32.gmra.mxu0 %v112
    %v191 = vpop.f32.mrf.mxu0
    %v192 = vadd.f32 0.0, %v191
    %193 = vdwg.mxu0
    %v194 = vld [vmem:[%s4] sm:$0xff]
    %196 = vset.pattern.permute.xlu0 0
    %197 = vperm.xlu0 %196, %v194
    %v198 = vpop.permute.xlu0 %197
    %v200 = vmul.f32 %v132, %v198
    %v201 = vmul.f32 %v152, %v198
    %v202 = vmul.f32 %v172, %v198
    %v203 = vmul.f32 %v192, %v198
    %v204 = vld [vmem:[%s5] sm:$0xff]
    %206 = vset.pattern.permute.xlu0 0
    %207 = vperm.xlu0 %206, %v204
    %v208 = vpop.permute.xlu0 %207
    %v210 = vadd.f32 %v200, %v208
    %v211 = vadd.f32 %v201, %v208
    %v212 = vadd.f32 %v202, %v208
    %v213 = vadd.f32 %v203, %v208
    %v214 = vmax.f32 %v210, 0.0
    %v215 = vmax.f32 %v211, 0.0
    %v216 = vmax.f32 %v212, 0.0
    %v217 = vmax.f32 %v213, 0.0
    %v218 = vld [vmem:[%s13] sm:$0xf]
    %220 = vrot.lane.b32.xlu0 %v217, 17
    %v221 = vpop.permute.xlu0 %220
    %226 = vrot.lane.b32.xlu0 %v214, 17
    %v227 = vpop.permute.xlu0 %226
    %228 = vrot.lane.b32.xlu0 %v215, 17
    %v229 = vpop.permute.xlu0 %228
    %230 = vrot.lane.b32.xlu0 %v216, 17
    %v231 = vpop.permute.xlu0 %230
    %vm232 = vcmask 138240
    %v233 = vsel %vm232, %v227, %v229
    %v234 = vsel %vm232, %v229, %v231
    %v235 = vsel %vm232, %v231, %v221
    %v240 = vsel %vm232, %v221, %v227
    %v242 = vperm.slane %v218, 0
    %v243 = vperm.slane %v218, 1
    %v244 = vperm.slane %v218, 2
    %v245 = vperm.slane %v218, 3
    %v250 = vmul.f32 %v242, %v240
    %v251 = vmul.f32 %v243, %v233
    %v252 = vmul.f32 %v244, %v234
    %v253 = vmul.f32 %v245, %v235
    %s254 = scalar_lea.vmem %s13, 4
    %v255 = vld [vmem:[%s254] sm:$0xf]
    %256 = vrot.lane.b32.xlu0 %v217, 16
    %v257 = vpop.permute.xlu0 %256
    %259 = vrot.lane.b32.xlu0 %v214, 16
    %v260 = vpop.permute.xlu0 %259
    %261 = vrot.lane.b32.xlu0 %v215, 16
    %v262 = vpop.permute.xlu0 %261
    %263 = vrot.lane.b32.xlu0 %v216, 16
    %v264 = vpop.permute.xlu0 %263
    %vm265 = vcmask 130048
    %v266 = vsel %vm265, %v260, %v262
    %v267 = vsel %vm265, %v262, %v264
    %v268 = vsel %vm265, %v264, %v257
    %v273 = vsel %vm265, %v257, %v260
    %v275 = vperm.slane %v255, 0
    %v276 = vperm.slane %v255, 1
    %v277 = vperm.slane %v255, 2
    %v278 = vperm.slane %v255, 3
    %v283 = vmul.f32 %v275, %v273
    %v284 = vmul.f32 %v276, %v266
    %v285 = vmul.f32 %v277, %v267
    %v286 = vmul.f32 %v278, %v268
    %s287 = scalar_lea.vmem %s13, 8
    %v288 = vld [vmem:[%s287] sm:$0xf]
    %289 = vrot.lane.b32.xlu0 %v217, 15
    %v290 = vpop.permute.xlu0 %289
    %292 = vrot.lane.b32.xlu0 %v214, 15
    %v293 = vpop.permute.xlu0 %292
    %294 = vrot.lane.b32.xlu0 %v215, 15
    %v295 = vpop.permute.xlu0 %294
    %296 = vrot.lane.b32.xlu0 %v216, 15
    %v297 = vpop.permute.xlu0 %296
    %vm298 = vcmask 121856
    %v299 = vsel %vm298, %v293, %v295
    %v300 = vsel %vm298, %v295, %v297
    %v301 = vsel %vm298, %v297, %v290
    %v306 = vsel %vm298, %v290, %v293
    %v308 = vperm.slane %v288, 0
    %v309 = vperm.slane %v288, 1
    %v310 = vperm.slane %v288, 2
    %v311 = vperm.slane %v288, 3
    %v316 = vmul.f32 %v308, %v306
    %v317 = vmul.f32 %v309, %v299
    %v318 = vmul.f32 %v310, %v300
    %v319 = vmul.f32 %v311, %v301
    %s320 = scalar_lea.vmem %s13, 12
    %v321 = vld [vmem:[%s320] sm:$0xf]
    %322 = vrot.lane.b32.xlu0 %v217, 1
    %v323 = vpop.permute.xlu0 %322
    %325 = vrot.lane.b32.xlu0 %v214, 1
    %v326 = vpop.permute.xlu0 %325
    %327 = vrot.lane.b32.xlu0 %v215, 1
    %v328 = vpop.permute.xlu0 %327
    %329 = vrot.lane.b32.xlu0 %v216, 1
    %v330 = vpop.permute.xlu0 %329
    %vm331 = vcmask 7168
    %v332 = vsel %vm331, %v326, %v328
    %v333 = vsel %vm331, %v328, %v330
    %v334 = vsel %vm331, %v330, %v323
    %v339 = vsel %vm331, %v323, %v326
    %v341 = vperm.slane %v321, 0
    %v342 = vperm.slane %v321, 1
    %v343 = vperm.slane %v321, 2
    %v344 = vperm.slane %v321, 3
    %v349 = vmul.f32 %v341, %v339
    %v350 = vmul.f32 %v342, %v332
    %v351 = vmul.f32 %v343, %v333
    %v352 = vmul.f32 %v344, %v334
    %s353 = scalar_lea.vmem %s13, 16
    %v354 = vld [vmem:[%s353] sm:$0xf]
    %v356 = vperm.slane %v354, 0
    %v357 = vperm.slane %v354, 1
    %v358 = vperm.slane %v354, 2
    %v359 = vperm.slane %v354, 3
    %v364 = vmul.f32 %v356, %v214
    %v365 = vmul.f32 %v357, %v215
    %v366 = vmul.f32 %v358, %v216
    %v367 = vmul.f32 %v359, %v217
    %s368 = scalar_lea.vmem %s13, 20
    %v369 = vld [vmem:[%s368] sm:$0xf]
    %370 = vrot.lane.b32.xlu0 %v214, 127
    %v371 = vpop.permute.xlu0 %370
    %372 = vrot.lane.b32.xlu0 %v215, 127
    %v373 = vpop.permute.xlu0 %372
    %374 = vrot.lane.b32.xlu0 %v216, 127
    %v375 = vpop.permute.xlu0 %374
    %376 = vrot.lane.b32.xlu0 %v217, 127
    %v377 = vpop.permute.xlu0 %376
    %vm378 = vcmask 1039360
    %v379 = vsel %vm378, %v371, %v373
    %v380 = vsel %vm378, %v373, %v375
    %v381 = vsel %vm378, %v375, %v377
    %v387 = vsel %vm378, %v377, %v371
    %v389 = vperm.slane %v369, 0
    %v390 = vperm.slane %v369, 1
    %v391 = vperm.slane %v369, 2
    %v392 = vperm.slane %v369, 3
    %v397 = vmul.f32 %v389, %v379
    %v398 = vmul.f32 %v390, %v380
    %v399 = vmul.f32 %v391, %v381
    %v400 = vmul.f32 %v392, %v387
    %s401 = scalar_lea.vmem %s13, 24
    %v402 = vld [vmem:[%s401] sm:$0xf]
    %403 = vrot.lane.b32.xlu0 %v214, 113
    %v404 = vpop.permute.xlu0 %403
    %405 = vrot.lane.b32.xlu0 %v215, 113
    %v406 = vpop.permute.xlu0 %405
    %407 = vrot.lane.b32.xlu0 %v216, 113
    %v408 = vpop.permute.xlu0 %407
    %409 = vrot.lane.b32.xlu0 %v217, 113
    %v410 = vpop.permute.xlu0 %409
    %vm411 = vcmask 924672
    %v412 = vsel %vm411, %v404, %v406
    %v413 = vsel %vm411, %v406, %v408
    %v414 = vsel %vm411, %v408, %v410
    %v420 = vsel %vm411, %v410, %v404
    %v422 = vperm.slane %v402, 0
    %v423 = vperm.slane %v402, 1
    %v424 = vperm.slane %v402, 2
    %v425 = vperm.slane %v402, 3
    %v430 = vmul.f32 %v422, %v412
    %v431 = vmul.f32 %v423, %v413
    %v432 = vmul.f32 %v424, %v414
    %v433 = vmul.f32 %v425, %v420
    %s434 = scalar_lea.vmem %s13, 28
    %v435 = vld [vmem:[%s434] sm:$0xf]
    %436 = vrot.lane.b32.xlu0 %v214, 112
    %v437 = vpop.permute.xlu0 %436
    %438 = vrot.lane.b32.xlu0 %v215, 112
    %v439 = vpop.permute.xlu0 %438
    %440 = vrot.lane.b32.xlu0 %v216, 112
    %v441 = vpop.permute.xlu0 %440
    %442 = vrot.lane.b32.xlu0 %v217, 112
    %v443 = vpop.permute.xlu0 %442
    %vm444 = vcmask 916480
    %v445 = vsel %vm444, %v437, %v439
    %v446 = vsel %vm444, %v439, %v441
    %v447 = vsel %vm444, %v441, %v443
    %v453 = vsel %vm444, %v443, %v437
    %v455 = vperm.slane %v435, 0
    %v456 = vperm.slane %v435, 1
    %v457 = vperm.slane %v435, 2
    %v458 = vperm.slane %v435, 3
    %v463 = vmul.f32 %v455, %v445
    %v464 = vmul.f32 %v456, %v446
    %v465 = vmul.f32 %v457, %v447
    %v466 = vmul.f32 %v458, %v453
    %s467 = scalar_lea.vmem %s13, 32
    %v468 = vld [vmem:[%s467] sm:$0xf]
    %469 = vrot.lane.b32.xlu0 %v214, 111
    %v470 = vpop.permute.xlu0 %469
    %471 = vrot.lane.b32.xlu0 %v215, 111
    %v472 = vpop.permute.xlu0 %471
    %473 = vrot.lane.b32.xlu0 %v216, 111
    %v474 = vpop.permute.xlu0 %473
    %475 = vrot.lane.b32.xlu0 %v217, 111
    %v476 = vpop.permute.xlu0 %475
    %vm477 = vcmask 908288
    %v478 = vsel %vm477, %v470, %v472
    %v479 = vsel %vm477, %v472, %v474
    %v480 = vsel %vm477, %v474, %v476
    %v486 = vsel %vm477, %v476, %v470
    %v488 = vperm.slane %v468, 0
    %v489 = vperm.slane %v468, 1
    %v490 = vperm.slane %v468, 2
    %v491 = vperm.slane %v468, 3
    %v496 = vmul.f32 %v488, %v478
    %v497 = vmul.f32 %v489, %v479
    %v498 = vmul.f32 %v490, %v480
    %v499 = vmul.f32 %v491, %v486
    %v500 = vld [vmem:[%s6] sm:$0xff]
    %vm501 = vcmask 588800
    %v503 = vsel %vm501, %v500, 0
    %505 = vmatpush.msra.mxu0 0.0
    %506 = vmatpush.msra.mxu0 0.0
    %507 = vmatpush.msra.mxu0 0.0
    %508 = vmatpush.msra.mxu0 0.0
    %509 = vmatpush.msra.mxu0 0.0
    %510 = vmatpush.msra.mxu0 0.0
    %511 = vmatpush.msra.mxu0 0.0
    %512 = vmatpush.msra.mxu0 %v496
    %513 = vmatpush.msra.mxu0 %v463
    %514 = vmatpush.msra.mxu0 %v430
    %515 = vmatpush.msra.mxu0 %v397
    %516 = vmatpush.msra.mxu0 %v364
    %517 = vmatpush.msra.mxu0 %v349
    %518 = vmatpush.msra.mxu0 %v316
    %519 = vmatpush.msra.mxu0 %v283
    %520 = vmatpush.msra.mxu0 %v250
    %521 = vmatmul.f32.gmra.mxu0 %v503
    %v522 = vpop.f32.mrf.mxu0
    %v523 = vadd.f32 0.0, %v522
    %524 = vdwg.mxu0
    %525 = vmatpush.msra.mxu0 0.0
    %526 = vmatpush.msra.mxu0 0.0
    %527 = vmatpush.msra.mxu0 0.0
    %528 = vmatpush.msra.mxu0 0.0
    %529 = vmatpush.msra.mxu0 0.0
    %530 = vmatpush.msra.mxu0 0.0
    %531 = vmatpush.msra.mxu0 0.0
    %532 = vmatpush.msra.mxu0 %v497
    %533 = vmatpush.msra.mxu0 %v464
    %534 = vmatpush.msra.mxu0 %v431
    %535 = vmatpush.msra.mxu0 %v398
    %536 = vmatpush.msra.mxu0 %v365
    %537 = vmatpush.msra.mxu0 %v350
    %538 = vmatpush.msra.mxu0 %v317
    %539 = vmatpush.msra.mxu0 %v284
    %540 = vmatpush.msra.mxu0 %v251
    %541 = vmatmul.f32.gmra.mxu0 %v503
    %v542 = vpop.f32.mrf.mxu0
    %v543 = vadd.f32 0.0, %v542
    %544 = vdwg.mxu0
    %545 = vmatpush.msra.mxu0 0.0
    %546 = vmatpush.msra.mxu0 0.0
    %547 = vmatpush.msra.mxu0 0.0
    %548 = vmatpush.msra.mxu0 0.0
    %549 = vmatpush.msra.mxu0 0.0
    %550 = vmatpush.msra.mxu0 0.0
    %551 = vmatpush.msra.mxu0 0.0
    %552 = vmatpush.msra.mxu0 %v498
    %553 = vmatpush.msra.mxu0 %v465
    %554 = vmatpush.msra.mxu0 %v432
    %555 = vmatpush.msra.mxu0 %v399
    %556 = vmatpush.msra.mxu0 %v366
    %557 = vmatpush.msra.mxu0 %v351
    %558 = vmatpush.msra.mxu0 %v318
    %559 = vmatpush.msra.mxu0 %v285
    %560 = vmatpush.msra.mxu0 %v252
    %561 = vmatmul.f32.gmra.mxu0 %v503
    %v562 = vpop.f32.mrf.mxu0
    %v563 = vadd.f32 0.0, %v562
    %564 = vdwg.mxu0
    %565 = vmatpush.msra.mxu0 0.0
    %566 = vmatpush.msra.mxu0 0.0
    %567 = vmatpush.msra.mxu0 0.0
    %568 = vmatpush.msra.mxu0 0.0
    %569 = vmatpush.msra.mxu0 0.0
    %570 = vmatpush.msra.mxu0 0.0
    %571 = vmatpush.msra.mxu0 0.0
    %572 = vmatpush.msra.mxu0 %v499
    %573 = vmatpush.msra.mxu0 %v466
    %574 = vmatpush.msra.mxu0 %v433
    %575 = vmatpush.msra.mxu0 %v400
    %576 = vmatpush.msra.mxu0 %v367
    %577 = vmatpush.msra.mxu0 %v352
    %578 = vmatpush.msra.mxu0 %v319
    %579 = vmatpush.msra.mxu0 %v286
    %580 = vmatpush.msra.mxu0 %v253
    %581 = vmatmul.f32.gmra.mxu0 %v503
    %v582 = vpop.f32.mrf.mxu0
    %v583 = vadd.f32 0.0, %v582
    %584 = vdwg.mxu0
    %v585 = vld [vmem:[%s7] sm:$0xff]
    %587 = vset.pattern.permute.xlu0 0
    %588 = vperm.xlu0 %587, %v585
    %v589 = vpop.permute.xlu0 %588
    %v591 = vmul.f32 %v523, %v589
    %v592 = vmul.f32 %v543, %v589
    %v593 = vmul.f32 %v563, %v589
    %v594 = vmul.f32 %v583, %v589
    %v595 = vld [vmem:[%s8] sm:$0xff]
    %597 = vset.pattern.permute.xlu0 0
    %598 = vperm.xlu0 %597, %v595
    %v599 = vpop.permute.xlu0 %598
    %v601 = vadd.f32 %v591, %v599
    %v602 = vadd.f32 %v592, %v599
    %v603 = vadd.f32 %v593, %v599
    %v604 = vadd.f32 %v594, %v599
    %v605 = vmax.f32 %v601, 0.0
    %v606 = vmax.f32 %v602, 0.0
    %v607 = vmax.f32 %v603, 0.0
    %v608 = vmax.f32 %v604, 0.0
    %v609 = vld [vmem:[%s9] sm:$0xff]
    %v611 = vsel %vm110, %v609, 0
    %613 = vmatpush.msra.mxu0 0.0
    %614 = vmatpush.msra.mxu0 0.0
    %615 = vmatpush.msra.mxu0 0.0
    %616 = vmatpush.msra.mxu0 0.0
    %617 = vmatpush.msra.mxu0 0.0
    %618 = vmatpush.msra.mxu0 0.0
    %619 = vmatpush.msra.mxu0 0.0
    %620 = vmatpush.msra.mxu0 0.0
    %621 = vmatpush.msra.mxu0 0.0
    %622 = vmatpush.msra.mxu0 0.0
    %623 = vmatpush.msra.mxu0 0.0
    %624 = vmatpush.msra.mxu0 0.0
    %625 = vmatpush.msra.mxu0 0.0
    %626 = vmatpush.msra.mxu0 0.0
    %627 = vmatpush.msra.mxu0 0.0
    %628 = vmatpush.msra.mxu0 %v605
    %629 = vmatmul.f32.gmra.mxu0 %v611
    %v630 = vpop.f32.mrf.mxu0
    %v631 = vadd.f32 %v81, %v630
    %632 = vdwg.mxu0
    %633 = vmatpush.msra.mxu0 0.0
    %634 = vmatpush.msra.mxu0 0.0
    %635 = vmatpush.msra.mxu0 0.0
    %636 = vmatpush.msra.mxu0 0.0
    %637 = vmatpush.msra.mxu0 0.0
    %638 = vmatpush.msra.mxu0 0.0
    %639 = vmatpush.msra.mxu0 0.0
    %640 = vmatpush.msra.mxu0 0.0
    %641 = vmatpush.msra.mxu0 0.0
    %642 = vmatpush.msra.mxu0 0.0
    %643 = vmatpush.msra.mxu0 0.0
    %644 = vmatpush.msra.mxu0 0.0
    %645 = vmatpush.msra.mxu0 0.0
    %646 = vmatpush.msra.mxu0 0.0
    %647 = vmatpush.msra.mxu0 0.0
    %648 = vmatpush.msra.mxu0 %v606
    %649 = vmatmul.f32.gmra.mxu0 %v611
    %v650 = vpop.f32.mrf.mxu0
    %v651 = vadd.f32 %v82, %v650
    %652 = vdwg.mxu0
    %653 = vmatpush.msra.mxu0 0.0
    %654 = vmatpush.msra.mxu0 0.0
    %655 = vmatpush.msra.mxu0 0.0
    %656 = vmatpush.msra.mxu0 0.0
    %657 = vmatpush.msra.mxu0 0.0
    %658 = vmatpush.msra.mxu0 0.0
    %659 = vmatpush.msra.mxu0 0.0
    %660 = vmatpush.msra.mxu0 0.0
    %661 = vmatpush.msra.mxu0 0.0
    %662 = vmatpush.msra.mxu0 0.0
    %663 = vmatpush.msra.mxu0 0.0
    %664 = vmatpush.msra.mxu0 0.0
    %665 = vmatpush.msra.mxu0 0.0
    %666 = vmatpush.msra.mxu0 0.0
    %667 = vmatpush.msra.mxu0 0.0
    %668 = vmatpush.msra.mxu0 %v607
    %669 = vmatmul.f32.gmra.mxu0 %v611
    %v670 = vpop.f32.mrf.mxu0
    %v671 = vadd.f32 %v83, %v670
    %672 = vdwg.mxu0
    %673 = vmatpush.msra.mxu0 0.0
    %674 = vmatpush.msra.mxu0 0.0
    %675 = vmatpush.msra.mxu0 0.0
    %676 = vmatpush.msra.mxu0 0.0
    %677 = vmatpush.msra.mxu0 0.0
    %678 = vmatpush.msra.mxu0 0.0
    %679 = vmatpush.msra.mxu0 0.0
    %680 = vmatpush.msra.mxu0 0.0
    %681 = vmatpush.msra.mxu0 0.0
    %682 = vmatpush.msra.mxu0 0.0
    %683 = vmatpush.msra.mxu0 0.0
    %684 = vmatpush.msra.mxu0 0.0
    %685 = vmatpush.msra.mxu0 0.0
    %686 = vmatpush.msra.mxu0 0.0
    %687 = vmatpush.msra.mxu0 0.0
    %688 = vmatpush.msra.mxu0 %v608
    %689 = vmatmul.f32.gmra.mxu0 %v611
    %v690 = vpop.f32.mrf.mxu0
    %v691 = vadd.f32 %v84, %v690
    %692 = vdwg.mxu0
    %s693 = scalar_lea.vmem %s1, 8
    %v694 = vld [vmem:[%s693] sm:$0xff]
    %696 = vset.pattern.permute.xlu0 0
    %697 = vperm.xlu0 %696, %v694
    %v698 = vpop.permute.xlu0 %697
    %v700 = vmul.f32 %v631, %v698
    %v701 = vmul.f32 %v651, %v698
    %v702 = vmul.f32 %v671, %v698
    %v703 = vmul.f32 %v691, %v698
    %s704 = scalar_lea.vmem %s2, 8
    %v705 = vld [vmem:[%s704] sm:$0xff]
    %707 = vset.pattern.permute.xlu0 0
    %708 = vperm.xlu0 %707, %v705
    %v709 = vpop.permute.xlu0 %708
    %v711 = vadd.f32 %v700, %v709
    %v712 = vadd.f32 %v701, %v709
    %v713 = vadd.f32 %v702, %v709
    %v714 = vadd.f32 %v703, %v709
    %v715 = vmax.f32 %v711, 0.0
    %v716 = vmax.f32 %v712, 0.0
    %v717 = vmax.f32 %v713, 0.0
    %v718 = vmax.f32 %v714, 0.0
    %s719 = scalar_lea.vmem %s3, 8
    %v720 = vld [vmem:[%s719] sm:$0xff]
    %v722 = vsel %vm110, %v720, 0
    %724 = vmatpush.msra.mxu0 0.0
    %725 = vmatpush.msra.mxu0 0.0
    %726 = vmatpush.msra.mxu0 0.0
    %727 = vmatpush.msra.mxu0 0.0
    %728 = vmatpush.msra.mxu0 0.0
    %729 = vmatpush.msra.mxu0 0.0
    %730 = vmatpush.msra.mxu0 0.0
    %731 = vmatpush.msra.mxu0 0.0
    %732 = vmatpush.msra.mxu0 0.0
    %733 = vmatpush.msra.mxu0 0.0
    %734 = vmatpush.msra.mxu0 0.0
    %735 = vmatpush.msra.mxu0 0.0
    %736 = vmatpush.msra.mxu0 0.0
    %737 = vmatpush.msra.mxu0 0.0
    %738 = vmatpush.msra.mxu0 0.0
    %739 = vmatpush.msra.mxu0 %v715
    %740 = vmatmul.f32.gmra.mxu0 %v722
    %v741 = vpop.f32.mrf.mxu0
    %v742 = vadd.f32 0.0, %v741
    %743 = vdwg.mxu0
    %744 = vmatpush.msra.mxu0 0.0
    %745 = vmatpush.msra.mxu0 0.0
    %746 = vmatpush.msra.mxu0 0.0
    %747 = vmatpush.msra.mxu0 0.0
    %748 = vmatpush.msra.mxu0 0.0
    %749 = vmatpush.msra.mxu0 0.0
    %750 = vmatpush.msra.mxu0 0.0
    %751 = vmatpush.msra.mxu0 0.0
    %752 = vmatpush.msra.mxu0 0.0
    %753 = vmatpush.msra.mxu0 0.0
    %754 = vmatpush.msra.mxu0 0.0
    %755 = vmatpush.msra.mxu0 0.0
    %756 = vmatpush.msra.mxu0 0.0
    %757 = vmatpush.msra.mxu0 0.0
    %758 = vmatpush.msra.mxu0 0.0
    %759 = vmatpush.msra.mxu0 %v716
    %760 = vmatmul.f32.gmra.mxu0 %v722
    %v761 = vpop.f32.mrf.mxu0
    %v762 = vadd.f32 0.0, %v761
    %763 = vdwg.mxu0
    %764 = vmatpush.msra.mxu0 0.0
    %765 = vmatpush.msra.mxu0 0.0
    %766 = vmatpush.msra.mxu0 0.0
    %767 = vmatpush.msra.mxu0 0.0
    %768 = vmatpush.msra.mxu0 0.0
    %769 = vmatpush.msra.mxu0 0.0
    %770 = vmatpush.msra.mxu0 0.0
    %771 = vmatpush.msra.mxu0 0.0
    %772 = vmatpush.msra.mxu0 0.0
    %773 = vmatpush.msra.mxu0 0.0
    %774 = vmatpush.msra.mxu0 0.0
    %775 = vmatpush.msra.mxu0 0.0
    %776 = vmatpush.msra.mxu0 0.0
    %777 = vmatpush.msra.mxu0 0.0
    %778 = vmatpush.msra.mxu0 0.0
    %779 = vmatpush.msra.mxu0 %v717
    %780 = vmatmul.f32.gmra.mxu0 %v722
    %v781 = vpop.f32.mrf.mxu0
    %v782 = vadd.f32 0.0, %v781
    %783 = vdwg.mxu0
    %784 = vmatpush.msra.mxu0 0.0
    %785 = vmatpush.msra.mxu0 0.0
    %786 = vmatpush.msra.mxu0 0.0
    %787 = vmatpush.msra.mxu0 0.0
    %788 = vmatpush.msra.mxu0 0.0
    %789 = vmatpush.msra.mxu0 0.0
    %790 = vmatpush.msra.mxu0 0.0
    %791 = vmatpush.msra.mxu0 0.0
    %792 = vmatpush.msra.mxu0 0.0
    %793 = vmatpush.msra.mxu0 0.0
    %794 = vmatpush.msra.mxu0 0.0
    %795 = vmatpush.msra.mxu0 0.0
    %796 = vmatpush.msra.mxu0 0.0
    %797 = vmatpush.msra.mxu0 0.0
    %798 = vmatpush.msra.mxu0 0.0
    %799 = vmatpush.msra.mxu0 %v718
    %800 = vmatmul.f32.gmra.mxu0 %v722
    %v801 = vpop.f32.mrf.mxu0
    %v802 = vadd.f32 0.0, %v801
    %803 = vdwg.mxu0
    %s804 = scalar_lea.vmem %s4, 8
    %v805 = vld [vmem:[%s804] sm:$0xff]
    %807 = vset.pattern.permute.xlu0 0
    %808 = vperm.xlu0 %807, %v805
    %v809 = vpop.permute.xlu0 %808
    %v811 = vmul.f32 %v742, %v809
    %v812 = vmul.f32 %v762, %v809
    %v813 = vmul.f32 %v782, %v809
    %v814 = vmul.f32 %v802, %v809
    %s815 = scalar_lea.vmem %s5, 8
    %v816 = vld [vmem:[%s815] sm:$0xff]
    %818 = vset.pattern.permute.xlu0 0
    %819 = vperm.xlu0 %818, %v816
    %v820 = vpop.permute.xlu0 %819
    %v822 = vadd.f32 %v811, %v820
    %v823 = vadd.f32 %v812, %v820
    %v824 = vadd.f32 %v813, %v820
    %v825 = vadd.f32 %v814, %v820
    %v826 = vmax.f32 %v822, 0.0
    %v827 = vmax.f32 %v823, 0.0
    %v828 = vmax.f32 %v824, 0.0
    %v829 = vmax.f32 %v825, 0.0
    %831 = vrot.lane.b32.xlu0 %v829, 17
    %v832 = vpop.permute.xlu0 %831
    %837 = vrot.lane.b32.xlu0 %v826, 17
    %v838 = vpop.permute.xlu0 %837
    %839 = vrot.lane.b32.xlu0 %v827, 17
    %v840 = vpop.permute.xlu0 %839
    %841 = vrot.lane.b32.xlu0 %v828, 17
    %v842 = vpop.permute.xlu0 %841
    %v843 = vsel %vm232, %v838, %v840
    %v844 = vsel %vm232, %v840, %v842
    %v845 = vsel %vm232, %v842, %v832
    %v850 = vsel %vm232, %v832, %v838
    %v851 = vmul.f32 %v242, %v850
    %v852 = vmul.f32 %v243, %v843
    %v853 = vmul.f32 %v244, %v844
    %v854 = vmul.f32 %v245, %v845
    %855 = vrot.lane.b32.xlu0 %v829, 16
    %v856 = vpop.permute.xlu0 %855
    %858 = vrot.lane.b32.xlu0 %v826, 16
    %v859 = vpop.permute.xlu0 %858
    %860 = vrot.lane.b32.xlu0 %v827, 16
    %v861 = vpop.permute.xlu0 %860
    %862 = vrot.lane.b32.xlu0 %v828, 16
    %v863 = vpop.permute.xlu0 %862
    %v864 = vsel %vm265, %v859, %v861
    %v865 = vsel %vm265, %v861, %v863
    %v866 = vsel %vm265, %v863, %v856
    %v871 = vsel %vm265, %v856, %v859
    %v872 = vmul.f32 %v275, %v871
    %v873 = vmul.f32 %v276, %v864
    %v874 = vmul.f32 %v277, %v865
    %v875 = vmul.f32 %v278, %v866
    %876 = vrot.lane.b32.xlu0 %v829, 15
    %v877 = vpop.permute.xlu0 %876
    %879 = vrot.lane.b32.xlu0 %v826, 15
    %v880 = vpop.permute.xlu0 %879
    %881 = vrot.lane.b32.xlu0 %v827, 15
    %v882 = vpop.permute.xlu0 %881
    %883 = vrot.lane.b32.xlu0 %v828, 15
    %v884 = vpop.permute.xlu0 %883
    %v885 = vsel %vm298, %v880, %v882
    %v886 = vsel %vm298, %v882, %v884
    %v887 = vsel %vm298, %v884, %v877
    %v892 = vsel %vm298, %v877, %v880
    %v893 = vmul.f32 %v308, %v892
    %v894 = vmul.f32 %v309, %v885
    %v895 = vmul.f32 %v310, %v886
    %v896 = vmul.f32 %v311, %v887
    %897 = vrot.lane.b32.xlu0 %v829, 1
    %v898 = vpop.permute.xlu0 %897
    %900 = vrot.lane.b32.xlu0 %v826, 1
    %v901 = vpop.permute.xlu0 %900
    %902 = vrot.lane.b32.xlu0 %v827, 1
    %v903 = vpop.permute.xlu0 %902
    %904 = vrot.lane.b32.xlu0 %v828, 1
    %v905 = vpop.permute.xlu0 %904
    %v906 = vsel %vm331, %v901, %v903
    %v907 = vsel %vm331, %v903, %v905
    %v908 = vsel %vm331, %v905, %v898
    %v913 = vsel %vm331, %v898, %v901
    %v914 = vmul.f32 %v341, %v913
    %v915 = vmul.f32 %v342, %v906
    %v916 = vmul.f32 %v343, %v907
    %v917 = vmul.f32 %v344, %v908
    %v918 = vmul.f32 %v356, %v826
    %v919 = vmul.f32 %v357, %v827
    %v920 = vmul.f32 %v358, %v828
    %v921 = vmul.f32 %v359, %v829
    %922 = vrot.lane.b32.xlu0 %v826, 127
    %v923 = vpop.permute.xlu0 %922
    %924 = vrot.lane.b32.xlu0 %v827, 127
    %v925 = vpop.permute.xlu0 %924
    %926 = vrot.lane.b32.xlu0 %v828, 127
    %v927 = vpop.permute.xlu0 %926
    %928 = vrot.lane.b32.xlu0 %v829, 127
    %v929 = vpop.permute.xlu0 %928
    %v930 = vsel %vm378, %v923, %v925
    %v931 = vsel %vm378, %v925, %v927
    %v932 = vsel %vm378, %v927, %v929
    %v938 = vsel %vm378, %v929, %v923
    %v939 = vmul.f32 %v389, %v930
    %v940 = vmul.f32 %v390, %v931
    %v941 = vmul.f32 %v391, %v932
    %v942 = vmul.f32 %v392, %v938
    %943 = vrot.lane.b32.xlu0 %v826, 113
    %v944 = vpop.permute.xlu0 %943
    %945 = vrot.lane.b32.xlu0 %v827, 113
    %v946 = vpop.permute.xlu0 %945
    %947 = vrot.lane.b32.xlu0 %v828, 113
    %v948 = vpop.permute.xlu0 %947
    %949 = vrot.lane.b32.xlu0 %v829, 113
    %v950 = vpop.permute.xlu0 %949
    %v951 = vsel %vm411, %v944, %v946
    %v952 = vsel %vm411, %v946, %v948
    %v953 = vsel %vm411, %v948, %v950
    %v959 = vsel %vm411, %v950, %v944
    %v960 = vmul.f32 %v422, %v951
    %v961 = vmul.f32 %v423, %v952
    %v962 = vmul.f32 %v424, %v953
    %v963 = vmul.f32 %v425, %v959
    %964 = vrot.lane.b32.xlu0 %v826, 112
    %v965 = vpop.permute.xlu0 %964
    %966 = vrot.lane.b32.xlu0 %v827, 112
    %v967 = vpop.permute.xlu0 %966
    %968 = vrot.lane.b32.xlu0 %v828, 112
    %v969 = vpop.permute.xlu0 %968
    %970 = vrot.lane.b32.xlu0 %v829, 112
    %v971 = vpop.permute.xlu0 %970
    %v972 = vsel %vm444, %v965, %v967
    %v973 = vsel %vm444, %v967, %v969
    %v974 = vsel %vm444, %v969, %v971
    %v980 = vsel %vm444, %v971, %v965
    %v981 = vmul.f32 %v455, %v972
    %v982 = vmul.f32 %v456, %v973
    %v983 = vmul.f32 %v457, %v974
    %v984 = vmul.f32 %v458, %v980
    %985 = vrot.lane.b32.xlu0 %v826, 111
    %v986 = vpop.permute.xlu0 %985
    %987 = vrot.lane.b32.xlu0 %v827, 111
    %v988 = vpop.permute.xlu0 %987
    %989 = vrot.lane.b32.xlu0 %v828, 111
    %v990 = vpop.permute.xlu0 %989
    %991 = vrot.lane.b32.xlu0 %v829, 111
    %v992 = vpop.permute.xlu0 %991
    %v993 = vsel %vm477, %v986, %v988
    %v994 = vsel %vm477, %v988, %v990
    %v995 = vsel %vm477, %v990, %v992
    %v1001 = vsel %vm477, %v992, %v986
    %v1002 = vmul.f32 %v488, %v993
    %v1003 = vmul.f32 %v489, %v994
    %v1004 = vmul.f32 %v490, %v995
    %v1005 = vmul.f32 %v491, %v1001
    %s1006 = scalar_lea.vmem %s6, 8
    %v1007 = vld [vmem:[%s1006] sm:$0xff]
    %v1009 = vsel %vm501, %v1007, 0
    %1011 = vmatpush.msra.mxu0 0.0
    %1012 = vmatpush.msra.mxu0 0.0
    %1013 = vmatpush.msra.mxu0 0.0
    %1014 = vmatpush.msra.mxu0 0.0
    %1015 = vmatpush.msra.mxu0 0.0
    %1016 = vmatpush.msra.mxu0 0.0
    %1017 = vmatpush.msra.mxu0 0.0
    %1018 = vmatpush.msra.mxu0 %v1002
    %1019 = vmatpush.msra.mxu0 %v981
    %1020 = vmatpush.msra.mxu0 %v960
    %1021 = vmatpush.msra.mxu0 %v939
    %1022 = vmatpush.msra.mxu0 %v918
    %1023 = vmatpush.msra.mxu0 %v914
    %1024 = vmatpush.msra.mxu0 %v893
    %1025 = vmatpush.msra.mxu0 %v872
    %1026 = vmatpush.msra.mxu0 %v851
    %1027 = vmatmul.f32.gmra.mxu0 %v1009
    %v1028 = vpop.f32.mrf.mxu0
    %v1029 = vadd.f32 0.0, %v1028
    %1030 = vdwg.mxu0
    %1031 = vmatpush.msra.mxu0 0.0
    %1032 = vmatpush.msra.mxu0 0.0
    %1033 = vmatpush.msra.mxu0 0.0
    %1034 = vmatpush.msra.mxu0 0.0
    %1035 = vmatpush.msra.mxu0 0.0
    %1036 = vmatpush.msra.mxu0 0.0
    %1037 = vmatpush.msra.mxu0 0.0
    %1038 = vmatpush.msra.mxu0 %v1003
    %1039 = vmatpush.msra.mxu0 %v982
    %1040 = vmatpush.msra.mxu0 %v961
    %1041 = vmatpush.msra.mxu0 %v940
    %1042 = vmatpush.msra.mxu0 %v919
    %1043 = vmatpush.msra.mxu0 %v915
    %1044 = vmatpush.msra.mxu0 %v894
    %1045 = vmatpush.msra.mxu0 %v873
    %1046 = vmatpush.msra.mxu0 %v852
    %1047 = vmatmul.f32.gmra.mxu0 %v1009
    %v1048 = vpop.f32.mrf.mxu0
    %v1049 = vadd.f32 0.0, %v1048
    %1050 = vdwg.mxu0
    %1051 = vmatpush.msra.mxu0 0.0
    %1052 = vmatpush.msra.mxu0 0.0
    %1053 = vmatpush.msra.mxu0 0.0
    %1054 = vmatpush.msra.mxu0 0.0
    %1055 = vmatpush.msra.mxu0 0.0
    %1056 = vmatpush.msra.mxu0 0.0
    %1057 = vmatpush.msra.mxu0 0.0
    %1058 = vmatpush.msra.mxu0 %v1004
    %1059 = vmatpush.msra.mxu0 %v983
    %1060 = vmatpush.msra.mxu0 %v962
    %1061 = vmatpush.msra.mxu0 %v941
    %1062 = vmatpush.msra.mxu0 %v920
    %1063 = vmatpush.msra.mxu0 %v916
    %1064 = vmatpush.msra.mxu0 %v895
    %1065 = vmatpush.msra.mxu0 %v874
    %1066 = vmatpush.msra.mxu0 %v853
    %1067 = vmatmul.f32.gmra.mxu0 %v1009
    %v1068 = vpop.f32.mrf.mxu0
    %v1069 = vadd.f32 0.0, %v1068
    %1070 = vdwg.mxu0
    %1071 = vmatpush.msra.mxu0 0.0
    %1072 = vmatpush.msra.mxu0 0.0
    %1073 = vmatpush.msra.mxu0 0.0
    %1074 = vmatpush.msra.mxu0 0.0
    %1075 = vmatpush.msra.mxu0 0.0
    %1076 = vmatpush.msra.mxu0 0.0
    %1077 = vmatpush.msra.mxu0 0.0
    %1078 = vmatpush.msra.mxu0 %v1005
    %1079 = vmatpush.msra.mxu0 %v984
    %1080 = vmatpush.msra.mxu0 %v963
    %1081 = vmatpush.msra.mxu0 %v942
    %1082 = vmatpush.msra.mxu0 %v921
    %1083 = vmatpush.msra.mxu0 %v917
    %1084 = vmatpush.msra.mxu0 %v896
    %1085 = vmatpush.msra.mxu0 %v875
    %1086 = vmatpush.msra.mxu0 %v854
    %1087 = vmatmul.f32.gmra.mxu0 %v1009
    %v1088 = vpop.f32.mrf.mxu0
    %v1089 = vadd.f32 0.0, %v1088
    %1090 = vdwg.mxu0
    %s1091 = scalar_lea.vmem %s7, 8
    %v1092 = vld [vmem:[%s1091] sm:$0xff]
    %1094 = vset.pattern.permute.xlu0 0
    %1095 = vperm.xlu0 %1094, %v1092
    %v1096 = vpop.permute.xlu0 %1095
    %v1098 = vmul.f32 %v1029, %v1096
    %v1099 = vmul.f32 %v1049, %v1096
    %v1100 = vmul.f32 %v1069, %v1096
    %v1101 = vmul.f32 %v1089, %v1096
    %s1102 = scalar_lea.vmem %s8, 8
    %v1103 = vld [vmem:[%s1102] sm:$0xff]
    %1105 = vset.pattern.permute.xlu0 0
    %1106 = vperm.xlu0 %1105, %v1103
    %v1107 = vpop.permute.xlu0 %1106
    %v1109 = vadd.f32 %v1098, %v1107
    %v1110 = vadd.f32 %v1099, %v1107
    %v1111 = vadd.f32 %v1100, %v1107
    %v1112 = vadd.f32 %v1101, %v1107
    %v1113 = vmax.f32 %v1109, 0.0
    %v1114 = vmax.f32 %v1110, 0.0
    %v1115 = vmax.f32 %v1111, 0.0
    %v1116 = vmax.f32 %v1112, 0.0
    %s1117 = scalar_lea.vmem %s9, 8
    %v1118 = vld [vmem:[%s1117] sm:$0xff]
    %v1120 = vsel %vm110, %v1118, 0
    %1122 = vmatpush.msra.mxu0 0.0
    %1123 = vmatpush.msra.mxu0 0.0
    %1124 = vmatpush.msra.mxu0 0.0
    %1125 = vmatpush.msra.mxu0 0.0
    %1126 = vmatpush.msra.mxu0 0.0
    %1127 = vmatpush.msra.mxu0 0.0
    %1128 = vmatpush.msra.mxu0 0.0
    %1129 = vmatpush.msra.mxu0 0.0
    %1130 = vmatpush.msra.mxu0 0.0
    %1131 = vmatpush.msra.mxu0 0.0
    %1132 = vmatpush.msra.mxu0 0.0
    %1133 = vmatpush.msra.mxu0 0.0
    %1134 = vmatpush.msra.mxu0 0.0
    %1135 = vmatpush.msra.mxu0 0.0
    %1136 = vmatpush.msra.mxu0 0.0
    %1137 = vmatpush.msra.mxu0 %v1113
    %1138 = vmatmul.f32.gmra.mxu0 %v1120
    %v1139 = vpop.f32.mrf.mxu0
    %v1140 = vadd.f32 %v631, %v1139
    %1141 = vdwg.mxu0
    %1142 = vmatpush.msra.mxu0 0.0
    %1143 = vmatpush.msra.mxu0 0.0
    %1144 = vmatpush.msra.mxu0 0.0
    %1145 = vmatpush.msra.mxu0 0.0
    %1146 = vmatpush.msra.mxu0 0.0
    %1147 = vmatpush.msra.mxu0 0.0
    %1148 = vmatpush.msra.mxu0 0.0
    %1149 = vmatpush.msra.mxu0 0.0
    %1150 = vmatpush.msra.mxu0 0.0
    %1151 = vmatpush.msra.mxu0 0.0
    %1152 = vmatpush.msra.mxu0 0.0
    %1153 = vmatpush.msra.mxu0 0.0
    %1154 = vmatpush.msra.mxu0 0.0
    %1155 = vmatpush.msra.mxu0 0.0
    %1156 = vmatpush.msra.mxu0 0.0
    %1157 = vmatpush.msra.mxu0 %v1114
    %1158 = vmatmul.f32.gmra.mxu0 %v1120
    %v1159 = vpop.f32.mrf.mxu0
    %v1160 = vadd.f32 %v651, %v1159
    %1161 = vdwg.mxu0
    %1162 = vmatpush.msra.mxu0 0.0
    %1163 = vmatpush.msra.mxu0 0.0
    %1164 = vmatpush.msra.mxu0 0.0
    %1165 = vmatpush.msra.mxu0 0.0
    %1166 = vmatpush.msra.mxu0 0.0
    %1167 = vmatpush.msra.mxu0 0.0
    %1168 = vmatpush.msra.mxu0 0.0
    %1169 = vmatpush.msra.mxu0 0.0
    %1170 = vmatpush.msra.mxu0 0.0
    %1171 = vmatpush.msra.mxu0 0.0
    %1172 = vmatpush.msra.mxu0 0.0
    %1173 = vmatpush.msra.mxu0 0.0
    %1174 = vmatpush.msra.mxu0 0.0
    %1175 = vmatpush.msra.mxu0 0.0
    %1176 = vmatpush.msra.mxu0 0.0
    %1177 = vmatpush.msra.mxu0 %v1115
    %1178 = vmatmul.f32.gmra.mxu0 %v1120
    %v1179 = vpop.f32.mrf.mxu0
    %v1180 = vadd.f32 %v671, %v1179
    %1181 = vdwg.mxu0
    %1182 = vmatpush.msra.mxu0 0.0
    %1183 = vmatpush.msra.mxu0 0.0
    %1184 = vmatpush.msra.mxu0 0.0
    %1185 = vmatpush.msra.mxu0 0.0
    %1186 = vmatpush.msra.mxu0 0.0
    %1187 = vmatpush.msra.mxu0 0.0
    %1188 = vmatpush.msra.mxu0 0.0
    %1189 = vmatpush.msra.mxu0 0.0
    %1190 = vmatpush.msra.mxu0 0.0
    %1191 = vmatpush.msra.mxu0 0.0
    %1192 = vmatpush.msra.mxu0 0.0
    %1193 = vmatpush.msra.mxu0 0.0
    %1194 = vmatpush.msra.mxu0 0.0
    %1195 = vmatpush.msra.mxu0 0.0
    %1196 = vmatpush.msra.mxu0 0.0
    %1197 = vmatpush.msra.mxu0 %v1116
    %1198 = vmatmul.f32.gmra.mxu0 %v1120
    %v1199 = vpop.f32.mrf.mxu0
    %v1200 = vadd.f32 %v691, %v1199
    %1201 = vdwg.mxu0
    %s1202 = scalar_lea.vmem %s1, 16
    %v1203 = vld [vmem:[%s1202] sm:$0xff]
    %1205 = vset.pattern.permute.xlu0 0
    %1206 = vperm.xlu0 %1205, %v1203
    %v1207 = vpop.permute.xlu0 %1206
    %v1209 = vmul.f32 %v1140, %v1207
    %v1210 = vmul.f32 %v1160, %v1207
    %v1211 = vmul.f32 %v1180, %v1207
    %v1212 = vmul.f32 %v1200, %v1207
    %s1213 = scalar_lea.vmem %s2, 16
    %v1214 = vld [vmem:[%s1213] sm:$0xff]
    %1216 = vset.pattern.permute.xlu0 0
    %1217 = vperm.xlu0 %1216, %v1214
    %v1218 = vpop.permute.xlu0 %1217
    %v1220 = vadd.f32 %v1209, %v1218
    %v1221 = vadd.f32 %v1210, %v1218
    %v1222 = vadd.f32 %v1211, %v1218
    %v1223 = vadd.f32 %v1212, %v1218
    %v1224 = vmax.f32 %v1220, 0.0
    %v1225 = vmax.f32 %v1221, 0.0
    %v1226 = vmax.f32 %v1222, 0.0
    %v1227 = vmax.f32 %v1223, 0.0
    %s1228 = scalar_lea.vmem %s3, 16
    %v1229 = vld [vmem:[%s1228] sm:$0xff]
    %v1231 = vsel %vm110, %v1229, 0
    %1233 = vmatpush.msra.mxu0 0.0
    %1234 = vmatpush.msra.mxu0 0.0
    %1235 = vmatpush.msra.mxu0 0.0
    %1236 = vmatpush.msra.mxu0 0.0
    %1237 = vmatpush.msra.mxu0 0.0
    %1238 = vmatpush.msra.mxu0 0.0
    %1239 = vmatpush.msra.mxu0 0.0
    %1240 = vmatpush.msra.mxu0 0.0
    %1241 = vmatpush.msra.mxu0 0.0
    %1242 = vmatpush.msra.mxu0 0.0
    %1243 = vmatpush.msra.mxu0 0.0
    %1244 = vmatpush.msra.mxu0 0.0
    %1245 = vmatpush.msra.mxu0 0.0
    %1246 = vmatpush.msra.mxu0 0.0
    %1247 = vmatpush.msra.mxu0 0.0
    %1248 = vmatpush.msra.mxu0 %v1224
    %1249 = vmatmul.f32.gmra.mxu0 %v1231
    %v1250 = vpop.f32.mrf.mxu0
    %v1251 = vadd.f32 0.0, %v1250
    %1252 = vdwg.mxu0
    %1253 = vmatpush.msra.mxu0 0.0
    %1254 = vmatpush.msra.mxu0 0.0
    %1255 = vmatpush.msra.mxu0 0.0
    %1256 = vmatpush.msra.mxu0 0.0
    %1257 = vmatpush.msra.mxu0 0.0
    %1258 = vmatpush.msra.mxu0 0.0
    %1259 = vmatpush.msra.mxu0 0.0
    %1260 = vmatpush.msra.mxu0 0.0
    %1261 = vmatpush.msra.mxu0 0.0
    %1262 = vmatpush.msra.mxu0 0.0
    %1263 = vmatpush.msra.mxu0 0.0
    %1264 = vmatpush.msra.mxu0 0.0
    %1265 = vmatpush.msra.mxu0 0.0
    %1266 = vmatpush.msra.mxu0 0.0
    %1267 = vmatpush.msra.mxu0 0.0
    %1268 = vmatpush.msra.mxu0 %v1225
    %1269 = vmatmul.f32.gmra.mxu0 %v1231
    %v1270 = vpop.f32.mrf.mxu0
    %v1271 = vadd.f32 0.0, %v1270
    %1272 = vdwg.mxu0
    %1273 = vmatpush.msra.mxu0 0.0
    %1274 = vmatpush.msra.mxu0 0.0
    %1275 = vmatpush.msra.mxu0 0.0
    %1276 = vmatpush.msra.mxu0 0.0
    %1277 = vmatpush.msra.mxu0 0.0
    %1278 = vmatpush.msra.mxu0 0.0
    %1279 = vmatpush.msra.mxu0 0.0
    %1280 = vmatpush.msra.mxu0 0.0
    %1281 = vmatpush.msra.mxu0 0.0
    %1282 = vmatpush.msra.mxu0 0.0
    %1283 = vmatpush.msra.mxu0 0.0
    %1284 = vmatpush.msra.mxu0 0.0
    %1285 = vmatpush.msra.mxu0 0.0
    %1286 = vmatpush.msra.mxu0 0.0
    %1287 = vmatpush.msra.mxu0 0.0
    %1288 = vmatpush.msra.mxu0 %v1226
    %1289 = vmatmul.f32.gmra.mxu0 %v1231
    %v1290 = vpop.f32.mrf.mxu0
    %v1291 = vadd.f32 0.0, %v1290
    %1292 = vdwg.mxu0
    %1293 = vmatpush.msra.mxu0 0.0
    %1294 = vmatpush.msra.mxu0 0.0
    %1295 = vmatpush.msra.mxu0 0.0
    %1296 = vmatpush.msra.mxu0 0.0
    %1297 = vmatpush.msra.mxu0 0.0
    %1298 = vmatpush.msra.mxu0 0.0
    %1299 = vmatpush.msra.mxu0 0.0
    %1300 = vmatpush.msra.mxu0 0.0
    %1301 = vmatpush.msra.mxu0 0.0
    %1302 = vmatpush.msra.mxu0 0.0
    %1303 = vmatpush.msra.mxu0 0.0
    %1304 = vmatpush.msra.mxu0 0.0
    %1305 = vmatpush.msra.mxu0 0.0
    %1306 = vmatpush.msra.mxu0 0.0
    %1307 = vmatpush.msra.mxu0 0.0
    %1308 = vmatpush.msra.mxu0 %v1227
    %1309 = vmatmul.f32.gmra.mxu0 %v1231
    %v1310 = vpop.f32.mrf.mxu0
    %v1311 = vadd.f32 0.0, %v1310
    %1312 = vdwg.mxu0
    %s1313 = scalar_lea.vmem %s4, 16
    %v1314 = vld [vmem:[%s1313] sm:$0xff]
    %1316 = vset.pattern.permute.xlu0 0
    %1317 = vperm.xlu0 %1316, %v1314
    %v1318 = vpop.permute.xlu0 %1317
    %v1320 = vmul.f32 %v1251, %v1318
    %v1321 = vmul.f32 %v1271, %v1318
    %v1322 = vmul.f32 %v1291, %v1318
    %v1323 = vmul.f32 %v1311, %v1318
    %s1324 = scalar_lea.vmem %s5, 16
    %v1325 = vld [vmem:[%s1324] sm:$0xff]
    %1327 = vset.pattern.permute.xlu0 0
    %1328 = vperm.xlu0 %1327, %v1325
    %v1329 = vpop.permute.xlu0 %1328
    %v1331 = vadd.f32 %v1320, %v1329
    %v1332 = vadd.f32 %v1321, %v1329
    %v1333 = vadd.f32 %v1322, %v1329
    %v1334 = vadd.f32 %v1323, %v1329
    %v1335 = vmax.f32 %v1331, 0.0
    %v1336 = vmax.f32 %v1332, 0.0
    %v1337 = vmax.f32 %v1333, 0.0
    %v1338 = vmax.f32 %v1334, 0.0
    %1340 = vrot.lane.b32.xlu0 %v1338, 17
    %v1341 = vpop.permute.xlu0 %1340
    %1346 = vrot.lane.b32.xlu0 %v1335, 17
    %v1347 = vpop.permute.xlu0 %1346
    %1348 = vrot.lane.b32.xlu0 %v1336, 17
    %v1349 = vpop.permute.xlu0 %1348
    %1350 = vrot.lane.b32.xlu0 %v1337, 17
    %v1351 = vpop.permute.xlu0 %1350
    %v1352 = vsel %vm232, %v1347, %v1349
    %v1353 = vsel %vm232, %v1349, %v1351
    %v1354 = vsel %vm232, %v1351, %v1341
    %v1359 = vsel %vm232, %v1341, %v1347
    %v1360 = vmul.f32 %v242, %v1359
    %v1361 = vmul.f32 %v243, %v1352
    %v1362 = vmul.f32 %v244, %v1353
    %v1363 = vmul.f32 %v245, %v1354
    %1364 = vrot.lane.b32.xlu0 %v1338, 16
    %v1365 = vpop.permute.xlu0 %1364
    %1367 = vrot.lane.b32.xlu0 %v1335, 16
    %v1368 = vpop.permute.xlu0 %1367
    %1369 = vrot.lane.b32.xlu0 %v1336, 16
    %v1370 = vpop.permute.xlu0 %1369
    %1371 = vrot.lane.b32.xlu0 %v1337, 16
    %v1372 = vpop.permute.xlu0 %1371
    %v1373 = vsel %vm265, %v1368, %v1370
    %v1374 = vsel %vm265, %v1370, %v1372
    %v1375 = vsel %vm265, %v1372, %v1365
    %v1380 = vsel %vm265, %v1365, %v1368
    %v1381 = vmul.f32 %v275, %v1380
    %v1382 = vmul.f32 %v276, %v1373
    %v1383 = vmul.f32 %v277, %v1374
    %v1384 = vmul.f32 %v278, %v1375
    %1385 = vrot.lane.b32.xlu0 %v1338, 15
    %v1386 = vpop.permute.xlu0 %1385
    %1388 = vrot.lane.b32.xlu0 %v1335, 15
    %v1389 = vpop.permute.xlu0 %1388
    %1390 = vrot.lane.b32.xlu0 %v1336, 15
    %v1391 = vpop.permute.xlu0 %1390
    %1392 = vrot.lane.b32.xlu0 %v1337, 15
    %v1393 = vpop.permute.xlu0 %1392
    %v1394 = vsel %vm298, %v1389, %v1391
    %v1395 = vsel %vm298, %v1391, %v1393
    %v1396 = vsel %vm298, %v1393, %v1386
    %v1401 = vsel %vm298, %v1386, %v1389
    %v1402 = vmul.f32 %v308, %v1401
    %v1403 = vmul.f32 %v309, %v1394
    %v1404 = vmul.f32 %v310, %v1395
    %v1405 = vmul.f32 %v311, %v1396
    %1406 = vrot.lane.b32.xlu0 %v1338, 1
    %v1407 = vpop.permute.xlu0 %1406
    %1409 = vrot.lane.b32.xlu0 %v1335, 1
    %v1410 = vpop.permute.xlu0 %1409
    %1411 = vrot.lane.b32.xlu0 %v1336, 1
    %v1412 = vpop.permute.xlu0 %1411
    %1413 = vrot.lane.b32.xlu0 %v1337, 1
    %v1414 = vpop.permute.xlu0 %1413
    %v1415 = vsel %vm331, %v1410, %v1412
    %v1416 = vsel %vm331, %v1412, %v1414
    %v1417 = vsel %vm331, %v1414, %v1407
    %v1422 = vsel %vm331, %v1407, %v1410
    %v1423 = vmul.f32 %v341, %v1422
    %v1424 = vmul.f32 %v342, %v1415
    %v1425 = vmul.f32 %v343, %v1416
    %v1426 = vmul.f32 %v344, %v1417
    %v1427 = vmul.f32 %v356, %v1335
    %v1428 = vmul.f32 %v357, %v1336
    %v1429 = vmul.f32 %v358, %v1337
    %v1430 = vmul.f32 %v359, %v1338
    %1431 = vrot.lane.b32.xlu0 %v1335, 127
    %v1432 = vpop.permute.xlu0 %1431
    %1433 = vrot.lane.b32.xlu0 %v1336, 127
    %v1434 = vpop.permute.xlu0 %1433
    %1435 = vrot.lane.b32.xlu0 %v1337, 127
    %v1436 = vpop.permute.xlu0 %1435
    %1437 = vrot.lane.b32.xlu0 %v1338, 127
    %v1438 = vpop.permute.xlu0 %1437
    %v1439 = vsel %vm378, %v1432, %v1434
    %v1440 = vsel %vm378, %v1434, %v1436
    %v1441 = vsel %vm378, %v1436, %v1438
    %v1447 = vsel %vm378, %v1438, %v1432
    %v1448 = vmul.f32 %v389, %v1439
    %v1449 = vmul.f32 %v390, %v1440
    %v1450 = vmul.f32 %v391, %v1441
    %v1451 = vmul.f32 %v392, %v1447
    %1452 = vrot.lane.b32.xlu0 %v1335, 113
    %v1453 = vpop.permute.xlu0 %1452
    %1454 = vrot.lane.b32.xlu0 %v1336, 113
    %v1455 = vpop.permute.xlu0 %1454
    %1456 = vrot.lane.b32.xlu0 %v1337, 113
    %v1457 = vpop.permute.xlu0 %1456
    %1458 = vrot.lane.b32.xlu0 %v1338, 113
    %v1459 = vpop.permute.xlu0 %1458
    %v1460 = vsel %vm411, %v1453, %v1455
    %v1461 = vsel %vm411, %v1455, %v1457
    %v1462 = vsel %vm411, %v1457, %v1459
    %v1468 = vsel %vm411, %v1459, %v1453
    %v1469 = vmul.f32 %v422, %v1460
    %v1470 = vmul.f32 %v423, %v1461
    %v1471 = vmul.f32 %v424, %v1462
    %v1472 = vmul.f32 %v425, %v1468
    %1473 = vrot.lane.b32.xlu0 %v1335, 112
    %v1474 = vpop.permute.xlu0 %1473
    %1475 = vrot.lane.b32.xlu0 %v1336, 112
    %v1476 = vpop.permute.xlu0 %1475
    %1477 = vrot.lane.b32.xlu0 %v1337, 112
    %v1478 = vpop.permute.xlu0 %1477
    %1479 = vrot.lane.b32.xlu0 %v1338, 112
    %v1480 = vpop.permute.xlu0 %1479
    %v1481 = vsel %vm444, %v1474, %v1476
    %v1482 = vsel %vm444, %v1476, %v1478
    %v1483 = vsel %vm444, %v1478, %v1480
    %v1489 = vsel %vm444, %v1480, %v1474
    %v1490 = vmul.f32 %v455, %v1481
    %v1491 = vmul.f32 %v456, %v1482
    %v1492 = vmul.f32 %v457, %v1483
    %v1493 = vmul.f32 %v458, %v1489
    %1494 = vrot.lane.b32.xlu0 %v1335, 111
    %v1495 = vpop.permute.xlu0 %1494
    %1496 = vrot.lane.b32.xlu0 %v1336, 111
    %v1497 = vpop.permute.xlu0 %1496
    %1498 = vrot.lane.b32.xlu0 %v1337, 111
    %v1499 = vpop.permute.xlu0 %1498
    %1500 = vrot.lane.b32.xlu0 %v1338, 111
    %v1501 = vpop.permute.xlu0 %1500
    %v1502 = vsel %vm477, %v1495, %v1497
    %v1503 = vsel %vm477, %v1497, %v1499
    %v1504 = vsel %vm477, %v1499, %v1501
    %v1510 = vsel %vm477, %v1501, %v1495
    %v1511 = vmul.f32 %v488, %v1502
    %v1512 = vmul.f32 %v489, %v1503
    %v1513 = vmul.f32 %v490, %v1504
    %v1514 = vmul.f32 %v491, %v1510
    %s1515 = scalar_lea.vmem %s6, 16
    %v1516 = vld [vmem:[%s1515] sm:$0xff]
    %v1518 = vsel %vm501, %v1516, 0
    %1520 = vmatpush.msra.mxu0 0.0
    %1521 = vmatpush.msra.mxu0 0.0
    %1522 = vmatpush.msra.mxu0 0.0
    %1523 = vmatpush.msra.mxu0 0.0
    %1524 = vmatpush.msra.mxu0 0.0
    %1525 = vmatpush.msra.mxu0 0.0
    %1526 = vmatpush.msra.mxu0 0.0
    %1527 = vmatpush.msra.mxu0 %v1511
    %1528 = vmatpush.msra.mxu0 %v1490
    %1529 = vmatpush.msra.mxu0 %v1469
    %1530 = vmatpush.msra.mxu0 %v1448
    %1531 = vmatpush.msra.mxu0 %v1427
    %1532 = vmatpush.msra.mxu0 %v1423
    %1533 = vmatpush.msra.mxu0 %v1402
    %1534 = vmatpush.msra.mxu0 %v1381
    %1535 = vmatpush.msra.mxu0 %v1360
    %1536 = vmatmul.f32.gmra.mxu0 %v1518
    %v1537 = vpop.f32.mrf.mxu0
    %v1538 = vadd.f32 0.0, %v1537
    %1539 = vdwg.mxu0
    %1540 = vmatpush.msra.mxu0 0.0
    %1541 = vmatpush.msra.mxu0 0.0
    %1542 = vmatpush.msra.mxu0 0.0
    %1543 = vmatpush.msra.mxu0 0.0
    %1544 = vmatpush.msra.mxu0 0.0
    %1545 = vmatpush.msra.mxu0 0.0
    %1546 = vmatpush.msra.mxu0 0.0
    %1547 = vmatpush.msra.mxu0 %v1512
    %1548 = vmatpush.msra.mxu0 %v1491
    %1549 = vmatpush.msra.mxu0 %v1470
    %1550 = vmatpush.msra.mxu0 %v1449
    %1551 = vmatpush.msra.mxu0 %v1428
    %1552 = vmatpush.msra.mxu0 %v1424
    %1553 = vmatpush.msra.mxu0 %v1403
    %1554 = vmatpush.msra.mxu0 %v1382
    %1555 = vmatpush.msra.mxu0 %v1361
    %1556 = vmatmul.f32.gmra.mxu0 %v1518
    %v1557 = vpop.f32.mrf.mxu0
    %v1558 = vadd.f32 0.0, %v1557
    %1559 = vdwg.mxu0
    %1560 = vmatpush.msra.mxu0 0.0
    %1561 = vmatpush.msra.mxu0 0.0
    %1562 = vmatpush.msra.mxu0 0.0
    %1563 = vmatpush.msra.mxu0 0.0
    %1564 = vmatpush.msra.mxu0 0.0
    %1565 = vmatpush.msra.mxu0 0.0
    %1566 = vmatpush.msra.mxu0 0.0
    %1567 = vmatpush.msra.mxu0 %v1513
    %1568 = vmatpush.msra.mxu0 %v1492
    %1569 = vmatpush.msra.mxu0 %v1471
    %1570 = vmatpush.msra.mxu0 %v1450
    %1571 = vmatpush.msra.mxu0 %v1429
    %1572 = vmatpush.msra.mxu0 %v1425
    %1573 = vmatpush.msra.mxu0 %v1404
    %1574 = vmatpush.msra.mxu0 %v1383
    %1575 = vmatpush.msra.mxu0 %v1362
    %1576 = vmatmul.f32.gmra.mxu0 %v1518
    %v1577 = vpop.f32.mrf.mxu0
    %v1578 = vadd.f32 0.0, %v1577
    %1579 = vdwg.mxu0
    %1580 = vmatpush.msra.mxu0 0.0
    %1581 = vmatpush.msra.mxu0 0.0
    %1582 = vmatpush.msra.mxu0 0.0
    %1583 = vmatpush.msra.mxu0 0.0
    %1584 = vmatpush.msra.mxu0 0.0
    %1585 = vmatpush.msra.mxu0 0.0
    %1586 = vmatpush.msra.mxu0 0.0
    %1587 = vmatpush.msra.mxu0 %v1514
    %1588 = vmatpush.msra.mxu0 %v1493
    %1589 = vmatpush.msra.mxu0 %v1472
    %1590 = vmatpush.msra.mxu0 %v1451
    %1591 = vmatpush.msra.mxu0 %v1430
    %1592 = vmatpush.msra.mxu0 %v1426
    %1593 = vmatpush.msra.mxu0 %v1405
    %1594 = vmatpush.msra.mxu0 %v1384
    %1595 = vmatpush.msra.mxu0 %v1363
    %1596 = vmatmul.f32.gmra.mxu0 %v1518
    %v1597 = vpop.f32.mrf.mxu0
    %v1598 = vadd.f32 0.0, %v1597
    %1599 = vdwg.mxu0
    %s1600 = scalar_lea.vmem %s7, 16
    %v1601 = vld [vmem:[%s1600] sm:$0xff]
    %1603 = vset.pattern.permute.xlu0 0
    %1604 = vperm.xlu0 %1603, %v1601
    %v1605 = vpop.permute.xlu0 %1604
    %v1607 = vmul.f32 %v1538, %v1605
    %v1608 = vmul.f32 %v1558, %v1605
    %v1609 = vmul.f32 %v1578, %v1605
    %v1610 = vmul.f32 %v1598, %v1605
    %s1611 = scalar_lea.vmem %s8, 16
    %v1612 = vld [vmem:[%s1611] sm:$0xff]
    %1614 = vset.pattern.permute.xlu0 0
    %1615 = vperm.xlu0 %1614, %v1612
    %v1616 = vpop.permute.xlu0 %1615
    %v1618 = vadd.f32 %v1607, %v1616
    %v1619 = vadd.f32 %v1608, %v1616
    %v1620 = vadd.f32 %v1609, %v1616
    %v1621 = vadd.f32 %v1610, %v1616
    %v1622 = vmax.f32 %v1618, 0.0
    %v1623 = vmax.f32 %v1619, 0.0
    %v1624 = vmax.f32 %v1620, 0.0
    %v1625 = vmax.f32 %v1621, 0.0
    %s1626 = scalar_lea.vmem %s9, 16
    %v1627 = vld [vmem:[%s1626] sm:$0xff]
    %v1629 = vsel %vm110, %v1627, 0
    %1631 = vmatpush.msra.mxu0 0.0
    %1632 = vmatpush.msra.mxu0 0.0
    %1633 = vmatpush.msra.mxu0 0.0
    %1634 = vmatpush.msra.mxu0 0.0
    %1635 = vmatpush.msra.mxu0 0.0
    %1636 = vmatpush.msra.mxu0 0.0
    %1637 = vmatpush.msra.mxu0 0.0
    %1638 = vmatpush.msra.mxu0 0.0
    %1639 = vmatpush.msra.mxu0 0.0
    %1640 = vmatpush.msra.mxu0 0.0
    %1641 = vmatpush.msra.mxu0 0.0
    %1642 = vmatpush.msra.mxu0 0.0
    %1643 = vmatpush.msra.mxu0 0.0
    %1644 = vmatpush.msra.mxu0 0.0
    %1645 = vmatpush.msra.mxu0 0.0
    %1646 = vmatpush.msra.mxu0 %v1622
    %1647 = vmatmul.f32.gmra.mxu0 %v1629
    %v1648 = vpop.f32.mrf.mxu0
    %v1649 = vadd.f32 %v1140, %v1648
    %1650 = vdwg.mxu0
    %1651 = vmatpush.msra.mxu0 0.0
    %1652 = vmatpush.msra.mxu0 0.0
    %1653 = vmatpush.msra.mxu0 0.0
    %1654 = vmatpush.msra.mxu0 0.0
    %1655 = vmatpush.msra.mxu0 0.0
    %1656 = vmatpush.msra.mxu0 0.0
    %1657 = vmatpush.msra.mxu0 0.0
    %1658 = vmatpush.msra.mxu0 0.0
    %1659 = vmatpush.msra.mxu0 0.0
    %1660 = vmatpush.msra.mxu0 0.0
    %1661 = vmatpush.msra.mxu0 0.0
    %1662 = vmatpush.msra.mxu0 0.0
    %1663 = vmatpush.msra.mxu0 0.0
    %1664 = vmatpush.msra.mxu0 0.0
    %1665 = vmatpush.msra.mxu0 0.0
    %1666 = vmatpush.msra.mxu0 %v1623
    %1667 = vmatmul.f32.gmra.mxu0 %v1629
    %v1668 = vpop.f32.mrf.mxu0
    %v1669 = vadd.f32 %v1160, %v1668
    %1670 = vdwg.mxu0
    %1671 = vmatpush.msra.mxu0 0.0
    %1672 = vmatpush.msra.mxu0 0.0
    %1673 = vmatpush.msra.mxu0 0.0
    %1674 = vmatpush.msra.mxu0 0.0
    %1675 = vmatpush.msra.mxu0 0.0
    %1676 = vmatpush.msra.mxu0 0.0
    %1677 = vmatpush.msra.mxu0 0.0
    %1678 = vmatpush.msra.mxu0 0.0
    %1679 = vmatpush.msra.mxu0 0.0
    %1680 = vmatpush.msra.mxu0 0.0
    %1681 = vmatpush.msra.mxu0 0.0
    %1682 = vmatpush.msra.mxu0 0.0
    %1683 = vmatpush.msra.mxu0 0.0
    %1684 = vmatpush.msra.mxu0 0.0
    %1685 = vmatpush.msra.mxu0 0.0
    %1686 = vmatpush.msra.mxu0 %v1624
    %1687 = vmatmul.f32.gmra.mxu0 %v1629
    %v1688 = vpop.f32.mrf.mxu0
    %v1689 = vadd.f32 %v1180, %v1688
    %1690 = vdwg.mxu0
    %1691 = vmatpush.msra.mxu0 0.0
    %1692 = vmatpush.msra.mxu0 0.0
    %1693 = vmatpush.msra.mxu0 0.0
    %1694 = vmatpush.msra.mxu0 0.0
    %1695 = vmatpush.msra.mxu0 0.0
    %1696 = vmatpush.msra.mxu0 0.0
    %1697 = vmatpush.msra.mxu0 0.0
    %1698 = vmatpush.msra.mxu0 0.0
    %1699 = vmatpush.msra.mxu0 0.0
    %1700 = vmatpush.msra.mxu0 0.0
    %1701 = vmatpush.msra.mxu0 0.0
    %1702 = vmatpush.msra.mxu0 0.0
    %1703 = vmatpush.msra.mxu0 0.0
    %1704 = vmatpush.msra.mxu0 0.0
    %1705 = vmatpush.msra.mxu0 0.0
    %1706 = vmatpush.msra.mxu0 %v1625
    %1707 = vmatmul.f32.gmra.mxu0 %v1629
    %v1708 = vpop.f32.mrf.mxu0
    %v1709 = vadd.f32 %v1200, %v1708
    %1710 = vdwg.mxu0
    %vm1711 = vcmp.ne.f32.partialorder %v218, 0.0
    %1713 = vrot.lane.b32.xlu0 %v691, 17
    %v1714 = vpop.permute.xlu0 %1713
    %1719 = vrot.lane.b32.xlu0 %v631, 17
    %v1720 = vpop.permute.xlu0 %1719
    %1721 = vrot.lane.b32.xlu0 %v651, 17
    %v1722 = vpop.permute.xlu0 %1721
    %1723 = vrot.lane.b32.xlu0 %v671, 17
    %v1724 = vpop.permute.xlu0 %1723
    %v1725 = vsel %vm232, %v1720, %v1722
    %v1726 = vsel %vm232, %v1722, %v1724
    %v1727 = vsel %vm232, %v1724, %v1714
    %v1732 = vsel %vm232, %v1714, %v1720
    %v1733 = vsel %vm1711, 1, 0
    %v1734 = vperm.slane %v1733, 0
    %v1735 = vperm.slane %v1733, 1
    %v1736 = vperm.slane %v1733, 2
    %v1737 = vperm.slane %v1733, 3
    %vm1738 = vcmp.eq.s32.totalorder %v1734, 1
    %vm1739 = vcmp.eq.s32.totalorder %v1735, 1
    %vm1740 = vcmp.eq.s32.totalorder %v1736, 1
    %vm1741 = vcmp.eq.s32.totalorder %v1737, 1
    %v1742 = vsel %vm1738, %v1732, -1e+30
    %v1743 = vsel %vm1739, %v1725, -1e+30
    %v1744 = vsel %vm1740, %v1726, -1e+30
    %v1745 = vsel %vm1741, %v1727, -1e+30
    %vm1746 = vcmp.ne.f32.partialorder %v255, 0.0
    %1747 = vrot.lane.b32.xlu0 %v691, 16
    %v1748 = vpop.permute.xlu0 %1747
    %1750 = vrot.lane.b32.xlu0 %v631, 16
    %v1751 = vpop.permute.xlu0 %1750
    %1752 = vrot.lane.b32.xlu0 %v651, 16
    %v1753 = vpop.permute.xlu0 %1752
    %1754 = vrot.lane.b32.xlu0 %v671, 16
    %v1755 = vpop.permute.xlu0 %1754
    %v1756 = vsel %vm265, %v1751, %v1753
    %v1757 = vsel %vm265, %v1753, %v1755
    %v1758 = vsel %vm265, %v1755, %v1748
    %v1763 = vsel %vm265, %v1748, %v1751
    %v1764 = vsel %vm1746, 1, 0
    %v1765 = vperm.slane %v1764, 0
    %v1766 = vperm.slane %v1764, 1
    %v1767 = vperm.slane %v1764, 2
    %v1768 = vperm.slane %v1764, 3
    %vm1769 = vcmp.eq.s32.totalorder %v1765, 1
    %vm1770 = vcmp.eq.s32.totalorder %v1766, 1
    %vm1771 = vcmp.eq.s32.totalorder %v1767, 1
    %vm1772 = vcmp.eq.s32.totalorder %v1768, 1
    %v1773 = vsel %vm1769, %v1763, -1e+30
    %v1774 = vsel %vm1770, %v1756, -1e+30
    %v1775 = vsel %vm1771, %v1757, -1e+30
    %v1776 = vsel %vm1772, %v1758, -1e+30
    %vm1777 = vcmp.ne.f32.partialorder %v288, 0.0
    %1778 = vrot.lane.b32.xlu0 %v691, 15
    %v1779 = vpop.permute.xlu0 %1778
    %1781 = vrot.lane.b32.xlu0 %v631, 15
    %v1782 = vpop.permute.xlu0 %1781
    %1783 = vrot.lane.b32.xlu0 %v651, 15
    %v1784 = vpop.permute.xlu0 %1783
    %1785 = vrot.lane.b32.xlu0 %v671, 15
    %v1786 = vpop.permute.xlu0 %1785
    %v1787 = vsel %vm298, %v1782, %v1784
    %v1788 = vsel %vm298, %v1784, %v1786
    %v1789 = vsel %vm298, %v1786, %v1779
    %v1794 = vsel %vm298, %v1779, %v1782
    %v1795 = vsel %vm1777, 1, 0
    %v1796 = vperm.slane %v1795, 0
    %v1797 = vperm.slane %v1795, 1
    %v1798 = vperm.slane %v1795, 2
    %v1799 = vperm.slane %v1795, 3
    %vm1800 = vcmp.eq.s32.totalorder %v1796, 1
    %vm1801 = vcmp.eq.s32.totalorder %v1797, 1
    %vm1802 = vcmp.eq.s32.totalorder %v1798, 1
    %vm1803 = vcmp.eq.s32.totalorder %v1799, 1
    %v1804 = vsel %vm1800, %v1794, -1e+30
    %v1805 = vsel %vm1801, %v1787, -1e+30
    %v1806 = vsel %vm1802, %v1788, -1e+30
    %v1807 = vsel %vm1803, %v1789, -1e+30
    %vm1808 = vcmp.ne.f32.partialorder %v321, 0.0
    %1809 = vrot.lane.b32.xlu0 %v691, 1
    %v1810 = vpop.permute.xlu0 %1809
    %1812 = vrot.lane.b32.xlu0 %v631, 1
    %v1813 = vpop.permute.xlu0 %1812
    %1814 = vrot.lane.b32.xlu0 %v651, 1
    %v1815 = vpop.permute.xlu0 %1814
    %1816 = vrot.lane.b32.xlu0 %v671, 1
    %v1817 = vpop.permute.xlu0 %1816
    %v1818 = vsel %vm331, %v1813, %v1815
    %v1819 = vsel %vm331, %v1815, %v1817
    %v1820 = vsel %vm331, %v1817, %v1810
    %v1825 = vsel %vm331, %v1810, %v1813
    %v1826 = vsel %vm1808, 1, 0
    %v1827 = vperm.slane %v1826, 0
    %v1828 = vperm.slane %v1826, 1
    %v1829 = vperm.slane %v1826, 2
    %v1830 = vperm.slane %v1826, 3
    %vm1831 = vcmp.eq.s32.totalorder %v1827, 1
    %vm1832 = vcmp.eq.s32.totalorder %v1828, 1
    %vm1833 = vcmp.eq.s32.totalorder %v1829, 1
    %vm1834 = vcmp.eq.s32.totalorder %v1830, 1
    %v1835 = vsel %vm1831, %v1825, -1e+30
    %v1836 = vsel %vm1832, %v1818, -1e+30
    %v1837 = vsel %vm1833, %v1819, -1e+30
    %v1838 = vsel %vm1834, %v1820, -1e+30
    %vm1839 = vcmp.ne.f32.partialorder %v354, 0.0
    %v1840 = vsel %vm1839, 1, 0
    %v1841 = vperm.slane %v1840, 0
    %v1842 = vperm.slane %v1840, 1
    %v1843 = vperm.slane %v1840, 2
    %v1844 = vperm.slane %v1840, 3
    %vm1845 = vcmp.eq.s32.totalorder %v1841, 1
    %vm1846 = vcmp.eq.s32.totalorder %v1842, 1
    %vm1847 = vcmp.eq.s32.totalorder %v1843, 1
    %vm1848 = vcmp.eq.s32.totalorder %v1844, 1
    %v1849 = vsel %vm1845, %v631, -1e+30
    %v1850 = vsel %vm1846, %v651, -1e+30
    %v1851 = vsel %vm1847, %v671, -1e+30
    %v1852 = vsel %vm1848, %v691, -1e+30
    %vm1853 = vcmp.ne.f32.partialorder %v369, 0.0
    %1854 = vrot.lane.b32.xlu0 %v631, 127
    %v1855 = vpop.permute.xlu0 %1854
    %1856 = vrot.lane.b32.xlu0 %v651, 127
    %v1857 = vpop.permute.xlu0 %1856
    %1858 = vrot.lane.b32.xlu0 %v671, 127
    %v1859 = vpop.permute.xlu0 %1858
    %1860 = vrot.lane.b32.xlu0 %v691, 127
    %v1861 = vpop.permute.xlu0 %1860
    %v1862 = vsel %vm378, %v1855, %v1857
    %v1863 = vsel %vm378, %v1857, %v1859
    %v1864 = vsel %vm378, %v1859, %v1861
    %v1870 = vsel %vm378, %v1861, %v1855
    %v1871 = vsel %vm1853, 1, 0
    %v1872 = vperm.slane %v1871, 0
    %v1873 = vperm.slane %v1871, 1
    %v1874 = vperm.slane %v1871, 2
    %v1875 = vperm.slane %v1871, 3
    %vm1876 = vcmp.eq.s32.totalorder %v1872, 1
    %vm1877 = vcmp.eq.s32.totalorder %v1873, 1
    %vm1878 = vcmp.eq.s32.totalorder %v1874, 1
    %vm1879 = vcmp.eq.s32.totalorder %v1875, 1
    %v1880 = vsel %vm1876, %v1862, -1e+30
    %v1881 = vsel %vm1877, %v1863, -1e+30
    %v1882 = vsel %vm1878, %v1864, -1e+30
    %v1883 = vsel %vm1879, %v1870, -1e+30
    %vm1884 = vcmp.ne.f32.partialorder %v402, 0.0
    %1885 = vrot.lane.b32.xlu0 %v631, 113
    %v1886 = vpop.permute.xlu0 %1885
    %1887 = vrot.lane.b32.xlu0 %v651, 113
    %v1888 = vpop.permute.xlu0 %1887
    %1889 = vrot.lane.b32.xlu0 %v671, 113
    %v1890 = vpop.permute.xlu0 %1889
    %1891 = vrot.lane.b32.xlu0 %v691, 113
    %v1892 = vpop.permute.xlu0 %1891
    %v1893 = vsel %vm411, %v1886, %v1888
    %v1894 = vsel %vm411, %v1888, %v1890
    %v1895 = vsel %vm411, %v1890, %v1892
    %v1901 = vsel %vm411, %v1892, %v1886
    %v1902 = vsel %vm1884, 1, 0
    %v1903 = vperm.slane %v1902, 0
    %v1904 = vperm.slane %v1902, 1
    %v1905 = vperm.slane %v1902, 2
    %v1906 = vperm.slane %v1902, 3
    %vm1907 = vcmp.eq.s32.totalorder %v1903, 1
    %vm1908 = vcmp.eq.s32.totalorder %v1904, 1
    %vm1909 = vcmp.eq.s32.totalorder %v1905, 1
    %vm1910 = vcmp.eq.s32.totalorder %v1906, 1
    %v1911 = vsel %vm1907, %v1893, -1e+30
    %v1912 = vsel %vm1908, %v1894, -1e+30
    %v1913 = vsel %vm1909, %v1895, -1e+30
    %v1914 = vsel %vm1910, %v1901, -1e+30
    %vm1915 = vcmp.ne.f32.partialorder %v435, 0.0
    %1916 = vrot.lane.b32.xlu0 %v631, 112
    %v1917 = vpop.permute.xlu0 %1916
    %1918 = vrot.lane.b32.xlu0 %v651, 112
    %v1919 = vpop.permute.xlu0 %1918
    %1920 = vrot.lane.b32.xlu0 %v671, 112
    %v1921 = vpop.permute.xlu0 %1920
    %1922 = vrot.lane.b32.xlu0 %v691, 112
    %v1923 = vpop.permute.xlu0 %1922
    %v1924 = vsel %vm444, %v1917, %v1919
    %v1925 = vsel %vm444, %v1919, %v1921
    %v1926 = vsel %vm444, %v1921, %v1923
    %v1932 = vsel %vm444, %v1923, %v1917
    %v1933 = vsel %vm1915, 1, 0
    %v1934 = vperm.slane %v1933, 0
    %v1935 = vperm.slane %v1933, 1
    %v1936 = vperm.slane %v1933, 2
    %v1937 = vperm.slane %v1933, 3
    %vm1938 = vcmp.eq.s32.totalorder %v1934, 1
    %vm1939 = vcmp.eq.s32.totalorder %v1935, 1
    %vm1940 = vcmp.eq.s32.totalorder %v1936, 1
    %vm1941 = vcmp.eq.s32.totalorder %v1937, 1
    %v1942 = vsel %vm1938, %v1924, -1e+30
    %v1943 = vsel %vm1939, %v1925, -1e+30
    %v1944 = vsel %vm1940, %v1926, -1e+30
    %v1945 = vsel %vm1941, %v1932, -1e+30
    %vm1946 = vcmp.ne.f32.partialorder %v468, 0.0
    %1947 = vrot.lane.b32.xlu0 %v631, 111
    %v1948 = vpop.permute.xlu0 %1947
    %1949 = vrot.lane.b32.xlu0 %v651, 111
    %v1950 = vpop.permute.xlu0 %1949
    %1951 = vrot.lane.b32.xlu0 %v671, 111
    %v1952 = vpop.permute.xlu0 %1951
    %1953 = vrot.lane.b32.xlu0 %v691, 111
    %v1954 = vpop.permute.xlu0 %1953
    %v1955 = vsel %vm477, %v1948, %v1950
    %v1956 = vsel %vm477, %v1950, %v1952
    %v1957 = vsel %vm477, %v1952, %v1954
    %v1963 = vsel %vm477, %v1954, %v1948
    %v1964 = vsel %vm1946, 1, 0
    %v1965 = vperm.slane %v1964, 0
    %v1966 = vperm.slane %v1964, 1
    %v1967 = vperm.slane %v1964, 2
    %v1968 = vperm.slane %v1964, 3
    %vm1969 = vcmp.eq.s32.totalorder %v1965, 1
    %vm1970 = vcmp.eq.s32.totalorder %v1966, 1
    %vm1971 = vcmp.eq.s32.totalorder %v1967, 1
    %vm1972 = vcmp.eq.s32.totalorder %v1968, 1
    %v1973 = vsel %vm1969, %v1955, -1e+30
    %v1974 = vsel %vm1970, %v1956, -1e+30
    %v1975 = vsel %vm1971, %v1957, -1e+30
    %v1976 = vsel %vm1972, %v1963, -1e+30
    %v1977 = vmax.f32 %v1742, %v1773
    %v1978 = vmax.f32 %v1743, %v1774
    %v1979 = vmax.f32 %v1744, %v1775
    %v1980 = vmax.f32 %v1745, %v1776
    %v1981 = vmax.f32 %v1804, %v1835
    %v1982 = vmax.f32 %v1805, %v1836
    %v1983 = vmax.f32 %v1806, %v1837
    %v1984 = vmax.f32 %v1807, %v1838
    %v1985 = vmax.f32 %v1849, %v1880
    %v1986 = vmax.f32 %v1850, %v1881
    %v1987 = vmax.f32 %v1851, %v1882
    %v1988 = vmax.f32 %v1852, %v1883
    %v1989 = vmax.f32 %v1911, %v1942
    %v1990 = vmax.f32 %v1912, %v1943
    %v1991 = vmax.f32 %v1913, %v1944
    %v1992 = vmax.f32 %v1914, %v1945
    %v1993 = vmax.f32 %v1977, %v1981
    %v1994 = vmax.f32 %v1978, %v1982
    %v1995 = vmax.f32 %v1979, %v1983
    %v1996 = vmax.f32 %v1980, %v1984
    %v1997 = vmax.f32 %v1985, %v1989
    %v1998 = vmax.f32 %v1986, %v1990
    %v1999 = vmax.f32 %v1987, %v1991
    %v2000 = vmax.f32 %v1988, %v1992
    %v2001 = vmax.f32 %v1993, %v1997
    %v2002 = vmax.f32 %v1994, %v1998
    %v2003 = vmax.f32 %v1995, %v1999
    %v2004 = vmax.f32 %v1996, %v2000
    %v2005 = vmax.f32 %v2001, %v1973
    %v2006 = vmax.f32 %v2002, %v1974
    %v2007 = vmax.f32 %v2003, %v1975
    %v2008 = vmax.f32 %v2004, %v1976
    %v2009 = vld [vmem:[%s16] sm:$0xff]
    %v2010 = vld [vmem:[%s16 + $0x8] sm:$0xff]
    %v2011 = vld [vmem:[%s16 + $0x10] sm:$0xff]
    %v2012 = vld [vmem:[%s16 + $0x18] sm:$0xff]
    %v2013 = vld [vmem:[%s16 + $0x20] sm:$0xff]
    %v2014 = vld [vmem:[%s16 + $0x28] sm:$0xff]
    %v2015 = vld [vmem:[%s16 + $0x30] sm:$0xff]
    %v2016 = vld [vmem:[%s16 + $0x38] sm:$0xff]
    %v2017 = vld [vmem:[%s16 + $0x40] sm:$0xff]
    %v2018 = vld [vmem:[%s16 + $0x48] sm:$0xff]
    %v2019 = vld [vmem:[%s16 + $0x50] sm:$0xff]
    %v2020 = vld [vmem:[%s16 + $0x58] sm:$0xff]
    %v2021 = vld [vmem:[%s16 + $0x60] sm:$0xff]
    %v2022 = vld [vmem:[%s16 + $0x68] sm:$0xff]
    %v2023 = vld [vmem:[%s16 + $0x70] sm:$0xff]
    %v2024 = vld [vmem:[%s16 + $0x78] sm:$0xff]
    %v2025 = vld [vmem:[%s16 + $0x80] sm:$0xff]
    %v2026 = vld [vmem:[%s16 + $0x88] sm:$0xff]
    %v2027 = vld [vmem:[%s16 + $0x90] sm:$0xff]
    %v2028 = vld [vmem:[%s16 + $0x98] sm:$0xff]
    %v2029 = vld [vmem:[%s16 + $0xa0] sm:$0xff]
    %v2030 = vld [vmem:[%s16 + $0xa8] sm:$0xff]
    %v2031 = vld [vmem:[%s16 + $0xb0] sm:$0xff]
    %v2032 = vld [vmem:[%s16 + $0xb8] sm:$0xff]
    %v2033 = vld [vmem:[%s16 + $0xc0] sm:$0xff]
    %v2034 = vld [vmem:[%s16 + $0xc8] sm:$0xff]
    %v2035 = vld [vmem:[%s16 + $0xd0] sm:$0xff]
    %v2036 = vld [vmem:[%s16 + $0xd8] sm:$0xff]
    %v2037 = vld [vmem:[%s16 + $0xe0] sm:$0xff]
    %v2038 = vld [vmem:[%s16 + $0xe8] sm:$0xff]
    %v2039 = vld [vmem:[%s16 + $0xf0] sm:$0xff]
    %v2040 = vld [vmem:[%s16 + $0xf8] sm:$0xff]
    %v2041 = vld [vmem:[%s16 + $0x100] sm:$0xff]
    %v2042 = vld [vmem:[%s16 + $0x108] sm:$0xff]
    %v2043 = vld [vmem:[%s16 + $0x110] sm:$0xff]
    %v2044 = vld [vmem:[%s16 + $0x118] sm:$0xff]
    %v2045 = vld [vmem:[%s16 + $0x120] sm:$0xff]
    %v2046 = vld [vmem:[%s16 + $0x128] sm:$0xff]
    %v2047 = vld [vmem:[%s16 + $0x130] sm:$0xff]
    %v2048 = vld [vmem:[%s16 + $0x138] sm:$0xff]
    %v2049 = vld [vmem:[%s16 + $0x140] sm:$0xff]
    %v2050 = vld [vmem:[%s16 + $0x148] sm:$0xff]
    %v2051 = vld [vmem:[%s16 + $0x150] sm:$0xff]
    %v2052 = vld [vmem:[%s16 + $0x158] sm:$0xff]
    %v2053 = vld [vmem:[%s16 + $0x160] sm:$0xff]
    %v2054 = vld [vmem:[%s16 + $0x168] sm:$0xff]
    %v2055 = vld [vmem:[%s16 + $0x170] sm:$0xff]
    %v2056 = vld [vmem:[%s16 + $0x178] sm:$0xff]
    %v2057 = vld [vmem:[%s16 + $0x180] sm:$0xff]
    %v2058 = vld [vmem:[%s16 + $0x188] sm:$0xff]
    %v2059 = vld [vmem:[%s16 + $0x190] sm:$0xff]
    %v2060 = vld [vmem:[%s16 + $0x198] sm:$0xff]
    %v2061 = vld [vmem:[%s16 + $0x1a0] sm:$0xff]
    %v2062 = vld [vmem:[%s16 + $0x1a8] sm:$0xff]
    %v2063 = vld [vmem:[%s16 + $0x1b0] sm:$0xff]
    %v2064 = vld [vmem:[%s16 + $0x1b8] sm:$0xff]
    %v2065 = vld [vmem:[%s16 + $0x1c0] sm:$0xff]
    %v2066 = vld [vmem:[%s16 + $0x1c8] sm:$0xff]
    %v2067 = vld [vmem:[%s16 + $0x1d0] sm:$0xff]
    %v2068 = vld [vmem:[%s16 + $0x1d8] sm:$0xff]
    %v2069 = vld [vmem:[%s16 + $0x1e0] sm:$0xff]
    %v2070 = vld [vmem:[%s16 + $0x1e8] sm:$0xff]
    %v2071 = vld [vmem:[%s16 + $0x1f0] sm:$0xff]
    %v2072 = vld [vmem:[%s16 + $0x1f8] sm:$0xff]
    %2073 = vmatpush.msra.mxu0 %v2024
    %2074 = vmatpush.msra.mxu0 %v2023
    %2075 = vmatpush.msra.mxu0 %v2022
    %2076 = vmatpush.msra.mxu0 %v2021
    %2077 = vmatpush.msra.mxu0 %v2020
    %2078 = vmatpush.msra.mxu0 %v2019
    %2079 = vmatpush.msra.mxu0 %v2018
    %2080 = vmatpush.msra.mxu0 %v2017
    %2081 = vmatpush.msra.mxu0 %v2016
    %2082 = vmatpush.msra.mxu0 %v2015
    %2083 = vmatpush.msra.mxu0 %v2014
    %2084 = vmatpush.msra.mxu0 %v2013
    %2085 = vmatpush.msra.mxu0 %v2012
    %2086 = vmatpush.msra.mxu0 %v2011
    %2087 = vmatpush.msra.mxu0 %v2010
    %2088 = vmatpush.msra.mxu0 %v2009
    %2089 = vmatmul.f32.gmra.mxu0 %v2005
    %v2090 = vpop.f32.mrf.mxu0
    %v2091 = vadd.f32 0.0, %v2090
    %2092 = vdwg.mxu0
    %2093 = vmatpush.msra.mxu0 %v2040
    %2094 = vmatpush.msra.mxu0 %v2039
    %2095 = vmatpush.msra.mxu0 %v2038
    %2096 = vmatpush.msra.mxu0 %v2037
    %2097 = vmatpush.msra.mxu0 %v2036
    %2098 = vmatpush.msra.mxu0 %v2035
    %2099 = vmatpush.msra.mxu0 %v2034
    %2100 = vmatpush.msra.mxu0 %v2033
    %2101 = vmatpush.msra.mxu0 %v2032
    %2102 = vmatpush.msra.mxu0 %v2031
    %2103 = vmatpush.msra.mxu0 %v2030
    %2104 = vmatpush.msra.mxu0 %v2029
    %2105 = vmatpush.msra.mxu0 %v2028
    %2106 = vmatpush.msra.mxu0 %v2027
    %2107 = vmatpush.msra.mxu0 %v2026
    %2108 = vmatpush.msra.mxu0 %v2025
    %2109 = vmatmul.f32.gmra.mxu0 %v2006
    %v2110 = vpop.f32.mrf.mxu0
    %v2111 = vadd.f32 %v2091, %v2110
    %2112 = vdwg.mxu0
    %2113 = vmatpush.msra.mxu0 %v2056
    %2114 = vmatpush.msra.mxu0 %v2055
    %2115 = vmatpush.msra.mxu0 %v2054
    %2116 = vmatpush.msra.mxu0 %v2053
    %2117 = vmatpush.msra.mxu0 %v2052
    %2118 = vmatpush.msra.mxu0 %v2051
    %2119 = vmatpush.msra.mxu0 %v2050
    %2120 = vmatpush.msra.mxu0 %v2049
    %2121 = vmatpush.msra.mxu0 %v2048
    %2122 = vmatpush.msra.mxu0 %v2047
    %2123 = vmatpush.msra.mxu0 %v2046
    %2124 = vmatpush.msra.mxu0 %v2045
    %2125 = vmatpush.msra.mxu0 %v2044
    %2126 = vmatpush.msra.mxu0 %v2043
    %2127 = vmatpush.msra.mxu0 %v2042
    %2128 = vmatpush.msra.mxu0 %v2041
    %2129 = vmatmul.f32.gmra.mxu0 %v2007
    %v2130 = vpop.f32.mrf.mxu0
    %v2131 = vadd.f32 %v2111, %v2130
    %2132 = vdwg.mxu0
    %2133 = vmatpush.msra.mxu0 %v2072
    %2134 = vmatpush.msra.mxu0 %v2071
    %2135 = vmatpush.msra.mxu0 %v2070
    %2136 = vmatpush.msra.mxu0 %v2069
    %2137 = vmatpush.msra.mxu0 %v2068
    %2138 = vmatpush.msra.mxu0 %v2067
    %2139 = vmatpush.msra.mxu0 %v2066
    %2140 = vmatpush.msra.mxu0 %v2065
    %2141 = vmatpush.msra.mxu0 %v2064
    %2142 = vmatpush.msra.mxu0 %v2063
    %2143 = vmatpush.msra.mxu0 %v2062
    %2144 = vmatpush.msra.mxu0 %v2061
    %2145 = vmatpush.msra.mxu0 %v2060
    %2146 = vmatpush.msra.mxu0 %v2059
    %2147 = vmatpush.msra.mxu0 %v2058
    %2148 = vmatpush.msra.mxu0 %v2057
    %2149 = vmatmul.f32.gmra.mxu0 %v2008
    %v2150 = vpop.f32.mrf.mxu0
    %v2151 = vadd.f32 %v2131, %v2150
    %2152 = vdwg.mxu0
    %s2153 = scalar_lea.vmem %s1, 24
    %v2154 = vld [vmem:[%s2153] sm:$0xff]
    %2156 = vset.pattern.permute.xlu0 0
    %2157 = vperm.xlu0 %2156, %v2154
    %v2158 = vpop.permute.xlu0 %2157
    %v2160 = vmul.f32 %v2151, %v2158
    %s2161 = scalar_lea.vmem %s2, 24
    %v2162 = vld [vmem:[%s2161] sm:$0xff]
    %2164 = vset.pattern.permute.xlu0 0
    %2165 = vperm.xlu0 %2164, %v2162
    %v2166 = vpop.permute.xlu0 %2165
    %v2168 = vadd.f32 %v2160, %v2166
    %v2169 = vmax.f32 %v2168, 0.0
    %s2170 = scalar_lea.vmem %s3, 24
    %v2171 = vld [vmem:[%s2170] sm:$0xff]
    %v2173 = vsel %vm110, %v2171, 0
    %2175 = vmatpush.msra.mxu0 0.0
    %2176 = vmatpush.msra.mxu0 0.0
    %2177 = vmatpush.msra.mxu0 0.0
    %2178 = vmatpush.msra.mxu0 0.0
    %2179 = vmatpush.msra.mxu0 0.0
    %2180 = vmatpush.msra.mxu0 0.0
    %2181 = vmatpush.msra.mxu0 0.0
    %2182 = vmatpush.msra.mxu0 0.0
    %2183 = vmatpush.msra.mxu0 0.0
    %2184 = vmatpush.msra.mxu0 0.0
    %2185 = vmatpush.msra.mxu0 0.0
    %2186 = vmatpush.msra.mxu0 0.0
    %2187 = vmatpush.msra.mxu0 0.0
    %2188 = vmatpush.msra.mxu0 0.0
    %2189 = vmatpush.msra.mxu0 0.0
    %2190 = vmatpush.msra.mxu0 %v2169
    %2191 = vmatmul.f32.gmra.mxu0 %v2173
    %v2192 = vpop.f32.mrf.mxu0
    %v2193 = vadd.f32 0.0, %v2192
    %2194 = vdwg.mxu0
    %s2195 = scalar_lea.vmem %s4, 24
    %v2196 = vld [vmem:[%s2195] sm:$0xff]
    %2198 = vset.pattern.permute.xlu0 0
    %2199 = vperm.xlu0 %2198, %v2196
    %v2200 = vpop.permute.xlu0 %2199
    %v2202 = vmul.f32 %v2193, %v2200
    %s2203 = scalar_lea.vmem %s5, 24
    %v2204 = vld [vmem:[%s2203] sm:$0xff]
    %2206 = vset.pattern.permute.xlu0 0
    %2207 = vperm.xlu0 %2206, %v2204
    %v2208 = vpop.permute.xlu0 %2207
    %v2210 = vadd.f32 %v2202, %v2208
    %v2211 = vmax.f32 %v2210, 0.0
    %v2212 = vld [vmem:[%s14] sm:$0x1]
    %2214 = vrot.lane.b32.xlu0 %v2211, 9
    %v2215 = vpop.permute.xlu0 %2214
    %v2218 = vperm.slane %v2212, 0
    %v2220 = vmul.f32 %v2218, %v2215
    %s2221 = scalar_lea.vmem %s14, 1
    %v2222 = vld [vmem:[%s2221] sm:$0x1]
    %2223 = vrot.lane.b32.xlu0 %v2211, 8
    %v2224 = vpop.permute.xlu0 %2223
    %v2227 = vperm.slane %v2222, 0
    %v2229 = vmul.f32 %v2227, %v2224
    %s2230 = scalar_lea.vmem %s14, 2
    %v2231 = vld [vmem:[%s2230] sm:$0x1]
    %2232 = vrot.lane.b32.xlu0 %v2211, 7
    %v2233 = vpop.permute.xlu0 %2232
    %v2236 = vperm.slane %v2231, 0
    %v2238 = vmul.f32 %v2236, %v2233
    %s2239 = scalar_lea.vmem %s14, 3
    %v2240 = vld [vmem:[%s2239] sm:$0x1]
    %2241 = vrot.lane.b32.xlu0 %v2211, 1
    %v2242 = vpop.permute.xlu0 %2241
    %v2245 = vperm.slane %v2240, 0
    %v2247 = vmul.f32 %v2245, %v2242
    %s2248 = scalar_lea.vmem %s14, 4
    %v2249 = vld [vmem:[%s2248] sm:$0x1]
    %v2251 = vperm.slane %v2249, 0
    %v2253 = vmul.f32 %v2251, %v2211
    %s2254 = scalar_lea.vmem %s14, 5
    %v2255 = vld [vmem:[%s2254] sm:$0x1]
    %2256 = vrot.lane.b32.xlu0 %v2211, 127
    %v2257 = vpop.permute.xlu0 %2256
    %v2260 = vperm.slane %v2255, 0
    %v2262 = vmul.f32 %v2260, %v2257
    %s2263 = scalar_lea.vmem %s14, 6
    %v2264 = vld [vmem:[%s2263] sm:$0x1]
    %2265 = vrot.lane.b32.xlu0 %v2211, 121
    %v2266 = vpop.permute.xlu0 %2265
    %v2269 = vperm.slane %v2264, 0
    %v2271 = vmul.f32 %v2269, %v2266
    %s2272 = scalar_lea.vmem %s14, 7
    %v2273 = vld [vmem:[%s2272] sm:$0x1]
    %2274 = vrot.lane.b32.xlu0 %v2211, 120
    %v2275 = vpop.permute.xlu0 %2274
    %v2278 = vperm.slane %v2273, 0
    %v2280 = vmul.f32 %v2278, %v2275
    %s2281 = scalar_lea.vmem %s14, 8
    %v2282 = vld [vmem:[%s2281] sm:$0x1]
    %2283 = vrot.lane.b32.xlu0 %v2211, 119
    %v2284 = vpop.permute.xlu0 %2283
    %v2287 = vperm.slane %v2282, 0
    %v2289 = vmul.f32 %v2287, %v2284
    %s2290 = scalar_lea.vmem %s6, 24
    %v2291 = vld [vmem:[%s2290] sm:$0xff]
    %v2293 = vsel %vm501, %v2291, 0
    %2295 = vmatpush.msra.mxu0 0.0
    %2296 = vmatpush.msra.mxu0 0.0
    %2297 = vmatpush.msra.mxu0 0.0
    %2298 = vmatpush.msra.mxu0 0.0
    %2299 = vmatpush.msra.mxu0 0.0
    %2300 = vmatpush.msra.mxu0 0.0
    %2301 = vmatpush.msra.mxu0 0.0
    %2302 = vmatpush.msra.mxu0 %v2289
    %2303 = vmatpush.msra.mxu0 %v2280
    %2304 = vmatpush.msra.mxu0 %v2271
    %2305 = vmatpush.msra.mxu0 %v2262
    %2306 = vmatpush.msra.mxu0 %v2253
    %2307 = vmatpush.msra.mxu0 %v2247
    %2308 = vmatpush.msra.mxu0 %v2238
    %2309 = vmatpush.msra.mxu0 %v2229
    %2310 = vmatpush.msra.mxu0 %v2220
    %2311 = vmatmul.f32.gmra.mxu0 %v2293
    %v2312 = vpop.f32.mrf.mxu0
    %v2313 = vadd.f32 0.0, %v2312
    %2314 = vdwg.mxu0
    %s2315 = scalar_lea.vmem %s7, 24
    %v2316 = vld [vmem:[%s2315] sm:$0xff]
    %2318 = vset.pattern.permute.xlu0 0
    %2319 = vperm.xlu0 %2318, %v2316
    %v2320 = vpop.permute.xlu0 %2319
    %v2322 = vmul.f32 %v2313, %v2320
    %s2323 = scalar_lea.vmem %s8, 24
    %v2324 = vld [vmem:[%s2323] sm:$0xff]
    %2326 = vset.pattern.permute.xlu0 0
    %2327 = vperm.xlu0 %2326, %v2324
    %v2328 = vpop.permute.xlu0 %2327
    %v2330 = vadd.f32 %v2322, %v2328
    %v2331 = vmax.f32 %v2330, 0.0
    %s2332 = scalar_lea.vmem %s9, 24
    %v2333 = vld [vmem:[%s2332] sm:$0xff]
    %v2335 = vsel %vm110, %v2333, 0
    %2337 = vmatpush.msra.mxu0 0.0
    %2338 = vmatpush.msra.mxu0 0.0
    %2339 = vmatpush.msra.mxu0 0.0
    %2340 = vmatpush.msra.mxu0 0.0
    %2341 = vmatpush.msra.mxu0 0.0
    %2342 = vmatpush.msra.mxu0 0.0
    %2343 = vmatpush.msra.mxu0 0.0
    %2344 = vmatpush.msra.mxu0 0.0
    %2345 = vmatpush.msra.mxu0 0.0
    %2346 = vmatpush.msra.mxu0 0.0
    %2347 = vmatpush.msra.mxu0 0.0
    %2348 = vmatpush.msra.mxu0 0.0
    %2349 = vmatpush.msra.mxu0 0.0
    %2350 = vmatpush.msra.mxu0 0.0
    %2351 = vmatpush.msra.mxu0 0.0
    %2352 = vmatpush.msra.mxu0 %v2331
    %2353 = vmatmul.f32.gmra.mxu0 %v2335
    %v2354 = vpop.f32.mrf.mxu0
    %v2355 = vadd.f32 %v2151, %v2354
    %2356 = vdwg.mxu0
    %s2357 = scalar_lea.vmem %s1, 32
    %v2358 = vld [vmem:[%s2357] sm:$0xff]
    %2360 = vset.pattern.permute.xlu0 0
    %2361 = vperm.xlu0 %2360, %v2358
    %v2362 = vpop.permute.xlu0 %2361
    %v2364 = vmul.f32 %v2355, %v2362
    %s2365 = scalar_lea.vmem %s2, 32
    %v2366 = vld [vmem:[%s2365] sm:$0xff]
    %2368 = vset.pattern.permute.xlu0 0
    %2369 = vperm.xlu0 %2368, %v2366
    %v2370 = vpop.permute.xlu0 %2369
    %v2372 = vadd.f32 %v2364, %v2370
    %v2373 = vmax.f32 %v2372, 0.0
    %s2374 = scalar_lea.vmem %s3, 32
    %v2375 = vld [vmem:[%s2374] sm:$0xff]
    %v2377 = vsel %vm110, %v2375, 0
    %2379 = vmatpush.msra.mxu0 0.0
    %2380 = vmatpush.msra.mxu0 0.0
    %2381 = vmatpush.msra.mxu0 0.0
    %2382 = vmatpush.msra.mxu0 0.0
    %2383 = vmatpush.msra.mxu0 0.0
    %2384 = vmatpush.msra.mxu0 0.0
    %2385 = vmatpush.msra.mxu0 0.0
    %2386 = vmatpush.msra.mxu0 0.0
    %2387 = vmatpush.msra.mxu0 0.0
    %2388 = vmatpush.msra.mxu0 0.0
    %2389 = vmatpush.msra.mxu0 0.0
    %2390 = vmatpush.msra.mxu0 0.0
    %2391 = vmatpush.msra.mxu0 0.0
    %2392 = vmatpush.msra.mxu0 0.0
    %2393 = vmatpush.msra.mxu0 0.0
    %2394 = vmatpush.msra.mxu0 %v2373
    %2395 = vmatmul.f32.gmra.mxu0 %v2377
    %v2396 = vpop.f32.mrf.mxu0
    %v2397 = vadd.f32 0.0, %v2396
    %2398 = vdwg.mxu0
    %s2399 = scalar_lea.vmem %s4, 32
    %v2400 = vld [vmem:[%s2399] sm:$0xff]
    %2402 = vset.pattern.permute.xlu0 0
    %2403 = vperm.xlu0 %2402, %v2400
    %v2404 = vpop.permute.xlu0 %2403
    %v2406 = vmul.f32 %v2397, %v2404
    %s2407 = scalar_lea.vmem %s5, 32
    %v2408 = vld [vmem:[%s2407] sm:$0xff]
    %2410 = vset.pattern.permute.xlu0 0
    %2411 = vperm.xlu0 %2410, %v2408
    %v2412 = vpop.permute.xlu0 %2411
    %v2414 = vadd.f32 %v2406, %v2412
    %v2415 = vmax.f32 %v2414, 0.0
    %2417 = vrot.lane.b32.xlu0 %v2415, 9
    %v2418 = vpop.permute.xlu0 %2417
    %v2420 = vmul.f32 %v2218, %v2418
    %2421 = vrot.lane.b32.xlu0 %v2415, 8
    %v2422 = vpop.permute.xlu0 %2421
    %v2424 = vmul.f32 %v2227, %v2422
    %2425 = vrot.lane.b32.xlu0 %v2415, 7
    %v2426 = vpop.permute.xlu0 %2425
    %v2428 = vmul.f32 %v2236, %v2426
    %2429 = vrot.lane.b32.xlu0 %v2415, 1
    %v2430 = vpop.permute.xlu0 %2429
    %v2432 = vmul.f32 %v2245, %v2430
    %v2433 = vmul.f32 %v2251, %v2415
    %2434 = vrot.lane.b32.xlu0 %v2415, 127
    %v2435 = vpop.permute.xlu0 %2434
    %v2437 = vmul.f32 %v2260, %v2435
    %2438 = vrot.lane.b32.xlu0 %v2415, 121
    %v2439 = vpop.permute.xlu0 %2438
    %v2441 = vmul.f32 %v2269, %v2439
    %2442 = vrot.lane.b32.xlu0 %v2415, 120
    %v2443 = vpop.permute.xlu0 %2442
    %v2445 = vmul.f32 %v2278, %v2443
    %2446 = vrot.lane.b32.xlu0 %v2415, 119
    %v2447 = vpop.permute.xlu0 %2446
    %v2449 = vmul.f32 %v2287, %v2447
    %s2450 = scalar_lea.vmem %s6, 32
    %v2451 = vld [vmem:[%s2450] sm:$0xff]
    %v2453 = vsel %vm501, %v2451, 0
    %2455 = vmatpush.msra.mxu0 0.0
    %2456 = vmatpush.msra.mxu0 0.0
    %2457 = vmatpush.msra.mxu0 0.0
    %2458 = vmatpush.msra.mxu0 0.0
    %2459 = vmatpush.msra.mxu0 0.0
    %2460 = vmatpush.msra.mxu0 0.0
    %2461 = vmatpush.msra.mxu0 0.0
    %2462 = vmatpush.msra.mxu0 %v2449
    %2463 = vmatpush.msra.mxu0 %v2445
    %2464 = vmatpush.msra.mxu0 %v2441
    %2465 = vmatpush.msra.mxu0 %v2437
    %2466 = vmatpush.msra.mxu0 %v2433
    %2467 = vmatpush.msra.mxu0 %v2432
    %2468 = vmatpush.msra.mxu0 %v2428
    %2469 = vmatpush.msra.mxu0 %v2424
    %2470 = vmatpush.msra.mxu0 %v2420
    %2471 = vmatmul.f32.gmra.mxu0 %v2453
    %v2472 = vpop.f32.mrf.mxu0
    %v2473 = vadd.f32 0.0, %v2472
    %2474 = vdwg.mxu0
    %s2475 = scalar_lea.vmem %s7, 32
    %v2476 = vld [vmem:[%s2475] sm:$0xff]
    %2478 = vset.pattern.permute.xlu0 0
    %2479 = vperm.xlu0 %2478, %v2476
    %v2480 = vpop.permute.xlu0 %2479
    %v2482 = vmul.f32 %v2473, %v2480
    %s2483 = scalar_lea.vmem %s8, 32
    %v2484 = vld [vmem:[%s2483] sm:$0xff]
    %2486 = vset.pattern.permute.xlu0 0
    %2487 = vperm.xlu0 %2486, %v2484
    %v2488 = vpop.permute.xlu0 %2487
    %v2490 = vadd.f32 %v2482, %v2488
    %v2491 = vmax.f32 %v2490, 0.0
    %s2492 = scalar_lea.vmem %s9, 32
    %v2493 = vld [vmem:[%s2492] sm:$0xff]
    %v2495 = vsel %vm110, %v2493, 0
    %2497 = vmatpush.msra.mxu0 0.0
    %2498 = vmatpush.msra.mxu0 0.0
    %2499 = vmatpush.msra.mxu0 0.0
    %2500 = vmatpush.msra.mxu0 0.0
    %2501 = vmatpush.msra.mxu0 0.0
    %2502 = vmatpush.msra.mxu0 0.0
    %2503 = vmatpush.msra.mxu0 0.0
    %2504 = vmatpush.msra.mxu0 0.0
    %2505 = vmatpush.msra.mxu0 0.0
    %2506 = vmatpush.msra.mxu0 0.0
    %2507 = vmatpush.msra.mxu0 0.0
    %2508 = vmatpush.msra.mxu0 0.0
    %2509 = vmatpush.msra.mxu0 0.0
    %2510 = vmatpush.msra.mxu0 0.0
    %2511 = vmatpush.msra.mxu0 0.0
    %2512 = vmatpush.msra.mxu0 %v2491
    %2513 = vmatmul.f32.gmra.mxu0 %v2495
    %v2514 = vpop.f32.mrf.mxu0
    %v2515 = vadd.f32 %v2355, %v2514
    %2516 = vdwg.mxu0
    %vm2517 = vcmp.ne.f32.partialorder %v2212, 0.0
    %2519 = vrot.lane.b32.xlu0 %v2355, 9
    %v2520 = vpop.permute.xlu0 %2519
    %v2522 = vsel %vm2517, 1, 0
    %v2523 = vperm.slane %v2522, 0
    %vm2524 = vcmp.eq.s32.totalorder %v2523, 1
    %v2525 = vsel %vm2524, %v2520, -1e+30
    %vm2526 = vcmp.ne.f32.partialorder %v2222, 0.0
    %2527 = vrot.lane.b32.xlu0 %v2355, 8
    %v2528 = vpop.permute.xlu0 %2527
    %v2530 = vsel %vm2526, 1, 0
    %v2531 = vperm.slane %v2530, 0
    %vm2532 = vcmp.eq.s32.totalorder %v2531, 1
    %v2533 = vsel %vm2532, %v2528, -1e+30
    %vm2534 = vcmp.ne.f32.partialorder %v2231, 0.0
    %2535 = vrot.lane.b32.xlu0 %v2355, 7
    %v2536 = vpop.permute.xlu0 %2535
    %v2538 = vsel %vm2534, 1, 0
    %v2539 = vperm.slane %v2538, 0
    %vm2540 = vcmp.eq.s32.totalorder %v2539, 1
    %v2541 = vsel %vm2540, %v2536, -1e+30
    %vm2542 = vcmp.ne.f32.partialorder %v2240, 0.0
    %2543 = vrot.lane.b32.xlu0 %v2355, 1
    %v2544 = vpop.permute.xlu0 %2543
    %v2546 = vsel %vm2542, 1, 0
    %v2547 = vperm.slane %v2546, 0
    %vm2548 = vcmp.eq.s32.totalorder %v2547, 1
    %v2549 = vsel %vm2548, %v2544, -1e+30
    %vm2550 = vcmp.ne.f32.partialorder %v2249, 0.0
    %v2551 = vsel %vm2550, 1, 0
    %v2552 = vperm.slane %v2551, 0
    %vm2553 = vcmp.eq.s32.totalorder %v2552, 1
    %v2554 = vsel %vm2553, %v2355, -1e+30
    %vm2555 = vcmp.ne.f32.partialorder %v2255, 0.0
    %2556 = vrot.lane.b32.xlu0 %v2355, 127
    %v2557 = vpop.permute.xlu0 %2556
    %v2559 = vsel %vm2555, 1, 0
    %v2560 = vperm.slane %v2559, 0
    %vm2561 = vcmp.eq.s32.totalorder %v2560, 1
    %v2562 = vsel %vm2561, %v2557, -1e+30
    %vm2563 = vcmp.ne.f32.partialorder %v2264, 0.0
    %2564 = vrot.lane.b32.xlu0 %v2355, 121
    %v2565 = vpop.permute.xlu0 %2564
    %v2567 = vsel %vm2563, 1, 0
    %v2568 = vperm.slane %v2567, 0
    %vm2569 = vcmp.eq.s32.totalorder %v2568, 1
    %v2570 = vsel %vm2569, %v2565, -1e+30
    %vm2571 = vcmp.ne.f32.partialorder %v2273, 0.0
    %2572 = vrot.lane.b32.xlu0 %v2355, 120
    %v2573 = vpop.permute.xlu0 %2572
    %v2575 = vsel %vm2571, 1, 0
    %v2576 = vperm.slane %v2575, 0
    %vm2577 = vcmp.eq.s32.totalorder %v2576, 1
    %v2578 = vsel %vm2577, %v2573, -1e+30
    %vm2579 = vcmp.ne.f32.partialorder %v2282, 0.0
    %2580 = vrot.lane.b32.xlu0 %v2355, 119
    %v2581 = vpop.permute.xlu0 %2580
    %v2583 = vsel %vm2579, 1, 0
    %v2584 = vperm.slane %v2583, 0
    %vm2585 = vcmp.eq.s32.totalorder %v2584, 1
    %v2586 = vsel %vm2585, %v2581, -1e+30
    %v2587 = vmax.f32 %v2525, %v2533
    %v2588 = vmax.f32 %v2541, %v2549
    %v2589 = vmax.f32 %v2554, %v2562
    %v2590 = vmax.f32 %v2570, %v2578
    %v2591 = vmax.f32 %v2587, %v2588
    %v2592 = vmax.f32 %v2589, %v2590
    %v2593 = vmax.f32 %v2591, %v2592
    %v2594 = vmax.f32 %v2593, %v2586
    %v2595 = vld [vmem:[%s17] sm:$0xff]
    %v2596 = vld [vmem:[%s17 + $0x8] sm:$0xff]
    %v2597 = vld [vmem:[%s17 + $0x10] sm:$0xff]
    %v2598 = vld [vmem:[%s17 + $0x18] sm:$0xff]
    %v2599 = vld [vmem:[%s17 + $0x20] sm:$0xff]
    %v2600 = vld [vmem:[%s17 + $0x28] sm:$0xff]
    %v2601 = vld [vmem:[%s17 + $0x30] sm:$0xff]
    %v2602 = vld [vmem:[%s17 + $0x38] sm:$0xff]
    %v2603 = vld [vmem:[%s17 + $0x40] sm:$0xff]
    %v2604 = vld [vmem:[%s17 + $0x48] sm:$0xff]
    %v2605 = vld [vmem:[%s17 + $0x50] sm:$0xff]
    %v2606 = vld [vmem:[%s17 + $0x58] sm:$0xff]
    %v2607 = vld [vmem:[%s17 + $0x60] sm:$0xff]
    %v2608 = vld [vmem:[%s17 + $0x68] sm:$0xff]
    %v2609 = vld [vmem:[%s17 + $0x70] sm:$0xff]
    %v2610 = vld [vmem:[%s17 + $0x78] sm:$0xff]
    %2611 = vmatpush.msra.mxu0 %v2610
    %2612 = vmatpush.msra.mxu0 %v2609
    %2613 = vmatpush.msra.mxu0 %v2608
    %2614 = vmatpush.msra.mxu0 %v2607
    %2615 = vmatpush.msra.mxu0 %v2606
    %2616 = vmatpush.msra.mxu0 %v2605
    %2617 = vmatpush.msra.mxu0 %v2604
    %2618 = vmatpush.msra.mxu0 %v2603
    %2619 = vmatpush.msra.mxu0 %v2602
    %2620 = vmatpush.msra.mxu0 %v2601
    %2621 = vmatpush.msra.mxu0 %v2600
    %2622 = vmatpush.msra.mxu0 %v2599
    %2623 = vmatpush.msra.mxu0 %v2598
    %2624 = vmatpush.msra.mxu0 %v2597
    %2625 = vmatpush.msra.mxu0 %v2596
    %2626 = vmatpush.msra.mxu0 %v2595
    %2627 = vmatmul.f32.gmra.mxu0 %v2594
    %v2628 = vpop.f32.mrf.mxu0
    %v2629 = vadd.f32 0.0, %v2628
    %2630 = vdwg.mxu0
    %s2631 = scalar_lea.vmem %s1, 40
    %v2632 = vld [vmem:[%s2631] sm:$0xff]
    %2634 = vset.pattern.permute.xlu0 0
    %2635 = vperm.xlu0 %2634, %v2632
    %v2636 = vpop.permute.xlu0 %2635
    %v2638 = vmul.f32 %v2629, %v2636
    %s2639 = scalar_lea.vmem %s2, 40
    %v2640 = vld [vmem:[%s2639] sm:$0xff]
    %2642 = vset.pattern.permute.xlu0 0
    %2643 = vperm.xlu0 %2642, %v2640
    %v2644 = vpop.permute.xlu0 %2643
    %v2646 = vadd.f32 %v2638, %v2644
    %v2647 = vmax.f32 %v2646, 0.0
    %s2648 = scalar_lea.vmem %s3, 40
    %v2649 = vld [vmem:[%s2648] sm:$0xff]
    %v2651 = vsel %vm110, %v2649, 0
    %2653 = vmatpush.msra.mxu0 0.0
    %2654 = vmatpush.msra.mxu0 0.0
    %2655 = vmatpush.msra.mxu0 0.0
    %2656 = vmatpush.msra.mxu0 0.0
    %2657 = vmatpush.msra.mxu0 0.0
    %2658 = vmatpush.msra.mxu0 0.0
    %2659 = vmatpush.msra.mxu0 0.0
    %2660 = vmatpush.msra.mxu0 0.0
    %2661 = vmatpush.msra.mxu0 0.0
    %2662 = vmatpush.msra.mxu0 0.0
    %2663 = vmatpush.msra.mxu0 0.0
    %2664 = vmatpush.msra.mxu0 0.0
    %2665 = vmatpush.msra.mxu0 0.0
    %2666 = vmatpush.msra.mxu0 0.0
    %2667 = vmatpush.msra.mxu0 0.0
    %2668 = vmatpush.msra.mxu0 %v2647
    %2669 = vmatmul.f32.gmra.mxu0 %v2651
    %v2670 = vpop.f32.mrf.mxu0
    %v2671 = vadd.f32 0.0, %v2670
    %2672 = vdwg.mxu0
    %s2673 = scalar_lea.vmem %s4, 40
    %v2674 = vld [vmem:[%s2673] sm:$0xff]
    %2676 = vset.pattern.permute.xlu0 0
    %2677 = vperm.xlu0 %2676, %v2674
    %v2678 = vpop.permute.xlu0 %2677
    %v2680 = vmul.f32 %v2671, %v2678
    %s2681 = scalar_lea.vmem %s5, 40
    %v2682 = vld [vmem:[%s2681] sm:$0xff]
    %2684 = vset.pattern.permute.xlu0 0
    %2685 = vperm.xlu0 %2684, %v2682
    %v2686 = vpop.permute.xlu0 %2685
    %v2688 = vadd.f32 %v2680, %v2686
    %v2689 = vmax.f32 %v2688, 0.0
    %v2690 = vld [vmem:[%s15] sm:$0x1]
    %2692 = vrot.lane.b32.xlu0 %v2689, 101
    %v2693 = vpop.permute.xlu0 %2692
    %2695 = vrot.lane.b32.xlu0 %v2689, 5
    %v2696 = vpop.permute.xlu0 %2695
    %vm2698 = vcmask 39936
    %v2699 = vsel %vm2698, %v2693, %v2696
    %v2701 = vperm.slane %v2690, 0
    %v2703 = vmul.f32 %v2701, %v2699
    %s2704 = scalar_lea.vmem %s15, 1
    %v2705 = vld [vmem:[%s2704] sm:$0x1]
    %2706 = vrot.lane.b32.xlu0 %v2689, 100
    %v2707 = vpop.permute.xlu0 %2706
    %2709 = vrot.lane.b32.xlu0 %v2689, 4
    %v2710 = vpop.permute.xlu0 %2709
    %vm2712 = vcmask 31744
    %v2713 = vsel %vm2712, %v2707, %v2710
    %v2715 = vperm.slane %v2705, 0
    %v2717 = vmul.f32 %v2715, %v2713
    %s2718 = scalar_lea.vmem %s15, 2
    %v2719 = vld [vmem:[%s2718] sm:$0x1]
    %2720 = vrot.lane.b32.xlu0 %v2689, 99
    %v2721 = vpop.permute.xlu0 %2720
    %2723 = vrot.lane.b32.xlu0 %v2689, 3
    %v2724 = vpop.permute.xlu0 %2723
    %vm2726 = vcmask 23552
    %v2727 = vsel %vm2726, %v2721, %v2724
    %v2729 = vperm.slane %v2719, 0
    %v2731 = vmul.f32 %v2729, %v2727
    %s2732 = scalar_lea.vmem %s15, 3
    %v2733 = vld [vmem:[%s2732] sm:$0x1]
    %2734 = vrot.lane.b32.xlu0 %v2689, 97
    %v2735 = vpop.permute.xlu0 %2734
    %2737 = vrot.lane.b32.xlu0 %v2689, 1
    %v2738 = vpop.permute.xlu0 %2737
    %v2740 = vsel %vm331, %v2735, %v2738
    %v2742 = vperm.slane %v2733, 0
    %v2744 = vmul.f32 %v2742, %v2740
    %s2745 = scalar_lea.vmem %s15, 4
    %v2746 = vld [vmem:[%s2745] sm:$0x1]
    %v2748 = vperm.slane %v2746, 0
    %v2750 = vmul.f32 %v2748, %v2689
    %s2751 = scalar_lea.vmem %s15, 5
    %v2752 = vld [vmem:[%s2751] sm:$0x1]
    %2753 = vrot.lane.b32.xlu0 %v2689, 127
    %v2754 = vpop.permute.xlu0 %2753
    %2756 = vrot.lane.b32.xlu0 %v2689, 31
    %v2757 = vpop.permute.xlu0 %2756
    %vm2759 = vcmask 252928
    %v2760 = vsel %vm2759, %v2754, %v2757
    %v2762 = vperm.slane %v2752, 0
    %v2764 = vmul.f32 %v2762, %v2760
    %s2765 = scalar_lea.vmem %s15, 6
    %v2766 = vld [vmem:[%s2765] sm:$0x1]
    %2767 = vrot.lane.b32.xlu0 %v2689, 125
    %v2768 = vpop.permute.xlu0 %2767
    %2770 = vrot.lane.b32.xlu0 %v2689, 29
    %v2771 = vpop.permute.xlu0 %2770
    %vm2773 = vcmask 236544
    %v2774 = vsel %vm2773, %v2768, %v2771
    %v2776 = vperm.slane %v2766, 0
    %v2778 = vmul.f32 %v2776, %v2774
    %s2779 = scalar_lea.vmem %s15, 7
    %v2780 = vld [vmem:[%s2779] sm:$0x1]
    %2781 = vrot.lane.b32.xlu0 %v2689, 124
    %v2782 = vpop.permute.xlu0 %2781
    %2784 = vrot.lane.b32.xlu0 %v2689, 28
    %v2785 = vpop.permute.xlu0 %2784
    %vm2787 = vcmask 228352
    %v2788 = vsel %vm2787, %v2782, %v2785
    %v2790 = vperm.slane %v2780, 0
    %v2792 = vmul.f32 %v2790, %v2788
    %s2793 = scalar_lea.vmem %s15, 8
    %v2794 = vld [vmem:[%s2793] sm:$0x1]
    %2795 = vrot.lane.b32.xlu0 %v2689, 123
    %v2796 = vpop.permute.xlu0 %2795
    %2798 = vrot.lane.b32.xlu0 %v2689, 27
    %v2799 = vpop.permute.xlu0 %2798
    %vm2801 = vcmask 220160
    %v2802 = vsel %vm2801, %v2796, %v2799
    %v2804 = vperm.slane %v2794, 0
    %v2806 = vmul.f32 %v2804, %v2802
    %s2807 = scalar_lea.vmem %s6, 40
    %v2808 = vld [vmem:[%s2807] sm:$0xff]
    %v2810 = vsel %vm501, %v2808, 0
    %2812 = vmatpush.msra.mxu0 0.0
    %2813 = vmatpush.msra.mxu0 0.0
    %2814 = vmatpush.msra.mxu0 0.0
    %2815 = vmatpush.msra.mxu0 0.0
    %2816 = vmatpush.msra.mxu0 0.0
    %2817 = vmatpush.msra.mxu0 0.0
    %2818 = vmatpush.msra.mxu0 0.0
    %2819 = vmatpush.msra.mxu0 %v2806
    %2820 = vmatpush.msra.mxu0 %v2792
    %2821 = vmatpush.msra.mxu0 %v2778
    %2822 = vmatpush.msra.mxu0 %v2764
    %2823 = vmatpush.msra.mxu0 %v2750
    %2824 = vmatpush.msra.mxu0 %v2744
    %2825 = vmatpush.msra.mxu0 %v2731
    %2826 = vmatpush.msra.mxu0 %v2717
    %2827 = vmatpush.msra.mxu0 %v2703
    %2828 = vmatmul.f32.gmra.mxu0 %v2810
    %v2829 = vpop.f32.mrf.mxu0
    %v2830 = vadd.f32 0.0, %v2829
    %2831 = vdwg.mxu0
    %s2832 = scalar_lea.vmem %s7, 40
    %v2833 = vld [vmem:[%s2832] sm:$0xff]
    %2835 = vset.pattern.permute.xlu0 0
    %2836 = vperm.xlu0 %2835, %v2833
    %v2837 = vpop.permute.xlu0 %2836
    %v2839 = vmul.f32 %v2830, %v2837
    %s2840 = scalar_lea.vmem %s8, 40
    %v2841 = vld [vmem:[%s2840] sm:$0xff]
    %2843 = vset.pattern.permute.xlu0 0
    %2844 = vperm.xlu0 %2843, %v2841
    %v2845 = vpop.permute.xlu0 %2844
    %v2847 = vadd.f32 %v2839, %v2845
    %v2848 = vmax.f32 %v2847, 0.0
    %s2849 = scalar_lea.vmem %s9, 40
    %v2850 = vld [vmem:[%s2849] sm:$0xff]
    %v2852 = vsel %vm110, %v2850, 0
    %2854 = vmatpush.msra.mxu0 0.0
    %2855 = vmatpush.msra.mxu0 0.0
    %2856 = vmatpush.msra.mxu0 0.0
    %2857 = vmatpush.msra.mxu0 0.0
    %2858 = vmatpush.msra.mxu0 0.0
    %2859 = vmatpush.msra.mxu0 0.0
    %2860 = vmatpush.msra.mxu0 0.0
    %2861 = vmatpush.msra.mxu0 0.0
    %2862 = vmatpush.msra.mxu0 0.0
    %2863 = vmatpush.msra.mxu0 0.0
    %2864 = vmatpush.msra.mxu0 0.0
    %2865 = vmatpush.msra.mxu0 0.0
    %2866 = vmatpush.msra.mxu0 0.0
    %2867 = vmatpush.msra.mxu0 0.0
    %2868 = vmatpush.msra.mxu0 0.0
    %2869 = vmatpush.msra.mxu0 %v2848
    %2870 = vmatmul.f32.gmra.mxu0 %v2852
    %v2871 = vpop.f32.mrf.mxu0
    %v2872 = vadd.f32 %v2629, %v2871
    %2873 = vdwg.mxu0
    %s2874 = scalar_lea.vmem %s1, 48
    %v2875 = vld [vmem:[%s2874] sm:$0xff]
    %2877 = vset.pattern.permute.xlu0 0
    %2878 = vperm.xlu0 %2877, %v2875
    %v2879 = vpop.permute.xlu0 %2878
    %v2881 = vmul.f32 %v2872, %v2879
    %s2882 = scalar_lea.vmem %s2, 48
    %v2883 = vld [vmem:[%s2882] sm:$0xff]
    %2885 = vset.pattern.permute.xlu0 0
    %2886 = vperm.xlu0 %2885, %v2883
    %v2887 = vpop.permute.xlu0 %2886
    %v2889 = vadd.f32 %v2881, %v2887
    %v2890 = vmax.f32 %v2889, 0.0
    %s2891 = scalar_lea.vmem %s3, 48
    %v2892 = vld [vmem:[%s2891] sm:$0xff]
    %v2894 = vsel %vm110, %v2892, 0
    %2896 = vmatpush.msra.mxu0 0.0
    %2897 = vmatpush.msra.mxu0 0.0
    %2898 = vmatpush.msra.mxu0 0.0
    %2899 = vmatpush.msra.mxu0 0.0
    %2900 = vmatpush.msra.mxu0 0.0
    %2901 = vmatpush.msra.mxu0 0.0
    %2902 = vmatpush.msra.mxu0 0.0
    %2903 = vmatpush.msra.mxu0 0.0
    %2904 = vmatpush.msra.mxu0 0.0
    %2905 = vmatpush.msra.mxu0 0.0
    %2906 = vmatpush.msra.mxu0 0.0
    %2907 = vmatpush.msra.mxu0 0.0
    %2908 = vmatpush.msra.mxu0 0.0
    %2909 = vmatpush.msra.mxu0 0.0
    %2910 = vmatpush.msra.mxu0 0.0
    %2911 = vmatpush.msra.mxu0 %v2890
    %2912 = vmatmul.f32.gmra.mxu0 %v2894
    %v2913 = vpop.f32.mrf.mxu0
    %v2914 = vadd.f32 0.0, %v2913
    %2915 = vdwg.mxu0
    %s2916 = scalar_lea.vmem %s4, 48
    %v2917 = vld [vmem:[%s2916] sm:$0xff]
    %2919 = vset.pattern.permute.xlu0 0
    %2920 = vperm.xlu0 %2919, %v2917
    %v2921 = vpop.permute.xlu0 %2920
    %v2923 = vmul.f32 %v2914, %v2921
    %s2924 = scalar_lea.vmem %s5, 48
    %v2925 = vld [vmem:[%s2924] sm:$0xff]
    %2927 = vset.pattern.permute.xlu0 0
    %2928 = vperm.xlu0 %2927, %v2925
    %v2929 = vpop.permute.xlu0 %2928
    %v2931 = vadd.f32 %v2923, %v2929
    %v2932 = vmax.f32 %v2931, 0.0
    %2934 = vrot.lane.b32.xlu0 %v2932, 101
    %v2935 = vpop.permute.xlu0 %2934
    %2937 = vrot.lane.b32.xlu0 %v2932, 5
    %v2938 = vpop.permute.xlu0 %2937
    %v2940 = vsel %vm2698, %v2935, %v2938
    %v2941 = vmul.f32 %v2701, %v2940
    %2942 = vrot.lane.b32.xlu0 %v2932, 100
    %v2943 = vpop.permute.xlu0 %2942
    %2945 = vrot.lane.b32.xlu0 %v2932, 4
    %v2946 = vpop.permute.xlu0 %2945
    %v2948 = vsel %vm2712, %v2943, %v2946
    %v2949 = vmul.f32 %v2715, %v2948
    %2950 = vrot.lane.b32.xlu0 %v2932, 99
    %v2951 = vpop.permute.xlu0 %2950
    %2953 = vrot.lane.b32.xlu0 %v2932, 3
    %v2954 = vpop.permute.xlu0 %2953
    %v2956 = vsel %vm2726, %v2951, %v2954
    %v2957 = vmul.f32 %v2729, %v2956
    %2958 = vrot.lane.b32.xlu0 %v2932, 97
    %v2959 = vpop.permute.xlu0 %2958
    %2961 = vrot.lane.b32.xlu0 %v2932, 1
    %v2962 = vpop.permute.xlu0 %2961
    %v2964 = vsel %vm331, %v2959, %v2962
    %v2965 = vmul.f32 %v2742, %v2964
    %v2966 = vmul.f32 %v2748, %v2932
    %2967 = vrot.lane.b32.xlu0 %v2932, 127
    %v2968 = vpop.permute.xlu0 %2967
    %2970 = vrot.lane.b32.xlu0 %v2932, 31
    %v2971 = vpop.permute.xlu0 %2970
    %v2973 = vsel %vm2759, %v2968, %v2971
    %v2974 = vmul.f32 %v2762, %v2973
    %2975 = vrot.lane.b32.xlu0 %v2932, 125
    %v2976 = vpop.permute.xlu0 %2975
    %2978 = vrot.lane.b32.xlu0 %v2932, 29
    %v2979 = vpop.permute.xlu0 %2978
    %v2981 = vsel %vm2773, %v2976, %v2979
    %v2982 = vmul.f32 %v2776, %v2981
    %2983 = vrot.lane.b32.xlu0 %v2932, 124
    %v2984 = vpop.permute.xlu0 %2983
    %2986 = vrot.lane.b32.xlu0 %v2932, 28
    %v2987 = vpop.permute.xlu0 %2986
    %v2989 = vsel %vm2787, %v2984, %v2987
    %v2990 = vmul.f32 %v2790, %v2989
    %2991 = vrot.lane.b32.xlu0 %v2932, 123
    %v2992 = vpop.permute.xlu0 %2991
    %2994 = vrot.lane.b32.xlu0 %v2932, 27
    %v2995 = vpop.permute.xlu0 %2994
    %v2997 = vsel %vm2801, %v2992, %v2995
    %v2998 = vmul.f32 %v2804, %v2997
    %s2999 = scalar_lea.vmem %s6, 48
    %v3000 = vld [vmem:[%s2999] sm:$0xff]
    %v3002 = vsel %vm501, %v3000, 0
    %3004 = vmatpush.msra.mxu0 0.0
    %3005 = vmatpush.msra.mxu0 0.0
    %3006 = vmatpush.msra.mxu0 0.0
    %3007 = vmatpush.msra.mxu0 0.0
    %3008 = vmatpush.msra.mxu0 0.0
    %3009 = vmatpush.msra.mxu0 0.0
    %3010 = vmatpush.msra.mxu0 0.0
    %3011 = vmatpush.msra.mxu0 %v2998
    %3012 = vmatpush.msra.mxu0 %v2990
    %3013 = vmatpush.msra.mxu0 %v2982
    %3014 = vmatpush.msra.mxu0 %v2974
    %3015 = vmatpush.msra.mxu0 %v2966
    %3016 = vmatpush.msra.mxu0 %v2965
    %3017 = vmatpush.msra.mxu0 %v2957
    %3018 = vmatpush.msra.mxu0 %v2949
    %3019 = vmatpush.msra.mxu0 %v2941
    %3020 = vmatmul.f32.gmra.mxu0 %v3002
    %v3021 = vpop.f32.mrf.mxu0
    %v3022 = vadd.f32 0.0, %v3021
    %3023 = vdwg.mxu0
    %s3024 = scalar_lea.vmem %s7, 48
    %v3025 = vld [vmem:[%s3024] sm:$0xff]
    %3027 = vset.pattern.permute.xlu0 0
    %3028 = vperm.xlu0 %3027, %v3025
    %v3029 = vpop.permute.xlu0 %3028
    %v3031 = vmul.f32 %v3022, %v3029
    %s3032 = scalar_lea.vmem %s8, 48
    %v3033 = vld [vmem:[%s3032] sm:$0xff]
    %3035 = vset.pattern.permute.xlu0 0
    %3036 = vperm.xlu0 %3035, %v3033
    %v3037 = vpop.permute.xlu0 %3036
    %v3039 = vadd.f32 %v3031, %v3037
    %v3040 = vmax.f32 %v3039, 0.0
    %s3041 = scalar_lea.vmem %s9, 48
    %v3042 = vld [vmem:[%s3041] sm:$0xff]
    %v3044 = vsel %vm110, %v3042, 0
    %3046 = vmatpush.msra.mxu0 0.0
    %3047 = vmatpush.msra.mxu0 0.0
    %3048 = vmatpush.msra.mxu0 0.0
    %3049 = vmatpush.msra.mxu0 0.0
    %3050 = vmatpush.msra.mxu0 0.0
    %3051 = vmatpush.msra.mxu0 0.0
    %3052 = vmatpush.msra.mxu0 0.0
    %3053 = vmatpush.msra.mxu0 0.0
    %3054 = vmatpush.msra.mxu0 0.0
    %3055 = vmatpush.msra.mxu0 0.0
    %3056 = vmatpush.msra.mxu0 0.0
    %3057 = vmatpush.msra.mxu0 0.0
    %3058 = vmatpush.msra.mxu0 0.0
    %3059 = vmatpush.msra.mxu0 0.0
    %3060 = vmatpush.msra.mxu0 0.0
    %3061 = vmatpush.msra.mxu0 %v3040
    %3062 = vmatmul.f32.gmra.mxu0 %v3044
    %v3063 = vpop.f32.mrf.mxu0
    %v3064 = vadd.f32 %v2872, %v3063
    %3065 = vdwg.mxu0
    %v3066 = vld [vmem:[%s18] sm:$0xff]
    %v3067 = vld [vmem:[%s18 + $0x8] sm:$0xff]
    %v3068 = vld [vmem:[%s18 + $0x10] sm:$0xff]
    %v3069 = vld [vmem:[%s18 + $0x18] sm:$0xff]
    %vm3070 = vcmask 261120
    %v3072 = vsel %vm3070, %v3064, 0
    %3074 = vmatpush.msra.mxu0 0.0
    %3075 = vmatpush.msra.mxu0 0.0
    %3076 = vmatpush.msra.mxu0 0.0
    %3077 = vmatpush.msra.mxu0 0.0
    %3078 = vmatpush.msra.mxu0 0.0
    %3079 = vmatpush.msra.mxu0 0.0
    %3080 = vmatpush.msra.mxu0 0.0
    %3081 = vmatpush.msra.mxu0 0.0
    %3082 = vmatpush.msra.mxu0 0.0
    %3083 = vmatpush.msra.mxu0 0.0
    %3084 = vmatpush.msra.mxu0 0.0
    %3085 = vmatpush.msra.mxu0 0.0
    %3086 = vmatpush.msra.mxu0 %v3069
    %3087 = vmatpush.msra.mxu0 %v3068
    %3088 = vmatpush.msra.mxu0 %v3067
    %3089 = vmatpush.msra.mxu0 %v3066
    %3090 = vmatmul.f32.gmra.mxu0 %v3072
    %v3091 = vpop.f32.mrf.mxu0
    %v3092 = vadd.f32 %v2355, %v3091
    %3093 = vdwg.mxu0
    %v3094 = vadd.f32 %v3092, %v2515
    %s3095 = scalar_lea.vmem %s1, 56
    %v3096 = vld [vmem:[%s3095] sm:$0xff]
    %3098 = vset.pattern.permute.xlu0 0
    %3099 = vperm.xlu0 %3098, %v3096
    %v3100 = vpop.permute.xlu0 %3099
    %v3102 = vmul.f32 %v3094, %v3100
    %s3103 = scalar_lea.vmem %s2, 56
    %v3104 = vld [vmem:[%s3103] sm:$0xff]
    %3106 = vset.pattern.permute.xlu0 0
    %3107 = vperm.xlu0 %3106, %v3104
    %v3108 = vpop.permute.xlu0 %3107
    %v3110 = vadd.f32 %v3102, %v3108
    %v3111 = vmax.f32 %v3110, 0.0
    %s3112 = scalar_lea.vmem %s3, 56
    %v3113 = vld [vmem:[%s3112] sm:$0xff]
    %v3115 = vsel %vm110, %v3113, 0
    %3117 = vmatpush.msra.mxu0 0.0
    %3118 = vmatpush.msra.mxu0 0.0
    %3119 = vmatpush.msra.mxu0 0.0
    %3120 = vmatpush.msra.mxu0 0.0
    %3121 = vmatpush.msra.mxu0 0.0
    %3122 = vmatpush.msra.mxu0 0.0
    %3123 = vmatpush.msra.mxu0 0.0
    %3124 = vmatpush.msra.mxu0 0.0
    %3125 = vmatpush.msra.mxu0 0.0
    %3126 = vmatpush.msra.mxu0 0.0
    %3127 = vmatpush.msra.mxu0 0.0
    %3128 = vmatpush.msra.mxu0 0.0
    %3129 = vmatpush.msra.mxu0 0.0
    %3130 = vmatpush.msra.mxu0 0.0
    %3131 = vmatpush.msra.mxu0 0.0
    %3132 = vmatpush.msra.mxu0 %v3111
    %3133 = vmatmul.f32.gmra.mxu0 %v3115
    %v3134 = vpop.f32.mrf.mxu0
    %v3135 = vadd.f32 0.0, %v3134
    %3136 = vdwg.mxu0
    %s3137 = scalar_lea.vmem %s4, 56
    %v3138 = vld [vmem:[%s3137] sm:$0xff]
    %3140 = vset.pattern.permute.xlu0 0
    %3141 = vperm.xlu0 %3140, %v3138
    %v3142 = vpop.permute.xlu0 %3141
    %v3144 = vmul.f32 %v3135, %v3142
    %s3145 = scalar_lea.vmem %s5, 56
    %v3146 = vld [vmem:[%s3145] sm:$0xff]
    %3148 = vset.pattern.permute.xlu0 0
    %3149 = vperm.xlu0 %3148, %v3146
    %v3150 = vpop.permute.xlu0 %3149
    %v3152 = vadd.f32 %v3144, %v3150
    %v3153 = vmax.f32 %v3152, 0.0
    %3155 = vrot.lane.b32.xlu0 %v3153, 9
    %v3156 = vpop.permute.xlu0 %3155
    %v3158 = vmul.f32 %v2218, %v3156
    %3159 = vrot.lane.b32.xlu0 %v3153, 8
    %v3160 = vpop.permute.xlu0 %3159
    %v3162 = vmul.f32 %v2227, %v3160
    %3163 = vrot.lane.b32.xlu0 %v3153, 7
    %v3164 = vpop.permute.xlu0 %3163
    %v3166 = vmul.f32 %v2236, %v3164
    %3167 = vrot.lane.b32.xlu0 %v3153, 1
    %v3168 = vpop.permute.xlu0 %3167
    %v3170 = vmul.f32 %v2245, %v3168
    %v3171 = vmul.f32 %v2251, %v3153
    %3172 = vrot.lane.b32.xlu0 %v3153, 127
    %v3173 = vpop.permute.xlu0 %3172
    %v3175 = vmul.f32 %v2260, %v3173
    %3176 = vrot.lane.b32.xlu0 %v3153, 121
    %v3177 = vpop.permute.xlu0 %3176
    %v3179 = vmul.f32 %v2269, %v3177
    %3180 = vrot.lane.b32.xlu0 %v3153, 120
    %v3181 = vpop.permute.xlu0 %3180
    %v3183 = vmul.f32 %v2278, %v3181
    %3184 = vrot.lane.b32.xlu0 %v3153, 119
    %v3185 = vpop.permute.xlu0 %3184
    %v3187 = vmul.f32 %v2287, %v3185
    %s3188 = scalar_lea.vmem %s6, 56
    %v3189 = vld [vmem:[%s3188] sm:$0xff]
    %v3191 = vsel %vm501, %v3189, 0
    %3193 = vmatpush.msra.mxu0 0.0
    %3194 = vmatpush.msra.mxu0 0.0
    %3195 = vmatpush.msra.mxu0 0.0
    %3196 = vmatpush.msra.mxu0 0.0
    %3197 = vmatpush.msra.mxu0 0.0
    %3198 = vmatpush.msra.mxu0 0.0
    %3199 = vmatpush.msra.mxu0 0.0
    %3200 = vmatpush.msra.mxu0 %v3187
    %3201 = vmatpush.msra.mxu0 %v3183
    %3202 = vmatpush.msra.mxu0 %v3179
    %3203 = vmatpush.msra.mxu0 %v3175
    %3204 = vmatpush.msra.mxu0 %v3171
    %3205 = vmatpush.msra.mxu0 %v3170
    %3206 = vmatpush.msra.mxu0 %v3166
    %3207 = vmatpush.msra.mxu0 %v3162
    %3208 = vmatpush.msra.mxu0 %v3158
    %3209 = vmatmul.f32.gmra.mxu0 %v3191
    %v3210 = vpop.f32.mrf.mxu0
    %v3211 = vadd.f32 0.0, %v3210
    %3212 = vdwg.mxu0
    %s3213 = scalar_lea.vmem %s7, 56
    %v3214 = vld [vmem:[%s3213] sm:$0xff]
    %3216 = vset.pattern.permute.xlu0 0
    %3217 = vperm.xlu0 %3216, %v3214
    %v3218 = vpop.permute.xlu0 %3217
    %v3220 = vmul.f32 %v3211, %v3218
    %s3221 = scalar_lea.vmem %s8, 56
    %v3222 = vld [vmem:[%s3221] sm:$0xff]
    %3224 = vset.pattern.permute.xlu0 0
    %3225 = vperm.xlu0 %3224, %v3222
    %v3226 = vpop.permute.xlu0 %3225
    %v3228 = vadd.f32 %v3220, %v3226
    %v3229 = vmax.f32 %v3228, 0.0
    %s3230 = scalar_lea.vmem %s9, 56
    %v3231 = vld [vmem:[%s3230] sm:$0xff]
    %v3233 = vsel %vm110, %v3231, 0
    %3235 = vmatpush.msra.mxu0 0.0
    %3236 = vmatpush.msra.mxu0 0.0
    %3237 = vmatpush.msra.mxu0 0.0
    %3238 = vmatpush.msra.mxu0 0.0
    %3239 = vmatpush.msra.mxu0 0.0
    %3240 = vmatpush.msra.mxu0 0.0
    %3241 = vmatpush.msra.mxu0 0.0
    %3242 = vmatpush.msra.mxu0 0.0
    %3243 = vmatpush.msra.mxu0 0.0
    %3244 = vmatpush.msra.mxu0 0.0
    %3245 = vmatpush.msra.mxu0 0.0
    %3246 = vmatpush.msra.mxu0 0.0
    %3247 = vmatpush.msra.mxu0 0.0
    %3248 = vmatpush.msra.mxu0 0.0
    %3249 = vmatpush.msra.mxu0 0.0
    %3250 = vmatpush.msra.mxu0 %v3229
    %3251 = vmatmul.f32.gmra.mxu0 %v3233
    %v3252 = vpop.f32.mrf.mxu0
    %v3253 = vadd.f32 %v3094, %v3252
    %3254 = vdwg.mxu0
    %v3255 = vld [vmem:[#allocation2] sm:$0xff]
    %v3256 = vld [vmem:[#allocation2 + $0x8] sm:$0xff]
    %v3257 = vld [vmem:[#allocation2 + $0x10] sm:$0xff]
    %v3258 = vld [vmem:[#allocation2 + $0x18] sm:$0xff]
    %v3259 = vld [vmem:[#allocation2 + $0x20] sm:$0xff]
    %v3260 = vld [vmem:[#allocation2 + $0x28] sm:$0xff]
    %v3261 = vld [vmem:[#allocation2 + $0x30] sm:$0xff]
    %v3262 = vld [vmem:[#allocation2 + $0x38] sm:$0xff]
    %v3263 = vld [vmem:[#allocation2 + $0x40] sm:$0xff]
    %v3264 = vld [vmem:[#allocation2 + $0x48] sm:$0xff]
    %v3265 = vld [vmem:[#allocation2 + $0x50] sm:$0xff]
    %v3266 = vld [vmem:[#allocation2 + $0x58] sm:$0xff]
    %v3267 = vld [vmem:[#allocation2 + $0x60] sm:$0xff]
    %v3268 = vld [vmem:[#allocation2 + $0x68] sm:$0xff]
    %v3269 = vld [vmem:[#allocation2 + $0x70] sm:$0xff]
    %v3270 = vld [vmem:[#allocation2 + $0x78] sm:$0xff]
    %v3271 = vld [vmem:[#allocation2 + $0x80] sm:$0xff]
    %v3272 = vld [vmem:[#allocation2 + $0x88] sm:$0xff]
    %v3273 = vld [vmem:[#allocation2 + $0x90] sm:$0xff]
    %v3274 = vld [vmem:[#allocation2 + $0x98] sm:$0xff]
    %v3275 = vld [vmem:[#allocation2 + $0xa0] sm:$0xff]
    %v3276 = vld [vmem:[#allocation2 + $0xa8] sm:$0xff]
    %v3277 = vld [vmem:[#allocation2 + $0xb0] sm:$0xff]
    %v3278 = vld [vmem:[#allocation2 + $0xb8] sm:$0xff]
    %v3279 = vld [vmem:[#allocation2 + $0xc0] sm:$0xff]
    %v3280 = vld [vmem:[#allocation2 + $0xc8] sm:$0xff]
    %v3281 = vld [vmem:[#allocation2 + $0xd0] sm:$0xff]
    %v3282 = vld [vmem:[#allocation2 + $0xd8] sm:$0xff]
    %v3283 = vld [vmem:[#allocation2 + $0xe0] sm:$0xff]
    %v3284 = vld [vmem:[#allocation2 + $0xe8] sm:$0xff]
    %v3285 = vld [vmem:[#allocation2 + $0xf0] sm:$0xff]
    %v3286 = vld [vmem:[#allocation2 + $0xf8] sm:$0xff]
    %v3287 = vld [vmem:[#allocation2 + $0x100] sm:$0xff]
    %v3288 = vld [vmem:[#allocation2 + $0x108] sm:$0xff]
    %v3289 = vld [vmem:[#allocation2 + $0x110] sm:$0xff]
    %v3290 = vld [vmem:[#allocation2 + $0x118] sm:$0xff]
    %v3291 = vld [vmem:[#allocation2 + $0x120] sm:$0xff]
    %v3292 = vld [vmem:[#allocation2 + $0x128] sm:$0xff]
    %v3293 = vld [vmem:[#allocation2 + $0x130] sm:$0xff]
    %v3294 = vld [vmem:[#allocation2 + $0x138] sm:$0xff]
    %v3295 = vld [vmem:[#allocation2 + $0x140] sm:$0xff]
    %v3296 = vld [vmem:[#allocation2 + $0x148] sm:$0xff]
    %v3297 = vld [vmem:[#allocation2 + $0x150] sm:$0xff]
    %v3298 = vld [vmem:[#allocation2 + $0x158] sm:$0xff]
    %v3299 = vld [vmem:[#allocation2 + $0x160] sm:$0xff]
    %v3300 = vld [vmem:[#allocation2 + $0x168] sm:$0xff]
    %v3301 = vld [vmem:[#allocation2 + $0x170] sm:$0xff]
    %v3302 = vld [vmem:[#allocation2 + $0x178] sm:$0xff]
    %v3303 = vld [vmem:[#allocation2 + $0x180] sm:$0xff]
    %v3304 = vld [vmem:[#allocation2 + $0x188] sm:$0xff]
    %v3305 = vld [vmem:[#allocation2 + $0x190] sm:$0xff]
    %v3306 = vld [vmem:[#allocation2 + $0x198] sm:$0xff]
    %v3307 = vld [vmem:[#allocation2 + $0x1a0] sm:$0xff]
    %v3308 = vld [vmem:[#allocation2 + $0x1a8] sm:$0xff]
    %v3309 = vld [vmem:[#allocation2 + $0x1b0] sm:$0xff]
    %v3310 = vld [vmem:[#allocation2 + $0x1b8] sm:$0xff]
    %v3311 = vld [vmem:[#allocation2 + $0x1c0] sm:$0xff]
    %v3312 = vld [vmem:[#allocation2 + $0x1c8] sm:$0xff]
    %v3313 = vld [vmem:[#allocation2 + $0x1d0] sm:$0xff]
    %v3314 = vld [vmem:[#allocation2 + $0x1d8] sm:$0xff]
    %v3315 = vld [vmem:[#allocation2 + $0x1e0] sm:$0xff]
    %v3316 = vld [vmem:[#allocation2 + $0x1e8] sm:$0xff]
    %v3317 = vld [vmem:[#allocation2 + $0x1f0] sm:$0xff]
    %v3318 = vld [vmem:[#allocation2 + $0x1f8] sm:$0xff]
    %3319 = vmatpush.msra.mxu0 %v3315
    %3320 = vmatpush.msra.mxu0 %v3311
    %3321 = vmatpush.msra.mxu0 %v3307
    %3322 = vmatpush.msra.mxu0 %v3303
    %3323 = vmatpush.msra.mxu0 %v3299
    %3324 = vmatpush.msra.mxu0 %v3295
    %3325 = vmatpush.msra.mxu0 %v3291
    %3326 = vmatpush.msra.mxu0 %v3287
    %3327 = vmatpush.msra.mxu0 %v3283
    %3328 = vmatpush.msra.mxu0 %v3279
    %3329 = vmatpush.msra.mxu0 %v3275
    %3330 = vmatpush.msra.mxu0 %v3271
    %3331 = vmatpush.msra.mxu0 %v3267
    %3332 = vmatpush.msra.mxu0 %v3263
    %3333 = vmatpush.msra.mxu0 %v3259
    %3334 = vmatpush.msra.mxu0 %v3255
    %3335 = vmatmul.f32.gmra.mxu0 %v3253
    %v3336 = vpop.f32.mrf.mxu0
    %v3337 = vadd.f32 %v1649, %v3336
    %3338 = vdwg.mxu0
    %3339 = vmatpush.msra.mxu0 %v3316
    %3340 = vmatpush.msra.mxu0 %v3312
    %3341 = vmatpush.msra.mxu0 %v3308
    %3342 = vmatpush.msra.mxu0 %v3304
    %3343 = vmatpush.msra.mxu0 %v3300
    %3344 = vmatpush.msra.mxu0 %v3296
    %3345 = vmatpush.msra.mxu0 %v3292
    %3346 = vmatpush.msra.mxu0 %v3288
    %3347 = vmatpush.msra.mxu0 %v3284
    %3348 = vmatpush.msra.mxu0 %v3280
    %3349 = vmatpush.msra.mxu0 %v3276
    %3350 = vmatpush.msra.mxu0 %v3272
    %3351 = vmatpush.msra.mxu0 %v3268
    %3352 = vmatpush.msra.mxu0 %v3264
    %3353 = vmatpush.msra.mxu0 %v3260
    %3354 = vmatpush.msra.mxu0 %v3256
    %3355 = vmatmul.f32.gmra.mxu0 %v3253
    %v3356 = vpop.f32.mrf.mxu0
    %v3357 = vadd.f32 %v1669, %v3356
    %3358 = vdwg.mxu0
    %3359 = vmatpush.msra.mxu0 %v3317
    %3360 = vmatpush.msra.mxu0 %v3313
    %3361 = vmatpush.msra.mxu0 %v3309
    %3362 = vmatpush.msra.mxu0 %v3305
    %3363 = vmatpush.msra.mxu0 %v3301
    %3364 = vmatpush.msra.mxu0 %v3297
    %3365 = vmatpush.msra.mxu0 %v3293
    %3366 = vmatpush.msra.mxu0 %v3289
    %3367 = vmatpush.msra.mxu0 %v3285
    %3368 = vmatpush.msra.mxu0 %v3281
    %3369 = vmatpush.msra.mxu0 %v3277
    %3370 = vmatpush.msra.mxu0 %v3273
    %3371 = vmatpush.msra.mxu0 %v3269
    %3372 = vmatpush.msra.mxu0 %v3265
    %3373 = vmatpush.msra.mxu0 %v3261
    %3374 = vmatpush.msra.mxu0 %v3257
    %3375 = vmatmul.f32.gmra.mxu0 %v3253
    %v3376 = vpop.f32.mrf.mxu0
    %v3377 = vadd.f32 %v1689, %v3376
    %3378 = vdwg.mxu0
    %3379 = vmatpush.msra.mxu0 %v3318
    %3380 = vmatpush.msra.mxu0 %v3314
    %3381 = vmatpush.msra.mxu0 %v3310
    %3382 = vmatpush.msra.mxu0 %v3306
    %3383 = vmatpush.msra.mxu0 %v3302
    %3384 = vmatpush.msra.mxu0 %v3298
    %3385 = vmatpush.msra.mxu0 %v3294
    %3386 = vmatpush.msra.mxu0 %v3290
    %3387 = vmatpush.msra.mxu0 %v3286
    %3388 = vmatpush.msra.mxu0 %v3282
    %3389 = vmatpush.msra.mxu0 %v3278
    %3390 = vmatpush.msra.mxu0 %v3274
    %3391 = vmatpush.msra.mxu0 %v3270
    %3392 = vmatpush.msra.mxu0 %v3266
    %3393 = vmatpush.msra.mxu0 %v3262
    %3394 = vmatpush.msra.mxu0 %v3258
    %3395 = vmatmul.f32.gmra.mxu0 %v3253
    %v3396 = vpop.f32.mrf.mxu0
    %v3397 = vadd.f32 %v1709, %v3396
    %3398 = vdwg.mxu0
    %v3399 = vld [vmem:[%s12] sm:$0xff]
    %v3400 = vld [vmem:[%s10] sm:$0xff]
    %3402 = vset.pattern.permute.xlu0 0
    %3403 = vperm.xlu0 %3402, %v3400
    %v3404 = vpop.permute.xlu0 %3403
    %v3406 = vmul.f32 %v3337, %v3404
    %v3407 = vmul.f32 %v3357, %v3404
    %v3408 = vmul.f32 %v3377, %v3404
    %v3409 = vmul.f32 %v3397, %v3404
    %v3410 = vld [vmem:[%s11] sm:$0xff]
    %3412 = vset.pattern.permute.xlu0 0
    %3413 = vperm.xlu0 %3412, %v3410
    %v3414 = vpop.permute.xlu0 %3413
    %v3416 = vadd.f32 %v3406, %v3414
    %v3417 = vadd.f32 %v3407, %v3414
    %v3418 = vadd.f32 %v3408, %v3414
    %v3419 = vadd.f32 %v3409, %v3414
    %v3420 = vmax.f32 %v3416, 0.0
    %v3421 = vmax.f32 %v3417, 0.0
    %v3422 = vmax.f32 %v3418, 0.0
    %v3423 = vmax.f32 %v3419, 0.0
    %v3425 = vsel %vm110, %v3399, 0
    %3427 = vmatpush.msra.mxu0 0.0
    %3428 = vmatpush.msra.mxu0 0.0
    %3429 = vmatpush.msra.mxu0 0.0
    %3430 = vmatpush.msra.mxu0 0.0
    %3431 = vmatpush.msra.mxu0 0.0
    %3432 = vmatpush.msra.mxu0 0.0
    %3433 = vmatpush.msra.mxu0 0.0
    %3434 = vmatpush.msra.mxu0 0.0
    %3435 = vmatpush.msra.mxu0 0.0
    %3436 = vmatpush.msra.mxu0 0.0
    %3437 = vmatpush.msra.mxu0 0.0
    %3438 = vmatpush.msra.mxu0 0.0
    %3439 = vmatpush.msra.mxu0 0.0
    %3440 = vmatpush.msra.mxu0 0.0
    %3441 = vmatpush.msra.mxu0 0.0
    %3442 = vmatpush.msra.mxu0 %v3420
    %3443 = vmatmul.f32.gmra.mxu0 %v3425
    %v3444 = vpop.f32.mrf.mxu0
    %v3445 = vadd.f32 0.0, %v3444
    %3446 = vdwg.mxu0
    %3447 = vmatpush.msra.mxu0 0.0
    %3448 = vmatpush.msra.mxu0 0.0
    %3449 = vmatpush.msra.mxu0 0.0
    %3450 = vmatpush.msra.mxu0 0.0
    %3451 = vmatpush.msra.mxu0 0.0
    %3452 = vmatpush.msra.mxu0 0.0
    %3453 = vmatpush.msra.mxu0 0.0
    %3454 = vmatpush.msra.mxu0 0.0
    %3455 = vmatpush.msra.mxu0 0.0
    %3456 = vmatpush.msra.mxu0 0.0
    %3457 = vmatpush.msra.mxu0 0.0
    %3458 = vmatpush.msra.mxu0 0.0
    %3459 = vmatpush.msra.mxu0 0.0
    %3460 = vmatpush.msra.mxu0 0.0
    %3461 = vmatpush.msra.mxu0 0.0
    %3462 = vmatpush.msra.mxu0 %v3421
    %3463 = vmatmul.f32.gmra.mxu0 %v3425
    %v3464 = vpop.f32.mrf.mxu0
    %v3465 = vadd.f32 0.0, %v3464
    %3466 = vdwg.mxu0
    %3467 = vmatpush.msra.mxu0 0.0
    %3468 = vmatpush.msra.mxu0 0.0
    %3469 = vmatpush.msra.mxu0 0.0
    %3470 = vmatpush.msra.mxu0 0.0
    %3471 = vmatpush.msra.mxu0 0.0
    %3472 = vmatpush.msra.mxu0 0.0
    %3473 = vmatpush.msra.mxu0 0.0
    %3474 = vmatpush.msra.mxu0 0.0
    %3475 = vmatpush.msra.mxu0 0.0
    %3476 = vmatpush.msra.mxu0 0.0
    %3477 = vmatpush.msra.mxu0 0.0
    %3478 = vmatpush.msra.mxu0 0.0
    %3479 = vmatpush.msra.mxu0 0.0
    %3480 = vmatpush.msra.mxu0 0.0
    %3481 = vmatpush.msra.mxu0 0.0
    %3482 = vmatpush.msra.mxu0 %v3422
    %3483 = vmatmul.f32.gmra.mxu0 %v3425
    %v3484 = vpop.f32.mrf.mxu0
    %v3485 = vadd.f32 0.0, %v3484
    %3486 = vdwg.mxu0
    %3487 = vmatpush.msra.mxu0 0.0
    %3488 = vmatpush.msra.mxu0 0.0
    %3489 = vmatpush.msra.mxu0 0.0
    %3490 = vmatpush.msra.mxu0 0.0
    %3491 = vmatpush.msra.mxu0 0.0
    %3492 = vmatpush.msra.mxu0 0.0
    %3493 = vmatpush.msra.mxu0 0.0
    %3494 = vmatpush.msra.mxu0 0.0
    %3495 = vmatpush.msra.mxu0 0.0
    %3496 = vmatpush.msra.mxu0 0.0
    %3497 = vmatpush.msra.mxu0 0.0
    %3498 = vmatpush.msra.mxu0 0.0
    %3499 = vmatpush.msra.mxu0 0.0
    %3500 = vmatpush.msra.mxu0 0.0
    %3501 = vmatpush.msra.mxu0 0.0
    %3502 = vmatpush.msra.mxu0 %v3423
    %3503 = vmatmul.f32.gmra.mxu0 %v3425
    %v3504 = vpop.f32.mrf.mxu0
    %v3505 = vadd.f32 0.0, %v3504
    %3506 = vdwg.mxu0
    %s3507 = scalar_lea.vmem %s12, 8
    %v3508 = vld [vmem:[%s3507] sm:$0xff]
    %s3509 = scalar_lea.vmem %s10, 8
    %v3510 = vld [vmem:[%s3509] sm:$0xff]
    %3512 = vset.pattern.permute.xlu0 0
    %3513 = vperm.xlu0 %3512, %v3510
    %v3514 = vpop.permute.xlu0 %3513
    %v3516 = vmul.f32 %v3445, %v3514
    %v3517 = vmul.f32 %v3465, %v3514
    %v3518 = vmul.f32 %v3485, %v3514
    %v3519 = vmul.f32 %v3505, %v3514
    %s3520 = scalar_lea.vmem %s11, 8
    %v3521 = vld [vmem:[%s3520] sm:$0xff]
    %3523 = vset.pattern.permute.xlu0 0
    %3524 = vperm.xlu0 %3523, %v3521
    %v3525 = vpop.permute.xlu0 %3524
    %v3527 = vadd.f32 %v3516, %v3525
    %v3528 = vadd.f32 %v3517, %v3525
    %v3529 = vadd.f32 %v3518, %v3525
    %v3530 = vadd.f32 %v3519, %v3525
    %v3531 = vmax.f32 %v3527, 0.0
    %v3532 = vmax.f32 %v3528, 0.0
    %v3533 = vmax.f32 %v3529, 0.0
    %v3534 = vmax.f32 %v3530, 0.0
    %v3536 = vsel %vm110, %v3508, 0
    %3538 = vmatpush.msra.mxu0 0.0
    %3539 = vmatpush.msra.mxu0 0.0
    %3540 = vmatpush.msra.mxu0 0.0
    %3541 = vmatpush.msra.mxu0 0.0
    %3542 = vmatpush.msra.mxu0 0.0
    %3543 = vmatpush.msra.mxu0 0.0
    %3544 = vmatpush.msra.mxu0 0.0
    %3545 = vmatpush.msra.mxu0 0.0
    %3546 = vmatpush.msra.mxu0 0.0
    %3547 = vmatpush.msra.mxu0 0.0
    %3548 = vmatpush.msra.mxu0 0.0
    %3549 = vmatpush.msra.mxu0 0.0
    %3550 = vmatpush.msra.mxu0 0.0
    %3551 = vmatpush.msra.mxu0 0.0
    %3552 = vmatpush.msra.mxu0 0.0
    %3553 = vmatpush.msra.mxu0 %v3531
    %3554 = vmatmul.f32.gmra.mxu0 %v3536
    %v3555 = vpop.f32.mrf.mxu0
    %v3556 = vadd.f32 0.0, %v3555
    %3557 = vdwg.mxu0
    %3558 = vmatpush.msra.mxu0 0.0
    %3559 = vmatpush.msra.mxu0 0.0
    %3560 = vmatpush.msra.mxu0 0.0
    %3561 = vmatpush.msra.mxu0 0.0
    %3562 = vmatpush.msra.mxu0 0.0
    %3563 = vmatpush.msra.mxu0 0.0
    %3564 = vmatpush.msra.mxu0 0.0
    %3565 = vmatpush.msra.mxu0 0.0
    %3566 = vmatpush.msra.mxu0 0.0
    %3567 = vmatpush.msra.mxu0 0.0
    %3568 = vmatpush.msra.mxu0 0.0
    %3569 = vmatpush.msra.mxu0 0.0
    %3570 = vmatpush.msra.mxu0 0.0
    %3571 = vmatpush.msra.mxu0 0.0
    %3572 = vmatpush.msra.mxu0 0.0
    %3573 = vmatpush.msra.mxu0 %v3532
    %3574 = vmatmul.f32.gmra.mxu0 %v3536
    %v3575 = vpop.f32.mrf.mxu0
    %v3576 = vadd.f32 0.0, %v3575
    %3577 = vdwg.mxu0
    %3578 = vmatpush.msra.mxu0 0.0
    %3579 = vmatpush.msra.mxu0 0.0
    %3580 = vmatpush.msra.mxu0 0.0
    %3581 = vmatpush.msra.mxu0 0.0
    %3582 = vmatpush.msra.mxu0 0.0
    %3583 = vmatpush.msra.mxu0 0.0
    %3584 = vmatpush.msra.mxu0 0.0
    %3585 = vmatpush.msra.mxu0 0.0
    %3586 = vmatpush.msra.mxu0 0.0
    %3587 = vmatpush.msra.mxu0 0.0
    %3588 = vmatpush.msra.mxu0 0.0
    %3589 = vmatpush.msra.mxu0 0.0
    %3590 = vmatpush.msra.mxu0 0.0
    %3591 = vmatpush.msra.mxu0 0.0
    %3592 = vmatpush.msra.mxu0 0.0
    %3593 = vmatpush.msra.mxu0 %v3533
    %3594 = vmatmul.f32.gmra.mxu0 %v3536
    %v3595 = vpop.f32.mrf.mxu0
    %v3596 = vadd.f32 0.0, %v3595
    %3597 = vdwg.mxu0
    %3598 = vmatpush.msra.mxu0 0.0
    %3599 = vmatpush.msra.mxu0 0.0
    %3600 = vmatpush.msra.mxu0 0.0
    %3601 = vmatpush.msra.mxu0 0.0
    %3602 = vmatpush.msra.mxu0 0.0
    %3603 = vmatpush.msra.mxu0 0.0
    %3604 = vmatpush.msra.mxu0 0.0
    %3605 = vmatpush.msra.mxu0 0.0
    %3606 = vmatpush.msra.mxu0 0.0
    %3607 = vmatpush.msra.mxu0 0.0
    %3608 = vmatpush.msra.mxu0 0.0
    %3609 = vmatpush.msra.mxu0 0.0
    %3610 = vmatpush.msra.mxu0 0.0
    %3611 = vmatpush.msra.mxu0 0.0
    %3612 = vmatpush.msra.mxu0 0.0
    %3613 = vmatpush.msra.mxu0 %v3534
    %3614 = vmatmul.f32.gmra.mxu0 %v3536
    %v3615 = vpop.f32.mrf.mxu0
    %v3616 = vadd.f32 0.0, %v3615
    %3617 = vdwg.mxu0
    %v3618 = vsub.f32 0.0, %v3556
    %v3619 = vsub.f32 0.0, %v3576
    %v3620 = vsub.f32 0.0, %v3596
    %v3621 = vsub.f32 0.0, %v3616
    %v3622 = vmul.f32 %v3618, 1.442695
    %v3623 = vpow.pop %v3622
    %v3624 = vmul.f32 %v3619, 1.442695
    %v3625 = vpow.pop %v3624
    %v3626 = vmul.f32 %v3620, 1.442695
    %v3627 = vpow.pop %v3626
    %v3628 = vmul.f32 %v3621, 1.442695
    %v3629 = vpow.pop %v3628
    %v3630 = vadd.f32 %v3623, 1.0
    %v3631 = vadd.f32 %v3625, 1.0
    %v3632 = vadd.f32 %v3627, 1.0
    %v3633 = vadd.f32 %v3629, 1.0
    %v3634 = vrcp.pop %v3630
    %v3635 = vmul.f32 %v3630, %v3634
    %v3636 = vsub.f32 1.0, %v3635
    %v3637 = vmul.f32 %v3634, %v3636
    %v3638 = vadd.f32 %v3634, %v3637
    %vm3639 = vweird.f32 %v3630
    %vm3640 = vweird.f32 %v3634
    %vm3641 = vmor %vm3639, %vm3640
    %v3642 = vsel %vm3641, %v3634, %v3638
    %v3643 = vand.u32 2147483647, %v3630
    %vm3644 = vcmp.eq.f32.partialorder %v3643, 8.507059e+37
    %v3645 = vand.u32 %v3630, 2147483648
    %v3646 = vor.u32 1.1754944e-38, %v3645
    %v3647 = vsel %vm3644, %v3646, %v3642
    %v3648 = vmul.f32 1.0, %v3647
    %v3649 = vrcp.pop %v3631
    %v3650 = vmul.f32 %v3631, %v3649
    %v3651 = vsub.f32 1.0, %v3650
    %v3652 = vmul.f32 %v3649, %v3651
    %v3653 = vadd.f32 %v3649, %v3652
    %vm3654 = vweird.f32 %v3631
    %vm3655 = vweird.f32 %v3649
    %vm3656 = vmor %vm3654, %vm3655
    %v3657 = vsel %vm3656, %v3649, %v3653
    %v3658 = vand.u32 2147483647, %v3631
    %vm3659 = vcmp.eq.f32.partialorder %v3658, 8.507059e+37
    %v3660 = vand.u32 %v3631, 2147483648
    %v3661 = vor.u32 1.1754944e-38, %v3660
    %v3662 = vsel %vm3659, %v3661, %v3657
    %v3663 = vmul.f32 1.0, %v3662
    %v3664 = vrcp.pop %v3632
    %v3665 = vmul.f32 %v3632, %v3664
    %v3666 = vsub.f32 1.0, %v3665
    %v3667 = vmul.f32 %v3664, %v3666
    %v3668 = vadd.f32 %v3664, %v3667
    %vm3669 = vweird.f32 %v3632
    %vm3670 = vweird.f32 %v3664
    %vm3671 = vmor %vm3669, %vm3670
    %v3672 = vsel %vm3671, %v3664, %v3668
    %v3673 = vand.u32 2147483647, %v3632
    %vm3674 = vcmp.eq.f32.partialorder %v3673, 8.507059e+37
    %v3675 = vand.u32 %v3632, 2147483648
    %v3676 = vor.u32 1.1754944e-38, %v3675
    %v3677 = vsel %vm3674, %v3676, %v3672
    %v3678 = vmul.f32 1.0, %v3677
    %v3679 = vrcp.pop %v3633
    %v3680 = vmul.f32 %v3633, %v3679
    %v3681 = vsub.f32 1.0, %v3680
    %v3682 = vmul.f32 %v3679, %v3681
    %v3683 = vadd.f32 %v3679, %v3682
    %vm3684 = vweird.f32 %v3633
    %vm3685 = vweird.f32 %v3679
    %vm3686 = vmor %vm3684, %vm3685
    %v3687 = vsel %vm3686, %v3679, %v3683
    %v3688 = vand.u32 2147483647, %v3633
    %vm3689 = vcmp.eq.f32.partialorder %v3688, 8.507059e+37
    %v3690 = vand.u32 %v3633, 2147483648
    %v3691 = vor.u32 1.1754944e-38, %v3690
    %v3692 = vsel %vm3689, %v3691, %v3687
    %v3693 = vmul.f32 1.0, %v3692
    %v3694 = vadd.f32 %v3648, 1.0
    %v3695 = vadd.f32 %v3663, 1.0
    %v3696 = vadd.f32 %v3678, 1.0
    %v3697 = vadd.f32 %v3693, 1.0
    %v3698 = vmul.f32 %v3694, %v1649
    %v3699 = vmul.f32 %v3695, %v1669
    %v3700 = vmul.f32 %v3696, %v1689
    %v3701 = vmul.f32 %v3697, %v1709
    %s3702 = scalar_lea.vmem %s1, 64
    %v3703 = vld [vmem:[%s3702] sm:$0xff]
    %3705 = vset.pattern.permute.xlu0 0
    %3706 = vperm.xlu0 %3705, %v3703
    %v3707 = vpop.permute.xlu0 %3706
    %v3709 = vmul.f32 %v3698, %v3707
    %v3710 = vmul.f32 %v3699, %v3707
    %v3711 = vmul.f32 %v3700, %v3707
    %v3712 = vmul.f32 %v3701, %v3707
    %s3713 = scalar_lea.vmem %s2, 64
    %v3714 = vld [vmem:[%s3713] sm:$0xff]
    %3716 = vset.pattern.permute.xlu0 0
    %3717 = vperm.xlu0 %3716, %v3714
    %v3718 = vpop.permute.xlu0 %3717
    %v3720 = vadd.f32 %v3709, %v3718
    %v3721 = vadd.f32 %v3710, %v3718
    %v3722 = vadd.f32 %v3711, %v3718
    %v3723 = vadd.f32 %v3712, %v3718
    %v3724 = vmax.f32 %v3720, 0.0
    %v3725 = vmax.f32 %v3721, 0.0
    %v3726 = vmax.f32 %v3722, 0.0
    %v3727 = vmax.f32 %v3723, 0.0
    %s3728 = scalar_lea.vmem %s3, 64
    %v3729 = vld [vmem:[%s3728] sm:$0xff]
    %v3731 = vsel %vm110, %v3729, 0
    %3733 = vmatpush.msra.mxu0 0.0
    %3734 = vmatpush.msra.mxu0 0.0
    %3735 = vmatpush.msra.mxu0 0.0
    %3736 = vmatpush.msra.mxu0 0.0
    %3737 = vmatpush.msra.mxu0 0.0
    %3738 = vmatpush.msra.mxu0 0.0
    %3739 = vmatpush.msra.mxu0 0.0
    %3740 = vmatpush.msra.mxu0 0.0
    %3741 = vmatpush.msra.mxu0 0.0
    %3742 = vmatpush.msra.mxu0 0.0
    %3743 = vmatpush.msra.mxu0 0.0
    %3744 = vmatpush.msra.mxu0 0.0
    %3745 = vmatpush.msra.mxu0 0.0
    %3746 = vmatpush.msra.mxu0 0.0
    %3747 = vmatpush.msra.mxu0 0.0
    %3748 = vmatpush.msra.mxu0 %v3724
    %3749 = vmatmul.f32.gmra.mxu0 %v3731
    %v3750 = vpop.f32.mrf.mxu0
    %v3751 = vadd.f32 0.0, %v3750
    %3752 = vdwg.mxu0
    %3753 = vmatpush.msra.mxu0 0.0
    %3754 = vmatpush.msra.mxu0 0.0
    %3755 = vmatpush.msra.mxu0 0.0
    %3756 = vmatpush.msra.mxu0 0.0
    %3757 = vmatpush.msra.mxu0 0.0
    %3758 = vmatpush.msra.mxu0 0.0
    %3759 = vmatpush.msra.mxu0 0.0
    %3760 = vmatpush.msra.mxu0 0.0
    %3761 = vmatpush.msra.mxu0 0.0
    %3762 = vmatpush.msra.mxu0 0.0
    %3763 = vmatpush.msra.mxu0 0.0
    %3764 = vmatpush.msra.mxu0 0.0
    %3765 = vmatpush.msra.mxu0 0.0
    %3766 = vmatpush.msra.mxu0 0.0
    %3767 = vmatpush.msra.mxu0 0.0
    %3768 = vmatpush.msra.mxu0 %v3725
    %3769 = vmatmul.f32.gmra.mxu0 %v3731
    %v3770 = vpop.f32.mrf.mxu0
    %v3771 = vadd.f32 0.0, %v3770
    %3772 = vdwg.mxu0
    %3773 = vmatpush.msra.mxu0 0.0
    %3774 = vmatpush.msra.mxu0 0.0
    %3775 = vmatpush.msra.mxu0 0.0
    %3776 = vmatpush.msra.mxu0 0.0
    %3777 = vmatpush.msra.mxu0 0.0
    %3778 = vmatpush.msra.mxu0 0.0
    %3779 = vmatpush.msra.mxu0 0.0
    %3780 = vmatpush.msra.mxu0 0.0
    %3781 = vmatpush.msra.mxu0 0.0
    %3782 = vmatpush.msra.mxu0 0.0
    %3783 = vmatpush.msra.mxu0 0.0
    %3784 = vmatpush.msra.mxu0 0.0
    %3785 = vmatpush.msra.mxu0 0.0
    %3786 = vmatpush.msra.mxu0 0.0
    %3787 = vmatpush.msra.mxu0 0.0
    %3788 = vmatpush.msra.mxu0 %v3726
    %3789 = vmatmul.f32.gmra.mxu0 %v3731
    %v3790 = vpop.f32.mrf.mxu0
    %v3791 = vadd.f32 0.0, %v3790
    %3792 = vdwg.mxu0
    %3793 = vmatpush.msra.mxu0 0.0
    %3794 = vmatpush.msra.mxu0 0.0
    %3795 = vmatpush.msra.mxu0 0.0
    %3796 = vmatpush.msra.mxu0 0.0
    %3797 = vmatpush.msra.mxu0 0.0
    %3798 = vmatpush.msra.mxu0 0.0
    %3799 = vmatpush.msra.mxu0 0.0
    %3800 = vmatpush.msra.mxu0 0.0
    %3801 = vmatpush.msra.mxu0 0.0
    %3802 = vmatpush.msra.mxu0 0.0
    %3803 = vmatpush.msra.mxu0 0.0
    %3804 = vmatpush.msra.mxu0 0.0
    %3805 = vmatpush.msra.mxu0 0.0
    %3806 = vmatpush.msra.mxu0 0.0
    %3807 = vmatpush.msra.mxu0 0.0
    %3808 = vmatpush.msra.mxu0 %v3727
    %3809 = vmatmul.f32.gmra.mxu0 %v3731
    %v3810 = vpop.f32.mrf.mxu0
    %v3811 = vadd.f32 0.0, %v3810
    %3812 = vdwg.mxu0
    %s3813 = scalar_lea.vmem %s4, 64
    %v3814 = vld [vmem:[%s3813] sm:$0xff]
    %3816 = vset.pattern.permute.xlu0 0
    %3817 = vperm.xlu0 %3816, %v3814
    %v3818 = vpop.permute.xlu0 %3817
    %v3820 = vmul.f32 %v3751, %v3818
    %v3821 = vmul.f32 %v3771, %v3818
    %v3822 = vmul.f32 %v3791, %v3818
    %v3823 = vmul.f32 %v3811, %v3818
    %s3824 = scalar_lea.vmem %s5, 64
    %v3825 = vld [vmem:[%s3824] sm:$0xff]
    %3827 = vset.pattern.permute.xlu0 0
    %3828 = vperm.xlu0 %3827, %v3825
    %v3829 = vpop.permute.xlu0 %3828
    %v3831 = vadd.f32 %v3820, %v3829
    %v3832 = vadd.f32 %v3821, %v3829
    %v3833 = vadd.f32 %v3822, %v3829
    %v3834 = vadd.f32 %v3823, %v3829
    %v3835 = vmax.f32 %v3831, 0.0
    %v3836 = vmax.f32 %v3832, 0.0
    %v3837 = vmax.f32 %v3833, 0.0
    %v3838 = vmax.f32 %v3834, 0.0
    %3840 = vrot.lane.b32.xlu0 %v3838, 17
    %v3841 = vpop.permute.xlu0 %3840
    %3846 = vrot.lane.b32.xlu0 %v3835, 17
    %v3847 = vpop.permute.xlu0 %3846
    %3848 = vrot.lane.b32.xlu0 %v3836, 17
    %v3849 = vpop.permute.xlu0 %3848
    %3850 = vrot.lane.b32.xlu0 %v3837, 17
    %v3851 = vpop.permute.xlu0 %3850
    %v3852 = vsel %vm232, %v3847, %v3849
    %v3853 = vsel %vm232, %v3849, %v3851
    %v3854 = vsel %vm232, %v3851, %v3841
    %v3859 = vsel %vm232, %v3841, %v3847
    %v3860 = vmul.f32 %v242, %v3859
    %v3861 = vmul.f32 %v243, %v3852
    %v3862 = vmul.f32 %v244, %v3853
    %v3863 = vmul.f32 %v245, %v3854
    %3864 = vrot.lane.b32.xlu0 %v3838, 16
    %v3865 = vpop.permute.xlu0 %3864
    %3867 = vrot.lane.b32.xlu0 %v3835, 16
    %v3868 = vpop.permute.xlu0 %3867
    %3869 = vrot.lane.b32.xlu0 %v3836, 16
    %v3870 = vpop.permute.xlu0 %3869
    %3871 = vrot.lane.b32.xlu0 %v3837, 16
    %v3872 = vpop.permute.xlu0 %3871
    %v3873 = vsel %vm265, %v3868, %v3870
    %v3874 = vsel %vm265, %v3870, %v3872
    %v3875 = vsel %vm265, %v3872, %v3865
    %v3880 = vsel %vm265, %v3865, %v3868
    %v3881 = vmul.f32 %v275, %v3880
    %v3882 = vmul.f32 %v276, %v3873
    %v3883 = vmul.f32 %v277, %v3874
    %v3884 = vmul.f32 %v278, %v3875
    %3885 = vrot.lane.b32.xlu0 %v3838, 15
    %v3886 = vpop.permute.xlu0 %3885
    %3888 = vrot.lane.b32.xlu0 %v3835, 15
    %v3889 = vpop.permute.xlu0 %3888
    %3890 = vrot.lane.b32.xlu0 %v3836, 15
    %v3891 = vpop.permute.xlu0 %3890
    %3892 = vrot.lane.b32.xlu0 %v3837, 15
    %v3893 = vpop.permute.xlu0 %3892
    %v3894 = vsel %vm298, %v3889, %v3891
    %v3895 = vsel %vm298, %v3891, %v3893
    %v3896 = vsel %vm298, %v3893, %v3886
    %v3901 = vsel %vm298, %v3886, %v3889
    %v3902 = vmul.f32 %v308, %v3901
    %v3903 = vmul.f32 %v309, %v3894
    %v3904 = vmul.f32 %v310, %v3895
    %v3905 = vmul.f32 %v311, %v3896
    %3906 = vrot.lane.b32.xlu0 %v3838, 1
    %v3907 = vpop.permute.xlu0 %3906
    %3909 = vrot.lane.b32.xlu0 %v3835, 1
    %v3910 = vpop.permute.xlu0 %3909
    %3911 = vrot.lane.b32.xlu0 %v3836, 1
    %v3912 = vpop.permute.xlu0 %3911
    %3913 = vrot.lane.b32.xlu0 %v3837, 1
    %v3914 = vpop.permute.xlu0 %3913
    %v3915 = vsel %vm331, %v3910, %v3912
    %v3916 = vsel %vm331, %v3912, %v3914
    %v3917 = vsel %vm331, %v3914, %v3907
    %v3922 = vsel %vm331, %v3907, %v3910
    %v3923 = vmul.f32 %v341, %v3922
    %v3924 = vmul.f32 %v342, %v3915
    %v3925 = vmul.f32 %v343, %v3916
    %v3926 = vmul.f32 %v344, %v3917
    %v3927 = vmul.f32 %v356, %v3835
    %v3928 = vmul.f32 %v357, %v3836
    %v3929 = vmul.f32 %v358, %v3837
    %v3930 = vmul.f32 %v359, %v3838
    %3931 = vrot.lane.b32.xlu0 %v3835, 127
    %v3932 = vpop.permute.xlu0 %3931
    %3933 = vrot.lane.b32.xlu0 %v3836, 127
    %v3934 = vpop.permute.xlu0 %3933
    %3935 = vrot.lane.b32.xlu0 %v3837, 127
    %v3936 = vpop.permute.xlu0 %3935
    %3937 = vrot.lane.b32.xlu0 %v3838, 127
    %v3938 = vpop.permute.xlu0 %3937
    %v3939 = vsel %vm378, %v3932, %v3934
    %v3940 = vsel %vm378, %v3934, %v3936
    %v3941 = vsel %vm378, %v3936, %v3938
    %v3947 = vsel %vm378, %v3938, %v3932
    %v3948 = vmul.f32 %v389, %v3939
    %v3949 = vmul.f32 %v390, %v3940
    %v3950 = vmul.f32 %v391, %v3941
    %v3951 = vmul.f32 %v392, %v3947
    %3952 = vrot.lane.b32.xlu0 %v3835, 113
    %v3953 = vpop.permute.xlu0 %3952
    %3954 = vrot.lane.b32.xlu0 %v3836, 113
    %v3955 = vpop.permute.xlu0 %3954
    %3956 = vrot.lane.b32.xlu0 %v3837, 113
    %v3957 = vpop.permute.xlu0 %3956
    %3958 = vrot.lane.b32.xlu0 %v3838, 113
    %v3959 = vpop.permute.xlu0 %3958
    %v3960 = vsel %vm411, %v3953, %v3955
    %v3961 = vsel %vm411, %v3955, %v3957
    %v3962 = vsel %vm411, %v3957, %v3959
    %v3968 = vsel %vm411, %v3959, %v3953
    %v3969 = vmul.f32 %v422, %v3960
    %v3970 = vmul.f32 %v423, %v3961
    %v3971 = vmul.f32 %v424, %v3962
    %v3972 = vmul.f32 %v425, %v3968
    %3973 = vrot.lane.b32.xlu0 %v3835, 112
    %v3974 = vpop.permute.xlu0 %3973
    %3975 = vrot.lane.b32.xlu0 %v3836, 112
    %v3976 = vpop.permute.xlu0 %3975
    %3977 = vrot.lane.b32.xlu0 %v3837, 112
    %v3978 = vpop.permute.xlu0 %3977
    %3979 = vrot.lane.b32.xlu0 %v3838, 112
    %v3980 = vpop.permute.xlu0 %3979
    %v3981 = vsel %vm444, %v3974, %v3976
    %v3982 = vsel %vm444, %v3976, %v3978
    %v3983 = vsel %vm444, %v3978, %v3980
    %v3989 = vsel %vm444, %v3980, %v3974
    %v3990 = vmul.f32 %v455, %v3981
    %v3991 = vmul.f32 %v456, %v3982
    %v3992 = vmul.f32 %v457, %v3983
    %v3993 = vmul.f32 %v458, %v3989
    %3994 = vrot.lane.b32.xlu0 %v3835, 111
    %v3995 = vpop.permute.xlu0 %3994
    %3996 = vrot.lane.b32.xlu0 %v3836, 111
    %v3997 = vpop.permute.xlu0 %3996
    %3998 = vrot.lane.b32.xlu0 %v3837, 111
    %v3999 = vpop.permute.xlu0 %3998
    %4000 = vrot.lane.b32.xlu0 %v3838, 111
    %v4001 = vpop.permute.xlu0 %4000
    %v4002 = vsel %vm477, %v3995, %v3997
    %v4003 = vsel %vm477, %v3997, %v3999
    %v4004 = vsel %vm477, %v3999, %v4001
    %v4010 = vsel %vm477, %v4001, %v3995
    %v4011 = vmul.f32 %v488, %v4002
    %v4012 = vmul.f32 %v489, %v4003
    %v4013 = vmul.f32 %v490, %v4004
    %v4014 = vmul.f32 %v491, %v4010
    %s4015 = scalar_lea.vmem %s6, 64
    %v4016 = vld [vmem:[%s4015] sm:$0xff]
    %v4018 = vsel %vm501, %v4016, 0
    %4020 = vmatpush.msra.mxu0 0.0
    %4021 = vmatpush.msra.mxu0 0.0
    %4022 = vmatpush.msra.mxu0 0.0
    %4023 = vmatpush.msra.mxu0 0.0
    %4024 = vmatpush.msra.mxu0 0.0
    %4025 = vmatpush.msra.mxu0 0.0
    %4026 = vmatpush.msra.mxu0 0.0
    %4027 = vmatpush.msra.mxu0 %v4011
    %4028 = vmatpush.msra.mxu0 %v3990
    %4029 = vmatpush.msra.mxu0 %v3969
    %4030 = vmatpush.msra.mxu0 %v3948
    %4031 = vmatpush.msra.mxu0 %v3927
    %4032 = vmatpush.msra.mxu0 %v3923
    %4033 = vmatpush.msra.mxu0 %v3902
    %4034 = vmatpush.msra.mxu0 %v3881
    %4035 = vmatpush.msra.mxu0 %v3860
    %4036 = vmatmul.f32.gmra.mxu0 %v4018
    %v4037 = vpop.f32.mrf.mxu0
    %v4038 = vadd.f32 0.0, %v4037
    %4039 = vdwg.mxu0
    %4040 = vmatpush.msra.mxu0 0.0
    %4041 = vmatpush.msra.mxu0 0.0
    %4042 = vmatpush.msra.mxu0 0.0
    %4043 = vmatpush.msra.mxu0 0.0
    %4044 = vmatpush.msra.mxu0 0.0
    %4045 = vmatpush.msra.mxu0 0.0
    %4046 = vmatpush.msra.mxu0 0.0
    %4047 = vmatpush.msra.mxu0 %v4012
    %4048 = vmatpush.msra.mxu0 %v3991
    %4049 = vmatpush.msra.mxu0 %v3970
    %4050 = vmatpush.msra.mxu0 %v3949
    %4051 = vmatpush.msra.mxu0 %v3928
    %4052 = vmatpush.msra.mxu0 %v3924
    %4053 = vmatpush.msra.mxu0 %v3903
    %4054 = vmatpush.msra.mxu0 %v3882
    %4055 = vmatpush.msra.mxu0 %v3861
    %4056 = vmatmul.f32.gmra.mxu0 %v4018
    %v4057 = vpop.f32.mrf.mxu0
    %v4058 = vadd.f32 0.0, %v4057
    %4059 = vdwg.mxu0
    %4060 = vmatpush.msra.mxu0 0.0
    %4061 = vmatpush.msra.mxu0 0.0
    %4062 = vmatpush.msra.mxu0 0.0
    %4063 = vmatpush.msra.mxu0 0.0
    %4064 = vmatpush.msra.mxu0 0.0
    %4065 = vmatpush.msra.mxu0 0.0
    %4066 = vmatpush.msra.mxu0 0.0
    %4067 = vmatpush.msra.mxu0 %v4013
    %4068 = vmatpush.msra.mxu0 %v3992
    %4069 = vmatpush.msra.mxu0 %v3971
    %4070 = vmatpush.msra.mxu0 %v3950
    %4071 = vmatpush.msra.mxu0 %v3929
    %4072 = vmatpush.msra.mxu0 %v3925
    %4073 = vmatpush.msra.mxu0 %v3904
    %4074 = vmatpush.msra.mxu0 %v3883
    %4075 = vmatpush.msra.mxu0 %v3862
    %4076 = vmatmul.f32.gmra.mxu0 %v4018
    %v4077 = vpop.f32.mrf.mxu0
    %v4078 = vadd.f32 0.0, %v4077
    %4079 = vdwg.mxu0
    %4080 = vmatpush.msra.mxu0 0.0
    %4081 = vmatpush.msra.mxu0 0.0
    %4082 = vmatpush.msra.mxu0 0.0
    %4083 = vmatpush.msra.mxu0 0.0
    %4084 = vmatpush.msra.mxu0 0.0
    %4085 = vmatpush.msra.mxu0 0.0
    %4086 = vmatpush.msra.mxu0 0.0
    %4087 = vmatpush.msra.mxu0 %v4014
    %4088 = vmatpush.msra.mxu0 %v3993
    %4089 = vmatpush.msra.mxu0 %v3972
    %4090 = vmatpush.msra.mxu0 %v3951
    %4091 = vmatpush.msra.mxu0 %v3930
    %4092 = vmatpush.msra.mxu0 %v3926
    %4093 = vmatpush.msra.mxu0 %v3905
    %4094 = vmatpush.msra.mxu0 %v3884
    %4095 = vmatpush.msra.mxu0 %v3863
    %4096 = vmatmul.f32.gmra.mxu0 %v4018
    %v4097 = vpop.f32.mrf.mxu0
    %v4098 = vadd.f32 0.0, %v4097
    %4099 = vdwg.mxu0
    %s4100 = scalar_lea.vmem %s7, 64
    %v4101 = vld [vmem:[%s4100] sm:$0xff]
    %4103 = vset.pattern.permute.xlu0 0
    %4104 = vperm.xlu0 %4103, %v4101
    %v4105 = vpop.permute.xlu0 %4104
    %v4107 = vmul.f32 %v4038, %v4105
    %v4108 = vmul.f32 %v4058, %v4105
    %v4109 = vmul.f32 %v4078, %v4105
    %v4110 = vmul.f32 %v4098, %v4105
    %s4111 = scalar_lea.vmem %s8, 64
    %v4112 = vld [vmem:[%s4111] sm:$0xff]
    %4114 = vset.pattern.permute.xlu0 0
    %4115 = vperm.xlu0 %4114, %v4112
    %v4116 = vpop.permute.xlu0 %4115
    %v4118 = vadd.f32 %v4107, %v4116
    %v4119 = vadd.f32 %v4108, %v4116
    %v4120 = vadd.f32 %v4109, %v4116
    %v4121 = vadd.f32 %v4110, %v4116
    %v4122 = vmax.f32 %v4118, 0.0
    %v4123 = vmax.f32 %v4119, 0.0
    %v4124 = vmax.f32 %v4120, 0.0
    %v4125 = vmax.f32 %v4121, 0.0
    %s4126 = scalar_lea.vmem %s9, 64
    %v4127 = vld [vmem:[%s4126] sm:$0xff]
    %v4129 = vsel %vm110, %v4127, 0
    %4131 = vmatpush.msra.mxu0 0.0
    %4132 = vmatpush.msra.mxu0 0.0
    %4133 = vmatpush.msra.mxu0 0.0
    %4134 = vmatpush.msra.mxu0 0.0
    %4135 = vmatpush.msra.mxu0 0.0
    %4136 = vmatpush.msra.mxu0 0.0
    %4137 = vmatpush.msra.mxu0 0.0
    %4138 = vmatpush.msra.mxu0 0.0
    %4139 = vmatpush.msra.mxu0 0.0
    %4140 = vmatpush.msra.mxu0 0.0
    %4141 = vmatpush.msra.mxu0 0.0
    %4142 = vmatpush.msra.mxu0 0.0
    %4143 = vmatpush.msra.mxu0 0.0
    %4144 = vmatpush.msra.mxu0 0.0
    %4145 = vmatpush.msra.mxu0 0.0
    %4146 = vmatpush.msra.mxu0 %v4122
    %4147 = vmatmul.f32.gmra.mxu0 %v4129
    %v4148 = vpop.f32.mrf.mxu0
    %v4149 = vadd.f32 %v3698, %v4148
    %4150 = vdwg.mxu0
    %4151 = vmatpush.msra.mxu0 0.0
    %4152 = vmatpush.msra.mxu0 0.0
    %4153 = vmatpush.msra.mxu0 0.0
    %4154 = vmatpush.msra.mxu0 0.0
    %4155 = vmatpush.msra.mxu0 0.0
    %4156 = vmatpush.msra.mxu0 0.0
    %4157 = vmatpush.msra.mxu0 0.0
    %4158 = vmatpush.msra.mxu0 0.0
    %4159 = vmatpush.msra.mxu0 0.0
    %4160 = vmatpush.msra.mxu0 0.0
    %4161 = vmatpush.msra.mxu0 0.0
    %4162 = vmatpush.msra.mxu0 0.0
    %4163 = vmatpush.msra.mxu0 0.0
    %4164 = vmatpush.msra.mxu0 0.0
    %4165 = vmatpush.msra.mxu0 0.0
    %4166 = vmatpush.msra.mxu0 %v4123
    %4167 = vmatmul.f32.gmra.mxu0 %v4129
    %v4168 = vpop.f32.mrf.mxu0
    %v4169 = vadd.f32 %v3699, %v4168
    %4170 = vdwg.mxu0
    %4171 = vmatpush.msra.mxu0 0.0
    %4172 = vmatpush.msra.mxu0 0.0
    %4173 = vmatpush.msra.mxu0 0.0
    %4174 = vmatpush.msra.mxu0 0.0
    %4175 = vmatpush.msra.mxu0 0.0
    %4176 = vmatpush.msra.mxu0 0.0
    %4177 = vmatpush.msra.mxu0 0.0
    %4178 = vmatpush.msra.mxu0 0.0
    %4179 = vmatpush.msra.mxu0 0.0
    %4180 = vmatpush.msra.mxu0 0.0
    %4181 = vmatpush.msra.mxu0 0.0
    %4182 = vmatpush.msra.mxu0 0.0
    %4183 = vmatpush.msra.mxu0 0.0
    %4184 = vmatpush.msra.mxu0 0.0
    %4185 = vmatpush.msra.mxu0 0.0
    %4186 = vmatpush.msra.mxu0 %v4124
    %4187 = vmatmul.f32.gmra.mxu0 %v4129
    %v4188 = vpop.f32.mrf.mxu0
    %v4189 = vadd.f32 %v3700, %v4188
    %4190 = vdwg.mxu0
    %4191 = vmatpush.msra.mxu0 0.0
    %4192 = vmatpush.msra.mxu0 0.0
    %4193 = vmatpush.msra.mxu0 0.0
    %4194 = vmatpush.msra.mxu0 0.0
    %4195 = vmatpush.msra.mxu0 0.0
    %4196 = vmatpush.msra.mxu0 0.0
    %4197 = vmatpush.msra.mxu0 0.0
    %4198 = vmatpush.msra.mxu0 0.0
    %4199 = vmatpush.msra.mxu0 0.0
    %4200 = vmatpush.msra.mxu0 0.0
    %4201 = vmatpush.msra.mxu0 0.0
    %4202 = vmatpush.msra.mxu0 0.0
    %4203 = vmatpush.msra.mxu0 0.0
    %4204 = vmatpush.msra.mxu0 0.0
    %4205 = vmatpush.msra.mxu0 0.0
    %4206 = vmatpush.msra.mxu0 %v4125
    %4207 = vmatmul.f32.gmra.mxu0 %v4129
    %v4208 = vpop.f32.mrf.mxu0
    %v4209 = vadd.f32 %v3701, %v4208
    %4210 = vdwg.mxu0
    %4211 = vst [vmem:[%s20] sm:$0xff] %v4149
    %4212 = vst [vmem:[%s20 + $0x8] sm:$0xff] %v4169
    %4213 = vst [vmem:[%s20 + $0x10] sm:$0xff] %v4189
    %4214 = vst [vmem:[%s20 + $0x18] sm:$0xff] %v4209
    // Predicated region
    $region86: #{attention_module_stage2.1} parent=1 // pred_check
      _
    $region87: #{attention_module_stage2.1} parent=1 // pred_check_branch
      %4216 = sbr.rel (0) target = $region89
    $region88: #{attention_module_stage2.1} parent=1 // pred_region
      _
    $region89: #{attention_module_stage2.1} parent=1 // pred_fallthru
      _
    // Predicated region
    $region90: #{attention_module_stage2.1} parent=1 // pred_check
      _
    $region91: #{attention_module_stage2.1} parent=1 // pred_check_branch
      %4218 = sbr.rel (0) target = $region93
    $region92: #{attention_module_stage2.1} parent=1 // pred_region
      _
    $region93: #{attention_module_stage2.1} parent=1 // pred_fallthru
      _
    %4219 = vsyncpa [#allocation3], 1

</llo_original>
